<compile_context>
chip_gen: v5e
topology: v5e:2x2
jax: 0.10.0
libtpu: 0.0.40
codegen_flags: <defaults>
</compile_context>

<pallas_src>
import jax
import jax.numpy as jnp
from jax.experimental import pallas as pl
from jax.experimental.pallas import tpu as pltpu


# ---------------------------------------------------------------------------
# Kernel 1: conv1 + ReLU + conv2 + ReLU + 2x2 max-pool (one batch element /
#           grid step; all intermediates stay in VMEM).
# ---------------------------------------------------------------------------
def _conv_pool_kernel(p1_ref, w1_ref, b1_ref, w2_ref, b2_ref, o_ref,
                      a1_s, hp_s):
    # conv1 as a single MXU matmul over the (26 x 32-padded) output grid:
    #   (832, 9) bf16 @ (9, 16) bf16 -> (832, 16) f32
    a1 = jnp.dot(p1_ref[...], w1_ref[...], preferred_element_type=jnp.float32)
    a1 = jnp.maximum(a1 + b1_ref[...], 0.0)
    # Stash as (H=26, Wpad=32, C=16); columns 26..31 are padding, never read.
    a1_s[...] = a1.reshape(26, 32, 16)

    # conv2 im2col built in VMEM: 9 shifted (24, 24, 16) windows, channel-minor,
    # concatenated along K -> (576, 144).  Never materialized in HBM.
    cols = []
    for i in range(3):
        for j in range(3):
            win = a1_s[i:i + 24, j:j + 24, :]               # (24, 24, 16) f32
            cols.append(win.reshape(576, 16).astype(jnp.bfloat16))
    patches = jnp.concatenate(cols, axis=1)                 # (576, 144) bf16

    # conv2: (576, 144) bf16 @ (144, 32) bf16 -> f32, + bias, ReLU.
    y2 = jnp.dot(patches, w2_ref[...], preferred_element_type=jnp.float32)
    y2 = jnp.maximum(y2 + b2_ref[...], 0.0)                 # rows = h*24 + w

    # Fused 2x2 max-pool.
    # H direction: split the leading (row) dim -> (12, 2, 24, 32), max over parity.
    y4 = y2.reshape(12, 2, 24, 32)
    hp_s[...] = jnp.maximum(y4[:, 0], y4[:, 1])             # (12, 24, 32)
    # W direction: sublane-strided reads of the scratch (even / odd columns).
    pooled = jnp.maximum(hp_s[:, pl.ds(0, 12, 2), :],
                         hp_s[:, pl.ds(1, 12, 2), :])       # (12, 12, 32)
    o_ref[...] = pooled.astype(o_ref.dtype)                 # NHWC order


def conv_pool_forward(patches1, w1, b1, w2, b2):
    B = patches1.shape[0]
    return pl.pallas_call(
        _conv_pool_kernel,
        out_shape=jax.ShapeDtypeStruct((B, 12, 12, 32), jnp.bfloat16),
        grid=(B,),
        in_specs=[
            pl.BlockSpec((None, 832, 9), lambda b: (b, 0, 0)),   # per-batch patches
            pl.BlockSpec((9, 16), lambda b: (0, 0)),             # conv1 weights (resident)
            pl.BlockSpec((1, 16), lambda b: (0, 0)),
            pl.BlockSpec((144, 32), lambda b: (0, 0)),           # conv2 weights (resident)
            pl.BlockSpec((1, 32), lambda b: (0, 0)),
        ],
        out_specs=pl.BlockSpec((None, 12, 12, 32), lambda b: (b, 0, 0, 0)),
        scratch_shapes=[
            pltpu.VMEM((26, 32, 16), jnp.float32),   # conv1 output (W padded to 32)
            pltpu.VMEM((12, 24, 32), jnp.float32),   # H-pooled conv2 output
        ],
        compiler_params=pltpu.CompilerParams(
            dimension_semantics=("parallel",)),
    )(patches1, w1, b1, w2, b2)


# ---------------------------------------------------------------------------
# Kernel 2: fc1 + ReLU + fc2 (fused), tiled over batch rows.
# ---------------------------------------------------------------------------
def _fc_kernel(x_ref, w1_ref, b1_ref, w2_ref, b2_ref, o_ref):
    h = jnp.dot(x_ref[...], w1_ref[...], preferred_element_type=jnp.float32)
    h = jnp.maximum(h + b1_ref[...], 0.0)                   # (TB, 64) f32
    y = jnp.dot(h.astype(jnp.bfloat16), w2_ref[...],
                preferred_element_type=jnp.float32)
    o_ref[...] = y + b2_ref[...]                            # (TB, 10) f32


def fc_forward(x, w1, b1, w2, b2, *, block_b=256):
    B, K = x.shape
    N = w2.shape[1]
    if B <= block_b:
        tb, nb = B, 1
        xp = x
    else:
        tb = block_b
        nb = pl.cdiv(B, tb)
        pad = nb * tb - B
        xp = jnp.pad(x, ((0, pad), (0, 0))) if pad else x
    out = pl.pallas_call(
        _fc_kernel,
        out_shape=jax.ShapeDtypeStruct((nb * tb, N), jnp.float32),
        grid=(nb,),
        in_specs=[
            pl.BlockSpec((tb, K), lambda i: (i, 0)),
            pl.BlockSpec((K, 64), lambda i: (0, 0)),        # fc1 weight, resident
            pl.BlockSpec((1, 64), lambda i: (0, 0)),
            pl.BlockSpec((64, N), lambda i: (0, 0)),        # fc2 weight, resident
            pl.BlockSpec((1, N), lambda i: (0, 0)),
        ],
        out_specs=pl.BlockSpec((tb, N), lambda i: (i, 0)),
        compiler_params=pltpu.CompilerParams(
            dimension_semantics=("parallel",)),
    )(xp, w1, b1, w2, b2)
    return out[:B]


# ---------------------------------------------------------------------------
# Cheap XLA glue + parameters + forward pass
# ---------------------------------------------------------------------------
def _conv1_im2col(x):
    """x: (B, 28, 28) f32 -> (B, 832, 9) bf16 conv1 patches.

    Rows cover a (26 x 32)-padded conv1 output grid in row-major (y, x) order
    (the 6 padded columns are never read downstream); columns are the 3x3 taps
    in (i, j) order, matching the conv1_w layout.  This is only a 9-value-per-
    pixel expansion of the tiny 28x28 input; conv2's much larger im2col is
    built inside the Pallas kernel.
    """
    B = x.shape[0]
    xp = jnp.pad(x, ((0, 0), (0, 0), (0, 6)))               # (B, 28, 34)
    taps = [xp[:, i:i + 26, j:j + 32] for i in range(3) for j in range(3)]
    p = jnp.stack(taps, axis=-1)                            # (B, 26, 32, 9)
    return p.reshape(B, 26 * 32, 9).astype(jnp.bfloat16)


def init_params(key):
    """Synthetic parameters, stored in kernel-friendly layouts (chosen once).

    Correspondence with the PyTorch module (a fixed offline re-layout):
      conv1_w (9, 16)    <- conv1.weight (16,1,3,3):  w[i*3+j, co]          = W[co, 0, i, j]
      conv2_w (144, 32)  <- conv2.weight (32,16,3,3): w[(i*3+j)*16+ci, co]  = W[co, ci, i, j]
      fc1_w   (4608, 64) <- fc1.weight (64,4608).T with input columns permuted from
                            NCHW-flatten (c*144+h*12+w) to NHWC-flatten (h*384+w*32+c)
      fc2_w   (64, 10)   <- fc2.weight (10,64).T
    Matmul operands are bf16 (MXU-native), biases f32.
    """
    ks = jax.random.split(key, 8)
    s = 0.05
    f32, bf16 = jnp.float32, jnp.bfloat16
    return {
        "conv1_w": (s * jax.random.normal(ks[0], (9, 16), f32)).astype(bf16),
        "conv1_b": s * jax.random.normal(ks[1], (1, 16), f32),
        "conv2_w": (s * jax.random.normal(ks[2], (144, 32), f32)).astype(bf16),
        "conv2_b": s * jax.random.normal(ks[3], (1, 32), f32),
        "fc1_w": (s * jax.random.normal(ks[4], (4608, 64), f32)).astype(bf16),
        "fc1_b": s * jax.random.normal(ks[5], (1, 64), f32),
        "fc2_w": (s * jax.random.normal(ks[6], (64, 10), f32)).astype(bf16),
        "fc2_b": s * jax.random.normal(ks[7], (1, 10), f32),
    }


@jax.jit
def netf1_forward(params, x_nchw):
    B = x_nchw.shape[0]
    x = x_nchw.reshape(B, 28, 28)                           # Cin = 1
    p1 = _conv1_im2col(x)
    pooled = conv_pool_forward(p1,
                               params["conv1_w"], params["conv1_b"],
                               params["conv2_w"], params["conv2_b"])
    feats = pooled.reshape(B, 4608)                         # NHWC flatten (metadata only)
    # dropout1 / dropout2: identity (eval mode)
    return fc_forward(feats,
                      params["fc1_w"], params["fc1_b"],
                      params["fc2_w"], params["fc2_b"])


def reference_forward(params, x_nchw):
    """Pure-JAX f32 reference using the same (bf16-stored) weights."""
    B = x_nchw.shape[0]
    x = x_nchw.reshape(B, 28, 28).astype(jnp.float32)
    w1 = params["conv1_w"].astype(jnp.float32).reshape(3, 3, 16)
    w2 = params["conv2_w"].astype(jnp.float32).reshape(3, 3, 16, 32)
    a1 = jnp.zeros((B, 26, 26, 16), jnp.float32)
    for i in range(3):
        for j in range(3):
            a1 = a1 + x[:, i:i + 26, j:j + 26, None] * w1[i, j][None, None, None, :]
    a1 = jax.nn.relu(a1 + params["conv1_b"].reshape(1, 1, 1, 16))
    y2 = jnp.zeros((B, 24, 24, 32), jnp.float32)
    for i in range(3):
        for j in range(3):
            y2 = y2 + jnp.einsum("bhwc,cd->bhwd",
                                 a1[:, i:i + 24, j:j + 24, :], w2[i, j])
    y2 = jax.nn.relu(y2 + params["conv2_b"].reshape(1, 1, 1, 32))
    pooled = jnp.max(y2.reshape(B, 12, 2, 12, 2, 32), axis=(2, 4))
    feats = pooled.reshape(B, 4608)
    h = jax.nn.relu(feats @ params["fc1_w"].astype(jnp.float32) + params["fc1_b"])
    return h @ params["fc2_w"].astype(jnp.float32) + params["fc2_b"]


if __name__ == "__main__":
    key = jax.random.PRNGKey(0)
    k_param, k_in = jax.random.split(key)
    params = init_params(k_param)
    # 28x28 input is implied by fc1's 4608 = 32 * 12 * 12 input features.
    x = jax.random.normal(k_in, (2, 1, 28, 28), jnp.float32)

    out = netf1_forward(params, x)
    jax.block_until_ready(out)
    assert out.shape == (2, 10) and out.dtype == jnp.float32

    ref = reference_forward(params, x)
    err = float(jnp.max(jnp.abs(out - ref)))
    assert err < 2e-2, f"max |pallas - reference| = {err}"
    print("KERNEL_OK")
</pallas_src>

<mosaic_0001>
module attributes {stable_mosaic.version = 11 : i64} {
  func.func @_conv_pool_kernel(%arg0: i32, %arg1: memref<1x832x9xbf16, #tpu.memory_space<vmem>>, %arg2: memref<9x16xbf16, #tpu.memory_space<vmem>>, %arg3: memref<1x16xf32, #tpu.memory_space<vmem>>, %arg4: memref<144x32xbf16, #tpu.memory_space<vmem>>, %arg5: memref<1x32xf32, #tpu.memory_space<vmem>>, %arg6: memref<1x12x12x32xbf16, #tpu.memory_space<vmem>>, %arg7: memref<26x32x16xf32, #tpu.memory_space<vmem>>, %arg8: memref<12x24x32xf32, #tpu.memory_space<vmem>>) attributes {dimension_semantics = [#tpu.dimension_semantics<parallel>], iteration_bounds = array<i64: 2>, scalar_prefetch = 0 : i64, scratch_operands = 2 : i64, tpu.core_type = #tpu.core_type<tc>, window_params = [{transform_indices = @transform_0, window_bounds = array<i64: 1, 832, 9>}, {pipeline_mode = #tpu.pipeline_mode<synchronous>, transform_indices = @transform_1, window_bounds = array<i64: 9, 16>}, {pipeline_mode = #tpu.pipeline_mode<synchronous>, transform_indices = @transform_2, window_bounds = array<i64: 1, 16>}, {pipeline_mode = #tpu.pipeline_mode<synchronous>, transform_indices = @transform_3, window_bounds = array<i64: 144, 32>}, {pipeline_mode = #tpu.pipeline_mode<synchronous>, transform_indices = @transform_4, window_bounds = array<i64: 1, 32>}, {transform_indices = @transform_5, window_bounds = array<i64: 1, 12, 12, 32>}]} {
    %c0 = arith.constant 0 : index
    %c0_0 = arith.constant 0 : index
    %c0_1 = arith.constant 0 : index
    %0 = vector.load %arg1[%c0, %c0_0, %c0_1] : memref<1x832x9xbf16, #tpu.memory_space<vmem>>, vector<1x832x9xbf16>
    %1 = vector.shape_cast %0 : vector<1x832x9xbf16> to vector<832x9xbf16>
    %c0_2 = arith.constant 0 : index
    %c0_3 = arith.constant 0 : index
    %2 = vector.load %arg2[%c0_2, %c0_3] : memref<9x16xbf16, #tpu.memory_space<vmem>>, vector<9x16xbf16>
    %cst = arith.constant dense<0.000000e+00> : vector<832x16xf32>
    %3 = tpu.matmul %1, %2, %cst {dimension_numbers = #tpu.dot_dimension_numbers<[1], [0], [0], [1], [0, 0, 1, 1], [], []>} : vector<832x9xbf16>, vector<9x16xbf16>, vector<832x16xf32> -> vector<832x16xf32>
    %c0_4 = arith.constant 0 : index
    %c0_5 = arith.constant 0 : index
    %4 = vector.load %arg3[%c0_4, %c0_5] : memref<1x16xf32, #tpu.memory_space<vmem>>, vector<1x16xf32>
    %5 = vector.broadcast %4 : vector<1x16xf32> to vector<832x16xf32>
    %6 = arith.addf %3, %5 : vector<832x16xf32>
    %cst_6 = arith.constant 0.000000e+00 : f32
    %7 = vector.broadcast %cst_6 : f32 to vector<832x16xf32>
    %8 = arith.maximumf %6, %7 : vector<832x16xf32>
    %9 = vector.shape_cast %8 : vector<832x16xf32> to vector<26x32x16xf32>
    %c0_7 = arith.constant 0 : index
    %c0_8 = arith.constant 0 : index
    %c0_9 = arith.constant 0 : index
    %10 = vector.load %arg7[%c0_7, %c0_8, %c0_9] : memref<26x32x16xf32, #tpu.memory_space<vmem>>, vector<26x32x16xf32>
    tpu.vector_store %arg7[%c0_7, %c0_8, %c0_9], %9 {strides = array<i32>} : memref<26x32x16xf32, #tpu.memory_space<vmem>>, vector<26x32x16xf32>,
    %c0_10 = arith.constant 0 : index
    %c0_11 = arith.constant 0 : index
    %c0_12 = arith.constant 0 : index
    %11 = vector.load %arg7[%c0_10, %c0_11, %c0_12] : memref<26x32x16xf32, #tpu.memory_space<vmem>>, vector<24x24x16xf32>
    %12 = vector.shape_cast %11 : vector<24x24x16xf32> to vector<576x16xf32>
    %13 = arith.truncf %12 : vector<576x16xf32> to vector<576x16xbf16>
    %c0_13 = arith.constant 0 : index
    %c1 = arith.constant 1 : index
    %c0_14 = arith.constant 0 : index
    %14 = vector.load %arg7[%c0_13, %c1, %c0_14] : memref<26x32x16xf32, #tpu.memory_space<vmem>>, vector<24x24x16xf32>
    %15 = vector.shape_cast %14 : vector<24x24x16xf32> to vector<576x16xf32>
    %16 = arith.truncf %15 : vector<576x16xf32> to vector<576x16xbf16>
    %c0_15 = arith.constant 0 : index
    %c2 = arith.constant 2 : index
    %c0_16 = arith.constant 0 : index
    %17 = vector.load %arg7[%c0_15, %c2, %c0_16] : memref<26x32x16xf32, #tpu.memory_space<vmem>>, vector<24x24x16xf32>
    %18 = vector.shape_cast %17 : vector<24x24x16xf32> to vector<576x16xf32>
    %19 = arith.truncf %18 : vector<576x16xf32> to vector<576x16xbf16>
    %c1_17 = arith.constant 1 : index
    %c0_18 = arith.constant 0 : index
    %c0_19 = arith.constant 0 : index
    %20 = vector.load %arg7[%c1_17, %c0_18, %c0_19] : memref<26x32x16xf32, #tpu.memory_space<vmem>>, vector<24x24x16xf32>
    %21 = vector.shape_cast %20 : vector<24x24x16xf32> to vector<576x16xf32>
    %22 = arith.truncf %21 : vector<576x16xf32> to vector<576x16xbf16>
    %c1_20 = arith.constant 1 : index
    %c1_21 = arith.constant 1 : index
    %c0_22 = arith.constant 0 : index
    %23 = vector.load %arg7[%c1_20, %c1_21, %c0_22] : memref<26x32x16xf32, #tpu.memory_space<vmem>>, vector<24x24x16xf32>
    %24 = vector.shape_cast %23 : vector<24x24x16xf32> to vector<576x16xf32>
    %25 = arith.truncf %24 : vector<576x16xf32> to vector<576x16xbf16>
    %c1_23 = arith.constant 1 : index
    %c2_24 = arith.constant 2 : index
    %c0_25 = arith.constant 0 : index
    %26 = vector.load %arg7[%c1_23, %c2_24, %c0_25] : memref<26x32x16xf32, #tpu.memory_space<vmem>>, vector<24x24x16xf32>
    %27 = vector.shape_cast %26 : vector<24x24x16xf32> to vector<576x16xf32>
    %28 = arith.truncf %27 : vector<576x16xf32> to vector<576x16xbf16>
    %c2_26 = arith.constant 2 : index
    %c0_27 = arith.constant 0 : index
    %c0_28 = arith.constant 0 : index
    %29 = vector.load %arg7[%c2_26, %c0_27, %c0_28] : memref<26x32x16xf32, #tpu.memory_space<vmem>>, vector<24x24x16xf32>
    %30 = vector.shape_cast %29 : vector<24x24x16xf32> to vector<576x16xf32>
    %31 = arith.truncf %30 : vector<576x16xf32> to vector<576x16xbf16>
    %c2_29 = arith.constant 2 : index
    %c1_30 = arith.constant 1 : index
    %c0_31 = arith.constant 0 : index
    %32 = vector.load %arg7[%c2_29, %c1_30, %c0_31] : memref<26x32x16xf32, #tpu.memory_space<vmem>>, vector<24x24x16xf32>
    %33 = vector.shape_cast %32 : vector<24x24x16xf32> to vector<576x16xf32>
    %34 = arith.truncf %33 : vector<576x16xf32> to vector<576x16xbf16>
    %c2_32 = arith.constant 2 : index
    %c2_33 = arith.constant 2 : index
    %c0_34 = arith.constant 0 : index
    %35 = vector.load %arg7[%c2_32, %c2_33, %c0_34] : memref<26x32x16xf32, #tpu.memory_space<vmem>>, vector<24x24x16xf32>
    %36 = vector.shape_cast %35 : vector<24x24x16xf32> to vector<576x16xf32>
    %37 = arith.truncf %36 : vector<576x16xf32> to vector<576x16xbf16>
    %38 = tpu.concatenate %13, %16, %19, %22, %25, %28, %31, %34, %37 in 1 : vector<576x16xbf16>, vector<576x16xbf16>, vector<576x16xbf16>, vector<576x16xbf16>, vector<576x16xbf16>, vector<576x16xbf16>, vector<576x16xbf16>, vector<576x16xbf16>, vector<576x16xbf16> -> vector<576x144xbf16>
    %c0_35 = arith.constant 0 : index
    %c0_36 = arith.constant 0 : index
    %39 = vector.load %arg4[%c0_35, %c0_36] : memref<144x32xbf16, #tpu.memory_space<vmem>>, vector<144x32xbf16>
    %cst_37 = arith.constant dense<0.000000e+00> : vector<576x32xf32>
    %40 = tpu.matmul %38, %39, %cst_37 {dimension_numbers = #tpu.dot_dimension_numbers<[1], [0], [0], [1], [0, 0, 1, 1], [], []>} : vector<576x144xbf16>, vector<144x32xbf16>, vector<576x32xf32> -> vector<576x32xf32>
    %c0_38 = arith.constant 0 : index
    %c0_39 = arith.constant 0 : index
    %41 = vector.load %arg5[%c0_38, %c0_39] : memref<1x32xf32, #tpu.memory_space<vmem>>, vector<1x32xf32>
    %42 = vector.broadcast %41 : vector<1x32xf32> to vector<576x32xf32>
    %43 = arith.addf %40, %42 : vector<576x32xf32>
    %cst_40 = arith.constant 0.000000e+00 : f32
    %44 = vector.broadcast %cst_40 : f32 to vector<576x32xf32>
    %45 = arith.maximumf %43, %44 : vector<576x32xf32>
    %46 = vector.shape_cast %45 : vector<576x32xf32> to vector<12x2x24x32xf32>
    %47 = vector.extract_strided_slice %46 {offsets = [0, 0, 0, 0], sizes = [12, 1, 24, 32], strides = [1, 1, 1, 1]} : vector<12x2x24x32xf32> to vector<12x1x24x32xf32>
    %48 = vector.shape_cast %47 : vector<12x1x24x32xf32> to vector<12x24x32xf32>
    %49 = vector.extract_strided_slice %46 {offsets = [0, 1, 0, 0], sizes = [12, 1, 24, 32], strides = [1, 1, 1, 1]} : vector<12x2x24x32xf32> to vector<12x1x24x32xf32>
    %50 = vector.shape_cast %49 : vector<12x1x24x32xf32> to vector<12x24x32xf32>
    %51 = arith.maximumf %48, %50 : vector<12x24x32xf32>
    %c0_41 = arith.constant 0 : index
    %c0_42 = arith.constant 0 : index
    %c0_43 = arith.constant 0 : index
    %52 = vector.load %arg8[%c0_41, %c0_42, %c0_43] : memref<12x24x32xf32, #tpu.memory_space<vmem>>, vector<12x24x32xf32>
    tpu.vector_store %arg8[%c0_41, %c0_42, %c0_43], %51 {strides = array<i32>} : memref<12x24x32xf32, #tpu.memory_space<vmem>>, vector<12x24x32xf32>,
    %c0_44 = arith.constant 0 : index
    %c0_45 = arith.constant 0 : index
    %c0_46 = arith.constant 0 : index
    %53 = tpu.strided_load %arg8[%c0_44, %c0_45, %c0_46] {strides = array<i32: 1, 2, 1>} : memref<12x24x32xf32, #tpu.memory_space<vmem>>, vector<12x12x32xf32>
    %c0_47 = arith.constant 0 : index
    %c1_48 = arith.constant 1 : index
    %c0_49 = arith.constant 0 : index
    %54 = tpu.strided_load %arg8[%c0_47, %c1_48, %c0_49] {strides = array<i32: 1, 2, 1>} : memref<12x24x32xf32, #tpu.memory_space<vmem>>, vector<12x12x32xf32>
    %55 = arith.maximumf %53, %54 : vector<12x12x32xf32>
    %56 = arith.truncf %55 : vector<12x12x32xf32> to vector<12x12x32xbf16>
    %c0_50 = arith.constant 0 : index
    %c0_51 = arith.constant 0 : index
    %c0_52 = arith.constant 0 : index
    %c0_53 = arith.constant 0 : index
    %57 = vector.load %arg6[%c0_50, %c0_51, %c0_52, %c0_53] : memref<1x12x12x32xbf16, #tpu.memory_space<vmem>>, vector<1x12x12x32xbf16>
    %58 = vector.shape_cast %57 : vector<1x12x12x32xbf16> to vector<12x12x32xbf16>
    %59 = vector.shape_cast %56 : vector<12x12x32xbf16> to vector<1x12x12x32xbf16>
    tpu.vector_store %arg6[%c0_50, %c0_51, %c0_52, %c0_53], %59 {strides = array<i32>} : memref<1x12x12x32xbf16, #tpu.memory_space<vmem>>, vector<1x12x12x32xbf16>,
    return
  }
  func.func @transform_0(%arg0: i32) -> (i32, i32, i32) {
    %c0_i32 = arith.constant 0 : i32
    %c0_i32_0 = arith.constant 0 : i32
    %c0_i32_1 = arith.constant 0 : i32
    return %arg0, %c0_i32, %c0_i32_0 : i32, i32, i32
  }
  func.func @transform_1(%arg0: i32) -> (i32, i32) {
    %c0_i32 = arith.constant 0 : i32
    %c0_i32_0 = arith.constant 0 : i32
    %c0_i32_1 = arith.constant 0 : i32
    return %c0_i32, %c0_i32_0 : i32, i32
  }
  func.func @transform_2(%arg0: i32) -> (i32, i32) {
    %c0_i32 = arith.constant 0 : i32
    %c0_i32_0 = arith.constant 0 : i32
    %c0_i32_1 = arith.constant 0 : i32
    return %c0_i32, %c0_i32_0 : i32, i32
  }
  func.func @transform_3(%arg0: i32) -> (i32, i32) {
    %c0_i32 = arith.constant 0 : i32
    %c0_i32_0 = arith.constant 0 : i32
    %c0_i32_1 = arith.constant 0 : i32
    return %c0_i32, %c0_i32_0 : i32, i32
  }
  func.func @transform_4(%arg0: i32) -> (i32, i32) {
    %c0_i32 = arith.constant 0 : i32
    %c0_i32_0 = arith.constant 0 : i32
    %c0_i32_1 = arith.constant 0 : i32
    return %c0_i32, %c0_i32_0 : i32, i32
  }
  func.func @transform_5(%arg0: i32) -> (i32, i32, i32, i32) {
    %c0_i32 = arith.constant 0 : i32
    %c0_i32_0 = arith.constant 0 : i32
    %c0_i32_1 = arith.constant 0 : i32
    %c0_i32_2 = arith.constant 0 : i32
    return %arg0, %c0_i32, %c0_i32_0, %c0_i32_1 : i32, i32, i32, i32
  }
}

module attributes {stable_mosaic.version = 11 : i64} {
  func.func @_fc_kernel(%arg0: i32, %arg1: memref<2x4608xbf16, #tpu.memory_space<vmem>>, %arg2: memref<4608x64xbf16, #tpu.memory_space<vmem>>, %arg3: memref<1x64xf32, #tpu.memory_space<vmem>>, %arg4: memref<64x10xbf16, #tpu.memory_space<vmem>>, %arg5: memref<1x10xf32, #tpu.memory_space<vmem>>, %arg6: memref<2x10xf32, #tpu.memory_space<vmem>>) attributes {dimension_semantics = [#tpu.dimension_semantics<parallel>], iteration_bounds = array<i64: 1>, scalar_prefetch = 0 : i64, scratch_operands = 0 : i64, tpu.core_type = #tpu.core_type<tc>, window_params = [{transform_indices = @transform_0, window_bounds = array<i64: 2, 4608>}, {pipeline_mode = #tpu.pipeline_mode<synchronous>, transform_indices = @transform_1, window_bounds = array<i64: 4608, 64>}, {pipeline_mode = #tpu.pipeline_mode<synchronous>, transform_indices = @transform_2, window_bounds = array<i64: 1, 64>}, {pipeline_mode = #tpu.pipeline_mode<synchronous>, transform_indices = @transform_3, window_bounds = array<i64: 64, 10>}, {pipeline_mode = #tpu.pipeline_mode<synchronous>, transform_indices = @transform_4, window_bounds = array<i64: 1, 10>}, {transform_indices = @transform_5, window_bounds = array<i64: 2, 10>}]} {
    %c0 = arith.constant 0 : index
    %c0_0 = arith.constant 0 : index
    %0 = vector.load %arg1[%c0, %c0_0] : memref<2x4608xbf16, #tpu.memory_space<vmem>>, vector<2x4608xbf16>
    %c0_1 = arith.constant 0 : index
    %c0_2 = arith.constant 0 : index
    %1 = vector.load %arg2[%c0_1, %c0_2] : memref<4608x64xbf16, #tpu.memory_space<vmem>>, vector<4608x64xbf16>
    %cst = arith.constant dense<0.000000e+00> : vector<2x64xf32>
    %2 = tpu.matmul %0, %1, %cst {dimension_numbers = #tpu.dot_dimension_numbers<[1], [0], [0], [1], [0, 0, 1, 1], [], []>} : vector<2x4608xbf16>, vector<4608x64xbf16>, vector<2x64xf32> -> vector<2x64xf32>
    %c0_3 = arith.constant 0 : index
    %c0_4 = arith.constant 0 : index
    %3 = vector.load %arg3[%c0_3, %c0_4] : memref<1x64xf32, #tpu.memory_space<vmem>>, vector<1x64xf32>
    %4 = vector.broadcast %3 : vector<1x64xf32> to vector<2x64xf32>
    %5 = arith.addf %2, %4 : vector<2x64xf32>
    %cst_5 = arith.constant 0.000000e+00 : f32
    %6 = vector.broadcast %cst_5 : f32 to vector<2x64xf32>
    %7 = arith.maximumf %5, %6 : vector<2x64xf32>
    %8 = arith.truncf %7 : vector<2x64xf32> to vector<2x64xbf16>
    %c0_6 = arith.constant 0 : index
    %c0_7 = arith.constant 0 : index
    %9 = vector.load %arg4[%c0_6, %c0_7] : memref<64x10xbf16, #tpu.memory_space<vmem>>, vector<64x10xbf16>
    %cst_8 = arith.constant dense<0.000000e+00> : vector<2x10xf32>
    %10 = tpu.matmul %8, %9, %cst_8 {dimension_numbers = #tpu.dot_dimension_numbers<[1], [0], [0], [1], [0, 0, 1, 1], [], []>} : vector<2x64xbf16>, vector<64x10xbf16>, vector<2x10xf32> -> vector<2x10xf32>
    %c0_9 = arith.constant 0 : index
    %c0_10 = arith.constant 0 : index
    %11 = vector.load %arg5[%c0_9, %c0_10] : memref<1x10xf32, #tpu.memory_space<vmem>>, vector<1x10xf32>
    %12 = vector.broadcast %11 : vector<1x10xf32> to vector<2x10xf32>
    %13 = arith.addf %10, %12 : vector<2x10xf32>
    %c0_11 = arith.constant 0 : index
    %c0_12 = arith.constant 0 : index
    %14 = vector.load %arg6[%c0_11, %c0_12] : memref<2x10xf32, #tpu.memory_space<vmem>>, vector<2x10xf32>
    tpu.vector_store %arg6[%c0_11, %c0_12], %13 {strides = array<i32>} : memref<2x10xf32, #tpu.memory_space<vmem>>, vector<2x10xf32>,
    return
  }
  func.func @transform_0(%arg0: i32) -> (i32, i32) {
    %c0_i32 = arith.constant 0 : i32
    %c0_i32_0 = arith.constant 0 : i32
    return %arg0, %c0_i32 : i32, i32
  }
  func.func @transform_1(%arg0: i32) -> (i32, i32) {
    %c0_i32 = arith.constant 0 : i32
    %c0_i32_0 = arith.constant 0 : i32
    %c0_i32_1 = arith.constant 0 : i32
    return %c0_i32, %c0_i32_0 : i32, i32
  }
  func.func @transform_2(%arg0: i32) -> (i32, i32) {
    %c0_i32 = arith.constant 0 : i32
    %c0_i32_0 = arith.constant 0 : i32
    %c0_i32_1 = arith.constant 0 : i32
    return %c0_i32, %c0_i32_0 : i32, i32
  }
  func.func @transform_3(%arg0: i32) -> (i32, i32) {
    %c0_i32 = arith.constant 0 : i32
    %c0_i32_0 = arith.constant 0 : i32
    %c0_i32_1 = arith.constant 0 : i32
    return %c0_i32, %c0_i32_0 : i32, i32
  }
  func.func @transform_4(%arg0: i32) -> (i32, i32) {
    %c0_i32 = arith.constant 0 : i32
    %c0_i32_0 = arith.constant 0 : i32
    %c0_i32_1 = arith.constant 0 : i32
    return %c0_i32, %c0_i32_0 : i32, i32
  }
  func.func @transform_5(%arg0: i32) -> (i32, i32) {
    %c0_i32 = arith.constant 0 : i32
    %c0_i32_0 = arith.constant 0 : i32
    return %arg0, %c0_i32 : i32, i32
  }
}

</mosaic_0001>

<llo_original>
// kernel: netf1_forward.3
$region0: #{netf1_forward.3}
  #allocation0 [shape = 'u32[]', space=smem, size = 0x4, offset = 0x4, fixed_abs, tag = 'smem constant byte address 0x4 - core index']
  #allocation1 [shape = 'u32[72,128]{1,0:T(1,128)}', space=vmem, size = 0x9000, scoped, tag = 'internal scratch']
  %s0 = inlined_call_operand.vmem [shape: bf16[2,4608], index: 0, kind: input, shape index: {}]
  %s1 = inlined_call_operand.vmem [shape: bf16[4608,64], index: 1, kind: input, shape index: {}]
  %s2 = inlined_call_operand.vmem [shape: f32[1,64], index: 2, kind: input, shape index: {}]
  %s3 = inlined_call_operand.vmem [shape: bf16[64,10], index: 3, kind: input, shape index: {}]
  %s4 = inlined_call_operand.vmem [shape: f32[1,10], index: 4, kind: input, shape index: {}]
  %s5 = inlined_call_operand.hbm [shape: f32[2,10], index: 5, kind: output, shape index: {}]
  %s6 = sld [smem:[#allocation0]]
  $region30: #{netf1_forward.3} parent=0
    _
  %s8 = ssub.s32 1, %s6
  %s9 = scalar_select 0, %s8, %s6
  $region1: #{netf1_forward.3} parent=0
    #allocation2 [shape = 'u8[1024]{0}', space=vmem, size = 0x400, scoped, tag = 'output window, operand 0, single buffered']
    #allocation3 [shape = 's32[1]{0}', space=sflag, size = 0x4, scoped, tag = 'scoped memory for netf1_forward.3']
    %10 = vsyncpa [#allocation3], 0
    // Predicated region
    $region2: #{netf1_forward.3} parent=1 // pred_check
      _
    $region3: #{netf1_forward.3} parent=1 // pred_check_branch
      %12 = sbr.rel (0) target = $region5
    $region4: #{netf1_forward.3} parent=1 // pred_region
      _
    $region5: #{netf1_forward.3} parent=1 // pred_fallthru
      _
    // Predicated region
    $region6: #{netf1_forward.3} parent=1 // pred_check
      _
    $region7: #{netf1_forward.3} parent=1 // pred_check_branch
      %14 = sbr.rel (0) target = $region9
    $region8: #{netf1_forward.3} parent=1 // pred_region
      _
    $region9: #{netf1_forward.3} parent=1 // pred_fallthru
      _
    // Predicated region
    $region10: #{netf1_forward.3} parent=1 // pred_check
      _
    $region11: #{netf1_forward.3} parent=1 // pred_check_branch
      %16 = sbr.rel (0) target = $region13
    $region12: #{netf1_forward.3} parent=1 // pred_region
      _
    $region13: #{netf1_forward.3} parent=1 // pred_fallthru
      _
    // Predicated region
    $region14: #{netf1_forward.3} parent=1 // pred_check
      _
    $region15: #{netf1_forward.3} parent=1 // pred_check_branch
      %18 = sbr.rel (0) target = $region17
    $region16: #{netf1_forward.3} parent=1 // pred_region
      _
    $region17: #{netf1_forward.3} parent=1 // pred_fallthru
      _
    // Predicated region
    $region18: #{netf1_forward.3} parent=1 // pred_check
      _
    $region19: #{netf1_forward.3} parent=1 // pred_check_branch
      %20 = sbr.rel (0) target = $region21
    $region20: #{netf1_forward.3} parent=1 // pred_region
      _
    $region21: #{netf1_forward.3} parent=1 // pred_fallthru
      _
    %v22 = vld [vmem:[%s0] sm:$0xff]
    %v23 = vld [vmem:[%s0 + $0x8] sm:$0xff]
    %v24 = vld [vmem:[%s0 + $0x10] sm:$0xff]
    %v25 = vld [vmem:[%s0 + $0x18] sm:$0xff]
    %v26 = vld [vmem:[%s0 + $0x20] sm:$0xf]
    %v27 = vld [vmem:[%s1] sm:$0xf]
    %v28 = vld [vmem:[%s1 + $0x4] sm:$0xf]
    %v29 = vld [vmem:[%s1 + $0x8] sm:$0xf]
    %v30 = vld [vmem:[%s1 + $0xc] sm:$0xf]
    %v31 = vld [vmem:[%s1 + $0x10] sm:$0xf]
    %v32 = vld [vmem:[%s1 + $0x14] sm:$0xf]
    %v33 = vld [vmem:[%s1 + $0x18] sm:$0xf]
    %v34 = vld [vmem:[%s1 + $0x1c] sm:$0xf]
    %v35 = vld [vmem:[%s1 + $0x20] sm:$0xf]
    %v36 = vld [vmem:[%s1 + $0x24] sm:$0xf]
    %v37 = vld [vmem:[%s1 + $0x28] sm:$0xf]
    %v38 = vld [vmem:[%s1 + $0x2c] sm:$0xf]
    %v39 = vld [vmem:[%s1 + $0x30] sm:$0xf]
    %v40 = vld [vmem:[%s1 + $0x34] sm:$0xf]
    %v41 = vld [vmem:[%s1 + $0x38] sm:$0xf]
    %v42 = vld [vmem:[%s1 + $0x3c] sm:$0xf]
    %v43 = vld [vmem:[%s1 + $0x40] sm:$0xf]
    %v44 = vld [vmem:[%s1 + $0x44] sm:$0xf]
    %v45 = vld [vmem:[%s1 + $0x48] sm:$0xf]
    %v46 = vld [vmem:[%s1 + $0x4c] sm:$0xf]
    %v47 = vld [vmem:[%s1 + $0x50] sm:$0xf]
    %v48 = vld [vmem:[%s1 + $0x54] sm:$0xf]
    %v49 = vld [vmem:[%s1 + $0x58] sm:$0xf]
    %v50 = vld [vmem:[%s1 + $0x5c] sm:$0xf]
    %v51 = vld [vmem:[%s1 + $0x60] sm:$0xf]
    %v52 = vld [vmem:[%s1 + $0x64] sm:$0xf]
    %v53 = vld [vmem:[%s1 + $0x68] sm:$0xf]
    %v54 = vld [vmem:[%s1 + $0x6c] sm:$0xf]
    %v55 = vld [vmem:[%s1 + $0x70] sm:$0xf]
    %v56 = vld [vmem:[%s1 + $0x74] sm:$0xf]
    %v57 = vld [vmem:[%s1 + $0x78] sm:$0xf]
    %v58 = vld [vmem:[%s1 + $0x7c] sm:$0xf]
    %v59 = vld [vmem:[%s1 + $0x80] sm:$0xf]
    %v60 = vld [vmem:[%s1 + $0x84] sm:$0xf]
    %v61 = vld [vmem:[%s1 + $0x88] sm:$0xf]
    %v62 = vld [vmem:[%s1 + $0x8c] sm:$0xf]
    %v63 = vld [vmem:[%s1 + $0x90] sm:$0xf]
    %v64 = vld [vmem:[%s1 + $0x94] sm:$0xf]
    %v65 = vld [vmem:[%s1 + $0x98] sm:$0xf]
    %v66 = vld [vmem:[%s1 + $0x9c] sm:$0xf]
    %v67 = vld [vmem:[%s1 + $0xa0] sm:$0xf]
    %v68 = vld [vmem:[%s1 + $0xa4] sm:$0xf]
    %v69 = vld [vmem:[%s1 + $0xa8] sm:$0xf]
    %v70 = vld [vmem:[%s1 + $0xac] sm:$0xf]
    %v71 = vld [vmem:[%s1 + $0xb0] sm:$0xf]
    %v72 = vld [vmem:[%s1 + $0xb4] sm:$0xf]
    %v73 = vld [vmem:[%s1 + $0xb8] sm:$0xf]
    %v74 = vld [vmem:[%s1 + $0xbc] sm:$0xf]
    %v75 = vld [vmem:[%s1 + $0xc0] sm:$0xf]
    %v76 = vld [vmem:[%s1 + $0xc4] sm:$0xf]
    %v77 = vld [vmem:[%s1 + $0xc8] sm:$0xf]
    %v78 = vld [vmem:[%s1 + $0xcc] sm:$0xf]
    %v79 = vld [vmem:[%s1 + $0xd0] sm:$0xf]
    %v80 = vld [vmem:[%s1 + $0xd4] sm:$0xf]
    %v81 = vld [vmem:[%s1 + $0xd8] sm:$0xf]
    %v82 = vld [vmem:[%s1 + $0xdc] sm:$0xf]
    %v83 = vld [vmem:[%s1 + $0xe0] sm:$0xf]
    %v84 = vld [vmem:[%s1 + $0xe4] sm:$0xf]
    %v85 = vld [vmem:[%s1 + $0xe8] sm:$0xf]
    %v86 = vld [vmem:[%s1 + $0xec] sm:$0xf]
    %v87 = vld [vmem:[%s1 + $0xf0] sm:$0xf]
    %v88 = vld [vmem:[%s1 + $0xf4] sm:$0xf]
    %v89 = vld [vmem:[%s1 + $0xf8] sm:$0xf]
    %v90 = vld [vmem:[%s1 + $0xfc] sm:$0xf]
    %v91 = vld [vmem:[%s1 + $0x100] sm:$0xf]
    %v92 = vld [vmem:[%s1 + $0x104] sm:$0xf]
    %v93 = vld [vmem:[%s1 + $0x108] sm:$0xf]
    %v94 = vld [vmem:[%s1 + $0x10c] sm:$0xf]
    %v95 = vld [vmem:[%s1 + $0x110] sm:$0xf]
    %v96 = vld [vmem:[%s1 + $0x114] sm:$0xf]
    %v97 = vld [vmem:[%s1 + $0x118] sm:$0xf]
    %v98 = vld [vmem:[%s1 + $0x11c] sm:$0xf]
    %v99 = vld [vmem:[%s1 + $0x120] sm:$0xf]
    %v100 = vld [vmem:[%s1 + $0x124] sm:$0xf]
    %v101 = vld [vmem:[%s1 + $0x128] sm:$0xf]
    %v102 = vld [vmem:[%s1 + $0x12c] sm:$0xf]
    %v103 = vld [vmem:[%s1 + $0x130] sm:$0xf]
    %v104 = vld [vmem:[%s1 + $0x134] sm:$0xf]
    %v105 = vld [vmem:[%s1 + $0x138] sm:$0xf]
    %v106 = vld [vmem:[%s1 + $0x13c] sm:$0xf]
    %v107 = vld [vmem:[%s1 + $0x140] sm:$0xf]
    %v108 = vld [vmem:[%s1 + $0x144] sm:$0xf]
    %v109 = vld [vmem:[%s1 + $0x148] sm:$0xf]
    %v110 = vld [vmem:[%s1 + $0x14c] sm:$0xf]
    %v111 = vld [vmem:[%s1 + $0x150] sm:$0xf]
    %v112 = vld [vmem:[%s1 + $0x154] sm:$0xf]
    %v113 = vld [vmem:[%s1 + $0x158] sm:$0xf]
    %v114 = vld [vmem:[%s1 + $0x15c] sm:$0xf]
    %v115 = vld [vmem:[%s1 + $0x160] sm:$0xf]
    %v116 = vld [vmem:[%s1 + $0x164] sm:$0xf]
    %v117 = vld [vmem:[%s1 + $0x168] sm:$0xf]
    %v118 = vld [vmem:[%s1 + $0x16c] sm:$0xf]
    %v119 = vld [vmem:[%s1 + $0x170] sm:$0xf]
    %v120 = vld [vmem:[%s1 + $0x174] sm:$0xf]
    %v121 = vld [vmem:[%s1 + $0x178] sm:$0xf]
    %v122 = vld [vmem:[%s1 + $0x17c] sm:$0xf]
    %v123 = vld [vmem:[%s1 + $0x180] sm:$0xf]
    %v124 = vld [vmem:[%s1 + $0x184] sm:$0xf]
    %v125 = vld [vmem:[%s1 + $0x188] sm:$0xf]
    %v126 = vld [vmem:[%s1 + $0x18c] sm:$0xf]
    %v127 = vld [vmem:[%s1 + $0x190] sm:$0xf]
    %v128 = vld [vmem:[%s1 + $0x194] sm:$0xf]
    %v129 = vld [vmem:[%s1 + $0x198] sm:$0xf]
    %v130 = vld [vmem:[%s1 + $0x19c] sm:$0xf]
    %v131 = vld [vmem:[%s1 + $0x1a0] sm:$0xf]
    %v132 = vld [vmem:[%s1 + $0x1a4] sm:$0xf]
    %v133 = vld [vmem:[%s1 + $0x1a8] sm:$0xf]
    %v134 = vld [vmem:[%s1 + $0x1ac] sm:$0xf]
    %v135 = vld [vmem:[%s1 + $0x1b0] sm:$0xf]
    %v136 = vld [vmem:[%s1 + $0x1b4] sm:$0xf]
    %v137 = vld [vmem:[%s1 + $0x1b8] sm:$0xf]
    %v138 = vld [vmem:[%s1 + $0x1bc] sm:$0xf]
    %v139 = vld [vmem:[%s1 + $0x1c0] sm:$0xf]
    %v140 = vld [vmem:[%s1 + $0x1c4] sm:$0xf]
    %v141 = vld [vmem:[%s1 + $0x1c8] sm:$0xf]
    %v142 = vld [vmem:[%s1 + $0x1cc] sm:$0xf]
    %v143 = vld [vmem:[%s1 + $0x1d0] sm:$0xf]
    %v144 = vld [vmem:[%s1 + $0x1d4] sm:$0xf]
    %v145 = vld [vmem:[%s1 + $0x1d8] sm:$0xf]
    %v146 = vld [vmem:[%s1 + $0x1dc] sm:$0xf]
    %v147 = vld [vmem:[%s1 + $0x1e0] sm:$0xf]
    %v148 = vld [vmem:[%s1 + $0x1e4] sm:$0xf]
    %v149 = vld [vmem:[%s1 + $0x1e8] sm:$0xf]
    %v150 = vld [vmem:[%s1 + $0x1ec] sm:$0xf]
    %v151 = vld [vmem:[%s1 + $0x1f0] sm:$0xf]
    %v152 = vld [vmem:[%s1 + $0x1f4] sm:$0xf]
    %v153 = vld [vmem:[%s1 + $0x1f8] sm:$0xf]
    %v154 = vld [vmem:[%s1 + $0x1fc] sm:$0xf]
    %v155 = vld [vmem:[%s1 + $0x200] sm:$0xf]
    %v156 = vld [vmem:[%s1 + $0x204] sm:$0xf]
    %v157 = vld [vmem:[%s1 + $0x208] sm:$0xf]
    %v158 = vld [vmem:[%s1 + $0x20c] sm:$0xf]
    %v159 = vld [vmem:[%s1 + $0x210] sm:$0xf]
    %v160 = vld [vmem:[%s1 + $0x214] sm:$0xf]
    %v161 = vld [vmem:[%s1 + $0x218] sm:$0xf]
    %v162 = vld [vmem:[%s1 + $0x21c] sm:$0xf]
    %v163 = vld [vmem:[%s1 + $0x220] sm:$0xf]
    %v164 = vld [vmem:[%s1 + $0x224] sm:$0xf]
    %v165 = vld [vmem:[%s1 + $0x228] sm:$0xf]
    %v166 = vld [vmem:[%s1 + $0x22c] sm:$0xf]
    %v167 = vld [vmem:[%s1 + $0x230] sm:$0xf]
    %v168 = vld [vmem:[%s1 + $0x234] sm:$0xf]
    %v169 = vld [vmem:[%s1 + $0x238] sm:$0xf]
    %v170 = vld [vmem:[%s1 + $0x23c] sm:$0xf]
    %v171 = vld [vmem:[%s1 + $0x240] sm:$0xf]
    %v172 = vld [vmem:[%s1 + $0x244] sm:$0xf]
    %v173 = vld [vmem:[%s1 + $0x248] sm:$0xf]
    %v174 = vld [vmem:[%s1 + $0x24c] sm:$0xf]
    %v175 = vld [vmem:[%s1 + $0x250] sm:$0xf]
    %v176 = vld [vmem:[%s1 + $0x254] sm:$0xf]
    %v177 = vld [vmem:[%s1 + $0x258] sm:$0xf]
    %v178 = vld [vmem:[%s1 + $0x25c] sm:$0xf]
    %v179 = vld [vmem:[%s1 + $0x260] sm:$0xf]
    %v180 = vld [vmem:[%s1 + $0x264] sm:$0xf]
    %v181 = vld [vmem:[%s1 + $0x268] sm:$0xf]
    %v182 = vld [vmem:[%s1 + $0x26c] sm:$0xf]
    %v183 = vld [vmem:[%s1 + $0x270] sm:$0xf]
    %v184 = vld [vmem:[%s1 + $0x274] sm:$0xf]
    %v185 = vld [vmem:[%s1 + $0x278] sm:$0xf]
    %v186 = vld [vmem:[%s1 + $0x27c] sm:$0xf]
    %v187 = vld [vmem:[%s1 + $0x280] sm:$0xf]
    %v188 = vld [vmem:[%s1 + $0x284] sm:$0xf]
    %v189 = vld [vmem:[%s1 + $0x288] sm:$0xf]
    %v190 = vld [vmem:[%s1 + $0x28c] sm:$0xf]
    %v191 = vld [vmem:[%s1 + $0x290] sm:$0xf]
    %v192 = vld [vmem:[%s1 + $0x294] sm:$0xf]
    %v193 = vld [vmem:[%s1 + $0x298] sm:$0xf]
    %v194 = vld [vmem:[%s1 + $0x29c] sm:$0xf]
    %v195 = vld [vmem:[%s1 + $0x2a0] sm:$0xf]
    %v196 = vld [vmem:[%s1 + $0x2a4] sm:$0xf]
    %v197 = vld [vmem:[%s1 + $0x2a8] sm:$0xf]
    %v198 = vld [vmem:[%s1 + $0x2ac] sm:$0xf]
    %v199 = vld [vmem:[%s1 + $0x2b0] sm:$0xf]
    %v200 = vld [vmem:[%s1 + $0x2b4] sm:$0xf]
    %v201 = vld [vmem:[%s1 + $0x2b8] sm:$0xf]
    %v202 = vld [vmem:[%s1 + $0x2bc] sm:$0xf]
    %v203 = vld [vmem:[%s1 + $0x2c0] sm:$0xf]
    %v204 = vld [vmem:[%s1 + $0x2c4] sm:$0xf]
    %v205 = vld [vmem:[%s1 + $0x2c8] sm:$0xf]
    %v206 = vld [vmem:[%s1 + $0x2cc] sm:$0xf]
    %v207 = vld [vmem:[%s1 + $0x2d0] sm:$0xf]
    %v208 = vld [vmem:[%s1 + $0x2d4] sm:$0xf]
    %v209 = vld [vmem:[%s1 + $0x2d8] sm:$0xf]
    %v210 = vld [vmem:[%s1 + $0x2dc] sm:$0xf]
    %v211 = vld [vmem:[%s1 + $0x2e0] sm:$0xf]
    %v212 = vld [vmem:[%s1 + $0x2e4] sm:$0xf]
    %v213 = vld [vmem:[%s1 + $0x2e8] sm:$0xf]
    %v214 = vld [vmem:[%s1 + $0x2ec] sm:$0xf]
    %v215 = vld [vmem:[%s1 + $0x2f0] sm:$0xf]
    %v216 = vld [vmem:[%s1 + $0x2f4] sm:$0xf]
    %v217 = vld [vmem:[%s1 + $0x2f8] sm:$0xf]
    %v218 = vld [vmem:[%s1 + $0x2fc] sm:$0xf]
    %v219 = vld [vmem:[%s1 + $0x300] sm:$0xf]
    %v220 = vld [vmem:[%s1 + $0x304] sm:$0xf]
    %v221 = vld [vmem:[%s1 + $0x308] sm:$0xf]
    %v222 = vld [vmem:[%s1 + $0x30c] sm:$0xf]
    %v223 = vld [vmem:[%s1 + $0x310] sm:$0xf]
    %v224 = vld [vmem:[%s1 + $0x314] sm:$0xf]
    %v225 = vld [vmem:[%s1 + $0x318] sm:$0xf]
    %v226 = vld [vmem:[%s1 + $0x31c] sm:$0xf]
    %v227 = vld [vmem:[%s1 + $0x320] sm:$0xf]
    %v228 = vld [vmem:[%s1 + $0x324] sm:$0xf]
    %v229 = vld [vmem:[%s1 + $0x328] sm:$0xf]
    %v230 = vld [vmem:[%s1 + $0x32c] sm:$0xf]
    %v231 = vld [vmem:[%s1 + $0x330] sm:$0xf]
    %v232 = vld [vmem:[%s1 + $0x334] sm:$0xf]
    %v233 = vld [vmem:[%s1 + $0x338] sm:$0xf]
    %v234 = vld [vmem:[%s1 + $0x33c] sm:$0xf]
    %v235 = vld [vmem:[%s1 + $0x340] sm:$0xf]
    %v236 = vld [vmem:[%s1 + $0x344] sm:$0xf]
    %v237 = vld [vmem:[%s1 + $0x348] sm:$0xf]
    %v238 = vld [vmem:[%s1 + $0x34c] sm:$0xf]
    %v239 = vld [vmem:[%s1 + $0x350] sm:$0xf]
    %v240 = vld [vmem:[%s1 + $0x354] sm:$0xf]
    %v241 = vld [vmem:[%s1 + $0x358] sm:$0xf]
    %v242 = vld [vmem:[%s1 + $0x35c] sm:$0xf]
    %v243 = vld [vmem:[%s1 + $0x360] sm:$0xf]
    %v244 = vld [vmem:[%s1 + $0x364] sm:$0xf]
    %v245 = vld [vmem:[%s1 + $0x368] sm:$0xf]
    %v246 = vld [vmem:[%s1 + $0x36c] sm:$0xf]
    %v247 = vld [vmem:[%s1 + $0x370] sm:$0xf]
    %v248 = vld [vmem:[%s1 + $0x374] sm:$0xf]
    %v249 = vld [vmem:[%s1 + $0x378] sm:$0xf]
    %v250 = vld [vmem:[%s1 + $0x37c] sm:$0xf]
    %v251 = vld [vmem:[%s1 + $0x380] sm:$0xf]
    %v252 = vld [vmem:[%s1 + $0x384] sm:$0xf]
    %v253 = vld [vmem:[%s1 + $0x388] sm:$0xf]
    %v254 = vld [vmem:[%s1 + $0x38c] sm:$0xf]
    %v255 = vld [vmem:[%s1 + $0x390] sm:$0xf]
    %v256 = vld [vmem:[%s1 + $0x394] sm:$0xf]
    %v257 = vld [vmem:[%s1 + $0x398] sm:$0xf]
    %v258 = vld [vmem:[%s1 + $0x39c] sm:$0xf]
    %v259 = vld [vmem:[%s1 + $0x3a0] sm:$0xf]
    %v260 = vld [vmem:[%s1 + $0x3a4] sm:$0xf]
    %v261 = vld [vmem:[%s1 + $0x3a8] sm:$0xf]
    %v262 = vld [vmem:[%s1 + $0x3ac] sm:$0xf]
    %v263 = vld [vmem:[%s1 + $0x3b0] sm:$0xf]
    %v264 = vld [vmem:[%s1 + $0x3b4] sm:$0xf]
    %v265 = vld [vmem:[%s1 + $0x3b8] sm:$0xf]
    %v266 = vld [vmem:[%s1 + $0x3bc] sm:$0xf]
    %v267 = vld [vmem:[%s1 + $0x3c0] sm:$0xf]
    %v268 = vld [vmem:[%s1 + $0x3c4] sm:$0xf]
    %v269 = vld [vmem:[%s1 + $0x3c8] sm:$0xf]
    %v270 = vld [vmem:[%s1 + $0x3cc] sm:$0xf]
    %v271 = vld [vmem:[%s1 + $0x3d0] sm:$0xf]
    %v272 = vld [vmem:[%s1 + $0x3d4] sm:$0xf]
    %v273 = vld [vmem:[%s1 + $0x3d8] sm:$0xf]
    %v274 = vld [vmem:[%s1 + $0x3dc] sm:$0xf]
    %v275 = vld [vmem:[%s1 + $0x3e0] sm:$0xf]
    %v276 = vld [vmem:[%s1 + $0x3e4] sm:$0xf]
    %v277 = vld [vmem:[%s1 + $0x3e8] sm:$0xf]
    %v278 = vld [vmem:[%s1 + $0x3ec] sm:$0xf]
    %v279 = vld [vmem:[%s1 + $0x3f0] sm:$0xf]
    %v280 = vld [vmem:[%s1 + $0x3f4] sm:$0xf]
    %v281 = vld [vmem:[%s1 + $0x3f8] sm:$0xf]
    %v282 = vld [vmem:[%s1 + $0x3fc] sm:$0xf]
    %v283 = vld [vmem:[%s1 + $0x400] sm:$0xf]
    %v284 = vld [vmem:[%s1 + $0x404] sm:$0xf]
    %v285 = vld [vmem:[%s1 + $0x408] sm:$0xf]
    %v286 = vld [vmem:[%s1 + $0x40c] sm:$0xf]
    %v287 = vld [vmem:[%s1 + $0x410] sm:$0xf]
    %v288 = vld [vmem:[%s1 + $0x414] sm:$0xf]
    %v289 = vld [vmem:[%s1 + $0x418] sm:$0xf]
    %v290 = vld [vmem:[%s1 + $0x41c] sm:$0xf]
    %v291 = vld [vmem:[%s1 + $0x420] sm:$0xf]
    %v292 = vld [vmem:[%s1 + $0x424] sm:$0xf]
    %v293 = vld [vmem:[%s1 + $0x428] sm:$0xf]
    %v294 = vld [vmem:[%s1 + $0x42c] sm:$0xf]
    %v295 = vld [vmem:[%s1 + $0x430] sm:$0xf]
    %v296 = vld [vmem:[%s1 + $0x434] sm:$0xf]
    %v297 = vld [vmem:[%s1 + $0x438] sm:$0xf]
    %v298 = vld [vmem:[%s1 + $0x43c] sm:$0xf]
    %v299 = vld [vmem:[%s1 + $0x440] sm:$0xf]
    %v300 = vld [vmem:[%s1 + $0x444] sm:$0xf]
    %v301 = vld [vmem:[%s1 + $0x448] sm:$0xf]
    %v302 = vld [vmem:[%s1 + $0x44c] sm:$0xf]
    %v303 = vld [vmem:[%s1 + $0x450] sm:$0xf]
    %v304 = vld [vmem:[%s1 + $0x454] sm:$0xf]
    %v305 = vld [vmem:[%s1 + $0x458] sm:$0xf]
    %v306 = vld [vmem:[%s1 + $0x45c] sm:$0xf]
    %v307 = vld [vmem:[%s1 + $0x460] sm:$0xf]
    %v308 = vld [vmem:[%s1 + $0x464] sm:$0xf]
    %v309 = vld [vmem:[%s1 + $0x468] sm:$0xf]
    %v310 = vld [vmem:[%s1 + $0x46c] sm:$0xf]
    %v311 = vld [vmem:[%s1 + $0x470] sm:$0xf]
    %v312 = vld [vmem:[%s1 + $0x474] sm:$0xf]
    %v313 = vld [vmem:[%s1 + $0x478] sm:$0xf]
    %v314 = vld [vmem:[%s1 + $0x47c] sm:$0xf]
    %v315 = vld [vmem:[%s1 + $0x480] sm:$0xf]
    %v316 = vld [vmem:[%s1 + $0x484] sm:$0xf]
    %v317 = vld [vmem:[%s1 + $0x488] sm:$0xf]
    %v318 = vld [vmem:[%s1 + $0x48c] sm:$0xf]
    %v319 = vld [vmem:[%s1 + $0x490] sm:$0xf]
    %v320 = vld [vmem:[%s1 + $0x494] sm:$0xf]
    %v321 = vld [vmem:[%s1 + $0x498] sm:$0xf]
    %v322 = vld [vmem:[%s1 + $0x49c] sm:$0xf]
    %v323 = vld [vmem:[%s1 + $0x4a0] sm:$0xf]
    %v324 = vld [vmem:[%s1 + $0x4a4] sm:$0xf]
    %v325 = vld [vmem:[%s1 + $0x4a8] sm:$0xf]
    %v326 = vld [vmem:[%s1 + $0x4ac] sm:$0xf]
    %v327 = vld [vmem:[%s1 + $0x4b0] sm:$0xf]
    %v328 = vld [vmem:[%s1 + $0x4b4] sm:$0xf]
    %v329 = vld [vmem:[%s1 + $0x4b8] sm:$0xf]
    %v330 = vld [vmem:[%s1 + $0x4bc] sm:$0xf]
    %v331 = vld [vmem:[%s1 + $0x4c0] sm:$0xf]
    %v332 = vld [vmem:[%s1 + $0x4c4] sm:$0xf]
    %v333 = vld [vmem:[%s1 + $0x4c8] sm:$0xf]
    %v334 = vld [vmem:[%s1 + $0x4cc] sm:$0xf]
    %v335 = vld [vmem:[%s1 + $0x4d0] sm:$0xf]
    %v336 = vld [vmem:[%s1 + $0x4d4] sm:$0xf]
    %v337 = vld [vmem:[%s1 + $0x4d8] sm:$0xf]
    %v338 = vld [vmem:[%s1 + $0x4dc] sm:$0xf]
    %v339 = vld [vmem:[%s1 + $0x4e0] sm:$0xf]
    %v340 = vld [vmem:[%s1 + $0x4e4] sm:$0xf]
    %v341 = vld [vmem:[%s1 + $0x4e8] sm:$0xf]
    %v342 = vld [vmem:[%s1 + $0x4ec] sm:$0xf]
    %v343 = vld [vmem:[%s1 + $0x4f0] sm:$0xf]
    %v344 = vld [vmem:[%s1 + $0x4f4] sm:$0xf]
    %v345 = vld [vmem:[%s1 + $0x4f8] sm:$0xf]
    %v346 = vld [vmem:[%s1 + $0x4fc] sm:$0xf]
    %v347 = vld [vmem:[%s1 + $0x500] sm:$0xf]
    %v348 = vld [vmem:[%s1 + $0x504] sm:$0xf]
    %v349 = vld [vmem:[%s1 + $0x508] sm:$0xf]
    %v350 = vld [vmem:[%s1 + $0x50c] sm:$0xf]
    %v351 = vld [vmem:[%s1 + $0x510] sm:$0xf]
    %v352 = vld [vmem:[%s1 + $0x514] sm:$0xf]
    %v353 = vld [vmem:[%s1 + $0x518] sm:$0xf]
    %v354 = vld [vmem:[%s1 + $0x51c] sm:$0xf]
    %v355 = vld [vmem:[%s1 + $0x520] sm:$0xf]
    %v356 = vld [vmem:[%s1 + $0x524] sm:$0xf]
    %v357 = vld [vmem:[%s1 + $0x528] sm:$0xf]
    %v358 = vld [vmem:[%s1 + $0x52c] sm:$0xf]
    %v359 = vld [vmem:[%s1 + $0x530] sm:$0xf]
    %v360 = vld [vmem:[%s1 + $0x534] sm:$0xf]
    %v361 = vld [vmem:[%s1 + $0x538] sm:$0xf]
    %v362 = vld [vmem:[%s1 + $0x53c] sm:$0xf]
    %v363 = vld [vmem:[%s1 + $0x540] sm:$0xf]
    %v364 = vld [vmem:[%s1 + $0x544] sm:$0xf]
    %v365 = vld [vmem:[%s1 + $0x548] sm:$0xf]
    %v366 = vld [vmem:[%s1 + $0x54c] sm:$0xf]
    %v367 = vld [vmem:[%s1 + $0x550] sm:$0xf]
    %v368 = vld [vmem:[%s1 + $0x554] sm:$0xf]
    %v369 = vld [vmem:[%s1 + $0x558] sm:$0xf]
    %v370 = vld [vmem:[%s1 + $0x55c] sm:$0xf]
    %v371 = vld [vmem:[%s1 + $0x560] sm:$0xf]
    %v372 = vld [vmem:[%s1 + $0x564] sm:$0xf]
    %v373 = vld [vmem:[%s1 + $0x568] sm:$0xf]
    %v374 = vld [vmem:[%s1 + $0x56c] sm:$0xf]
    %v375 = vld [vmem:[%s1 + $0x570] sm:$0xf]
    %v376 = vld [vmem:[%s1 + $0x574] sm:$0xf]
    %v377 = vld [vmem:[%s1 + $0x578] sm:$0xf]
    %v378 = vld [vmem:[%s1 + $0x57c] sm:$0xf]
    %v379 = vld [vmem:[%s1 + $0x580] sm:$0xf]
    %v380 = vld [vmem:[%s1 + $0x584] sm:$0xf]
    %v381 = vld [vmem:[%s1 + $0x588] sm:$0xf]
    %v382 = vld [vmem:[%s1 + $0x58c] sm:$0xf]
    %v383 = vld [vmem:[%s1 + $0x590] sm:$0xf]
    %v384 = vld [vmem:[%s1 + $0x594] sm:$0xf]
    %v385 = vld [vmem:[%s1 + $0x598] sm:$0xf]
    %v386 = vld [vmem:[%s1 + $0x59c] sm:$0xf]
    %v387 = vld [vmem:[%s1 + $0x5a0] sm:$0xf]
    %v388 = vld [vmem:[%s1 + $0x5a4] sm:$0xf]
    %v389 = vld [vmem:[%s1 + $0x5a8] sm:$0xf]
    %v390 = vld [vmem:[%s1 + $0x5ac] sm:$0xf]
    %v391 = vld [vmem:[%s1 + $0x5b0] sm:$0xf]
    %v392 = vld [vmem:[%s1 + $0x5b4] sm:$0xf]
    %v393 = vld [vmem:[%s1 + $0x5b8] sm:$0xf]
    %v394 = vld [vmem:[%s1 + $0x5bc] sm:$0xf]
    %v395 = vld [vmem:[%s1 + $0x5c0] sm:$0xf]
    %v396 = vld [vmem:[%s1 + $0x5c4] sm:$0xf]
    %v397 = vld [vmem:[%s1 + $0x5c8] sm:$0xf]
    %v398 = vld [vmem:[%s1 + $0x5cc] sm:$0xf]
    %v399 = vld [vmem:[%s1 + $0x5d0] sm:$0xf]
    %v400 = vld [vmem:[%s1 + $0x5d4] sm:$0xf]
    %v401 = vld [vmem:[%s1 + $0x5d8] sm:$0xf]
    %v402 = vld [vmem:[%s1 + $0x5dc] sm:$0xf]
    %v403 = vld [vmem:[%s1 + $0x5e0] sm:$0xf]
    %v404 = vld [vmem:[%s1 + $0x5e4] sm:$0xf]
    %v405 = vld [vmem:[%s1 + $0x5e8] sm:$0xf]
    %v406 = vld [vmem:[%s1 + $0x5ec] sm:$0xf]
    %v407 = vld [vmem:[%s1 + $0x5f0] sm:$0xf]
    %v408 = vld [vmem:[%s1 + $0x5f4] sm:$0xf]
    %v409 = vld [vmem:[%s1 + $0x5f8] sm:$0xf]
    %v410 = vld [vmem:[%s1 + $0x5fc] sm:$0xf]
    %v411 = vld [vmem:[%s1 + $0x600] sm:$0xf]
    %v412 = vld [vmem:[%s1 + $0x604] sm:$0xf]
    %v413 = vld [vmem:[%s1 + $0x608] sm:$0xf]
    %v414 = vld [vmem:[%s1 + $0x60c] sm:$0xf]
    %v415 = vld [vmem:[%s1 + $0x610] sm:$0xf]
    %v416 = vld [vmem:[%s1 + $0x614] sm:$0xf]
    %v417 = vld [vmem:[%s1 + $0x618] sm:$0xf]
    %v418 = vld [vmem:[%s1 + $0x61c] sm:$0xf]
    %v419 = vld [vmem:[%s1 + $0x620] sm:$0xf]
    %v420 = vld [vmem:[%s1 + $0x624] sm:$0xf]
    %v421 = vld [vmem:[%s1 + $0x628] sm:$0xf]
    %v422 = vld [vmem:[%s1 + $0x62c] sm:$0xf]
    %v423 = vld [vmem:[%s1 + $0x630] sm:$0xf]
    %v424 = vld [vmem:[%s1 + $0x634] sm:$0xf]
    %v425 = vld [vmem:[%s1 + $0x638] sm:$0xf]
    %v426 = vld [vmem:[%s1 + $0x63c] sm:$0xf]
    %v427 = vld [vmem:[%s1 + $0x640] sm:$0xf]
    %v428 = vld [vmem:[%s1 + $0x644] sm:$0xf]
    %v429 = vld [vmem:[%s1 + $0x648] sm:$0xf]
    %v430 = vld [vmem:[%s1 + $0x64c] sm:$0xf]
    %v431 = vld [vmem:[%s1 + $0x650] sm:$0xf]
    %v432 = vld [vmem:[%s1 + $0x654] sm:$0xf]
    %v433 = vld [vmem:[%s1 + $0x658] sm:$0xf]
    %v434 = vld [vmem:[%s1 + $0x65c] sm:$0xf]
    %v435 = vld [vmem:[%s1 + $0x660] sm:$0xf]
    %v436 = vld [vmem:[%s1 + $0x664] sm:$0xf]
    %v437 = vld [vmem:[%s1 + $0x668] sm:$0xf]
    %v438 = vld [vmem:[%s1 + $0x66c] sm:$0xf]
    %v439 = vld [vmem:[%s1 + $0x670] sm:$0xf]
    %v440 = vld [vmem:[%s1 + $0x674] sm:$0xf]
    %v441 = vld [vmem:[%s1 + $0x678] sm:$0xf]
    %v442 = vld [vmem:[%s1 + $0x67c] sm:$0xf]
    %v443 = vld [vmem:[%s1 + $0x680] sm:$0xf]
    %v444 = vld [vmem:[%s1 + $0x684] sm:$0xf]
    %v445 = vld [vmem:[%s1 + $0x688] sm:$0xf]
    %v446 = vld [vmem:[%s1 + $0x68c] sm:$0xf]
    %v447 = vld [vmem:[%s1 + $0x690] sm:$0xf]
    %v448 = vld [vmem:[%s1 + $0x694] sm:$0xf]
    %v449 = vld [vmem:[%s1 + $0x698] sm:$0xf]
    %v450 = vld [vmem:[%s1 + $0x69c] sm:$0xf]
    %v451 = vld [vmem:[%s1 + $0x6a0] sm:$0xf]
    %v452 = vld [vmem:[%s1 + $0x6a4] sm:$0xf]
    %v453 = vld [vmem:[%s1 + $0x6a8] sm:$0xf]
    %v454 = vld [vmem:[%s1 + $0x6ac] sm:$0xf]
    %v455 = vld [vmem:[%s1 + $0x6b0] sm:$0xf]
    %v456 = vld [vmem:[%s1 + $0x6b4] sm:$0xf]
    %v457 = vld [vmem:[%s1 + $0x6b8] sm:$0xf]
    %v458 = vld [vmem:[%s1 + $0x6bc] sm:$0xf]
    %v459 = vld [vmem:[%s1 + $0x6c0] sm:$0xf]
    %v460 = vld [vmem:[%s1 + $0x6c4] sm:$0xf]
    %v461 = vld [vmem:[%s1 + $0x6c8] sm:$0xf]
    %v462 = vld [vmem:[%s1 + $0x6cc] sm:$0xf]
    %v463 = vld [vmem:[%s1 + $0x6d0] sm:$0xf]
    %v464 = vld [vmem:[%s1 + $0x6d4] sm:$0xf]
    %v465 = vld [vmem:[%s1 + $0x6d8] sm:$0xf]
    %v466 = vld [vmem:[%s1 + $0x6dc] sm:$0xf]
    %v467 = vld [vmem:[%s1 + $0x6e0] sm:$0xf]
    %v468 = vld [vmem:[%s1 + $0x6e4] sm:$0xf]
    %v469 = vld [vmem:[%s1 + $0x6e8] sm:$0xf]
    %v470 = vld [vmem:[%s1 + $0x6ec] sm:$0xf]
    %v471 = vld [vmem:[%s1 + $0x6f0] sm:$0xf]
    %v472 = vld [vmem:[%s1 + $0x6f4] sm:$0xf]
    %v473 = vld [vmem:[%s1 + $0x6f8] sm:$0xf]
    %v474 = vld [vmem:[%s1 + $0x6fc] sm:$0xf]
    %v475 = vld [vmem:[%s1 + $0x700] sm:$0xf]
    %v476 = vld [vmem:[%s1 + $0x704] sm:$0xf]
    %v477 = vld [vmem:[%s1 + $0x708] sm:$0xf]
    %v478 = vld [vmem:[%s1 + $0x70c] sm:$0xf]
    %v479 = vld [vmem:[%s1 + $0x710] sm:$0xf]
    %v480 = vld [vmem:[%s1 + $0x714] sm:$0xf]
    %v481 = vld [vmem:[%s1 + $0x718] sm:$0xf]
    %v482 = vld [vmem:[%s1 + $0x71c] sm:$0xf]
    %v483 = vld [vmem:[%s1 + $0x720] sm:$0xf]
    %v484 = vld [vmem:[%s1 + $0x724] sm:$0xf]
    %v485 = vld [vmem:[%s1 + $0x728] sm:$0xf]
    %v486 = vld [vmem:[%s1 + $0x72c] sm:$0xf]
    %v487 = vld [vmem:[%s1 + $0x730] sm:$0xf]
    %v488 = vld [vmem:[%s1 + $0x734] sm:$0xf]
    %v489 = vld [vmem:[%s1 + $0x738] sm:$0xf]
    %v490 = vld [vmem:[%s1 + $0x73c] sm:$0xf]
    %v491 = vld [vmem:[%s1 + $0x740] sm:$0xf]
    %v492 = vld [vmem:[%s1 + $0x744] sm:$0xf]
    %v493 = vld [vmem:[%s1 + $0x748] sm:$0xf]
    %v494 = vld [vmem:[%s1 + $0x74c] sm:$0xf]
    %v495 = vld [vmem:[%s1 + $0x750] sm:$0xf]
    %v496 = vld [vmem:[%s1 + $0x754] sm:$0xf]
    %v497 = vld [vmem:[%s1 + $0x758] sm:$0xf]
    %v498 = vld [vmem:[%s1 + $0x75c] sm:$0xf]
    %v499 = vld [vmem:[%s1 + $0x760] sm:$0xf]
    %v500 = vld [vmem:[%s1 + $0x764] sm:$0xf]
    %v501 = vld [vmem:[%s1 + $0x768] sm:$0xf]
    %v502 = vld [vmem:[%s1 + $0x76c] sm:$0xf]
    %v503 = vld [vmem:[%s1 + $0x770] sm:$0xf]
    %v504 = vld [vmem:[%s1 + $0x774] sm:$0xf]
    %v505 = vld [vmem:[%s1 + $0x778] sm:$0xf]
    %v506 = vld [vmem:[%s1 + $0x77c] sm:$0xf]
    %v507 = vld [vmem:[%s1 + $0x780] sm:$0xf]
    %v508 = vld [vmem:[%s1 + $0x784] sm:$0xf]
    %v509 = vld [vmem:[%s1 + $0x788] sm:$0xf]
    %v510 = vld [vmem:[%s1 + $0x78c] sm:$0xf]
    %v511 = vld [vmem:[%s1 + $0x790] sm:$0xf]
    %v512 = vld [vmem:[%s1 + $0x794] sm:$0xf]
    %v513 = vld [vmem:[%s1 + $0x798] sm:$0xf]
    %v514 = vld [vmem:[%s1 + $0x79c] sm:$0xf]
    %v515 = vld [vmem:[%s1 + $0x7a0] sm:$0xf]
    %v516 = vld [vmem:[%s1 + $0x7a4] sm:$0xf]
    %v517 = vld [vmem:[%s1 + $0x7a8] sm:$0xf]
    %v518 = vld [vmem:[%s1 + $0x7ac] sm:$0xf]
    %v519 = vld [vmem:[%s1 + $0x7b0] sm:$0xf]
    %v520 = vld [vmem:[%s1 + $0x7b4] sm:$0xf]
    %v521 = vld [vmem:[%s1 + $0x7b8] sm:$0xf]
    %v522 = vld [vmem:[%s1 + $0x7bc] sm:$0xf]
    %v523 = vld [vmem:[%s1 + $0x7c0] sm:$0xf]
    %v524 = vld [vmem:[%s1 + $0x7c4] sm:$0xf]
    %v525 = vld [vmem:[%s1 + $0x7c8] sm:$0xf]
    %v526 = vld [vmem:[%s1 + $0x7cc] sm:$0xf]
    %v527 = vld [vmem:[%s1 + $0x7d0] sm:$0xf]
    %v528 = vld [vmem:[%s1 + $0x7d4] sm:$0xf]
    %v529 = vld [vmem:[%s1 + $0x7d8] sm:$0xf]
    %v530 = vld [vmem:[%s1 + $0x7dc] sm:$0xf]
    %v531 = vld [vmem:[%s1 + $0x7e0] sm:$0xf]
    %v532 = vld [vmem:[%s1 + $0x7e4] sm:$0xf]
    %v533 = vld [vmem:[%s1 + $0x7e8] sm:$0xf]
    %v534 = vld [vmem:[%s1 + $0x7ec] sm:$0xf]
    %v535 = vld [vmem:[%s1 + $0x7f0] sm:$0xf]
    %v536 = vld [vmem:[%s1 + $0x7f4] sm:$0xf]
    %v537 = vld [vmem:[%s1 + $0x7f8] sm:$0xf]
    %v538 = vld [vmem:[%s1 + $0x7fc] sm:$0xf]
    %v539 = vld [vmem:[%s1 + $0x800] sm:$0xf]
    %v540 = vld [vmem:[%s1 + $0x804] sm:$0xf]
    %v541 = vld [vmem:[%s1 + $0x808] sm:$0xf]
    %v542 = vld [vmem:[%s1 + $0x80c] sm:$0xf]
    %v543 = vld [vmem:[%s1 + $0x810] sm:$0xf]
    %v544 = vld [vmem:[%s1 + $0x814] sm:$0xf]
    %v545 = vld [vmem:[%s1 + $0x818] sm:$0xf]
    %v546 = vld [vmem:[%s1 + $0x81c] sm:$0xf]
    %v547 = vld [vmem:[%s1 + $0x820] sm:$0xf]
    %v548 = vld [vmem:[%s1 + $0x824] sm:$0xf]
    %v549 = vld [vmem:[%s1 + $0x828] sm:$0xf]
    %v550 = vld [vmem:[%s1 + $0x82c] sm:$0xf]
    %v551 = vld [vmem:[%s1 + $0x830] sm:$0xf]
    %v552 = vld [vmem:[%s1 + $0x834] sm:$0xf]
    %v553 = vld [vmem:[%s1 + $0x838] sm:$0xf]
    %v554 = vld [vmem:[%s1 + $0x83c] sm:$0xf]
    %v555 = vld [vmem:[%s1 + $0x840] sm:$0xf]
    %v556 = vld [vmem:[%s1 + $0x844] sm:$0xf]
    %v557 = vld [vmem:[%s1 + $0x848] sm:$0xf]
    %v558 = vld [vmem:[%s1 + $0x84c] sm:$0xf]
    %v559 = vld [vmem:[%s1 + $0x850] sm:$0xf]
    %v560 = vld [vmem:[%s1 + $0x854] sm:$0xf]
    %v561 = vld [vmem:[%s1 + $0x858] sm:$0xf]
    %v562 = vld [vmem:[%s1 + $0x85c] sm:$0xf]
    %v563 = vld [vmem:[%s1 + $0x860] sm:$0xf]
    %v564 = vld [vmem:[%s1 + $0x864] sm:$0xf]
    %v565 = vld [vmem:[%s1 + $0x868] sm:$0xf]
    %v566 = vld [vmem:[%s1 + $0x86c] sm:$0xf]
    %v567 = vld [vmem:[%s1 + $0x870] sm:$0xf]
    %v568 = vld [vmem:[%s1 + $0x874] sm:$0xf]
    %v569 = vld [vmem:[%s1 + $0x878] sm:$0xf]
    %v570 = vld [vmem:[%s1 + $0x87c] sm:$0xf]
    %v571 = vld [vmem:[%s1 + $0x880] sm:$0xf]
    %v572 = vld [vmem:[%s1 + $0x884] sm:$0xf]
    %v573 = vld [vmem:[%s1 + $0x888] sm:$0xf]
    %v574 = vld [vmem:[%s1 + $0x88c] sm:$0xf]
    %v575 = vld [vmem:[%s1 + $0x890] sm:$0xf]
    %v576 = vld [vmem:[%s1 + $0x894] sm:$0xf]
    %v577 = vld [vmem:[%s1 + $0x898] sm:$0xf]
    %v578 = vld [vmem:[%s1 + $0x89c] sm:$0xf]
    %v579 = vld [vmem:[%s1 + $0x8a0] sm:$0xf]
    %v580 = vld [vmem:[%s1 + $0x8a4] sm:$0xf]
    %v581 = vld [vmem:[%s1 + $0x8a8] sm:$0xf]
    %v582 = vld [vmem:[%s1 + $0x8ac] sm:$0xf]
    %v583 = vld [vmem:[%s1 + $0x8b0] sm:$0xf]
    %v584 = vld [vmem:[%s1 + $0x8b4] sm:$0xf]
    %v585 = vld [vmem:[%s1 + $0x8b8] sm:$0xf]
    %v586 = vld [vmem:[%s1 + $0x8bc] sm:$0xf]
    %v587 = vld [vmem:[%s1 + $0x8c0] sm:$0xf]
    %v588 = vld [vmem:[%s1 + $0x8c4] sm:$0xf]
    %v589 = vld [vmem:[%s1 + $0x8c8] sm:$0xf]
    %v590 = vld [vmem:[%s1 + $0x8cc] sm:$0xf]
    %v591 = vld [vmem:[%s1 + $0x8d0] sm:$0xf]
    %v592 = vld [vmem:[%s1 + $0x8d4] sm:$0xf]
    %v593 = vld [vmem:[%s1 + $0x8d8] sm:$0xf]
    %v594 = vld [vmem:[%s1 + $0x8dc] sm:$0xf]
    %v595 = vld [vmem:[%s1 + $0x8e0] sm:$0xf]
    %v596 = vld [vmem:[%s1 + $0x8e4] sm:$0xf]
    %v597 = vld [vmem:[%s1 + $0x8e8] sm:$0xf]
    %v598 = vld [vmem:[%s1 + $0x8ec] sm:$0xf]
    %v599 = vld [vmem:[%s1 + $0x8f0] sm:$0xf]
    %v600 = vld [vmem:[%s1 + $0x8f4] sm:$0xf]
    %v601 = vld [vmem:[%s1 + $0x8f8] sm:$0xf]
    %v602 = vld [vmem:[%s1 + $0x8fc] sm:$0xf]
    %v603 = vld [vmem:[%s2] sm:$0x1]
    %v605 = vperm.slane %v603, 0
    %608 = vst [vmem:[#allocation1] ss:$9 sm:$0xff] %v22
    %v609 = vld [vmem:[#allocation1] sm:$0xff]
    %v610 = vld [vmem:[#allocation1 + $0x9] sm:$0xff]
    %v611 = vld [vmem:[#allocation1 + $0x12] sm:$0xff]
    %v612 = vld [vmem:[#allocation1 + $0x1b] sm:$0xff]
    %v613 = vld [vmem:[#allocation1 + $0x24] sm:$0xff]
    %v614 = vld [vmem:[#allocation1 + $0x2d] sm:$0xff]
    %v615 = vld [vmem:[#allocation1 + $0x36] sm:$0xff]
    %v616 = vld [vmem:[#allocation1 + $0x3f] sm:$0xff]
    %618 = vst [vmem:[#allocation1] ss:$9 sm:$0xff] %v23
    %v619 = vld [vmem:[#allocation1] sm:$0xff]
    %v620 = vld [vmem:[#allocation1 + $0x9] sm:$0xff]
    %v621 = vld [vmem:[#allocation1 + $0x12] sm:$0xff]
    %v622 = vld [vmem:[#allocation1 + $0x1b] sm:$0xff]
    %v623 = vld [vmem:[#allocation1 + $0x24] sm:$0xff]
    %v624 = vld [vmem:[#allocation1 + $0x2d] sm:$0xff]
    %v625 = vld [vmem:[#allocation1 + $0x36] sm:$0xff]
    %v626 = vld [vmem:[#allocation1 + $0x3f] sm:$0xff]
    %628 = vst [vmem:[#allocation1] ss:$9 sm:$0xff] %v24
    %v629 = vld [vmem:[#allocation1] sm:$0xff]
    %v630 = vld [vmem:[#allocation1 + $0x9] sm:$0xff]
    %v631 = vld [vmem:[#allocation1 + $0x12] sm:$0xff]
    %v632 = vld [vmem:[#allocation1 + $0x1b] sm:$0xff]
    %v633 = vld [vmem:[#allocation1 + $0x24] sm:$0xff]
    %v634 = vld [vmem:[#allocation1 + $0x2d] sm:$0xff]
    %v635 = vld [vmem:[#allocation1 + $0x36] sm:$0xff]
    %v636 = vld [vmem:[#allocation1 + $0x3f] sm:$0xff]
    %638 = vst [vmem:[#allocation1] ss:$9 sm:$0xff] %v25
    %v639 = vld [vmem:[#allocation1] sm:$0xff]
    %v640 = vld [vmem:[#allocation1 + $0x9] sm:$0xff]
    %v641 = vld [vmem:[#allocation1 + $0x12] sm:$0xff]
    %v642 = vld [vmem:[#allocation1 + $0x1b] sm:$0xff]
    %v643 = vld [vmem:[#allocation1 + $0x24] sm:$0xff]
    %v644 = vld [vmem:[#allocation1 + $0x2d] sm:$0xff]
    %v645 = vld [vmem:[#allocation1 + $0x36] sm:$0xff]
    %v646 = vld [vmem:[#allocation1 + $0x3f] sm:$0xff]
    %648 = vst [vmem:[#allocation1] ss:$9 sm:$0xff] %v26
    %v649 = vld [vmem:[#allocation1] sm:$0xff]
    %v650 = vld [vmem:[#allocation1 + $0x9] sm:$0xff]
    %v651 = vld [vmem:[#allocation1 + $0x12] sm:$0xff]
    %v652 = vld [vmem:[#allocation1 + $0x1b] sm:$0xff]
    %v1265 = vunpack.c.l.b16 %v27
    %v1266 = vunpack.c.l.b16 %v28
    %v1267 = vunpack.c.l.b16 %v29
    %v1268 = vunpack.c.l.b16 %v30
    %v1269 = vunpack.c.l.b16 %v31
    %v1270 = vunpack.c.l.b16 %v32
    %v1271 = vunpack.c.l.b16 %v33
    %v1272 = vunpack.c.l.b16 %v34
    %v1273 = vunpack.c.l.b16 %v35
    %v1274 = vunpack.c.l.b16 %v36
    %v1275 = vunpack.c.l.b16 %v37
    %v1276 = vunpack.c.l.b16 %v38
    %v1277 = vunpack.c.l.b16 %v39
    %v1278 = vunpack.c.l.b16 %v40
    %v1279 = vunpack.c.l.b16 %v41
    %v1280 = vunpack.c.l.b16 %v42
    %v1281 = vunpack.c.l.b16 %v43
    %v1282 = vunpack.c.l.b16 %v44
    %v1283 = vunpack.c.l.b16 %v45
    %v1284 = vunpack.c.l.b16 %v46
    %v1285 = vunpack.c.l.b16 %v47
    %v1286 = vunpack.c.l.b16 %v48
    %v1287 = vunpack.c.l.b16 %v49
    %v1288 = vunpack.c.l.b16 %v50
    %v1289 = vunpack.c.l.b16 %v51
    %v1290 = vunpack.c.l.b16 %v52
    %v1291 = vunpack.c.l.b16 %v53
    %v1292 = vunpack.c.l.b16 %v54
    %v1293 = vunpack.c.l.b16 %v55
    %v1294 = vunpack.c.l.b16 %v56
    %v1295 = vunpack.c.l.b16 %v57
    %v1296 = vunpack.c.l.b16 %v58
    %v1297 = vunpack.c.l.b16 %v59
    %v1298 = vunpack.c.l.b16 %v60
    %v1299 = vunpack.c.l.b16 %v61
    %v1300 = vunpack.c.l.b16 %v62
    %v1301 = vunpack.c.l.b16 %v63
    %v1302 = vunpack.c.l.b16 %v64
    %v1303 = vunpack.c.l.b16 %v65
    %v1304 = vunpack.c.l.b16 %v66
    %v1305 = vunpack.c.l.b16 %v67
    %v1306 = vunpack.c.l.b16 %v68
    %v1307 = vunpack.c.l.b16 %v69
    %v1308 = vunpack.c.l.b16 %v70
    %v1309 = vunpack.c.l.b16 %v71
    %v1310 = vunpack.c.l.b16 %v72
    %v1311 = vunpack.c.l.b16 %v73
    %v1312 = vunpack.c.l.b16 %v74
    %v1313 = vunpack.c.l.b16 %v75
    %v1314 = vunpack.c.l.b16 %v76
    %v1315 = vunpack.c.l.b16 %v77
    %v1316 = vunpack.c.l.b16 %v78
    %v1317 = vunpack.c.l.b16 %v79
    %v1318 = vunpack.c.l.b16 %v80
    %v1319 = vunpack.c.l.b16 %v81
    %v1320 = vunpack.c.l.b16 %v82
    %v1321 = vunpack.c.l.b16 %v83
    %v1322 = vunpack.c.l.b16 %v84
    %v1323 = vunpack.c.l.b16 %v85
    %v1324 = vunpack.c.l.b16 %v86
    %v1325 = vunpack.c.l.b16 %v87
    %v1326 = vunpack.c.l.b16 %v88
    %v1327 = vunpack.c.l.b16 %v89
    %v1328 = vunpack.c.l.b16 %v90
    %v1329 = vunpack.c.l.b16 %v91
    %v1330 = vunpack.c.l.b16 %v92
    %v1331 = vunpack.c.l.b16 %v93
    %v1332 = vunpack.c.l.b16 %v94
    %v1333 = vunpack.c.l.b16 %v95
    %v1334 = vunpack.c.l.b16 %v96
    %v1335 = vunpack.c.l.b16 %v97
    %v1336 = vunpack.c.l.b16 %v98
    %v1337 = vunpack.c.l.b16 %v99
    %v1338 = vunpack.c.l.b16 %v100
    %v1339 = vunpack.c.l.b16 %v101
    %v1340 = vunpack.c.l.b16 %v102
    %v1341 = vunpack.c.l.b16 %v103
    %v1342 = vunpack.c.l.b16 %v104
    %v1343 = vunpack.c.l.b16 %v105
    %v1344 = vunpack.c.l.b16 %v106
    %v1345 = vunpack.c.l.b16 %v107
    %v1346 = vunpack.c.l.b16 %v108
    %v1347 = vunpack.c.l.b16 %v109
    %v1348 = vunpack.c.l.b16 %v110
    %v1349 = vunpack.c.l.b16 %v111
    %v1350 = vunpack.c.l.b16 %v112
    %v1351 = vunpack.c.l.b16 %v113
    %v1352 = vunpack.c.l.b16 %v114
    %v1353 = vunpack.c.l.b16 %v115
    %v1354 = vunpack.c.l.b16 %v116
    %v1355 = vunpack.c.l.b16 %v117
    %v1356 = vunpack.c.l.b16 %v118
    %v1357 = vunpack.c.l.b16 %v119
    %v1358 = vunpack.c.l.b16 %v120
    %v1359 = vunpack.c.l.b16 %v121
    %v1360 = vunpack.c.l.b16 %v122
    %v1361 = vunpack.c.l.b16 %v123
    %v1362 = vunpack.c.l.b16 %v124
    %v1363 = vunpack.c.l.b16 %v125
    %v1364 = vunpack.c.l.b16 %v126
    %v1365 = vunpack.c.l.b16 %v127
    %v1366 = vunpack.c.l.b16 %v128
    %v1367 = vunpack.c.l.b16 %v129
    %v1368 = vunpack.c.l.b16 %v130
    %v1369 = vunpack.c.l.b16 %v131
    %v1370 = vunpack.c.l.b16 %v132
    %v1371 = vunpack.c.l.b16 %v133
    %v1372 = vunpack.c.l.b16 %v134
    %v1373 = vunpack.c.l.b16 %v135
    %v1374 = vunpack.c.l.b16 %v136
    %v1375 = vunpack.c.l.b16 %v137
    %v1376 = vunpack.c.l.b16 %v138
    %v1377 = vunpack.c.l.b16 %v139
    %v1378 = vunpack.c.l.b16 %v140
    %v1379 = vunpack.c.l.b16 %v141
    %v1380 = vunpack.c.l.b16 %v142
    %v1381 = vunpack.c.l.b16 %v143
    %v1382 = vunpack.c.l.b16 %v144
    %v1383 = vunpack.c.l.b16 %v145
    %v1384 = vunpack.c.l.b16 %v146
    %v1385 = vunpack.c.l.b16 %v147
    %v1386 = vunpack.c.l.b16 %v148
    %v1387 = vunpack.c.l.b16 %v149
    %v1388 = vunpack.c.l.b16 %v150
    %v1389 = vunpack.c.l.b16 %v151
    %v1390 = vunpack.c.l.b16 %v152
    %v1391 = vunpack.c.l.b16 %v153
    %v1392 = vunpack.c.l.b16 %v154
    %v1393 = vunpack.c.l.b16 %v155
    %v1394 = vunpack.c.l.b16 %v156
    %v1395 = vunpack.c.l.b16 %v157
    %v1396 = vunpack.c.l.b16 %v158
    %v1397 = vunpack.c.l.b16 %v159
    %v1398 = vunpack.c.l.b16 %v160
    %v1399 = vunpack.c.l.b16 %v161
    %v1400 = vunpack.c.l.b16 %v162
    %v1401 = vunpack.c.l.b16 %v163
    %v1402 = vunpack.c.l.b16 %v164
    %v1403 = vunpack.c.l.b16 %v165
    %v1404 = vunpack.c.l.b16 %v166
    %v1405 = vunpack.c.l.b16 %v167
    %v1406 = vunpack.c.l.b16 %v168
    %v1407 = vunpack.c.l.b16 %v169
    %v1408 = vunpack.c.l.b16 %v170
    %v1409 = vunpack.c.l.b16 %v171
    %v1410 = vunpack.c.l.b16 %v172
    %v1411 = vunpack.c.l.b16 %v173
    %v1412 = vunpack.c.l.b16 %v174
    %v1413 = vunpack.c.l.b16 %v175
    %v1414 = vunpack.c.l.b16 %v176
    %v1415 = vunpack.c.l.b16 %v177
    %v1416 = vunpack.c.l.b16 %v178
    %v1417 = vunpack.c.l.b16 %v179
    %v1418 = vunpack.c.l.b16 %v180
    %v1419 = vunpack.c.l.b16 %v181
    %v1420 = vunpack.c.l.b16 %v182
    %v1421 = vunpack.c.l.b16 %v183
    %v1422 = vunpack.c.l.b16 %v184
    %v1423 = vunpack.c.l.b16 %v185
    %v1424 = vunpack.c.l.b16 %v186
    %v1425 = vunpack.c.l.b16 %v187
    %v1426 = vunpack.c.l.b16 %v188
    %v1427 = vunpack.c.l.b16 %v189
    %v1428 = vunpack.c.l.b16 %v190
    %v1429 = vunpack.c.l.b16 %v191
    %v1430 = vunpack.c.l.b16 %v192
    %v1431 = vunpack.c.l.b16 %v193
    %v1432 = vunpack.c.l.b16 %v194
    %v1433 = vunpack.c.l.b16 %v195
    %v1434 = vunpack.c.l.b16 %v196
    %v1435 = vunpack.c.l.b16 %v197
    %v1436 = vunpack.c.l.b16 %v198
    %v1437 = vunpack.c.l.b16 %v199
    %v1438 = vunpack.c.l.b16 %v200
    %v1439 = vunpack.c.l.b16 %v201
    %v1440 = vunpack.c.l.b16 %v202
    %v1441 = vunpack.c.l.b16 %v203
    %v1442 = vunpack.c.l.b16 %v204
    %v1443 = vunpack.c.l.b16 %v205
    %v1444 = vunpack.c.l.b16 %v206
    %v1445 = vunpack.c.l.b16 %v207
    %v1446 = vunpack.c.l.b16 %v208
    %v1447 = vunpack.c.l.b16 %v209
    %v1448 = vunpack.c.l.b16 %v210
    %v1449 = vunpack.c.l.b16 %v211
    %v1450 = vunpack.c.l.b16 %v212
    %v1451 = vunpack.c.l.b16 %v213
    %v1452 = vunpack.c.l.b16 %v214
    %v1453 = vunpack.c.l.b16 %v215
    %v1454 = vunpack.c.l.b16 %v216
    %v1455 = vunpack.c.l.b16 %v217
    %v1456 = vunpack.c.l.b16 %v218
    %v1457 = vunpack.c.l.b16 %v219
    %v1458 = vunpack.c.l.b16 %v220
    %v1459 = vunpack.c.l.b16 %v221
    %v1460 = vunpack.c.l.b16 %v222
    %v1461 = vunpack.c.l.b16 %v223
    %v1462 = vunpack.c.l.b16 %v224
    %v1463 = vunpack.c.l.b16 %v225
    %v1464 = vunpack.c.l.b16 %v226
    %v1465 = vunpack.c.l.b16 %v227
    %v1466 = vunpack.c.l.b16 %v228
    %v1467 = vunpack.c.l.b16 %v229
    %v1468 = vunpack.c.l.b16 %v230
    %v1469 = vunpack.c.l.b16 %v231
    %v1470 = vunpack.c.l.b16 %v232
    %v1471 = vunpack.c.l.b16 %v233
    %v1472 = vunpack.c.l.b16 %v234
    %v1473 = vunpack.c.l.b16 %v235
    %v1474 = vunpack.c.l.b16 %v236
    %v1475 = vunpack.c.l.b16 %v237
    %v1476 = vunpack.c.l.b16 %v238
    %v1477 = vunpack.c.l.b16 %v239
    %v1478 = vunpack.c.l.b16 %v240
    %v1479 = vunpack.c.l.b16 %v241
    %v1480 = vunpack.c.l.b16 %v242
    %v1481 = vunpack.c.l.b16 %v243
    %v1482 = vunpack.c.l.b16 %v244
    %v1483 = vunpack.c.l.b16 %v245
    %v1484 = vunpack.c.l.b16 %v246
    %v1485 = vunpack.c.l.b16 %v247
    %v1486 = vunpack.c.l.b16 %v248
    %v1487 = vunpack.c.l.b16 %v249
    %v1488 = vunpack.c.l.b16 %v250
    %v1489 = vunpack.c.l.b16 %v251
    %v1490 = vunpack.c.l.b16 %v252
    %v1491 = vunpack.c.l.b16 %v253
    %v1492 = vunpack.c.l.b16 %v254
    %v1493 = vunpack.c.l.b16 %v255
    %v1494 = vunpack.c.l.b16 %v256
    %v1495 = vunpack.c.l.b16 %v257
    %v1496 = vunpack.c.l.b16 %v258
    %v1497 = vunpack.c.l.b16 %v259
    %v1498 = vunpack.c.l.b16 %v260
    %v1499 = vunpack.c.l.b16 %v261
    %v1500 = vunpack.c.l.b16 %v262
    %v1501 = vunpack.c.l.b16 %v263
    %v1502 = vunpack.c.l.b16 %v264
    %v1503 = vunpack.c.l.b16 %v265
    %v1504 = vunpack.c.l.b16 %v266
    %v1505 = vunpack.c.l.b16 %v267
    %v1506 = vunpack.c.l.b16 %v268
    %v1507 = vunpack.c.l.b16 %v269
    %v1508 = vunpack.c.l.b16 %v270
    %v1509 = vunpack.c.l.b16 %v271
    %v1510 = vunpack.c.l.b16 %v272
    %v1511 = vunpack.c.l.b16 %v273
    %v1512 = vunpack.c.l.b16 %v274
    %v1513 = vunpack.c.l.b16 %v275
    %v1514 = vunpack.c.l.b16 %v276
    %v1515 = vunpack.c.l.b16 %v277
    %v1516 = vunpack.c.l.b16 %v278
    %v1517 = vunpack.c.l.b16 %v279
    %v1518 = vunpack.c.l.b16 %v280
    %v1519 = vunpack.c.l.b16 %v281
    %v1520 = vunpack.c.l.b16 %v282
    %v1521 = vunpack.c.l.b16 %v283
    %v1522 = vunpack.c.l.b16 %v284
    %v1523 = vunpack.c.l.b16 %v285
    %v1524 = vunpack.c.l.b16 %v286
    %v1525 = vunpack.c.l.b16 %v287
    %v1526 = vunpack.c.l.b16 %v288
    %v1527 = vunpack.c.l.b16 %v289
    %v1528 = vunpack.c.l.b16 %v290
    %v1529 = vunpack.c.l.b16 %v291
    %v1530 = vunpack.c.l.b16 %v292
    %v1531 = vunpack.c.l.b16 %v293
    %v1532 = vunpack.c.l.b16 %v294
    %v1533 = vunpack.c.l.b16 %v295
    %v1534 = vunpack.c.l.b16 %v296
    %v1535 = vunpack.c.l.b16 %v297
    %v1536 = vunpack.c.l.b16 %v298
    %v1537 = vunpack.c.l.b16 %v299
    %v1538 = vunpack.c.l.b16 %v300
    %v1539 = vunpack.c.l.b16 %v301
    %v1540 = vunpack.c.l.b16 %v302
    %v1541 = vunpack.c.l.b16 %v303
    %v1542 = vunpack.c.l.b16 %v304
    %v1543 = vunpack.c.l.b16 %v305
    %v1544 = vunpack.c.l.b16 %v306
    %v1545 = vunpack.c.l.b16 %v307
    %v1546 = vunpack.c.l.b16 %v308
    %v1547 = vunpack.c.l.b16 %v309
    %v1548 = vunpack.c.l.b16 %v310
    %v1549 = vunpack.c.l.b16 %v311
    %v1550 = vunpack.c.l.b16 %v312
    %v1551 = vunpack.c.l.b16 %v313
    %v1552 = vunpack.c.l.b16 %v314
    %v1553 = vunpack.c.l.b16 %v315
    %v1554 = vunpack.c.l.b16 %v316
    %v1555 = vunpack.c.l.b16 %v317
    %v1556 = vunpack.c.l.b16 %v318
    %v1557 = vunpack.c.l.b16 %v319
    %v1558 = vunpack.c.l.b16 %v320
    %v1559 = vunpack.c.l.b16 %v321
    %v1560 = vunpack.c.l.b16 %v322
    %v1561 = vunpack.c.l.b16 %v323
    %v1562 = vunpack.c.l.b16 %v324
    %v1563 = vunpack.c.l.b16 %v325
    %v1564 = vunpack.c.l.b16 %v326
    %v1565 = vunpack.c.l.b16 %v327
    %v1566 = vunpack.c.l.b16 %v328
    %v1567 = vunpack.c.l.b16 %v329
    %v1568 = vunpack.c.l.b16 %v330
    %v1569 = vunpack.c.l.b16 %v331
    %v1570 = vunpack.c.l.b16 %v332
    %v1571 = vunpack.c.l.b16 %v333
    %v1572 = vunpack.c.l.b16 %v334
    %v1573 = vunpack.c.l.b16 %v335
    %v1574 = vunpack.c.l.b16 %v336
    %v1575 = vunpack.c.l.b16 %v337
    %v1576 = vunpack.c.l.b16 %v338
    %v1577 = vunpack.c.l.b16 %v339
    %v1578 = vunpack.c.l.b16 %v340
    %v1579 = vunpack.c.l.b16 %v341
    %v1580 = vunpack.c.l.b16 %v342
    %v1581 = vunpack.c.l.b16 %v343
    %v1582 = vunpack.c.l.b16 %v344
    %v1583 = vunpack.c.l.b16 %v345
    %v1584 = vunpack.c.l.b16 %v346
    %v1585 = vunpack.c.l.b16 %v347
    %v1586 = vunpack.c.l.b16 %v348
    %v1587 = vunpack.c.l.b16 %v349
    %v1588 = vunpack.c.l.b16 %v350
    %v1589 = vunpack.c.l.b16 %v351
    %v1590 = vunpack.c.l.b16 %v352
    %v1591 = vunpack.c.l.b16 %v353
    %v1592 = vunpack.c.l.b16 %v354
    %v1593 = vunpack.c.l.b16 %v355
    %v1594 = vunpack.c.l.b16 %v356
    %v1595 = vunpack.c.l.b16 %v357
    %v1596 = vunpack.c.l.b16 %v358
    %v1597 = vunpack.c.l.b16 %v359
    %v1598 = vunpack.c.l.b16 %v360
    %v1599 = vunpack.c.l.b16 %v361
    %v1600 = vunpack.c.l.b16 %v362
    %v1601 = vunpack.c.l.b16 %v363
    %v1602 = vunpack.c.l.b16 %v364
    %v1603 = vunpack.c.l.b16 %v365
    %v1604 = vunpack.c.l.b16 %v366
    %v1605 = vunpack.c.l.b16 %v367
    %v1606 = vunpack.c.l.b16 %v368
    %v1607 = vunpack.c.l.b16 %v369
    %v1608 = vunpack.c.l.b16 %v370
    %v1609 = vunpack.c.l.b16 %v371
    %v1610 = vunpack.c.l.b16 %v372
    %v1611 = vunpack.c.l.b16 %v373
    %v1612 = vunpack.c.l.b16 %v374
    %v1613 = vunpack.c.l.b16 %v375
    %v1614 = vunpack.c.l.b16 %v376
    %v1615 = vunpack.c.l.b16 %v377
    %v1616 = vunpack.c.l.b16 %v378
    %v1617 = vunpack.c.l.b16 %v379
    %v1618 = vunpack.c.l.b16 %v380
    %v1619 = vunpack.c.l.b16 %v381
    %v1620 = vunpack.c.l.b16 %v382
    %v1621 = vunpack.c.l.b16 %v383
    %v1622 = vunpack.c.l.b16 %v384
    %v1623 = vunpack.c.l.b16 %v385
    %v1624 = vunpack.c.l.b16 %v386
    %v1625 = vunpack.c.l.b16 %v387
    %v1626 = vunpack.c.l.b16 %v388
    %v1627 = vunpack.c.l.b16 %v389
    %v1628 = vunpack.c.l.b16 %v390
    %v1629 = vunpack.c.l.b16 %v391
    %v1630 = vunpack.c.l.b16 %v392
    %v1631 = vunpack.c.l.b16 %v393
    %v1632 = vunpack.c.l.b16 %v394
    %v1633 = vunpack.c.l.b16 %v395
    %v1634 = vunpack.c.l.b16 %v396
    %v1635 = vunpack.c.l.b16 %v397
    %v1636 = vunpack.c.l.b16 %v398
    %v1637 = vunpack.c.l.b16 %v399
    %v1638 = vunpack.c.l.b16 %v400
    %v1639 = vunpack.c.l.b16 %v401
    %v1640 = vunpack.c.l.b16 %v402
    %v1641 = vunpack.c.l.b16 %v403
    %v1642 = vunpack.c.l.b16 %v404
    %v1643 = vunpack.c.l.b16 %v405
    %v1644 = vunpack.c.l.b16 %v406
    %v1645 = vunpack.c.l.b16 %v407
    %v1646 = vunpack.c.l.b16 %v408
    %v1647 = vunpack.c.l.b16 %v409
    %v1648 = vunpack.c.l.b16 %v410
    %v1649 = vunpack.c.l.b16 %v411
    %v1650 = vunpack.c.l.b16 %v412
    %v1651 = vunpack.c.l.b16 %v413
    %v1652 = vunpack.c.l.b16 %v414
    %v1653 = vunpack.c.l.b16 %v415
    %v1654 = vunpack.c.l.b16 %v416
    %v1655 = vunpack.c.l.b16 %v417
    %v1656 = vunpack.c.l.b16 %v418
    %v1657 = vunpack.c.l.b16 %v419
    %v1658 = vunpack.c.l.b16 %v420
    %v1659 = vunpack.c.l.b16 %v421
    %v1660 = vunpack.c.l.b16 %v422
    %v1661 = vunpack.c.l.b16 %v423
    %v1662 = vunpack.c.l.b16 %v424
    %v1663 = vunpack.c.l.b16 %v425
    %v1664 = vunpack.c.l.b16 %v426
    %v1665 = vunpack.c.l.b16 %v427
    %v1666 = vunpack.c.l.b16 %v428
    %v1667 = vunpack.c.l.b16 %v429
    %v1668 = vunpack.c.l.b16 %v430
    %v1669 = vunpack.c.l.b16 %v431
    %v1670 = vunpack.c.l.b16 %v432
    %v1671 = vunpack.c.l.b16 %v433
    %v1672 = vunpack.c.l.b16 %v434
    %v1673 = vunpack.c.l.b16 %v435
    %v1674 = vunpack.c.l.b16 %v436
    %v1675 = vunpack.c.l.b16 %v437
    %v1676 = vunpack.c.l.b16 %v438
    %v1677 = vunpack.c.l.b16 %v439
    %v1678 = vunpack.c.l.b16 %v440
    %v1679 = vunpack.c.l.b16 %v441
    %v1680 = vunpack.c.l.b16 %v442
    %v1681 = vunpack.c.l.b16 %v443
    %v1682 = vunpack.c.l.b16 %v444
    %v1683 = vunpack.c.l.b16 %v445
    %v1684 = vunpack.c.l.b16 %v446
    %v1685 = vunpack.c.l.b16 %v447
    %v1686 = vunpack.c.l.b16 %v448
    %v1687 = vunpack.c.l.b16 %v449
    %v1688 = vunpack.c.l.b16 %v450
    %v1689 = vunpack.c.l.b16 %v451
    %v1690 = vunpack.c.l.b16 %v452
    %v1691 = vunpack.c.l.b16 %v453
    %v1692 = vunpack.c.l.b16 %v454
    %v1693 = vunpack.c.l.b16 %v455
    %v1694 = vunpack.c.l.b16 %v456
    %v1695 = vunpack.c.l.b16 %v457
    %v1696 = vunpack.c.l.b16 %v458
    %v1697 = vunpack.c.l.b16 %v459
    %v1698 = vunpack.c.l.b16 %v460
    %v1699 = vunpack.c.l.b16 %v461
    %v1700 = vunpack.c.l.b16 %v462
    %v1701 = vunpack.c.l.b16 %v463
    %v1702 = vunpack.c.l.b16 %v464
    %v1703 = vunpack.c.l.b16 %v465
    %v1704 = vunpack.c.l.b16 %v466
    %v1705 = vunpack.c.l.b16 %v467
    %v1706 = vunpack.c.l.b16 %v468
    %v1707 = vunpack.c.l.b16 %v469
    %v1708 = vunpack.c.l.b16 %v470
    %v1709 = vunpack.c.l.b16 %v471
    %v1710 = vunpack.c.l.b16 %v472
    %v1711 = vunpack.c.l.b16 %v473
    %v1712 = vunpack.c.l.b16 %v474
    %v1713 = vunpack.c.l.b16 %v475
    %v1714 = vunpack.c.l.b16 %v476
    %v1715 = vunpack.c.l.b16 %v477
    %v1716 = vunpack.c.l.b16 %v478
    %v1717 = vunpack.c.l.b16 %v479
    %v1718 = vunpack.c.l.b16 %v480
    %v1719 = vunpack.c.l.b16 %v481
    %v1720 = vunpack.c.l.b16 %v482
    %v1721 = vunpack.c.l.b16 %v483
    %v1722 = vunpack.c.l.b16 %v484
    %v1723 = vunpack.c.l.b16 %v485
    %v1724 = vunpack.c.l.b16 %v486
    %v1725 = vunpack.c.l.b16 %v487
    %v1726 = vunpack.c.l.b16 %v488
    %v1727 = vunpack.c.l.b16 %v489
    %v1728 = vunpack.c.l.b16 %v490
    %v1729 = vunpack.c.l.b16 %v491
    %v1730 = vunpack.c.l.b16 %v492
    %v1731 = vunpack.c.l.b16 %v493
    %v1732 = vunpack.c.l.b16 %v494
    %v1733 = vunpack.c.l.b16 %v495
    %v1734 = vunpack.c.l.b16 %v496
    %v1735 = vunpack.c.l.b16 %v497
    %v1736 = vunpack.c.l.b16 %v498
    %v1737 = vunpack.c.l.b16 %v499
    %v1738 = vunpack.c.l.b16 %v500
    %v1739 = vunpack.c.l.b16 %v501
    %v1740 = vunpack.c.l.b16 %v502
    %v1741 = vunpack.c.l.b16 %v503
    %v1742 = vunpack.c.l.b16 %v504
    %v1743 = vunpack.c.l.b16 %v505
    %v1744 = vunpack.c.l.b16 %v506
    %v1745 = vunpack.c.l.b16 %v507
    %v1746 = vunpack.c.l.b16 %v508
    %v1747 = vunpack.c.l.b16 %v509
    %v1748 = vunpack.c.l.b16 %v510
    %v1749 = vunpack.c.l.b16 %v511
    %v1750 = vunpack.c.l.b16 %v512
    %v1751 = vunpack.c.l.b16 %v513
    %v1752 = vunpack.c.l.b16 %v514
    %v1753 = vunpack.c.l.b16 %v515
    %v1754 = vunpack.c.l.b16 %v516
    %v1755 = vunpack.c.l.b16 %v517
    %v1756 = vunpack.c.l.b16 %v518
    %v1757 = vunpack.c.l.b16 %v519
    %v1758 = vunpack.c.l.b16 %v520
    %v1759 = vunpack.c.l.b16 %v521
    %v1760 = vunpack.c.l.b16 %v522
    %v1761 = vunpack.c.l.b16 %v523
    %v1762 = vunpack.c.l.b16 %v524
    %v1763 = vunpack.c.l.b16 %v525
    %v1764 = vunpack.c.l.b16 %v526
    %v1765 = vunpack.c.l.b16 %v527
    %v1766 = vunpack.c.l.b16 %v528
    %v1767 = vunpack.c.l.b16 %v529
    %v1768 = vunpack.c.l.b16 %v530
    %v1769 = vunpack.c.l.b16 %v531
    %v1770 = vunpack.c.l.b16 %v532
    %v1771 = vunpack.c.l.b16 %v533
    %v1772 = vunpack.c.l.b16 %v534
    %v1773 = vunpack.c.l.b16 %v535
    %v1774 = vunpack.c.l.b16 %v536
    %v1775 = vunpack.c.l.b16 %v537
    %v1776 = vunpack.c.l.b16 %v538
    %v1777 = vunpack.c.l.b16 %v539
    %v1778 = vunpack.c.l.b16 %v540
    %v1779 = vunpack.c.l.b16 %v541
    %v1780 = vunpack.c.l.b16 %v542
    %v1781 = vunpack.c.l.b16 %v543
    %v1782 = vunpack.c.l.b16 %v544
    %v1783 = vunpack.c.l.b16 %v545
    %v1784 = vunpack.c.l.b16 %v546
    %v1785 = vunpack.c.l.b16 %v547
    %v1786 = vunpack.c.l.b16 %v548
    %v1787 = vunpack.c.l.b16 %v549
    %v1788 = vunpack.c.l.b16 %v550
    %v1789 = vunpack.c.l.b16 %v551
    %v1790 = vunpack.c.l.b16 %v552
    %v1791 = vunpack.c.l.b16 %v553
    %v1792 = vunpack.c.l.b16 %v554
    %v1793 = vunpack.c.l.b16 %v555
    %v1794 = vunpack.c.l.b16 %v556
    %v1795 = vunpack.c.l.b16 %v557
    %v1796 = vunpack.c.l.b16 %v558
    %v1797 = vunpack.c.l.b16 %v559
    %v1798 = vunpack.c.l.b16 %v560
    %v1799 = vunpack.c.l.b16 %v561
    %v1800 = vunpack.c.l.b16 %v562
    %v1801 = vunpack.c.l.b16 %v563
    %v1802 = vunpack.c.l.b16 %v564
    %v1803 = vunpack.c.l.b16 %v565
    %v1804 = vunpack.c.l.b16 %v566
    %v1805 = vunpack.c.l.b16 %v567
    %v1806 = vunpack.c.l.b16 %v568
    %v1807 = vunpack.c.l.b16 %v569
    %v1808 = vunpack.c.l.b16 %v570
    %v1809 = vunpack.c.l.b16 %v571
    %v1810 = vunpack.c.l.b16 %v572
    %v1811 = vunpack.c.l.b16 %v573
    %v1812 = vunpack.c.l.b16 %v574
    %v1813 = vunpack.c.l.b16 %v575
    %v1814 = vunpack.c.l.b16 %v576
    %v1815 = vunpack.c.l.b16 %v577
    %v1816 = vunpack.c.l.b16 %v578
    %v1817 = vunpack.c.l.b16 %v579
    %v1818 = vunpack.c.l.b16 %v580
    %v1819 = vunpack.c.l.b16 %v581
    %v1820 = vunpack.c.l.b16 %v582
    %v1821 = vunpack.c.l.b16 %v583
    %v1822 = vunpack.c.l.b16 %v584
    %v1823 = vunpack.c.l.b16 %v585
    %v1824 = vunpack.c.l.b16 %v586
    %v1825 = vunpack.c.l.b16 %v587
    %v1826 = vunpack.c.l.b16 %v588
    %v1827 = vunpack.c.l.b16 %v589
    %v1828 = vunpack.c.l.b16 %v590
    %v1829 = vunpack.c.l.b16 %v591
    %v1830 = vunpack.c.l.b16 %v592
    %v1831 = vunpack.c.l.b16 %v593
    %v1832 = vunpack.c.l.b16 %v594
    %v1833 = vunpack.c.l.b16 %v595
    %v1834 = vunpack.c.l.b16 %v596
    %v1835 = vunpack.c.l.b16 %v597
    %v1836 = vunpack.c.l.b16 %v598
    %v1837 = vunpack.c.l.b16 %v599
    %v1838 = vunpack.c.l.b16 %v600
    %v1839 = vunpack.c.l.b16 %v601
    %v1840 = vunpack.c.l.b16 %v602
    %v1841 = vpack.c.b16 %v1266, %v1265
    %v1842 = vpack.c.b16 %v1268, %v1267
    %v1843 = vpack.c.b16 %v1270, %v1269
    %v1844 = vpack.c.b16 %v1272, %v1271
    %v1845 = vpack.c.b16 %v1274, %v1273
    %v1846 = vpack.c.b16 %v1276, %v1275
    %v1847 = vpack.c.b16 %v1278, %v1277
    %v1848 = vpack.c.b16 %v1280, %v1279
    %v1849 = vpack.c.b16 %v1282, %v1281
    %v1850 = vpack.c.b16 %v1284, %v1283
    %v1851 = vpack.c.b16 %v1286, %v1285
    %v1852 = vpack.c.b16 %v1288, %v1287
    %v1853 = vpack.c.b16 %v1290, %v1289
    %v1854 = vpack.c.b16 %v1292, %v1291
    %v1855 = vpack.c.b16 %v1294, %v1293
    %v1856 = vpack.c.b16 %v1296, %v1295
    %v1857 = vpack.c.b16 %v1298, %v1297
    %v1858 = vpack.c.b16 %v1300, %v1299
    %v1859 = vpack.c.b16 %v1302, %v1301
    %v1860 = vpack.c.b16 %v1304, %v1303
    %v1861 = vpack.c.b16 %v1306, %v1305
    %v1862 = vpack.c.b16 %v1308, %v1307
    %v1863 = vpack.c.b16 %v1310, %v1309
    %v1864 = vpack.c.b16 %v1312, %v1311
    %v1865 = vpack.c.b16 %v1314, %v1313
    %v1866 = vpack.c.b16 %v1316, %v1315
    %v1867 = vpack.c.b16 %v1318, %v1317
    %v1868 = vpack.c.b16 %v1320, %v1319
    %v1869 = vpack.c.b16 %v1322, %v1321
    %v1870 = vpack.c.b16 %v1324, %v1323
    %v1871 = vpack.c.b16 %v1326, %v1325
    %v1872 = vpack.c.b16 %v1328, %v1327
    %v1873 = vpack.c.b16 %v1330, %v1329
    %v1874 = vpack.c.b16 %v1332, %v1331
    %v1875 = vpack.c.b16 %v1334, %v1333
    %v1876 = vpack.c.b16 %v1336, %v1335
    %v1877 = vpack.c.b16 %v1338, %v1337
    %v1878 = vpack.c.b16 %v1340, %v1339
    %v1879 = vpack.c.b16 %v1342, %v1341
    %v1880 = vpack.c.b16 %v1344, %v1343
    %v1881 = vpack.c.b16 %v1346, %v1345
    %v1882 = vpack.c.b16 %v1348, %v1347
    %v1883 = vpack.c.b16 %v1350, %v1349
    %v1884 = vpack.c.b16 %v1352, %v1351
    %v1885 = vpack.c.b16 %v1354, %v1353
    %v1886 = vpack.c.b16 %v1356, %v1355
    %v1887 = vpack.c.b16 %v1358, %v1357
    %v1888 = vpack.c.b16 %v1360, %v1359
    %v1889 = vpack.c.b16 %v1362, %v1361
    %v1890 = vpack.c.b16 %v1364, %v1363
    %v1891 = vpack.c.b16 %v1366, %v1365
    %v1892 = vpack.c.b16 %v1368, %v1367
    %v1893 = vpack.c.b16 %v1370, %v1369
    %v1894 = vpack.c.b16 %v1372, %v1371
    %v1895 = vpack.c.b16 %v1374, %v1373
    %v1896 = vpack.c.b16 %v1376, %v1375
    %v1897 = vpack.c.b16 %v1378, %v1377
    %v1898 = vpack.c.b16 %v1380, %v1379
    %v1899 = vpack.c.b16 %v1382, %v1381
    %v1900 = vpack.c.b16 %v1384, %v1383
    %v1901 = vpack.c.b16 %v1386, %v1385
    %v1902 = vpack.c.b16 %v1388, %v1387
    %v1903 = vpack.c.b16 %v1390, %v1389
    %v1904 = vpack.c.b16 %v1392, %v1391
    %v1905 = vpack.c.b16 %v1394, %v1393
    %v1906 = vpack.c.b16 %v1396, %v1395
    %v1907 = vpack.c.b16 %v1398, %v1397
    %v1908 = vpack.c.b16 %v1400, %v1399
    %v1909 = vpack.c.b16 %v1402, %v1401
    %v1910 = vpack.c.b16 %v1404, %v1403
    %v1911 = vpack.c.b16 %v1406, %v1405
    %v1912 = vpack.c.b16 %v1408, %v1407
    %v1913 = vpack.c.b16 %v1410, %v1409
    %v1914 = vpack.c.b16 %v1412, %v1411
    %v1915 = vpack.c.b16 %v1414, %v1413
    %v1916 = vpack.c.b16 %v1416, %v1415
    %v1917 = vpack.c.b16 %v1418, %v1417
    %v1918 = vpack.c.b16 %v1420, %v1419
    %v1919 = vpack.c.b16 %v1422, %v1421
    %v1920 = vpack.c.b16 %v1424, %v1423
    %v1921 = vpack.c.b16 %v1426, %v1425
    %v1922 = vpack.c.b16 %v1428, %v1427
    %v1923 = vpack.c.b16 %v1430, %v1429
    %v1924 = vpack.c.b16 %v1432, %v1431
    %v1925 = vpack.c.b16 %v1434, %v1433
    %v1926 = vpack.c.b16 %v1436, %v1435
    %v1927 = vpack.c.b16 %v1438, %v1437
    %v1928 = vpack.c.b16 %v1440, %v1439
    %v1929 = vpack.c.b16 %v1442, %v1441
    %v1930 = vpack.c.b16 %v1444, %v1443
    %v1931 = vpack.c.b16 %v1446, %v1445
    %v1932 = vpack.c.b16 %v1448, %v1447
    %v1933 = vpack.c.b16 %v1450, %v1449
    %v1934 = vpack.c.b16 %v1452, %v1451
    %v1935 = vpack.c.b16 %v1454, %v1453
    %v1936 = vpack.c.b16 %v1456, %v1455
    %v1937 = vpack.c.b16 %v1458, %v1457
    %v1938 = vpack.c.b16 %v1460, %v1459
    %v1939 = vpack.c.b16 %v1462, %v1461
    %v1940 = vpack.c.b16 %v1464, %v1463
    %v1941 = vpack.c.b16 %v1466, %v1465
    %v1942 = vpack.c.b16 %v1468, %v1467
    %v1943 = vpack.c.b16 %v1470, %v1469
    %v1944 = vpack.c.b16 %v1472, %v1471
    %v1945 = vpack.c.b16 %v1474, %v1473
    %v1946 = vpack.c.b16 %v1476, %v1475
    %v1947 = vpack.c.b16 %v1478, %v1477
    %v1948 = vpack.c.b16 %v1480, %v1479
    %v1949 = vpack.c.b16 %v1482, %v1481
    %v1950 = vpack.c.b16 %v1484, %v1483
    %v1951 = vpack.c.b16 %v1486, %v1485
    %v1952 = vpack.c.b16 %v1488, %v1487
    %v1953 = vpack.c.b16 %v1490, %v1489
    %v1954 = vpack.c.b16 %v1492, %v1491
    %v1955 = vpack.c.b16 %v1494, %v1493
    %v1956 = vpack.c.b16 %v1496, %v1495
    %v1957 = vpack.c.b16 %v1498, %v1497
    %v1958 = vpack.c.b16 %v1500, %v1499
    %v1959 = vpack.c.b16 %v1502, %v1501
    %v1960 = vpack.c.b16 %v1504, %v1503
    %v1961 = vpack.c.b16 %v1506, %v1505
    %v1962 = vpack.c.b16 %v1508, %v1507
    %v1963 = vpack.c.b16 %v1510, %v1509
    %v1964 = vpack.c.b16 %v1512, %v1511
    %v1965 = vpack.c.b16 %v1514, %v1513
    %v1966 = vpack.c.b16 %v1516, %v1515
    %v1967 = vpack.c.b16 %v1518, %v1517
    %v1968 = vpack.c.b16 %v1520, %v1519
    %v1969 = vpack.c.b16 %v1522, %v1521
    %v1970 = vpack.c.b16 %v1524, %v1523
    %v1971 = vpack.c.b16 %v1526, %v1525
    %v1972 = vpack.c.b16 %v1528, %v1527
    %v1973 = vpack.c.b16 %v1530, %v1529
    %v1974 = vpack.c.b16 %v1532, %v1531
    %v1975 = vpack.c.b16 %v1534, %v1533
    %v1976 = vpack.c.b16 %v1536, %v1535
    %v1977 = vpack.c.b16 %v1538, %v1537
    %v1978 = vpack.c.b16 %v1540, %v1539
    %v1979 = vpack.c.b16 %v1542, %v1541
    %v1980 = vpack.c.b16 %v1544, %v1543
    %v1981 = vpack.c.b16 %v1546, %v1545
    %v1982 = vpack.c.b16 %v1548, %v1547
    %v1983 = vpack.c.b16 %v1550, %v1549
    %v1984 = vpack.c.b16 %v1552, %v1551
    %v1985 = vpack.c.b16 %v1554, %v1553
    %v1986 = vpack.c.b16 %v1556, %v1555
    %v1987 = vpack.c.b16 %v1558, %v1557
    %v1988 = vpack.c.b16 %v1560, %v1559
    %v1989 = vpack.c.b16 %v1562, %v1561
    %v1990 = vpack.c.b16 %v1564, %v1563
    %v1991 = vpack.c.b16 %v1566, %v1565
    %v1992 = vpack.c.b16 %v1568, %v1567
    %v1993 = vpack.c.b16 %v1570, %v1569
    %v1994 = vpack.c.b16 %v1572, %v1571
    %v1995 = vpack.c.b16 %v1574, %v1573
    %v1996 = vpack.c.b16 %v1576, %v1575
    %v1997 = vpack.c.b16 %v1578, %v1577
    %v1998 = vpack.c.b16 %v1580, %v1579
    %v1999 = vpack.c.b16 %v1582, %v1581
    %v2000 = vpack.c.b16 %v1584, %v1583
    %v2001 = vpack.c.b16 %v1586, %v1585
    %v2002 = vpack.c.b16 %v1588, %v1587
    %v2003 = vpack.c.b16 %v1590, %v1589
    %v2004 = vpack.c.b16 %v1592, %v1591
    %v2005 = vpack.c.b16 %v1594, %v1593
    %v2006 = vpack.c.b16 %v1596, %v1595
    %v2007 = vpack.c.b16 %v1598, %v1597
    %v2008 = vpack.c.b16 %v1600, %v1599
    %v2009 = vpack.c.b16 %v1602, %v1601
    %v2010 = vpack.c.b16 %v1604, %v1603
    %v2011 = vpack.c.b16 %v1606, %v1605
    %v2012 = vpack.c.b16 %v1608, %v1607
    %v2013 = vpack.c.b16 %v1610, %v1609
    %v2014 = vpack.c.b16 %v1612, %v1611
    %v2015 = vpack.c.b16 %v1614, %v1613
    %v2016 = vpack.c.b16 %v1616, %v1615
    %v2017 = vpack.c.b16 %v1618, %v1617
    %v2018 = vpack.c.b16 %v1620, %v1619
    %v2019 = vpack.c.b16 %v1622, %v1621
    %v2020 = vpack.c.b16 %v1624, %v1623
    %v2021 = vpack.c.b16 %v1626, %v1625
    %v2022 = vpack.c.b16 %v1628, %v1627
    %v2023 = vpack.c.b16 %v1630, %v1629
    %v2024 = vpack.c.b16 %v1632, %v1631
    %v2025 = vpack.c.b16 %v1634, %v1633
    %v2026 = vpack.c.b16 %v1636, %v1635
    %v2027 = vpack.c.b16 %v1638, %v1637
    %v2028 = vpack.c.b16 %v1640, %v1639
    %v2029 = vpack.c.b16 %v1642, %v1641
    %v2030 = vpack.c.b16 %v1644, %v1643
    %v2031 = vpack.c.b16 %v1646, %v1645
    %v2032 = vpack.c.b16 %v1648, %v1647
    %v2033 = vpack.c.b16 %v1650, %v1649
    %v2034 = vpack.c.b16 %v1652, %v1651
    %v2035 = vpack.c.b16 %v1654, %v1653
    %v2036 = vpack.c.b16 %v1656, %v1655
    %v2037 = vpack.c.b16 %v1658, %v1657
    %v2038 = vpack.c.b16 %v1660, %v1659
    %v2039 = vpack.c.b16 %v1662, %v1661
    %v2040 = vpack.c.b16 %v1664, %v1663
    %v2041 = vpack.c.b16 %v1666, %v1665
    %v2042 = vpack.c.b16 %v1668, %v1667
    %v2043 = vpack.c.b16 %v1670, %v1669
    %v2044 = vpack.c.b16 %v1672, %v1671
    %v2045 = vpack.c.b16 %v1674, %v1673
    %v2046 = vpack.c.b16 %v1676, %v1675
    %v2047 = vpack.c.b16 %v1678, %v1677
    %v2048 = vpack.c.b16 %v1680, %v1679
    %v2049 = vpack.c.b16 %v1682, %v1681
    %v2050 = vpack.c.b16 %v1684, %v1683
    %v2051 = vpack.c.b16 %v1686, %v1685
    %v2052 = vpack.c.b16 %v1688, %v1687
    %v2053 = vpack.c.b16 %v1690, %v1689
    %v2054 = vpack.c.b16 %v1692, %v1691
    %v2055 = vpack.c.b16 %v1694, %v1693
    %v2056 = vpack.c.b16 %v1696, %v1695
    %v2057 = vpack.c.b16 %v1698, %v1697
    %v2058 = vpack.c.b16 %v1700, %v1699
    %v2059 = vpack.c.b16 %v1702, %v1701
    %v2060 = vpack.c.b16 %v1704, %v1703
    %v2061 = vpack.c.b16 %v1706, %v1705
    %v2062 = vpack.c.b16 %v1708, %v1707
    %v2063 = vpack.c.b16 %v1710, %v1709
    %v2064 = vpack.c.b16 %v1712, %v1711
    %v2065 = vpack.c.b16 %v1714, %v1713
    %v2066 = vpack.c.b16 %v1716, %v1715
    %v2067 = vpack.c.b16 %v1718, %v1717
    %v2068 = vpack.c.b16 %v1720, %v1719
    %v2069 = vpack.c.b16 %v1722, %v1721
    %v2070 = vpack.c.b16 %v1724, %v1723
    %v2071 = vpack.c.b16 %v1726, %v1725
    %v2072 = vpack.c.b16 %v1728, %v1727
    %v2073 = vpack.c.b16 %v1730, %v1729
    %v2074 = vpack.c.b16 %v1732, %v1731
    %v2075 = vpack.c.b16 %v1734, %v1733
    %v2076 = vpack.c.b16 %v1736, %v1735
    %v2077 = vpack.c.b16 %v1738, %v1737
    %v2078 = vpack.c.b16 %v1740, %v1739
    %v2079 = vpack.c.b16 %v1742, %v1741
    %v2080 = vpack.c.b16 %v1744, %v1743
    %v2081 = vpack.c.b16 %v1746, %v1745
    %v2082 = vpack.c.b16 %v1748, %v1747
    %v2083 = vpack.c.b16 %v1750, %v1749
    %v2084 = vpack.c.b16 %v1752, %v1751
    %v2085 = vpack.c.b16 %v1754, %v1753
    %v2086 = vpack.c.b16 %v1756, %v1755
    %v2087 = vpack.c.b16 %v1758, %v1757
    %v2088 = vpack.c.b16 %v1760, %v1759
    %v2089 = vpack.c.b16 %v1762, %v1761
    %v2090 = vpack.c.b16 %v1764, %v1763
    %v2091 = vpack.c.b16 %v1766, %v1765
    %v2092 = vpack.c.b16 %v1768, %v1767
    %v2093 = vpack.c.b16 %v1770, %v1769
    %v2094 = vpack.c.b16 %v1772, %v1771
    %v2095 = vpack.c.b16 %v1774, %v1773
    %v2096 = vpack.c.b16 %v1776, %v1775
    %v2097 = vpack.c.b16 %v1778, %v1777
    %v2098 = vpack.c.b16 %v1780, %v1779
    %v2099 = vpack.c.b16 %v1782, %v1781
    %v2100 = vpack.c.b16 %v1784, %v1783
    %v2101 = vpack.c.b16 %v1786, %v1785
    %v2102 = vpack.c.b16 %v1788, %v1787
    %v2103 = vpack.c.b16 %v1790, %v1789
    %v2104 = vpack.c.b16 %v1792, %v1791
    %v2105 = vpack.c.b16 %v1794, %v1793
    %v2106 = vpack.c.b16 %v1796, %v1795
    %v2107 = vpack.c.b16 %v1798, %v1797
    %v2108 = vpack.c.b16 %v1800, %v1799
    %v2109 = vpack.c.b16 %v1802, %v1801
    %v2110 = vpack.c.b16 %v1804, %v1803
    %v2111 = vpack.c.b16 %v1806, %v1805
    %v2112 = vpack.c.b16 %v1808, %v1807
    %v2113 = vpack.c.b16 %v1810, %v1809
    %v2114 = vpack.c.b16 %v1812, %v1811
    %v2115 = vpack.c.b16 %v1814, %v1813
    %v2116 = vpack.c.b16 %v1816, %v1815
    %v2117 = vpack.c.b16 %v1818, %v1817
    %v2118 = vpack.c.b16 %v1820, %v1819
    %v2119 = vpack.c.b16 %v1822, %v1821
    %v2120 = vpack.c.b16 %v1824, %v1823
    %v2121 = vpack.c.b16 %v1826, %v1825
    %v2122 = vpack.c.b16 %v1828, %v1827
    %v2123 = vpack.c.b16 %v1830, %v1829
    %v2124 = vpack.c.b16 %v1832, %v1831
    %v2125 = vpack.c.b16 %v1834, %v1833
    %v2126 = vpack.c.b16 %v1836, %v1835
    %v2127 = vpack.c.b16 %v1838, %v1837
    %v2128 = vpack.c.b16 %v1840, %v1839
    %2417 = vmatpush.bf16.msra.mxu0 %v1848
    %2418 = vmatpush.bf16.msra.mxu0 %v1847
    %2419 = vmatpush.bf16.msra.mxu0 %v1846
    %2420 = vmatpush.bf16.msra.mxu0 %v1845
    %2421 = vmatpush.bf16.msra.mxu0 %v1844
    %2422 = vmatpush.bf16.msra.mxu0 %v1843
    %2423 = vmatpush.bf16.msra.mxu0 %v1842
    %2424 = vmatpush.bf16.msra.mxu0 %v1841
    %2425 = vmatmul.bf16.gmra.mxu0 %v609
    %v2426 = vpop.f32.mrf.mxu0
    %v2427 = vadd.f32 %v605, %v2426
    %v2428 = vpop.f32.mrf.mxu0
    %2429 = vdwg.mxu0
    %2430 = vmatpush.bf16.msra.mxu0 %v1856
    %2431 = vmatpush.bf16.msra.mxu0 %v1855
    %2432 = vmatpush.bf16.msra.mxu0 %v1854
    %2433 = vmatpush.bf16.msra.mxu0 %v1853
    %2434 = vmatpush.bf16.msra.mxu0 %v1852
    %2435 = vmatpush.bf16.msra.mxu0 %v1851
    %2436 = vmatpush.bf16.msra.mxu0 %v1850
    %2437 = vmatpush.bf16.msra.mxu0 %v1849
    %2438 = vmatmul.bf16.gmra.mxu0 %v610
    %v2439 = vpop.f32.mrf.mxu0
    %v2440 = vadd.f32 %v2427, %v2439
    %v2441 = vpop.f32.mrf.mxu0
    %2442 = vdwg.mxu0
    %2443 = vmatpush.bf16.msra.mxu0 %v1864
    %2444 = vmatpush.bf16.msra.mxu0 %v1863
    %2445 = vmatpush.bf16.msra.mxu0 %v1862
    %2446 = vmatpush.bf16.msra.mxu0 %v1861
    %2447 = vmatpush.bf16.msra.mxu0 %v1860
    %2448 = vmatpush.bf16.msra.mxu0 %v1859
    %2449 = vmatpush.bf16.msra.mxu0 %v1858
    %2450 = vmatpush.bf16.msra.mxu0 %v1857
    %2451 = vmatmul.bf16.gmra.mxu0 %v611
    %v2452 = vpop.f32.mrf.mxu0
    %v2453 = vadd.f32 %v2440, %v2452
    %v2454 = vpop.f32.mrf.mxu0
    %2455 = vdwg.mxu0
    %2456 = vmatpush.bf16.msra.mxu0 %v1872
    %2457 = vmatpush.bf16.msra.mxu0 %v1871
    %2458 = vmatpush.bf16.msra.mxu0 %v1870
    %2459 = vmatpush.bf16.msra.mxu0 %v1869
    %2460 = vmatpush.bf16.msra.mxu0 %v1868
    %2461 = vmatpush.bf16.msra.mxu0 %v1867
    %2462 = vmatpush.bf16.msra.mxu0 %v1866
    %2463 = vmatpush.bf16.msra.mxu0 %v1865
    %2464 = vmatmul.bf16.gmra.mxu0 %v612
    %v2465 = vpop.f32.mrf.mxu0
    %v2466 = vadd.f32 %v2453, %v2465
    %v2467 = vpop.f32.mrf.mxu0
    %2468 = vdwg.mxu0
    %2469 = vmatpush.bf16.msra.mxu0 %v1880
    %2470 = vmatpush.bf16.msra.mxu0 %v1879
    %2471 = vmatpush.bf16.msra.mxu0 %v1878
    %2472 = vmatpush.bf16.msra.mxu0 %v1877
    %2473 = vmatpush.bf16.msra.mxu0 %v1876
    %2474 = vmatpush.bf16.msra.mxu0 %v1875
    %2475 = vmatpush.bf16.msra.mxu0 %v1874
    %2476 = vmatpush.bf16.msra.mxu0 %v1873
    %2477 = vmatmul.bf16.gmra.mxu0 %v613
    %v2478 = vpop.f32.mrf.mxu0
    %v2479 = vadd.f32 %v2466, %v2478
    %v2480 = vpop.f32.mrf.mxu0
    %2481 = vdwg.mxu0
    %2482 = vmatpush.bf16.msra.mxu0 %v1888
    %2483 = vmatpush.bf16.msra.mxu0 %v1887
    %2484 = vmatpush.bf16.msra.mxu0 %v1886
    %2485 = vmatpush.bf16.msra.mxu0 %v1885
    %2486 = vmatpush.bf16.msra.mxu0 %v1884
    %2487 = vmatpush.bf16.msra.mxu0 %v1883
    %2488 = vmatpush.bf16.msra.mxu0 %v1882
    %2489 = vmatpush.bf16.msra.mxu0 %v1881
    %2490 = vmatmul.bf16.gmra.mxu0 %v614
    %v2491 = vpop.f32.mrf.mxu0
    %v2492 = vadd.f32 %v2479, %v2491
    %v2493 = vpop.f32.mrf.mxu0
    %2494 = vdwg.mxu0
    %2495 = vmatpush.bf16.msra.mxu0 %v1896
    %2496 = vmatpush.bf16.msra.mxu0 %v1895
    %2497 = vmatpush.bf16.msra.mxu0 %v1894
    %2498 = vmatpush.bf16.msra.mxu0 %v1893
    %2499 = vmatpush.bf16.msra.mxu0 %v1892
    %2500 = vmatpush.bf16.msra.mxu0 %v1891
    %2501 = vmatpush.bf16.msra.mxu0 %v1890
    %2502 = vmatpush.bf16.msra.mxu0 %v1889
    %2503 = vmatmul.bf16.gmra.mxu0 %v615
    %v2504 = vpop.f32.mrf.mxu0
    %v2505 = vadd.f32 %v2492, %v2504
    %v2506 = vpop.f32.mrf.mxu0
    %2507 = vdwg.mxu0
    %2508 = vmatpush.bf16.msra.mxu0 %v1904
    %2509 = vmatpush.bf16.msra.mxu0 %v1903
    %2510 = vmatpush.bf16.msra.mxu0 %v1902
    %2511 = vmatpush.bf16.msra.mxu0 %v1901
    %2512 = vmatpush.bf16.msra.mxu0 %v1900
    %2513 = vmatpush.bf16.msra.mxu0 %v1899
    %2514 = vmatpush.bf16.msra.mxu0 %v1898
    %2515 = vmatpush.bf16.msra.mxu0 %v1897
    %2516 = vmatmul.bf16.gmra.mxu0 %v616
    %v2517 = vpop.f32.mrf.mxu0
    %v2518 = vadd.f32 %v2505, %v2517
    %v2519 = vpop.f32.mrf.mxu0
    %2520 = vdwg.mxu0
    %2521 = vmatpush.bf16.msra.mxu0 %v1912
    %2522 = vmatpush.bf16.msra.mxu0 %v1911
    %2523 = vmatpush.bf16.msra.mxu0 %v1910
    %2524 = vmatpush.bf16.msra.mxu0 %v1909
    %2525 = vmatpush.bf16.msra.mxu0 %v1908
    %2526 = vmatpush.bf16.msra.mxu0 %v1907
    %2527 = vmatpush.bf16.msra.mxu0 %v1906
    %2528 = vmatpush.bf16.msra.mxu0 %v1905
    %2529 = vmatmul.bf16.gmra.mxu0 %v619
    %v2530 = vpop.f32.mrf.mxu0
    %v2531 = vadd.f32 %v2518, %v2530
    %v2532 = vpop.f32.mrf.mxu0
    %2533 = vdwg.mxu0
    %2534 = vmatpush.bf16.msra.mxu0 %v1920
    %2535 = vmatpush.bf16.msra.mxu0 %v1919
    %2536 = vmatpush.bf16.msra.mxu0 %v1918
    %2537 = vmatpush.bf16.msra.mxu0 %v1917
    %2538 = vmatpush.bf16.msra.mxu0 %v1916
    %2539 = vmatpush.bf16.msra.mxu0 %v1915
    %2540 = vmatpush.bf16.msra.mxu0 %v1914
    %2541 = vmatpush.bf16.msra.mxu0 %v1913
    %2542 = vmatmul.bf16.gmra.mxu0 %v620
    %v2543 = vpop.f32.mrf.mxu0
    %v2544 = vadd.f32 %v2531, %v2543
    %v2545 = vpop.f32.mrf.mxu0
    %2546 = vdwg.mxu0
    %2547 = vmatpush.bf16.msra.mxu0 %v1928
    %2548 = vmatpush.bf16.msra.mxu0 %v1927
    %2549 = vmatpush.bf16.msra.mxu0 %v1926
    %2550 = vmatpush.bf16.msra.mxu0 %v1925
    %2551 = vmatpush.bf16.msra.mxu0 %v1924
    %2552 = vmatpush.bf16.msra.mxu0 %v1923
    %2553 = vmatpush.bf16.msra.mxu0 %v1922
    %2554 = vmatpush.bf16.msra.mxu0 %v1921
    %2555 = vmatmul.bf16.gmra.mxu0 %v621
    %v2556 = vpop.f32.mrf.mxu0
    %v2557 = vadd.f32 %v2544, %v2556
    %v2558 = vpop.f32.mrf.mxu0
    %2559 = vdwg.mxu0
    %2560 = vmatpush.bf16.msra.mxu0 %v1936
    %2561 = vmatpush.bf16.msra.mxu0 %v1935
    %2562 = vmatpush.bf16.msra.mxu0 %v1934
    %2563 = vmatpush.bf16.msra.mxu0 %v1933
    %2564 = vmatpush.bf16.msra.mxu0 %v1932
    %2565 = vmatpush.bf16.msra.mxu0 %v1931
    %2566 = vmatpush.bf16.msra.mxu0 %v1930
    %2567 = vmatpush.bf16.msra.mxu0 %v1929
    %2568 = vmatmul.bf16.gmra.mxu0 %v622
    %v2569 = vpop.f32.mrf.mxu0
    %v2570 = vadd.f32 %v2557, %v2569
    %v2571 = vpop.f32.mrf.mxu0
    %2572 = vdwg.mxu0
    %2573 = vmatpush.bf16.msra.mxu0 %v1944
    %2574 = vmatpush.bf16.msra.mxu0 %v1943
    %2575 = vmatpush.bf16.msra.mxu0 %v1942
    %2576 = vmatpush.bf16.msra.mxu0 %v1941
    %2577 = vmatpush.bf16.msra.mxu0 %v1940
    %2578 = vmatpush.bf16.msra.mxu0 %v1939
    %2579 = vmatpush.bf16.msra.mxu0 %v1938
    %2580 = vmatpush.bf16.msra.mxu0 %v1937
    %2581 = vmatmul.bf16.gmra.mxu0 %v623
    %v2582 = vpop.f32.mrf.mxu0
    %v2583 = vadd.f32 %v2570, %v2582
    %v2584 = vpop.f32.mrf.mxu0
    %2585 = vdwg.mxu0
    %2586 = vmatpush.bf16.msra.mxu0 %v1952
    %2587 = vmatpush.bf16.msra.mxu0 %v1951
    %2588 = vmatpush.bf16.msra.mxu0 %v1950
    %2589 = vmatpush.bf16.msra.mxu0 %v1949
    %2590 = vmatpush.bf16.msra.mxu0 %v1948
    %2591 = vmatpush.bf16.msra.mxu0 %v1947
    %2592 = vmatpush.bf16.msra.mxu0 %v1946
    %2593 = vmatpush.bf16.msra.mxu0 %v1945
    %2594 = vmatmul.bf16.gmra.mxu0 %v624
    %v2595 = vpop.f32.mrf.mxu0
    %v2596 = vadd.f32 %v2583, %v2595
    %v2597 = vpop.f32.mrf.mxu0
    %2598 = vdwg.mxu0
    %2599 = vmatpush.bf16.msra.mxu0 %v1960
    %2600 = vmatpush.bf16.msra.mxu0 %v1959
    %2601 = vmatpush.bf16.msra.mxu0 %v1958
    %2602 = vmatpush.bf16.msra.mxu0 %v1957
    %2603 = vmatpush.bf16.msra.mxu0 %v1956
    %2604 = vmatpush.bf16.msra.mxu0 %v1955
    %2605 = vmatpush.bf16.msra.mxu0 %v1954
    %2606 = vmatpush.bf16.msra.mxu0 %v1953
    %2607 = vmatmul.bf16.gmra.mxu0 %v625
    %v2608 = vpop.f32.mrf.mxu0
    %v2609 = vadd.f32 %v2596, %v2608
    %v2610 = vpop.f32.mrf.mxu0
    %2611 = vdwg.mxu0
    %2612 = vmatpush.bf16.msra.mxu0 %v1968
    %2613 = vmatpush.bf16.msra.mxu0 %v1967
    %2614 = vmatpush.bf16.msra.mxu0 %v1966
    %2615 = vmatpush.bf16.msra.mxu0 %v1965
    %2616 = vmatpush.bf16.msra.mxu0 %v1964
    %2617 = vmatpush.bf16.msra.mxu0 %v1963
    %2618 = vmatpush.bf16.msra.mxu0 %v1962
    %2619 = vmatpush.bf16.msra.mxu0 %v1961
    %2620 = vmatmul.bf16.gmra.mxu0 %v626
    %v2621 = vpop.f32.mrf.mxu0
    %v2622 = vadd.f32 %v2609, %v2621
    %v2623 = vpop.f32.mrf.mxu0
    %2624 = vdwg.mxu0
    %2625 = vmatpush.bf16.msra.mxu0 %v1976
    %2626 = vmatpush.bf16.msra.mxu0 %v1975
    %2627 = vmatpush.bf16.msra.mxu0 %v1974
    %2628 = vmatpush.bf16.msra.mxu0 %v1973
    %2629 = vmatpush.bf16.msra.mxu0 %v1972
    %2630 = vmatpush.bf16.msra.mxu0 %v1971
    %2631 = vmatpush.bf16.msra.mxu0 %v1970
    %2632 = vmatpush.bf16.msra.mxu0 %v1969
    %2633 = vmatmul.bf16.gmra.mxu0 %v629
    %v2634 = vpop.f32.mrf.mxu0
    %v2635 = vadd.f32 %v2622, %v2634
    %v2636 = vpop.f32.mrf.mxu0
    %2637 = vdwg.mxu0
    %2638 = vmatpush.bf16.msra.mxu0 %v1984
    %2639 = vmatpush.bf16.msra.mxu0 %v1983
    %2640 = vmatpush.bf16.msra.mxu0 %v1982
    %2641 = vmatpush.bf16.msra.mxu0 %v1981
    %2642 = vmatpush.bf16.msra.mxu0 %v1980
    %2643 = vmatpush.bf16.msra.mxu0 %v1979
    %2644 = vmatpush.bf16.msra.mxu0 %v1978
    %2645 = vmatpush.bf16.msra.mxu0 %v1977
    %2646 = vmatmul.bf16.gmra.mxu0 %v630
    %v2647 = vpop.f32.mrf.mxu0
    %v2648 = vadd.f32 %v2635, %v2647
    %v2649 = vpop.f32.mrf.mxu0
    %2650 = vdwg.mxu0
    %2651 = vmatpush.bf16.msra.mxu0 %v1992
    %2652 = vmatpush.bf16.msra.mxu0 %v1991
    %2653 = vmatpush.bf16.msra.mxu0 %v1990
    %2654 = vmatpush.bf16.msra.mxu0 %v1989
    %2655 = vmatpush.bf16.msra.mxu0 %v1988
    %2656 = vmatpush.bf16.msra.mxu0 %v1987
    %2657 = vmatpush.bf16.msra.mxu0 %v1986
    %2658 = vmatpush.bf16.msra.mxu0 %v1985
    %2659 = vmatmul.bf16.gmra.mxu0 %v631
    %v2660 = vpop.f32.mrf.mxu0
    %v2661 = vadd.f32 %v2648, %v2660
    %v2662 = vpop.f32.mrf.mxu0
    %2663 = vdwg.mxu0
    %2664 = vmatpush.bf16.msra.mxu0 %v2000
    %2665 = vmatpush.bf16.msra.mxu0 %v1999
    %2666 = vmatpush.bf16.msra.mxu0 %v1998
    %2667 = vmatpush.bf16.msra.mxu0 %v1997
    %2668 = vmatpush.bf16.msra.mxu0 %v1996
    %2669 = vmatpush.bf16.msra.mxu0 %v1995
    %2670 = vmatpush.bf16.msra.mxu0 %v1994
    %2671 = vmatpush.bf16.msra.mxu0 %v1993
    %2672 = vmatmul.bf16.gmra.mxu0 %v632
    %v2673 = vpop.f32.mrf.mxu0
    %v2674 = vadd.f32 %v2661, %v2673
    %v2675 = vpop.f32.mrf.mxu0
    %2676 = vdwg.mxu0
    %2677 = vmatpush.bf16.msra.mxu0 %v2008
    %2678 = vmatpush.bf16.msra.mxu0 %v2007
    %2679 = vmatpush.bf16.msra.mxu0 %v2006
    %2680 = vmatpush.bf16.msra.mxu0 %v2005
    %2681 = vmatpush.bf16.msra.mxu0 %v2004
    %2682 = vmatpush.bf16.msra.mxu0 %v2003
    %2683 = vmatpush.bf16.msra.mxu0 %v2002
    %2684 = vmatpush.bf16.msra.mxu0 %v2001
    %2685 = vmatmul.bf16.gmra.mxu0 %v633
    %v2686 = vpop.f32.mrf.mxu0
    %v2687 = vadd.f32 %v2674, %v2686
    %v2688 = vpop.f32.mrf.mxu0
    %2689 = vdwg.mxu0
    %2690 = vmatpush.bf16.msra.mxu0 %v2016
    %2691 = vmatpush.bf16.msra.mxu0 %v2015
    %2692 = vmatpush.bf16.msra.mxu0 %v2014
    %2693 = vmatpush.bf16.msra.mxu0 %v2013
    %2694 = vmatpush.bf16.msra.mxu0 %v2012
    %2695 = vmatpush.bf16.msra.mxu0 %v2011
    %2696 = vmatpush.bf16.msra.mxu0 %v2010
    %2697 = vmatpush.bf16.msra.mxu0 %v2009
    %2698 = vmatmul.bf16.gmra.mxu0 %v634
    %v2699 = vpop.f32.mrf.mxu0
    %v2700 = vadd.f32 %v2687, %v2699
    %v2701 = vpop.f32.mrf.mxu0
    %2702 = vdwg.mxu0
    %2703 = vmatpush.bf16.msra.mxu0 %v2024
    %2704 = vmatpush.bf16.msra.mxu0 %v2023
    %2705 = vmatpush.bf16.msra.mxu0 %v2022
    %2706 = vmatpush.bf16.msra.mxu0 %v2021
    %2707 = vmatpush.bf16.msra.mxu0 %v2020
    %2708 = vmatpush.bf16.msra.mxu0 %v2019
    %2709 = vmatpush.bf16.msra.mxu0 %v2018
    %2710 = vmatpush.bf16.msra.mxu0 %v2017
    %2711 = vmatmul.bf16.gmra.mxu0 %v635
    %v2712 = vpop.f32.mrf.mxu0
    %v2713 = vadd.f32 %v2700, %v2712
    %v2714 = vpop.f32.mrf.mxu0
    %2715 = vdwg.mxu0
    %2716 = vmatpush.bf16.msra.mxu0 %v2032
    %2717 = vmatpush.bf16.msra.mxu0 %v2031
    %2718 = vmatpush.bf16.msra.mxu0 %v2030
    %2719 = vmatpush.bf16.msra.mxu0 %v2029
    %2720 = vmatpush.bf16.msra.mxu0 %v2028
    %2721 = vmatpush.bf16.msra.mxu0 %v2027
    %2722 = vmatpush.bf16.msra.mxu0 %v2026
    %2723 = vmatpush.bf16.msra.mxu0 %v2025
    %2724 = vmatmul.bf16.gmra.mxu0 %v636
    %v2725 = vpop.f32.mrf.mxu0
    %v2726 = vadd.f32 %v2713, %v2725
    %v2727 = vpop.f32.mrf.mxu0
    %2728 = vdwg.mxu0
    %2729 = vmatpush.bf16.msra.mxu0 %v2040
    %2730 = vmatpush.bf16.msra.mxu0 %v2039
    %2731 = vmatpush.bf16.msra.mxu0 %v2038
    %2732 = vmatpush.bf16.msra.mxu0 %v2037
    %2733 = vmatpush.bf16.msra.mxu0 %v2036
    %2734 = vmatpush.bf16.msra.mxu0 %v2035
    %2735 = vmatpush.bf16.msra.mxu0 %v2034
    %2736 = vmatpush.bf16.msra.mxu0 %v2033
    %2737 = vmatmul.bf16.gmra.mxu0 %v639
    %v2738 = vpop.f32.mrf.mxu0
    %v2739 = vadd.f32 %v2726, %v2738
    %v2740 = vpop.f32.mrf.mxu0
    %2741 = vdwg.mxu0
    %2742 = vmatpush.bf16.msra.mxu0 %v2048
    %2743 = vmatpush.bf16.msra.mxu0 %v2047
    %2744 = vmatpush.bf16.msra.mxu0 %v2046
    %2745 = vmatpush.bf16.msra.mxu0 %v2045
    %2746 = vmatpush.bf16.msra.mxu0 %v2044
    %2747 = vmatpush.bf16.msra.mxu0 %v2043
    %2748 = vmatpush.bf16.msra.mxu0 %v2042
    %2749 = vmatpush.bf16.msra.mxu0 %v2041
    %2750 = vmatmul.bf16.gmra.mxu0 %v640
    %v2751 = vpop.f32.mrf.mxu0
    %v2752 = vadd.f32 %v2739, %v2751
    %v2753 = vpop.f32.mrf.mxu0
    %2754 = vdwg.mxu0
    %2755 = vmatpush.bf16.msra.mxu0 %v2056
    %2756 = vmatpush.bf16.msra.mxu0 %v2055
    %2757 = vmatpush.bf16.msra.mxu0 %v2054
    %2758 = vmatpush.bf16.msra.mxu0 %v2053
    %2759 = vmatpush.bf16.msra.mxu0 %v2052
    %2760 = vmatpush.bf16.msra.mxu0 %v2051
    %2761 = vmatpush.bf16.msra.mxu0 %v2050
    %2762 = vmatpush.bf16.msra.mxu0 %v2049
    %2763 = vmatmul.bf16.gmra.mxu0 %v641
    %v2764 = vpop.f32.mrf.mxu0
    %v2765 = vadd.f32 %v2752, %v2764
    %v2766 = vpop.f32.mrf.mxu0
    %2767 = vdwg.mxu0
    %2768 = vmatpush.bf16.msra.mxu0 %v2064
    %2769 = vmatpush.bf16.msra.mxu0 %v2063
    %2770 = vmatpush.bf16.msra.mxu0 %v2062
    %2771 = vmatpush.bf16.msra.mxu0 %v2061
    %2772 = vmatpush.bf16.msra.mxu0 %v2060
    %2773 = vmatpush.bf16.msra.mxu0 %v2059
    %2774 = vmatpush.bf16.msra.mxu0 %v2058
    %2775 = vmatpush.bf16.msra.mxu0 %v2057
    %2776 = vmatmul.bf16.gmra.mxu0 %v642
    %v2777 = vpop.f32.mrf.mxu0
    %v2778 = vadd.f32 %v2765, %v2777
    %v2779 = vpop.f32.mrf.mxu0
    %2780 = vdwg.mxu0
    %2781 = vmatpush.bf16.msra.mxu0 %v2072
    %2782 = vmatpush.bf16.msra.mxu0 %v2071
    %2783 = vmatpush.bf16.msra.mxu0 %v2070
    %2784 = vmatpush.bf16.msra.mxu0 %v2069
    %2785 = vmatpush.bf16.msra.mxu0 %v2068
    %2786 = vmatpush.bf16.msra.mxu0 %v2067
    %2787 = vmatpush.bf16.msra.mxu0 %v2066
    %2788 = vmatpush.bf16.msra.mxu0 %v2065
    %2789 = vmatmul.bf16.gmra.mxu0 %v643
    %v2790 = vpop.f32.mrf.mxu0
    %v2791 = vadd.f32 %v2778, %v2790
    %v2792 = vpop.f32.mrf.mxu0
    %2793 = vdwg.mxu0
    %2794 = vmatpush.bf16.msra.mxu0 %v2080
    %2795 = vmatpush.bf16.msra.mxu0 %v2079
    %2796 = vmatpush.bf16.msra.mxu0 %v2078
    %2797 = vmatpush.bf16.msra.mxu0 %v2077
    %2798 = vmatpush.bf16.msra.mxu0 %v2076
    %2799 = vmatpush.bf16.msra.mxu0 %v2075
    %2800 = vmatpush.bf16.msra.mxu0 %v2074
    %2801 = vmatpush.bf16.msra.mxu0 %v2073
    %2802 = vmatmul.bf16.gmra.mxu0 %v644
    %v2803 = vpop.f32.mrf.mxu0
    %v2804 = vadd.f32 %v2791, %v2803
    %v2805 = vpop.f32.mrf.mxu0
    %2806 = vdwg.mxu0
    %2807 = vmatpush.bf16.msra.mxu0 %v2088
    %2808 = vmatpush.bf16.msra.mxu0 %v2087
    %2809 = vmatpush.bf16.msra.mxu0 %v2086
    %2810 = vmatpush.bf16.msra.mxu0 %v2085
    %2811 = vmatpush.bf16.msra.mxu0 %v2084
    %2812 = vmatpush.bf16.msra.mxu0 %v2083
    %2813 = vmatpush.bf16.msra.mxu0 %v2082
    %2814 = vmatpush.bf16.msra.mxu0 %v2081
    %2815 = vmatmul.bf16.gmra.mxu0 %v645
    %v2816 = vpop.f32.mrf.mxu0
    %v2817 = vadd.f32 %v2804, %v2816
    %v2818 = vpop.f32.mrf.mxu0
    %2819 = vdwg.mxu0
    %2820 = vmatpush.bf16.msra.mxu0 %v2096
    %2821 = vmatpush.bf16.msra.mxu0 %v2095
    %2822 = vmatpush.bf16.msra.mxu0 %v2094
    %2823 = vmatpush.bf16.msra.mxu0 %v2093
    %2824 = vmatpush.bf16.msra.mxu0 %v2092
    %2825 = vmatpush.bf16.msra.mxu0 %v2091
    %2826 = vmatpush.bf16.msra.mxu0 %v2090
    %2827 = vmatpush.bf16.msra.mxu0 %v2089
    %2828 = vmatmul.bf16.gmra.mxu0 %v646
    %v2829 = vpop.f32.mrf.mxu0
    %v2830 = vadd.f32 %v2817, %v2829
    %v2831 = vpop.f32.mrf.mxu0
    %2832 = vdwg.mxu0
    %2833 = vmatpush.bf16.msra.mxu0 %v2104
    %2834 = vmatpush.bf16.msra.mxu0 %v2103
    %2835 = vmatpush.bf16.msra.mxu0 %v2102
    %2836 = vmatpush.bf16.msra.mxu0 %v2101
    %2837 = vmatpush.bf16.msra.mxu0 %v2100
    %2838 = vmatpush.bf16.msra.mxu0 %v2099
    %2839 = vmatpush.bf16.msra.mxu0 %v2098
    %2840 = vmatpush.bf16.msra.mxu0 %v2097
    %2841 = vmatmul.bf16.gmra.mxu0 %v649
    %v2842 = vpop.f32.mrf.mxu0
    %v2843 = vadd.f32 %v2830, %v2842
    %v2844 = vpop.f32.mrf.mxu0
    %2845 = vdwg.mxu0
    %2846 = vmatpush.bf16.msra.mxu0 %v2112
    %2847 = vmatpush.bf16.msra.mxu0 %v2111
    %2848 = vmatpush.bf16.msra.mxu0 %v2110
    %2849 = vmatpush.bf16.msra.mxu0 %v2109
    %2850 = vmatpush.bf16.msra.mxu0 %v2108
    %2851 = vmatpush.bf16.msra.mxu0 %v2107
    %2852 = vmatpush.bf16.msra.mxu0 %v2106
    %2853 = vmatpush.bf16.msra.mxu0 %v2105
    %2854 = vmatmul.bf16.gmra.mxu0 %v650
    %v2855 = vpop.f32.mrf.mxu0
    %v2856 = vadd.f32 %v2843, %v2855
    %v2857 = vpop.f32.mrf.mxu0
    %2858 = vdwg.mxu0
    %2859 = vmatpush.bf16.msra.mxu0 %v2120
    %2860 = vmatpush.bf16.msra.mxu0 %v2119
    %2861 = vmatpush.bf16.msra.mxu0 %v2118
    %2862 = vmatpush.bf16.msra.mxu0 %v2117
    %2863 = vmatpush.bf16.msra.mxu0 %v2116
    %2864 = vmatpush.bf16.msra.mxu0 %v2115
    %2865 = vmatpush.bf16.msra.mxu0 %v2114
    %2866 = vmatpush.bf16.msra.mxu0 %v2113
    %2867 = vmatmul.bf16.gmra.mxu0 %v651
    %v2868 = vpop.f32.mrf.mxu0
    %v2869 = vadd.f32 %v2856, %v2868
    %v2870 = vpop.f32.mrf.mxu0
    %2871 = vdwg.mxu0
    %2872 = vmatpush.bf16.msra.mxu0 %v2128
    %2873 = vmatpush.bf16.msra.mxu0 %v2127
    %2874 = vmatpush.bf16.msra.mxu0 %v2126
    %2875 = vmatpush.bf16.msra.mxu0 %v2125
    %2876 = vmatpush.bf16.msra.mxu0 %v2124
    %2877 = vmatpush.bf16.msra.mxu0 %v2123
    %2878 = vmatpush.bf16.msra.mxu0 %v2122
    %2879 = vmatpush.bf16.msra.mxu0 %v2121
    %2880 = vmatmul.bf16.gmra.mxu0 %v652
    %v2881 = vpop.f32.mrf.mxu0
    %v2882 = vadd.f32 %v2869, %v2881
    %v2883 = vpop.f32.mrf.mxu0
    %2884 = vdwg.mxu0
    %v2885 = vmax.f32 %v2882, 0.0
    %v2886 = vpack.c.bf16 %v2885, %v2885
    %v2887 = vld [vmem:[%s3] sm:$0xf]
    %v2888 = vld [vmem:[%s3 + $0x4] sm:$0xf]
    %v2889 = vld [vmem:[%s3 + $0x8] sm:$0xf]
    %v2890 = vld [vmem:[%s3 + $0xc] sm:$0xf]
    %v2891 = vld [vmem:[%s3 + $0x10] sm:$0xf]
    %v2892 = vld [vmem:[%s3 + $0x14] sm:$0xf]
    %v2893 = vld [vmem:[%s3 + $0x18] sm:$0xf]
    %v2894 = vld [vmem:[%s3 + $0x1c] sm:$0xf]
    %v2895 = vld [vmem:[%s4] sm:$0x1]
    %v2897 = vperm.slane %v2895, 0
    %v2907 = vunpack.c.l.b16 %v2887
    %v2908 = vunpack.c.l.b16 %v2888
    %v2909 = vunpack.c.l.b16 %v2889
    %v2910 = vunpack.c.l.b16 %v2890
    %v2911 = vunpack.c.l.b16 %v2891
    %v2912 = vunpack.c.l.b16 %v2892
    %v2913 = vunpack.c.l.b16 %v2893
    %v2914 = vunpack.c.l.b16 %v2894
    %v2915 = vpack.c.b16 %v2908, %v2907
    %v2916 = vpack.c.b16 %v2910, %v2909
    %v2917 = vpack.c.b16 %v2912, %v2911
    %v2918 = vpack.c.b16 %v2914, %v2913
    %vm2923 = vcmask 523264
    %v2925 = vsel %vm2923, %v2886, 0
    %2927 = vmatpush.bf16.msra.mxu0 0
    %2928 = vmatpush.bf16.msra.mxu0 0
    %2929 = vmatpush.bf16.msra.mxu0 0
    %2930 = vmatpush.bf16.msra.mxu0 0
    %2931 = vmatpush.bf16.msra.mxu0 %v2918
    %2932 = vmatpush.bf16.msra.mxu0 %v2917
    %2933 = vmatpush.bf16.msra.mxu0 %v2916
    %2934 = vmatpush.bf16.msra.mxu0 %v2915
    %2935 = vmatmul.bf16.gmra.mxu0 %v2925
    %v2936 = vpop.f32.mrf.mxu0
    %v2937 = vadd.f32 %v2897, %v2936
    %v2938 = vpop.f32.mrf.mxu0
    %2939 = vdwg.mxu0
    %vm2940 = vcmask 74752
    %2941 = vst.msk [vmem:[#allocation2] sm:$0x3] %vm2940, %v2937
    // Predicated region
    $region22: #{netf1_forward.3} parent=1 // pred_check
      _
    $region23: #{netf1_forward.3} parent=1 // pred_check_branch
      %2943 = sbr.rel (0) target = $region25
    $region24: #{netf1_forward.3} parent=1 // pred_region
      %2945 = vsyncadd [#allocation3], 0
      %s2947 = sshll.u32 [#allocation2], 4
      %s2948 = int_to_ptr.vmem [resolvable:$true] %s2947
      %s2949 = sshll.u32 %s5, 4
      %s2950 = int_to_ptr.hbm [resolvable:$true] %s2949
      %2952 = dma.vmem_to_hbm [thread:$0]  %s2948, 32, %s2950, [#allocation3]
    $region25: #{netf1_forward.3} parent=1 // pred_fallthru
      _
    // Predicated region
    $region26: #{netf1_forward.3} parent=1 // pred_check
      _
    $region27: #{netf1_forward.3} parent=1 // pred_check_branch
      %2954 = sbr.rel (0) target = $region29
    $region28: #{netf1_forward.3} parent=1 // pred_region
      %2956 = dma.done [#allocation3], 32
    $region29: #{netf1_forward.3} parent=1 // pred_fallthru
      _
    %2957 = vsyncpa [#allocation3], 1

// kernel: netf1_forward.2
$region0: #{netf1_forward.2}
  #allocation0 [shape = 'u32[]', space=smem, size = 0x4, offset = 0x4, fixed_abs, tag = 'smem constant byte address 0x4 - core index']
  #allocation1 [shape = 'u32[72,128]{1,0:T(1,128)}', space=vmem, size = 0x9000, scoped, tag = 'internal scratch']
  #allocation2 [shape = 'f32[26,32,16]{2,1,0:T(8,128)}', space=vmem, size = 0x68000, scoped, tag = 'scratch operand']
  #allocation3 [shape = 'f32[12,24,32]{2,1,0:T(8,128)}', space=vmem, size = 0x24000, scoped, tag = 'scratch operand']
  %s0 = inlined_call_operand.vmem [shape: bf16[2,832,9], index: 0, kind: input, shape index: {}]
  %s1 = inlined_call_operand.vmem [shape: bf16[9,16], index: 1, kind: input, shape index: {}]
  %s2 = inlined_call_operand.vmem [shape: f32[1,16], index: 2, kind: input, shape index: {}]
  %s3 = inlined_call_operand.vmem [shape: bf16[144,32], index: 3, kind: input, shape index: {}]
  %s4 = inlined_call_operand.vmem [shape: f32[1,32], index: 4, kind: input, shape index: {}]
  %s5 = inlined_call_operand.vmem [shape: bf16[2,12,12,32], index: 5, kind: output, shape index: {}]
  %s6 = sld [smem:[#allocation0]]
  $region53: #{netf1_forward.2} parent=0
    _
  %s8 = ssub.s32 1, %s6
  %s9 = scalar_select 0, %s8, %s6
  loop: start=0, step=1, limit=4
  $region2: #{netf1_forward.2} parent=0 // loop_pre_header
    _
  $region3: #{netf1_forward.2} parent=0 // loop_header
    %s11 = sphi 0, %s15
    %p12 = scmp.ge.s32.totalorder %s11, 4
    %s21 = sphi 0, %s23
    %s24 = sphi 0, %s21
    %s25 = sphi 0, %s24
    %s41 = sphi 0, %s25
    %s45 = sphi 0, %s45
    %s47 = sphi 0, %s45
    %s48 = sphi 0, %s47
    %s62 = sphi 0, %s48
    %s66 = sphi 0, %s66
    %s68 = sphi 0, %s66
    %s69 = sphi 0, %s68
    %s83 = sphi 0, %s69
    %s87 = sphi 0, %s87
    %s89 = sphi 0, %s87
    %s90 = sphi 0, %s89
    %s104 = sphi 0, %s90
    %s108 = sphi 0, %s108
    %s110 = sphi 0, %s108
    %s111 = sphi 0, %s110
    %s125 = sphi 0, %s111
    %s131 = sphi 0, %s133
    %s134 = sphi 0, %s131
    %s135 = sphi 0, %s134
    %s151 = sphi 0, %s135
  $region4: #{netf1_forward.2} parent=0 // loop_header_branch
    %14 = sbr.rel (%p12) target = $region8
  $region5: #{netf1_forward.2} parent=0 // loop_body
    %s16 = ssub.s32 %s11, 1
    %s17 = ssub.s32 %s11, 2
    %s18 = sadd.s32 %s11, 1
    %s19 = ssub.s32 %s11, %s18
    %p20 = scmp.eq.s32.totalorder %s19, 0
    %s22 = sadd.s32 %s21, 1
    %s23 = scalar_select %p20, %s21, %s22
    %p26 = pneg %p20
    %p27 = scmp.eq.s32.totalorder %s11, 1
    %p28 = por %p26, %p27
    %p29 = scmp.ne.s32.totalorder %s21, %s24
    %p30 = scmp.eq.s32.totalorder %s11, 0
    %p31 = por %p29, %p30
    %p32 = scmp.ne.s32.totalorder %s21, %s24
    %p33 = scmp.eq.s32.totalorder %s16, 1
    %p34 = por %p32, %p33
    %p35 = scmp.ne.s32.totalorder %s24, %s25
    %p36 = scmp.eq.s32.totalorder %s16, 0
    %p37 = por %p35, %p36
    %p38 = scmp.ne.s32.totalorder %s24, %s25
    %p39 = scmp.eq.s32.totalorder %s17, 1
    %p40 = por %p38, %p39
    %p42 = scmp.ne.s32.totalorder %s25, %s41
    %p43 = scmp.eq.s32.totalorder %s17, 0
    %p44 = por %p42, %p43
    %s46 = sadd.s32 %s45, 1
    %p49 = scmp.eq.s32.totalorder %s11, 1
    %p50 = scmp.ne.s32.totalorder %s45, %s47
    %p51 = scmp.eq.s32.totalorder %s11, 0
    %p52 = por %p50, %p51
    %p53 = scmp.ne.s32.totalorder %s45, %s47
    %p54 = scmp.eq.s32.totalorder %s16, 1
    %p55 = por %p53, %p54
    %p56 = scmp.ne.s32.totalorder %s47, %s48
    %p57 = scmp.eq.s32.totalorder %s16, 0
    %p58 = por %p56, %p57
    %p59 = scmp.ne.s32.totalorder %s47, %s48
    %p60 = scmp.eq.s32.totalorder %s17, 1
    %p61 = por %p59, %p60
    %p63 = scmp.ne.s32.totalorder %s48, %s62
    %p64 = scmp.eq.s32.totalorder %s17, 0
    %p65 = por %p63, %p64
    %s67 = sadd.s32 %s66, 1
    %p70 = scmp.eq.s32.totalorder %s11, 1
    %p71 = scmp.ne.s32.totalorder %s66, %s68
    %p72 = scmp.eq.s32.totalorder %s11, 0
    %p73 = por %p71, %p72
    %p74 = scmp.ne.s32.totalorder %s66, %s68
    %p75 = scmp.eq.s32.totalorder %s16, 1
    %p76 = por %p74, %p75
    %p77 = scmp.ne.s32.totalorder %s68, %s69
    %p78 = scmp.eq.s32.totalorder %s16, 0
    %p79 = por %p77, %p78
    %p80 = scmp.ne.s32.totalorder %s68, %s69
    %p81 = scmp.eq.s32.totalorder %s17, 1
    %p82 = por %p80, %p81
    %p84 = scmp.ne.s32.totalorder %s69, %s83
    %p85 = scmp.eq.s32.totalorder %s17, 0
    %p86 = por %p84, %p85
    %s88 = sadd.s32 %s87, 1
    %p91 = scmp.eq.s32.totalorder %s11, 1
    %p92 = scmp.ne.s32.totalorder %s87, %s89
    %p93 = scmp.eq.s32.totalorder %s11, 0
    %p94 = por %p92, %p93
    %p95 = scmp.ne.s32.totalorder %s87, %s89
    %p96 = scmp.eq.s32.totalorder %s16, 1
    %p97 = por %p95, %p96
    %p98 = scmp.ne.s32.totalorder %s89, %s90
    %p99 = scmp.eq.s32.totalorder %s16, 0
    %p100 = por %p98, %p99
    %p101 = scmp.ne.s32.totalorder %s89, %s90
    %p102 = scmp.eq.s32.totalorder %s17, 1
    %p103 = por %p101, %p102
    %p105 = scmp.ne.s32.totalorder %s90, %s104
    %p106 = scmp.eq.s32.totalorder %s17, 0
    %p107 = por %p105, %p106
    %s109 = sadd.s32 %s108, 1
    %p112 = scmp.eq.s32.totalorder %s11, 1
    %p113 = scmp.ne.s32.totalorder %s108, %s110
    %p114 = scmp.eq.s32.totalorder %s11, 0
    %p115 = por %p113, %p114
    %p116 = scmp.ne.s32.totalorder %s108, %s110
    %p117 = scmp.eq.s32.totalorder %s16, 1
    %p118 = por %p116, %p117
    %p119 = scmp.ne.s32.totalorder %s110, %s111
    %p120 = scmp.eq.s32.totalorder %s16, 0
    %p121 = por %p119, %p120
    %p122 = scmp.ne.s32.totalorder %s110, %s111
    %p123 = scmp.eq.s32.totalorder %s17, 1
    %p124 = por %p122, %p123
    %p126 = scmp.ne.s32.totalorder %s111, %s125
    %p127 = scmp.eq.s32.totalorder %s17, 0
    %p128 = por %p126, %p127
    %s129 = ssub.s32 %s11, %s18
    %p130 = scmp.eq.s32.totalorder %s129, 0
    %s132 = sadd.s32 %s131, 1
    %s133 = scalar_select %p130, %s131, %s132
    %p136 = pneg %p130
    %p137 = scmp.eq.s32.totalorder %s11, 1
    %p138 = por %p136, %p137
    %p139 = scmp.ne.s32.totalorder %s131, %s134
    %p140 = scmp.eq.s32.totalorder %s11, 0
    %p141 = por %p139, %p140
    %p142 = scmp.ne.s32.totalorder %s131, %s134
    %p143 = scmp.eq.s32.totalorder %s16, 1
    %p144 = por %p142, %p143
    %p145 = scmp.ne.s32.totalorder %s134, %s135
    %p146 = scmp.eq.s32.totalorder %s16, 0
    %p147 = por %p145, %p146
    %p148 = scmp.ne.s32.totalorder %s134, %s135
    %p149 = scmp.eq.s32.totalorder %s17, 1
    %p150 = por %p148, %p149
    %p152 = scmp.ne.s32.totalorder %s135, %s151
    %p153 = scmp.eq.s32.totalorder %s17, 0
    %p154 = por %p152, %p153
    %p155 = scmp.le.s32.totalorder 1, %s11
    %p156 = scmp.lt.s32.totalorder %s11, 3
    %p157 = pnand %p155, %p156
    %p158 = pneg %p157
    // Predicated region
    $region9: #{netf1_forward.2} parent=5 // pred_check
      _
    $region10: #{netf1_forward.2} parent=5 // pred_check_branch
      %160 = sbr.rel (%p157) target = $region12
    $region11: #{netf1_forward.2} parent=5 // pred_region
      %s161 = ssub.s32 %s11, 1
      // Predicated region
      $region13: #{netf1_forward.2} parent=11 // pred_check
        %p162 = pneg %p58
      $region14: #{netf1_forward.2} parent=11 // pred_check_branch
        %164 = sbr.rel (%p162) target = $region16
      $region15: #{netf1_forward.2} parent=11 // pred_region
        _
      $region16: #{netf1_forward.2} parent=11 // pred_fallthru
        _
      // Predicated region
      $region17: #{netf1_forward.2} parent=11 // pred_check
        %p165 = pneg %p79
      $region18: #{netf1_forward.2} parent=11 // pred_check_branch
        %167 = sbr.rel (%p165) target = $region20
      $region19: #{netf1_forward.2} parent=11 // pred_region
        _
      $region20: #{netf1_forward.2} parent=11 // pred_fallthru
        _
      // Predicated region
      $region21: #{netf1_forward.2} parent=11 // pred_check
        %p168 = pneg %p100
      $region22: #{netf1_forward.2} parent=11 // pred_check_branch
        %170 = sbr.rel (%p168) target = $region24
      $region23: #{netf1_forward.2} parent=11 // pred_region
        _
      $region24: #{netf1_forward.2} parent=11 // pred_fallthru
        _
      // Predicated region
      $region25: #{netf1_forward.2} parent=11 // pred_check
        %p171 = pneg %p121
      $region26: #{netf1_forward.2} parent=11 // pred_check_branch
        %173 = sbr.rel (%p171) target = $region28
      $region27: #{netf1_forward.2} parent=11 // pred_region
        _
      $region28: #{netf1_forward.2} parent=11 // pred_fallthru
        _
    $region12: #{netf1_forward.2} parent=5 // pred_fallthru
      _
    %p174 = scmp.lt.s32.totalorder %s11, 2
    // Predicated region
    $region29: #{netf1_forward.2} parent=5 // pred_check
      %p175 = pneg %p174
    $region30: #{netf1_forward.2} parent=5 // pred_check_branch
      %177 = sbr.rel (%p175) target = $region32
    $region31: #{netf1_forward.2} parent=5 // pred_region
      // Predicated region
      $region33: #{netf1_forward.2} parent=31 // pred_check
        %p178 = pneg %p31
      $region34: #{netf1_forward.2} parent=31 // pred_check_branch
        %180 = sbr.rel (%p178) target = $region36
      $region35: #{netf1_forward.2} parent=31 // pred_region
        %p181 = scmp.lt.s32.totalorder %s11, 1
        %s182 = scalar_select %p181, %s11, 1
        %s183 = smul.addr %s182, 104
        %s184 = smul.addr %s183, 4
        %s185 = scalar_lea.vmem %s0, %s184
      $region36: #{netf1_forward.2} parent=31 // pred_fallthru
        _
    $region32: #{netf1_forward.2} parent=5 // pred_fallthru
      _
    %p186 = scmp.le.s32.totalorder 1, %s11
    %p187 = scmp.lt.s32.totalorder %s11, 3
    %p188 = pnand %p186, %p187
    %p189 = pneg %p188
    // Predicated region
    $region37: #{netf1_forward.2} parent=5 // pred_check
      _
    $region38: #{netf1_forward.2} parent=5 // pred_check_branch
      %191 = sbr.rel (%p188) target = $region40
    $region39: #{netf1_forward.2} parent=5 // pred_region
      %s192 = ssub.s32 %s11, 1
      %p193 = scmp.lt.s32.totalorder %s16, 1
      %s194 = scalar_select %p193, %s16, 1
      %s195 = smul.addr %s194, 104
      %s196 = smul.addr %s195, 4
      %s197 = scalar_lea.vmem %s0, %s196
      %p198 = pneg %p37
      %p199 = pneg %p34
      %p200 = pneg %p58
      %p201 = pneg %p55
      %p202 = pneg %p79
      %p203 = pneg %p76
      %p204 = pneg %p100
      %p205 = pneg %p97
      %p206 = pneg %p121
      %p207 = pneg %p118
      %p208 = pneg %p147
      %p209 = pneg %p144
      %p210 = scmp.lt.s32.totalorder %s16, 1
      %s211 = scalar_select %p210, %s16, 1
      %s212 = smul.addr %s211, 24
      %s213 = smul.addr %s212, 4
      %s214 = scalar_lea.vmem %s5, %s213
      %p215 = scmp.lt.s32.totalorder %s16, 1
      %s216 = scalar_select %p215, %s16, 1
      %s217 = smul.addr %s216, 104
      %s218 = smul.addr %s217, 4
      %s219 = scalar_lea.vmem %s0, %s218
      %p220 = scmp.lt.s32.totalorder %s16, 1
      %s221 = scalar_select %p220, %s16, 1
      %s222 = smul.addr %s221, 24
      %s223 = smul.addr %s222, 4
      %s224 = scalar_lea.vmem %s5, %s223
      %v226 = vld [vmem:[%s219] sm:$0xf]
      %v227 = vld [vmem:[%s219 + $0x4] sm:$0xf]
      %v228 = vld [vmem:[%s219 + $0x8] sm:$0xf]
      %v229 = vld [vmem:[%s219 + $0xc] sm:$0xf]
      %v230 = vld [vmem:[%s219 + $0x10] sm:$0xf]
      %v231 = vld [vmem:[%s219 + $0x14] sm:$0xf]
      %v232 = vld [vmem:[%s219 + $0x18] sm:$0xf]
      %v233 = vld [vmem:[%s219 + $0x1c] sm:$0xf]
      %v234 = vld [vmem:[%s219 + $0x20] sm:$0xf]
      %v235 = vld [vmem:[%s219 + $0x24] sm:$0xf]
      %v236 = vld [vmem:[%s219 + $0x28] sm:$0xf]
      %v237 = vld [vmem:[%s219 + $0x2c] sm:$0xf]
      %v238 = vld [vmem:[%s219 + $0x30] sm:$0xf]
      %v239 = vld [vmem:[%s219 + $0x34] sm:$0xf]
      %v240 = vld [vmem:[%s219 + $0x38] sm:$0xf]
      %v241 = vld [vmem:[%s219 + $0x3c] sm:$0xf]
      %v242 = vld [vmem:[%s219 + $0x40] sm:$0xf]
      %v243 = vld [vmem:[%s219 + $0x44] sm:$0xf]
      %v244 = vld [vmem:[%s219 + $0x48] sm:$0xf]
      %v245 = vld [vmem:[%s219 + $0x4c] sm:$0xf]
      %v246 = vld [vmem:[%s219 + $0x50] sm:$0xf]
      %v247 = vld [vmem:[%s219 + $0x54] sm:$0xf]
      %v248 = vld [vmem:[%s219 + $0x58] sm:$0xf]
      %v249 = vld [vmem:[%s219 + $0x5c] sm:$0xf]
      %v250 = vld [vmem:[%s219 + $0x60] sm:$0xf]
      %v251 = vld [vmem:[%s219 + $0x64] sm:$0xf]
      %v252 = vld [vmem:[%s219 + $0x68] sm:$0xf]
      %v253 = vld [vmem:[%s219 + $0x6c] sm:$0xf]
      %v254 = vld [vmem:[%s219 + $0x70] sm:$0xf]
      %v255 = vld [vmem:[%s219 + $0x74] sm:$0xf]
      %v256 = vld [vmem:[%s219 + $0x78] sm:$0xf]
      %v257 = vld [vmem:[%s219 + $0x7c] sm:$0xf]
      %v258 = vld [vmem:[%s219 + $0x80] sm:$0xf]
      %v259 = vld [vmem:[%s219 + $0x84] sm:$0xf]
      %v260 = vld [vmem:[%s219 + $0x88] sm:$0xf]
      %v261 = vld [vmem:[%s219 + $0x8c] sm:$0xf]
      %v262 = vld [vmem:[%s219 + $0x90] sm:$0xf]
      %v263 = vld [vmem:[%s219 + $0x94] sm:$0xf]
      %v264 = vld [vmem:[%s219 + $0x98] sm:$0xf]
      %v265 = vld [vmem:[%s219 + $0x9c] sm:$0xf]
      %v266 = vld [vmem:[%s219 + $0xa0] sm:$0xf]
      %v267 = vld [vmem:[%s219 + $0xa4] sm:$0xf]
      %v268 = vld [vmem:[%s219 + $0xa8] sm:$0xf]
      %v269 = vld [vmem:[%s219 + $0xac] sm:$0xf]
      %v270 = vld [vmem:[%s219 + $0xb0] sm:$0xf]
      %v271 = vld [vmem:[%s219 + $0xb4] sm:$0xf]
      %v272 = vld [vmem:[%s219 + $0xb8] sm:$0xf]
      %v273 = vld [vmem:[%s219 + $0xbc] sm:$0xf]
      %v274 = vld [vmem:[%s219 + $0xc0] sm:$0xf]
      %v275 = vld [vmem:[%s219 + $0xc4] sm:$0xf]
      %v276 = vld [vmem:[%s219 + $0xc8] sm:$0xf]
      %v277 = vld [vmem:[%s219 + $0xcc] sm:$0xf]
      %v278 = vld [vmem:[%s219 + $0xd0] sm:$0xf]
      %v279 = vld [vmem:[%s219 + $0xd4] sm:$0xf]
      %v280 = vld [vmem:[%s219 + $0xd8] sm:$0xf]
      %v281 = vld [vmem:[%s219 + $0xdc] sm:$0xf]
      %v282 = vld [vmem:[%s219 + $0xe0] sm:$0xf]
      %v283 = vld [vmem:[%s219 + $0xe4] sm:$0xf]
      %v284 = vld [vmem:[%s219 + $0xe8] sm:$0xf]
      %v285 = vld [vmem:[%s219 + $0xec] sm:$0xf]
      %v286 = vld [vmem:[%s219 + $0xf0] sm:$0xf]
      %v287 = vld [vmem:[%s219 + $0xf4] sm:$0xf]
      %v288 = vld [vmem:[%s219 + $0xf8] sm:$0xf]
      %v289 = vld [vmem:[%s219 + $0xfc] sm:$0xf]
      %v290 = vld [vmem:[%s219 + $0x100] sm:$0xf]
      %v291 = vld [vmem:[%s219 + $0x104] sm:$0xf]
      %v292 = vld [vmem:[%s219 + $0x108] sm:$0xf]
      %v293 = vld [vmem:[%s219 + $0x10c] sm:$0xf]
      %v294 = vld [vmem:[%s219 + $0x110] sm:$0xf]
      %v295 = vld [vmem:[%s219 + $0x114] sm:$0xf]
      %v296 = vld [vmem:[%s219 + $0x118] sm:$0xf]
      %v297 = vld [vmem:[%s219 + $0x11c] sm:$0xf]
      %v298 = vld [vmem:[%s219 + $0x120] sm:$0xf]
      %v299 = vld [vmem:[%s219 + $0x124] sm:$0xf]
      %v300 = vld [vmem:[%s219 + $0x128] sm:$0xf]
      %v301 = vld [vmem:[%s219 + $0x12c] sm:$0xf]
      %v302 = vld [vmem:[%s219 + $0x130] sm:$0xf]
      %v303 = vld [vmem:[%s219 + $0x134] sm:$0xf]
      %v304 = vld [vmem:[%s219 + $0x138] sm:$0xf]
      %v305 = vld [vmem:[%s219 + $0x13c] sm:$0xf]
      %v306 = vld [vmem:[%s219 + $0x140] sm:$0xf]
      %v307 = vld [vmem:[%s219 + $0x144] sm:$0xf]
      %v308 = vld [vmem:[%s219 + $0x148] sm:$0xf]
      %v309 = vld [vmem:[%s219 + $0x14c] sm:$0xf]
      %v310 = vld [vmem:[%s219 + $0x150] sm:$0xf]
      %v311 = vld [vmem:[%s219 + $0x154] sm:$0xf]
      %v312 = vld [vmem:[%s219 + $0x158] sm:$0xf]
      %v313 = vld [vmem:[%s219 + $0x15c] sm:$0xf]
      %v314 = vld [vmem:[%s219 + $0x160] sm:$0xf]
      %v315 = vld [vmem:[%s219 + $0x164] sm:$0xf]
      %v316 = vld [vmem:[%s219 + $0x168] sm:$0xf]
      %v317 = vld [vmem:[%s219 + $0x16c] sm:$0xf]
      %v318 = vld [vmem:[%s219 + $0x170] sm:$0xf]
      %v319 = vld [vmem:[%s219 + $0x174] sm:$0xf]
      %v320 = vld [vmem:[%s219 + $0x178] sm:$0xf]
      %v321 = vld [vmem:[%s219 + $0x17c] sm:$0xf]
      %v322 = vld [vmem:[%s219 + $0x180] sm:$0xf]
      %v323 = vld [vmem:[%s219 + $0x184] sm:$0xf]
      %v324 = vld [vmem:[%s219 + $0x188] sm:$0xf]
      %v325 = vld [vmem:[%s219 + $0x18c] sm:$0xf]
      %v326 = vld [vmem:[%s219 + $0x190] sm:$0xf]
      %v327 = vld [vmem:[%s219 + $0x194] sm:$0xf]
      %v328 = vld [vmem:[%s219 + $0x198] sm:$0xf]
      %v329 = vld [vmem:[%s219 + $0x19c] sm:$0xf]
      %v330 = vld [vmem:[%s1] sm:$0xf]
      %v331 = vld [vmem:[%s1 + $0x4] sm:$0x1]
      %v332 = vld [vmem:[%s2] sm:$0x1]
      %v334 = vperm.slane %v332, 0
      %v440 = vunpack.c.l.b16 %v226
      %v441 = vunpack.c.l.b16 %v227
      %v442 = vunpack.c.l.b16 %v228
      %v443 = vunpack.c.l.b16 %v229
      %v444 = vunpack.c.l.b16 %v230
      %v445 = vunpack.c.l.b16 %v231
      %v446 = vunpack.c.l.b16 %v232
      %v447 = vunpack.c.l.b16 %v233
      %v448 = vunpack.c.l.b16 %v234
      %v449 = vunpack.c.l.b16 %v235
      %v450 = vunpack.c.l.b16 %v236
      %v451 = vunpack.c.l.b16 %v237
      %v452 = vunpack.c.l.b16 %v238
      %v453 = vunpack.c.l.b16 %v239
      %v454 = vunpack.c.l.b16 %v240
      %v455 = vunpack.c.l.b16 %v241
      %v456 = vunpack.c.l.b16 %v242
      %v457 = vunpack.c.l.b16 %v243
      %v458 = vunpack.c.l.b16 %v244
      %v459 = vunpack.c.l.b16 %v245
      %v460 = vunpack.c.l.b16 %v246
      %v461 = vunpack.c.l.b16 %v247
      %v462 = vunpack.c.l.b16 %v248
      %v463 = vunpack.c.l.b16 %v249
      %v464 = vunpack.c.l.b16 %v250
      %v465 = vunpack.c.l.b16 %v251
      %v466 = vunpack.c.l.b16 %v252
      %v467 = vunpack.c.l.b16 %v253
      %v468 = vunpack.c.l.b16 %v254
      %v469 = vunpack.c.l.b16 %v255
      %v470 = vunpack.c.l.b16 %v256
      %v471 = vunpack.c.l.b16 %v257
      %v472 = vunpack.c.l.b16 %v258
      %v473 = vunpack.c.l.b16 %v259
      %v474 = vunpack.c.l.b16 %v260
      %v475 = vunpack.c.l.b16 %v261
      %v476 = vunpack.c.l.b16 %v262
      %v477 = vunpack.c.l.b16 %v263
      %v478 = vunpack.c.l.b16 %v264
      %v479 = vunpack.c.l.b16 %v265
      %v480 = vunpack.c.l.b16 %v266
      %v481 = vunpack.c.l.b16 %v267
      %v482 = vunpack.c.l.b16 %v268
      %v483 = vunpack.c.l.b16 %v269
      %v484 = vunpack.c.l.b16 %v270
      %v485 = vunpack.c.l.b16 %v271
      %v486 = vunpack.c.l.b16 %v272
      %v487 = vunpack.c.l.b16 %v273
      %v488 = vunpack.c.l.b16 %v274
      %v489 = vunpack.c.l.b16 %v275
      %v490 = vunpack.c.l.b16 %v276
      %v491 = vunpack.c.l.b16 %v277
      %v492 = vunpack.c.l.b16 %v278
      %v493 = vunpack.c.l.b16 %v279
      %v494 = vunpack.c.l.b16 %v280
      %v495 = vunpack.c.l.b16 %v281
      %v496 = vunpack.c.l.b16 %v282
      %v497 = vunpack.c.l.b16 %v283
      %v498 = vunpack.c.l.b16 %v284
      %v499 = vunpack.c.l.b16 %v285
      %v500 = vunpack.c.l.b16 %v286
      %v501 = vunpack.c.l.b16 %v287
      %v502 = vunpack.c.l.b16 %v288
      %v503 = vunpack.c.l.b16 %v289
      %v504 = vunpack.c.l.b16 %v290
      %v505 = vunpack.c.l.b16 %v291
      %v506 = vunpack.c.l.b16 %v292
      %v507 = vunpack.c.l.b16 %v293
      %v508 = vunpack.c.l.b16 %v294
      %v509 = vunpack.c.l.b16 %v295
      %v510 = vunpack.c.l.b16 %v296
      %v511 = vunpack.c.l.b16 %v297
      %v512 = vunpack.c.l.b16 %v298
      %v513 = vunpack.c.l.b16 %v299
      %v514 = vunpack.c.l.b16 %v300
      %v515 = vunpack.c.l.b16 %v301
      %v516 = vunpack.c.l.b16 %v302
      %v517 = vunpack.c.l.b16 %v303
      %v518 = vunpack.c.l.b16 %v304
      %v519 = vunpack.c.l.b16 %v305
      %v520 = vunpack.c.l.b16 %v306
      %v521 = vunpack.c.l.b16 %v307
      %v522 = vunpack.c.l.b16 %v308
      %v523 = vunpack.c.l.b16 %v309
      %v524 = vunpack.c.l.b16 %v310
      %v525 = vunpack.c.l.b16 %v311
      %v526 = vunpack.c.l.b16 %v312
      %v527 = vunpack.c.l.b16 %v313
      %v528 = vunpack.c.l.b16 %v314
      %v529 = vunpack.c.l.b16 %v315
      %v530 = vunpack.c.l.b16 %v316
      %v531 = vunpack.c.l.b16 %v317
      %v532 = vunpack.c.l.b16 %v318
      %v533 = vunpack.c.l.b16 %v319
      %v534 = vunpack.c.l.b16 %v320
      %v535 = vunpack.c.l.b16 %v321
      %v536 = vunpack.c.l.b16 %v322
      %v537 = vunpack.c.l.b16 %v323
      %v538 = vunpack.c.l.b16 %v324
      %v539 = vunpack.c.l.b16 %v325
      %v540 = vunpack.c.l.b16 %v326
      %v541 = vunpack.c.l.b16 %v327
      %v542 = vunpack.c.l.b16 %v328
      %v543 = vunpack.c.l.b16 %v329
      %v544 = vpack.c.b16 %v441, %v440
      %v545 = vpack.c.b16 %v443, %v442
      %v546 = vpack.c.b16 %v445, %v444
      %v547 = vpack.c.b16 %v447, %v446
      %v548 = vpack.c.b16 %v449, %v448
      %v549 = vpack.c.b16 %v451, %v450
      %v550 = vpack.c.b16 %v453, %v452
      %v551 = vpack.c.b16 %v455, %v454
      %v552 = vpack.c.b16 %v457, %v456
      %v553 = vpack.c.b16 %v459, %v458
      %v554 = vpack.c.b16 %v461, %v460
      %v555 = vpack.c.b16 %v463, %v462
      %v556 = vpack.c.b16 %v465, %v464
      %v557 = vpack.c.b16 %v467, %v466
      %v558 = vpack.c.b16 %v469, %v468
      %v559 = vpack.c.b16 %v471, %v470
      %v560 = vpack.c.b16 %v473, %v472
      %v561 = vpack.c.b16 %v475, %v474
      %v562 = vpack.c.b16 %v477, %v476
      %v563 = vpack.c.b16 %v479, %v478
      %v564 = vpack.c.b16 %v481, %v480
      %v565 = vpack.c.b16 %v483, %v482
      %v566 = vpack.c.b16 %v485, %v484
      %v567 = vpack.c.b16 %v487, %v486
      %v568 = vpack.c.b16 %v489, %v488
      %v569 = vpack.c.b16 %v491, %v490
      %v570 = vpack.c.b16 %v493, %v492
      %v571 = vpack.c.b16 %v495, %v494
      %v572 = vpack.c.b16 %v497, %v496
      %v573 = vpack.c.b16 %v499, %v498
      %v574 = vpack.c.b16 %v501, %v500
      %v575 = vpack.c.b16 %v503, %v502
      %v576 = vpack.c.b16 %v505, %v504
      %v577 = vpack.c.b16 %v507, %v506
      %v578 = vpack.c.b16 %v509, %v508
      %v579 = vpack.c.b16 %v511, %v510
      %v580 = vpack.c.b16 %v513, %v512
      %v581 = vpack.c.b16 %v515, %v514
      %v582 = vpack.c.b16 %v517, %v516
      %v583 = vpack.c.b16 %v519, %v518
      %v584 = vpack.c.b16 %v521, %v520
      %v585 = vpack.c.b16 %v523, %v522
      %v586 = vpack.c.b16 %v525, %v524
      %v587 = vpack.c.b16 %v527, %v526
      %v588 = vpack.c.b16 %v529, %v528
      %v589 = vpack.c.b16 %v531, %v530
      %v590 = vpack.c.b16 %v533, %v532
      %v591 = vpack.c.b16 %v535, %v534
      %v592 = vpack.c.b16 %v537, %v536
      %v593 = vpack.c.b16 %v539, %v538
      %v594 = vpack.c.b16 %v541, %v540
      %v595 = vpack.c.b16 %v543, %v542
      %v598 = vunpack.c.l.b16 %v330
      %v599 = vunpack.c.l.b16 %v331
      %v600 = vpack.c.b16 %v599, %v598
      %vm601 = vcmask 72704
      %v603 = vsel %vm601, %v544, 0
      %v606 = vsel %vm601, %v545, 0
      %v609 = vsel %vm601, %v546, 0
      %v612 = vsel %vm601, %v547, 0
      %v615 = vsel %vm601, %v548, 0
      %v618 = vsel %vm601, %v549, 0
      %v621 = vsel %vm601, %v550, 0
      %v624 = vsel %vm601, %v551, 0
      %v627 = vsel %vm601, %v552, 0
      %v630 = vsel %vm601, %v553, 0
      %v633 = vsel %vm601, %v554, 0
      %v636 = vsel %vm601, %v555, 0
      %v639 = vsel %vm601, %v556, 0
      %v642 = vsel %vm601, %v557, 0
      %v645 = vsel %vm601, %v558, 0
      %v648 = vsel %vm601, %v559, 0
      %v651 = vsel %vm601, %v560, 0
      %v654 = vsel %vm601, %v561, 0
      %v657 = vsel %vm601, %v562, 0
      %v660 = vsel %vm601, %v563, 0
      %v663 = vsel %vm601, %v564, 0
      %v666 = vsel %vm601, %v565, 0
      %v669 = vsel %vm601, %v566, 0
      %v672 = vsel %vm601, %v567, 0
      %v675 = vsel %vm601, %v568, 0
      %v678 = vsel %vm601, %v569, 0
      %v681 = vsel %vm601, %v570, 0
      %v684 = vsel %vm601, %v571, 0
      %v687 = vsel %vm601, %v572, 0
      %v690 = vsel %vm601, %v573, 0
      %v693 = vsel %vm601, %v574, 0
      %v696 = vsel %vm601, %v575, 0
      %v699 = vsel %vm601, %v576, 0
      %v702 = vsel %vm601, %v577, 0
      %v705 = vsel %vm601, %v578, 0
      %v708 = vsel %vm601, %v579, 0
      %v711 = vsel %vm601, %v580, 0
      %v714 = vsel %vm601, %v581, 0
      %v717 = vsel %vm601, %v582, 0
      %v720 = vsel %vm601, %v583, 0
      %v723 = vsel %vm601, %v584, 0
      %v726 = vsel %vm601, %v585, 0
      %v729 = vsel %vm601, %v586, 0
      %v732 = vsel %vm601, %v587, 0
      %v735 = vsel %vm601, %v588, 0
      %v738 = vsel %vm601, %v589, 0
      %v741 = vsel %vm601, %v590, 0
      %v744 = vsel %vm601, %v591, 0
      %v747 = vsel %vm601, %v592, 0
      %v750 = vsel %vm601, %v593, 0
      %v753 = vsel %vm601, %v594, 0
      %v756 = vsel %vm601, %v595, 0
      %vm758 = vcmask 1043456
      %vm759 = vcmask 1044480
      %v760 = vsel %vm758, 4294967295, 65535
      %v761 = vsel %vm759, %v760, 0
      %v763 = vand.u32 %v600, %v761
      %765 = vmatpush.bf16.msra.mxu0 0
      %766 = vmatpush.bf16.msra.mxu0 0
      %767 = vmatpush.bf16.msra.mxu0 0
      %768 = vmatpush.bf16.msra.mxu0 0
      %769 = vmatpush.bf16.msra.mxu0 0
      %770 = vmatpush.bf16.msra.mxu0 0
      %771 = vmatpush.bf16.msra.mxu0 0
      %772 = vmatpush.bf16.msra.mxu0 %v763
      %773 = vmatmul.bf16.gmra.mxu0 %v603
      %v774 = vpop.f32.mrf.mxu0
      %v775 = vadd.f32 %v334, %v774
      %v776 = vpop.f32.mrf.mxu0
      %v777 = vadd.f32 %v334, %v776
      %778 = vmatmul.bf16.gmra.mxu0 %v606
      %v779 = vpop.f32.mrf.mxu0
      %v780 = vadd.f32 %v334, %v779
      %v781 = vpop.f32.mrf.mxu0
      %v782 = vadd.f32 %v334, %v781
      %783 = vmatmul.bf16.gmra.mxu0 %v609
      %v784 = vpop.f32.mrf.mxu0
      %v785 = vadd.f32 %v334, %v784
      %v786 = vpop.f32.mrf.mxu0
      %v787 = vadd.f32 %v334, %v786
      %788 = vmatmul.bf16.gmra.mxu0 %v612
      %v789 = vpop.f32.mrf.mxu0
      %v790 = vadd.f32 %v334, %v789
      %v791 = vpop.f32.mrf.mxu0
      %v792 = vadd.f32 %v334, %v791
      %793 = vmatmul.bf16.gmra.mxu0 %v615
      %v794 = vpop.f32.mrf.mxu0
      %v795 = vadd.f32 %v334, %v794
      %v796 = vpop.f32.mrf.mxu0
      %v797 = vadd.f32 %v334, %v796
      %798 = vmatmul.bf16.gmra.mxu0 %v618
      %v799 = vpop.f32.mrf.mxu0
      %v800 = vadd.f32 %v334, %v799
      %v801 = vpop.f32.mrf.mxu0
      %v802 = vadd.f32 %v334, %v801
      %803 = vmatmul.bf16.gmra.mxu0 %v621
      %v804 = vpop.f32.mrf.mxu0
      %v805 = vadd.f32 %v334, %v804
      %v806 = vpop.f32.mrf.mxu0
      %v807 = vadd.f32 %v334, %v806
      %808 = vmatmul.bf16.gmra.mxu0 %v624
      %v809 = vpop.f32.mrf.mxu0
      %v810 = vadd.f32 %v334, %v809
      %v811 = vpop.f32.mrf.mxu0
      %v812 = vadd.f32 %v334, %v811
      %813 = vmatmul.bf16.gmra.mxu0 %v627
      %v814 = vpop.f32.mrf.mxu0
      %v815 = vadd.f32 %v334, %v814
      %v816 = vpop.f32.mrf.mxu0
      %v817 = vadd.f32 %v334, %v816
      %818 = vmatmul.bf16.gmra.mxu0 %v630
      %v819 = vpop.f32.mrf.mxu0
      %v820 = vadd.f32 %v334, %v819
      %v821 = vpop.f32.mrf.mxu0
      %v822 = vadd.f32 %v334, %v821
      %823 = vmatmul.bf16.gmra.mxu0 %v633
      %v824 = vpop.f32.mrf.mxu0
      %v825 = vadd.f32 %v334, %v824
      %v826 = vpop.f32.mrf.mxu0
      %v827 = vadd.f32 %v334, %v826
      %828 = vmatmul.bf16.gmra.mxu0 %v636
      %v829 = vpop.f32.mrf.mxu0
      %v830 = vadd.f32 %v334, %v829
      %v831 = vpop.f32.mrf.mxu0
      %v832 = vadd.f32 %v334, %v831
      %833 = vmatmul.bf16.gmra.mxu0 %v639
      %v834 = vpop.f32.mrf.mxu0
      %v835 = vadd.f32 %v334, %v834
      %v836 = vpop.f32.mrf.mxu0
      %v837 = vadd.f32 %v334, %v836
      %838 = vmatmul.bf16.gmra.mxu0 %v642
      %v839 = vpop.f32.mrf.mxu0
      %v840 = vadd.f32 %v334, %v839
      %v841 = vpop.f32.mrf.mxu0
      %v842 = vadd.f32 %v334, %v841
      %843 = vmatmul.bf16.gmra.mxu0 %v645
      %v844 = vpop.f32.mrf.mxu0
      %v845 = vadd.f32 %v334, %v844
      %v846 = vpop.f32.mrf.mxu0
      %v847 = vadd.f32 %v334, %v846
      %848 = vmatmul.bf16.gmra.mxu0 %v648
      %v849 = vpop.f32.mrf.mxu0
      %v850 = vadd.f32 %v334, %v849
      %v851 = vpop.f32.mrf.mxu0
      %v852 = vadd.f32 %v334, %v851
      %853 = vmatmul.bf16.gmra.mxu0 %v651
      %v854 = vpop.f32.mrf.mxu0
      %v855 = vadd.f32 %v334, %v854
      %v856 = vpop.f32.mrf.mxu0
      %v857 = vadd.f32 %v334, %v856
      %858 = vmatmul.bf16.gmra.mxu0 %v654
      %v859 = vpop.f32.mrf.mxu0
      %v860 = vadd.f32 %v334, %v859
      %v861 = vpop.f32.mrf.mxu0
      %v862 = vadd.f32 %v334, %v861
      %863 = vmatmul.bf16.gmra.mxu0 %v657
      %v864 = vpop.f32.mrf.mxu0
      %v865 = vadd.f32 %v334, %v864
      %v866 = vpop.f32.mrf.mxu0
      %v867 = vadd.f32 %v334, %v866
      %868 = vmatmul.bf16.gmra.mxu0 %v660
      %v869 = vpop.f32.mrf.mxu0
      %v870 = vadd.f32 %v334, %v869
      %v871 = vpop.f32.mrf.mxu0
      %v872 = vadd.f32 %v334, %v871
      %873 = vmatmul.bf16.gmra.mxu0 %v663
      %v874 = vpop.f32.mrf.mxu0
      %v875 = vadd.f32 %v334, %v874
      %v876 = vpop.f32.mrf.mxu0
      %v877 = vadd.f32 %v334, %v876
      %878 = vmatmul.bf16.gmra.mxu0 %v666
      %v879 = vpop.f32.mrf.mxu0
      %v880 = vadd.f32 %v334, %v879
      %v881 = vpop.f32.mrf.mxu0
      %v882 = vadd.f32 %v334, %v881
      %883 = vmatmul.bf16.gmra.mxu0 %v669
      %v884 = vpop.f32.mrf.mxu0
      %v885 = vadd.f32 %v334, %v884
      %v886 = vpop.f32.mrf.mxu0
      %v887 = vadd.f32 %v334, %v886
      %888 = vmatmul.bf16.gmra.mxu0 %v672
      %v889 = vpop.f32.mrf.mxu0
      %v890 = vadd.f32 %v334, %v889
      %v891 = vpop.f32.mrf.mxu0
      %v892 = vadd.f32 %v334, %v891
      %893 = vmatmul.bf16.gmra.mxu0 %v675
      %v894 = vpop.f32.mrf.mxu0
      %v895 = vadd.f32 %v334, %v894
      %v896 = vpop.f32.mrf.mxu0
      %v897 = vadd.f32 %v334, %v896
      %898 = vmatmul.bf16.gmra.mxu0 %v678
      %v899 = vpop.f32.mrf.mxu0
      %v900 = vadd.f32 %v334, %v899
      %v901 = vpop.f32.mrf.mxu0
      %v902 = vadd.f32 %v334, %v901
      %903 = vmatmul.bf16.gmra.mxu0 %v681
      %v904 = vpop.f32.mrf.mxu0
      %v905 = vadd.f32 %v334, %v904
      %v906 = vpop.f32.mrf.mxu0
      %v907 = vadd.f32 %v334, %v906
      %908 = vmatmul.bf16.gmra.mxu0 %v684
      %v909 = vpop.f32.mrf.mxu0
      %v910 = vadd.f32 %v334, %v909
      %v911 = vpop.f32.mrf.mxu0
      %v912 = vadd.f32 %v334, %v911
      %913 = vmatmul.bf16.gmra.mxu0 %v687
      %v914 = vpop.f32.mrf.mxu0
      %v915 = vadd.f32 %v334, %v914
      %v916 = vpop.f32.mrf.mxu0
      %v917 = vadd.f32 %v334, %v916
      %918 = vmatmul.bf16.gmra.mxu0 %v690
      %v919 = vpop.f32.mrf.mxu0
      %v920 = vadd.f32 %v334, %v919
      %v921 = vpop.f32.mrf.mxu0
      %v922 = vadd.f32 %v334, %v921
      %923 = vmatmul.bf16.gmra.mxu0 %v693
      %v924 = vpop.f32.mrf.mxu0
      %v925 = vadd.f32 %v334, %v924
      %v926 = vpop.f32.mrf.mxu0
      %v927 = vadd.f32 %v334, %v926
      %928 = vmatmul.bf16.gmra.mxu0 %v696
      %v929 = vpop.f32.mrf.mxu0
      %v930 = vadd.f32 %v334, %v929
      %v931 = vpop.f32.mrf.mxu0
      %v932 = vadd.f32 %v334, %v931
      %933 = vmatmul.bf16.gmra.mxu0 %v699
      %v934 = vpop.f32.mrf.mxu0
      %v935 = vadd.f32 %v334, %v934
      %v936 = vpop.f32.mrf.mxu0
      %v937 = vadd.f32 %v334, %v936
      %938 = vmatmul.bf16.gmra.mxu0 %v702
      %v939 = vpop.f32.mrf.mxu0
      %v940 = vadd.f32 %v334, %v939
      %v941 = vpop.f32.mrf.mxu0
      %v942 = vadd.f32 %v334, %v941
      %943 = vmatmul.bf16.gmra.mxu0 %v705
      %v944 = vpop.f32.mrf.mxu0
      %v945 = vadd.f32 %v334, %v944
      %v946 = vpop.f32.mrf.mxu0
      %v947 = vadd.f32 %v334, %v946
      %948 = vmatmul.bf16.gmra.mxu0 %v708
      %v949 = vpop.f32.mrf.mxu0
      %v950 = vadd.f32 %v334, %v949
      %v951 = vpop.f32.mrf.mxu0
      %v952 = vadd.f32 %v334, %v951
      %953 = vmatmul.bf16.gmra.mxu0 %v711
      %v954 = vpop.f32.mrf.mxu0
      %v955 = vadd.f32 %v334, %v954
      %v956 = vpop.f32.mrf.mxu0
      %v957 = vadd.f32 %v334, %v956
      %958 = vmatmul.bf16.gmra.mxu0 %v714
      %v959 = vpop.f32.mrf.mxu0
      %v960 = vadd.f32 %v334, %v959
      %v961 = vpop.f32.mrf.mxu0
      %v962 = vadd.f32 %v334, %v961
      %963 = vmatmul.bf16.gmra.mxu0 %v717
      %v964 = vpop.f32.mrf.mxu0
      %v965 = vadd.f32 %v334, %v964
      %v966 = vpop.f32.mrf.mxu0
      %v967 = vadd.f32 %v334, %v966
      %968 = vmatmul.bf16.gmra.mxu0 %v720
      %v969 = vpop.f32.mrf.mxu0
      %v970 = vadd.f32 %v334, %v969
      %v971 = vpop.f32.mrf.mxu0
      %v972 = vadd.f32 %v334, %v971
      %973 = vmatmul.bf16.gmra.mxu0 %v723
      %v974 = vpop.f32.mrf.mxu0
      %v975 = vadd.f32 %v334, %v974
      %v976 = vpop.f32.mrf.mxu0
      %v977 = vadd.f32 %v334, %v976
      %978 = vmatmul.bf16.gmra.mxu0 %v726
      %v979 = vpop.f32.mrf.mxu0
      %v980 = vadd.f32 %v334, %v979
      %v981 = vpop.f32.mrf.mxu0
      %v982 = vadd.f32 %v334, %v981
      %983 = vmatmul.bf16.gmra.mxu0 %v729
      %v984 = vpop.f32.mrf.mxu0
      %v985 = vadd.f32 %v334, %v984
      %v986 = vpop.f32.mrf.mxu0
      %v987 = vadd.f32 %v334, %v986
      %988 = vmatmul.bf16.gmra.mxu0 %v732
      %v989 = vpop.f32.mrf.mxu0
      %v990 = vadd.f32 %v334, %v989
      %v991 = vpop.f32.mrf.mxu0
      %v992 = vadd.f32 %v334, %v991
      %993 = vmatmul.bf16.gmra.mxu0 %v735
      %v994 = vpop.f32.mrf.mxu0
      %v995 = vadd.f32 %v334, %v994
      %v996 = vpop.f32.mrf.mxu0
      %v997 = vadd.f32 %v334, %v996
      %998 = vmatmul.bf16.gmra.mxu0 %v738
      %v999 = vpop.f32.mrf.mxu0
      %v1000 = vadd.f32 %v334, %v999
      %v1001 = vpop.f32.mrf.mxu0
      %v1002 = vadd.f32 %v334, %v1001
      %1003 = vmatmul.bf16.gmra.mxu0 %v741
      %v1004 = vpop.f32.mrf.mxu0
      %v1005 = vadd.f32 %v334, %v1004
      %v1006 = vpop.f32.mrf.mxu0
      %v1007 = vadd.f32 %v334, %v1006
      %1008 = vmatmul.bf16.gmra.mxu0 %v744
      %v1009 = vpop.f32.mrf.mxu0
      %v1010 = vadd.f32 %v334, %v1009
      %v1011 = vpop.f32.mrf.mxu0
      %v1012 = vadd.f32 %v334, %v1011
      %1013 = vmatmul.bf16.gmra.mxu0 %v747
      %v1014 = vpop.f32.mrf.mxu0
      %v1015 = vadd.f32 %v334, %v1014
      %v1016 = vpop.f32.mrf.mxu0
      %v1017 = vadd.f32 %v334, %v1016
      %1018 = vmatmul.bf16.gmra.mxu0 %v750
      %v1019 = vpop.f32.mrf.mxu0
      %v1020 = vadd.f32 %v334, %v1019
      %v1021 = vpop.f32.mrf.mxu0
      %v1022 = vadd.f32 %v334, %v1021
      %1023 = vmatmul.bf16.gmra.mxu0 %v753
      %v1024 = vpop.f32.mrf.mxu0
      %v1025 = vadd.f32 %v334, %v1024
      %v1026 = vpop.f32.mrf.mxu0
      %v1027 = vadd.f32 %v334, %v1026
      %1028 = vmatmul.bf16.gmra.mxu0 %v756
      %v1029 = vpop.f32.mrf.mxu0
      %v1030 = vadd.f32 %v334, %v1029
      %v1031 = vpop.f32.mrf.mxu0
      %v1032 = vadd.f32 %v334, %v1031
      %1033 = vdwg.mxu0
      %v1034 = vmax.f32 %v775, 0.0
      %v1035 = vmax.f32 %v777, 0.0
      %v1036 = vmax.f32 %v780, 0.0
      %v1037 = vmax.f32 %v782, 0.0
      %v1038 = vmax.f32 %v785, 0.0
      %v1039 = vmax.f32 %v787, 0.0
      %v1040 = vmax.f32 %v790, 0.0
      %v1041 = vmax.f32 %v792, 0.0
      %v1042 = vmax.f32 %v795, 0.0
      %v1043 = vmax.f32 %v797, 0.0
      %v1044 = vmax.f32 %v800, 0.0
      %v1045 = vmax.f32 %v802, 0.0
      %v1046 = vmax.f32 %v805, 0.0
      %v1047 = vmax.f32 %v807, 0.0
      %v1048 = vmax.f32 %v810, 0.0
      %v1049 = vmax.f32 %v812, 0.0
      %v1050 = vmax.f32 %v815, 0.0
      %v1051 = vmax.f32 %v817, 0.0
      %v1052 = vmax.f32 %v820, 0.0
      %v1053 = vmax.f32 %v822, 0.0
      %v1054 = vmax.f32 %v825, 0.0
      %v1055 = vmax.f32 %v827, 0.0
      %v1056 = vmax.f32 %v830, 0.0
      %v1057 = vmax.f32 %v832, 0.0
      %v1058 = vmax.f32 %v835, 0.0
      %v1059 = vmax.f32 %v837, 0.0
      %v1060 = vmax.f32 %v840, 0.0
      %v1061 = vmax.f32 %v842, 0.0
      %v1062 = vmax.f32 %v845, 0.0
      %v1063 = vmax.f32 %v847, 0.0
      %v1064 = vmax.f32 %v850, 0.0
      %v1065 = vmax.f32 %v852, 0.0
      %v1066 = vmax.f32 %v855, 0.0
      %v1067 = vmax.f32 %v857, 0.0
      %v1068 = vmax.f32 %v860, 0.0
      %v1069 = vmax.f32 %v862, 0.0
      %v1070 = vmax.f32 %v865, 0.0
      %v1071 = vmax.f32 %v867, 0.0
      %v1072 = vmax.f32 %v870, 0.0
      %v1073 = vmax.f32 %v872, 0.0
      %v1074 = vmax.f32 %v875, 0.0
      %v1075 = vmax.f32 %v877, 0.0
      %v1076 = vmax.f32 %v880, 0.0
      %v1077 = vmax.f32 %v882, 0.0
      %v1078 = vmax.f32 %v885, 0.0
      %v1079 = vmax.f32 %v887, 0.0
      %v1080 = vmax.f32 %v890, 0.0
      %v1081 = vmax.f32 %v892, 0.0
      %v1082 = vmax.f32 %v895, 0.0
      %v1083 = vmax.f32 %v897, 0.0
      %v1084 = vmax.f32 %v900, 0.0
      %v1085 = vmax.f32 %v902, 0.0
      %v1086 = vmax.f32 %v905, 0.0
      %v1087 = vmax.f32 %v907, 0.0
      %v1088 = vmax.f32 %v910, 0.0
      %v1089 = vmax.f32 %v912, 0.0
      %v1090 = vmax.f32 %v915, 0.0
      %v1091 = vmax.f32 %v917, 0.0
      %v1092 = vmax.f32 %v920, 0.0
      %v1093 = vmax.f32 %v922, 0.0
      %v1094 = vmax.f32 %v925, 0.0
      %v1095 = vmax.f32 %v927, 0.0
      %v1096 = vmax.f32 %v930, 0.0
      %v1097 = vmax.f32 %v932, 0.0
      %v1098 = vmax.f32 %v935, 0.0
      %v1099 = vmax.f32 %v937, 0.0
      %v1100 = vmax.f32 %v940, 0.0
      %v1101 = vmax.f32 %v942, 0.0
      %v1102 = vmax.f32 %v945, 0.0
      %v1103 = vmax.f32 %v947, 0.0
      %v1104 = vmax.f32 %v950, 0.0
      %v1105 = vmax.f32 %v952, 0.0
      %v1106 = vmax.f32 %v955, 0.0
      %v1107 = vmax.f32 %v957, 0.0
      %v1108 = vmax.f32 %v960, 0.0
      %v1109 = vmax.f32 %v962, 0.0
      %v1110 = vmax.f32 %v965, 0.0
      %v1111 = vmax.f32 %v967, 0.0
      %v1112 = vmax.f32 %v970, 0.0
      %v1113 = vmax.f32 %v972, 0.0
      %v1114 = vmax.f32 %v975, 0.0
      %v1115 = vmax.f32 %v977, 0.0
      %v1116 = vmax.f32 %v980, 0.0
      %v1117 = vmax.f32 %v982, 0.0
      %v1118 = vmax.f32 %v985, 0.0
      %v1119 = vmax.f32 %v987, 0.0
      %v1120 = vmax.f32 %v990, 0.0
      %v1121 = vmax.f32 %v992, 0.0
      %v1122 = vmax.f32 %v995, 0.0
      %v1123 = vmax.f32 %v997, 0.0
      %v1124 = vmax.f32 %v1000, 0.0
      %v1125 = vmax.f32 %v1002, 0.0
      %v1126 = vmax.f32 %v1005, 0.0
      %v1127 = vmax.f32 %v1007, 0.0
      %v1128 = vmax.f32 %v1010, 0.0
      %v1129 = vmax.f32 %v1012, 0.0
      %v1130 = vmax.f32 %v1015, 0.0
      %v1131 = vmax.f32 %v1017, 0.0
      %v1132 = vmax.f32 %v1020, 0.0
      %v1133 = vmax.f32 %v1022, 0.0
      %v1134 = vmax.f32 %v1025, 0.0
      %v1135 = vmax.f32 %v1027, 0.0
      %v1136 = vmax.f32 %v1030, 0.0
      %v1137 = vmax.f32 %v1032, 0.0
      %vm1138 = vcmask 130048
      %1139 = vst.msk [vmem:[#allocation2] sm:$0xff] %vm1138, %v1034
      %1140 = vst.msk [vmem:[#allocation2 + $0x8] sm:$0xff] %vm1138, %v1035
      %1141 = vst.msk [vmem:[#allocation2 + $0x10] sm:$0xff] %vm1138, %v1036
      %1142 = vst.msk [vmem:[#allocation2 + $0x18] sm:$0xff] %vm1138, %v1037
      %1143 = vst.msk [vmem:[#allocation2 + $0x20] sm:$0xff] %vm1138, %v1038
      %1144 = vst.msk [vmem:[#allocation2 + $0x28] sm:$0xff] %vm1138, %v1039
      %1145 = vst.msk [vmem:[#allocation2 + $0x30] sm:$0xff] %vm1138, %v1040
      %1146 = vst.msk [vmem:[#allocation2 + $0x38] sm:$0xff] %vm1138, %v1041
      %1147 = vst.msk [vmem:[#allocation2 + $0x40] sm:$0xff] %vm1138, %v1042
      %1148 = vst.msk [vmem:[#allocation2 + $0x48] sm:$0xff] %vm1138, %v1043
      %1149 = vst.msk [vmem:[#allocation2 + $0x50] sm:$0xff] %vm1138, %v1044
      %1150 = vst.msk [vmem:[#allocation2 + $0x58] sm:$0xff] %vm1138, %v1045
      %1151 = vst.msk [vmem:[#allocation2 + $0x60] sm:$0xff] %vm1138, %v1046
      %1152 = vst.msk [vmem:[#allocation2 + $0x68] sm:$0xff] %vm1138, %v1047
      %1153 = vst.msk [vmem:[#allocation2 + $0x70] sm:$0xff] %vm1138, %v1048
      %1154 = vst.msk [vmem:[#allocation2 + $0x78] sm:$0xff] %vm1138, %v1049
      %1155 = vst.msk [vmem:[#allocation2 + $0x80] sm:$0xff] %vm1138, %v1050
      %1156 = vst.msk [vmem:[#allocation2 + $0x88] sm:$0xff] %vm1138, %v1051
      %1157 = vst.msk [vmem:[#allocation2 + $0x90] sm:$0xff] %vm1138, %v1052
      %1158 = vst.msk [vmem:[#allocation2 + $0x98] sm:$0xff] %vm1138, %v1053
      %1159 = vst.msk [vmem:[#allocation2 + $0xa0] sm:$0xff] %vm1138, %v1054
      %1160 = vst.msk [vmem:[#allocation2 + $0xa8] sm:$0xff] %vm1138, %v1055
      %1161 = vst.msk [vmem:[#allocation2 + $0xb0] sm:$0xff] %vm1138, %v1056
      %1162 = vst.msk [vmem:[#allocation2 + $0xb8] sm:$0xff] %vm1138, %v1057
      %1163 = vst.msk [vmem:[#allocation2 + $0xc0] sm:$0xff] %vm1138, %v1058
      %1164 = vst.msk [vmem:[#allocation2 + $0xc8] sm:$0xff] %vm1138, %v1059
      %1165 = vst.msk [vmem:[#allocation2 + $0xd0] sm:$0xff] %vm1138, %v1060
      %1166 = vst.msk [vmem:[#allocation2 + $0xd8] sm:$0xff] %vm1138, %v1061
      %1167 = vst.msk [vmem:[#allocation2 + $0xe0] sm:$0xff] %vm1138, %v1062
      %1168 = vst.msk [vmem:[#allocation2 + $0xe8] sm:$0xff] %vm1138, %v1063
      %1169 = vst.msk [vmem:[#allocation2 + $0xf0] sm:$0xff] %vm1138, %v1064
      %1170 = vst.msk [vmem:[#allocation2 + $0xf8] sm:$0xff] %vm1138, %v1065
      %1171 = vst.msk [vmem:[#allocation2 + $0x100] sm:$0xff] %vm1138, %v1066
      %1172 = vst.msk [vmem:[#allocation2 + $0x108] sm:$0xff] %vm1138, %v1067
      %1173 = vst.msk [vmem:[#allocation2 + $0x110] sm:$0xff] %vm1138, %v1068
      %1174 = vst.msk [vmem:[#allocation2 + $0x118] sm:$0xff] %vm1138, %v1069
      %1175 = vst.msk [vmem:[#allocation2 + $0x120] sm:$0xff] %vm1138, %v1070
      %1176 = vst.msk [vmem:[#allocation2 + $0x128] sm:$0xff] %vm1138, %v1071
      %1177 = vst.msk [vmem:[#allocation2 + $0x130] sm:$0xff] %vm1138, %v1072
      %1178 = vst.msk [vmem:[#allocation2 + $0x138] sm:$0xff] %vm1138, %v1073
      %1179 = vst.msk [vmem:[#allocation2 + $0x140] sm:$0xff] %vm1138, %v1074
      %1180 = vst.msk [vmem:[#allocation2 + $0x148] sm:$0xff] %vm1138, %v1075
      %1181 = vst.msk [vmem:[#allocation2 + $0x150] sm:$0xff] %vm1138, %v1076
      %1182 = vst.msk [vmem:[#allocation2 + $0x158] sm:$0xff] %vm1138, %v1077
      %1183 = vst.msk [vmem:[#allocation2 + $0x160] sm:$0xff] %vm1138, %v1078
      %1184 = vst.msk [vmem:[#allocation2 + $0x168] sm:$0xff] %vm1138, %v1079
      %1185 = vst.msk [vmem:[#allocation2 + $0x170] sm:$0xff] %vm1138, %v1080
      %1186 = vst.msk [vmem:[#allocation2 + $0x178] sm:$0xff] %vm1138, %v1081
      %1187 = vst.msk [vmem:[#allocation2 + $0x180] sm:$0xff] %vm1138, %v1082
      %1188 = vst.msk [vmem:[#allocation2 + $0x188] sm:$0xff] %vm1138, %v1083
      %1189 = vst.msk [vmem:[#allocation2 + $0x190] sm:$0xff] %vm1138, %v1084
      %1190 = vst.msk [vmem:[#allocation2 + $0x198] sm:$0xff] %vm1138, %v1085
      %1191 = vst.msk [vmem:[#allocation2 + $0x1a0] sm:$0xff] %vm1138, %v1086
      %1192 = vst.msk [vmem:[#allocation2 + $0x1a8] sm:$0xff] %vm1138, %v1087
      %1193 = vst.msk [vmem:[#allocation2 + $0x1b0] sm:$0xff] %vm1138, %v1088
      %1194 = vst.msk [vmem:[#allocation2 + $0x1b8] sm:$0xff] %vm1138, %v1089
      %1195 = vst.msk [vmem:[#allocation2 + $0x1c0] sm:$0xff] %vm1138, %v1090
      %1196 = vst.msk [vmem:[#allocation2 + $0x1c8] sm:$0xff] %vm1138, %v1091
      %1197 = vst.msk [vmem:[#allocation2 + $0x1d0] sm:$0xff] %vm1138, %v1092
      %1198 = vst.msk [vmem:[#allocation2 + $0x1d8] sm:$0xff] %vm1138, %v1093
      %1199 = vst.msk [vmem:[#allocation2 + $0x1e0] sm:$0xff] %vm1138, %v1094
      %1200 = vst.msk [vmem:[#allocation2 + $0x1e8] sm:$0xff] %vm1138, %v1095
      %1201 = vst.msk [vmem:[#allocation2 + $0x1f0] sm:$0xff] %vm1138, %v1096
      %1202 = vst.msk [vmem:[#allocation2 + $0x1f8] sm:$0xff] %vm1138, %v1097
      %1203 = vst.msk [vmem:[#allocation2 + $0x200] sm:$0xff] %vm1138, %v1098
      %1204 = vst.msk [vmem:[#allocation2 + $0x208] sm:$0xff] %vm1138, %v1099
      %1205 = vst.msk [vmem:[#allocation2 + $0x210] sm:$0xff] %vm1138, %v1100
      %1206 = vst.msk [vmem:[#allocation2 + $0x218] sm:$0xff] %vm1138, %v1101
      %1207 = vst.msk [vmem:[#allocation2 + $0x220] sm:$0xff] %vm1138, %v1102
      %1208 = vst.msk [vmem:[#allocation2 + $0x228] sm:$0xff] %vm1138, %v1103
      %1209 = vst.msk [vmem:[#allocation2 + $0x230] sm:$0xff] %vm1138, %v1104
      %1210 = vst.msk [vmem:[#allocation2 + $0x238] sm:$0xff] %vm1138, %v1105
      %1211 = vst.msk [vmem:[#allocation2 + $0x240] sm:$0xff] %vm1138, %v1106
      %1212 = vst.msk [vmem:[#allocation2 + $0x248] sm:$0xff] %vm1138, %v1107
      %1213 = vst.msk [vmem:[#allocation2 + $0x250] sm:$0xff] %vm1138, %v1108
      %1214 = vst.msk [vmem:[#allocation2 + $0x258] sm:$0xff] %vm1138, %v1109
      %1215 = vst.msk [vmem:[#allocation2 + $0x260] sm:$0xff] %vm1138, %v1110
      %1216 = vst.msk [vmem:[#allocation2 + $0x268] sm:$0xff] %vm1138, %v1111
      %1217 = vst.msk [vmem:[#allocation2 + $0x270] sm:$0xff] %vm1138, %v1112
      %1218 = vst.msk [vmem:[#allocation2 + $0x278] sm:$0xff] %vm1138, %v1113
      %1219 = vst.msk [vmem:[#allocation2 + $0x280] sm:$0xff] %vm1138, %v1114
      %1220 = vst.msk [vmem:[#allocation2 + $0x288] sm:$0xff] %vm1138, %v1115
      %1221 = vst.msk [vmem:[#allocation2 + $0x290] sm:$0xff] %vm1138, %v1116
      %1222 = vst.msk [vmem:[#allocation2 + $0x298] sm:$0xff] %vm1138, %v1117
      %1223 = vst.msk [vmem:[#allocation2 + $0x2a0] sm:$0xff] %vm1138, %v1118
      %1224 = vst.msk [vmem:[#allocation2 + $0x2a8] sm:$0xff] %vm1138, %v1119
      %1225 = vst.msk [vmem:[#allocation2 + $0x2b0] sm:$0xff] %vm1138, %v1120
      %1226 = vst.msk [vmem:[#allocation2 + $0x2b8] sm:$0xff] %vm1138, %v1121
      %1227 = vst.msk [vmem:[#allocation2 + $0x2c0] sm:$0xff] %vm1138, %v1122
      %1228 = vst.msk [vmem:[#allocation2 + $0x2c8] sm:$0xff] %vm1138, %v1123
      %1229 = vst.msk [vmem:[#allocation2 + $0x2d0] sm:$0xff] %vm1138, %v1124
      %1230 = vst.msk [vmem:[#allocation2 + $0x2d8] sm:$0xff] %vm1138, %v1125
      %1231 = vst.msk [vmem:[#allocation2 + $0x2e0] sm:$0xff] %vm1138, %v1126
      %1232 = vst.msk [vmem:[#allocation2 + $0x2e8] sm:$0xff] %vm1138, %v1127
      %1233 = vst.msk [vmem:[#allocation2 + $0x2f0] sm:$0xff] %vm1138, %v1128
      %1234 = vst.msk [vmem:[#allocation2 + $0x2f8] sm:$0xff] %vm1138, %v1129
      %1235 = vst.msk [vmem:[#allocation2 + $0x300] sm:$0xff] %vm1138, %v1130
      %1236 = vst.msk [vmem:[#allocation2 + $0x308] sm:$0xff] %vm1138, %v1131
      %1237 = vst.msk [vmem:[#allocation2 + $0x310] sm:$0xff] %vm1138, %v1132
      %1238 = vst.msk [vmem:[#allocation2 + $0x318] sm:$0xff] %vm1138, %v1133
      %1239 = vst.msk [vmem:[#allocation2 + $0x320] sm:$0xff] %vm1138, %v1134
      %1240 = vst.msk [vmem:[#allocation2 + $0x328] sm:$0xff] %vm1138, %v1135
      %1241 = vst.msk [vmem:[#allocation2 + $0x330] sm:$0xff] %vm1138, %v1136
      %1242 = vst.msk [vmem:[#allocation2 + $0x338] sm:$0xff] %vm1138, %v1137
      %v1243 = vld [vmem:[#allocation2] sm:$0xff]
      %v1244 = vld [vmem:[#allocation2 + $0x8] sm:$0xff]
      %v1245 = vld [vmem:[#allocation2 + $0x10] sm:$0xff]
      %v1246 = vld [vmem:[#allocation2 + $0x20] sm:$0xff]
      %v1247 = vld [vmem:[#allocation2 + $0x28] sm:$0xff]
      %v1248 = vld [vmem:[#allocation2 + $0x30] sm:$0xff]
      %v1249 = vld [vmem:[#allocation2 + $0x40] sm:$0xff]
      %v1250 = vld [vmem:[#allocation2 + $0x48] sm:$0xff]
      %v1251 = vld [vmem:[#allocation2 + $0x50] sm:$0xff]
      %v1252 = vld [vmem:[#allocation2 + $0x60] sm:$0xff]
      %v1253 = vld [vmem:[#allocation2 + $0x68] sm:$0xff]
      %v1254 = vld [vmem:[#allocation2 + $0x70] sm:$0xff]
      %v1255 = vld [vmem:[#allocation2 + $0x80] sm:$0xff]
      %v1256 = vld [vmem:[#allocation2 + $0x88] sm:$0xff]
      %v1257 = vld [vmem:[#allocation2 + $0x90] sm:$0xff]
      %v1258 = vld [vmem:[#allocation2 + $0xa0] sm:$0xff]
      %v1259 = vld [vmem:[#allocation2 + $0xa8] sm:$0xff]
      %v1260 = vld [vmem:[#allocation2 + $0xb0] sm:$0xff]
      %v1261 = vld [vmem:[#allocation2 + $0xc0] sm:$0xff]
      %v1262 = vld [vmem:[#allocation2 + $0xc8] sm:$0xff]
      %v1263 = vld [vmem:[#allocation2 + $0xd0] sm:$0xff]
      %v1264 = vld [vmem:[#allocation2 + $0xe0] sm:$0xff]
      %v1265 = vld [vmem:[#allocation2 + $0xe8] sm:$0xff]
      %v1266 = vld [vmem:[#allocation2 + $0xf0] sm:$0xff]
      %v1267 = vld [vmem:[#allocation2 + $0x100] sm:$0xff]
      %v1268 = vld [vmem:[#allocation2 + $0x108] sm:$0xff]
      %v1269 = vld [vmem:[#allocation2 + $0x110] sm:$0xff]
      %v1270 = vld [vmem:[#allocation2 + $0x120] sm:$0xff]
      %v1271 = vld [vmem:[#allocation2 + $0x128] sm:$0xff]
      %v1272 = vld [vmem:[#allocation2 + $0x130] sm:$0xff]
      %v1273 = vld [vmem:[#allocation2 + $0x140] sm:$0xff]
      %v1274 = vld [vmem:[#allocation2 + $0x148] sm:$0xff]
      %v1275 = vld [vmem:[#allocation2 + $0x150] sm:$0xff]
      %v1276 = vld [vmem:[#allocation2 + $0x160] sm:$0xff]
      %v1277 = vld [vmem:[#allocation2 + $0x168] sm:$0xff]
      %v1278 = vld [vmem:[#allocation2 + $0x170] sm:$0xff]
      %v1279 = vld [vmem:[#allocation2 + $0x180] sm:$0xff]
      %v1280 = vld [vmem:[#allocation2 + $0x188] sm:$0xff]
      %v1281 = vld [vmem:[#allocation2 + $0x190] sm:$0xff]
      %v1282 = vld [vmem:[#allocation2 + $0x1a0] sm:$0xff]
      %v1283 = vld [vmem:[#allocation2 + $0x1a8] sm:$0xff]
      %v1284 = vld [vmem:[#allocation2 + $0x1b0] sm:$0xff]
      %v1285 = vld [vmem:[#allocation2 + $0x1c0] sm:$0xff]
      %v1286 = vld [vmem:[#allocation2 + $0x1c8] sm:$0xff]
      %v1287 = vld [vmem:[#allocation2 + $0x1d0] sm:$0xff]
      %v1288 = vld [vmem:[#allocation2 + $0x1e0] sm:$0xff]
      %v1289 = vld [vmem:[#allocation2 + $0x1e8] sm:$0xff]
      %v1290 = vld [vmem:[#allocation2 + $0x1f0] sm:$0xff]
      %v1291 = vld [vmem:[#allocation2 + $0x200] sm:$0xff]
      %v1292 = vld [vmem:[#allocation2 + $0x208] sm:$0xff]
      %v1293 = vld [vmem:[#allocation2 + $0x210] sm:$0xff]
      %v1294 = vld [vmem:[#allocation2 + $0x220] sm:$0xff]
      %v1295 = vld [vmem:[#allocation2 + $0x228] sm:$0xff]
      %v1296 = vld [vmem:[#allocation2 + $0x230] sm:$0xff]
      %v1297 = vld [vmem:[#allocation2 + $0x240] sm:$0xff]
      %v1298 = vld [vmem:[#allocation2 + $0x248] sm:$0xff]
      %v1299 = vld [vmem:[#allocation2 + $0x250] sm:$0xff]
      %v1300 = vld [vmem:[#allocation2 + $0x260] sm:$0xff]
      %v1301 = vld [vmem:[#allocation2 + $0x268] sm:$0xff]
      %v1302 = vld [vmem:[#allocation2 + $0x270] sm:$0xff]
      %v1303 = vld [vmem:[#allocation2 + $0x280] sm:$0xff]
      %v1304 = vld [vmem:[#allocation2 + $0x288] sm:$0xff]
      %v1305 = vld [vmem:[#allocation2 + $0x290] sm:$0xff]
      %v1306 = vld [vmem:[#allocation2 + $0x2a0] sm:$0xff]
      %v1307 = vld [vmem:[#allocation2 + $0x2a8] sm:$0xff]
      %v1308 = vld [vmem:[#allocation2 + $0x2b0] sm:$0xff]
      %v1309 = vld [vmem:[#allocation2 + $0x2c0] sm:$0xff]
      %v1310 = vld [vmem:[#allocation2 + $0x2c8] sm:$0xff]
      %v1311 = vld [vmem:[#allocation2 + $0x2d0] sm:$0xff]
      %v1312 = vld [vmem:[#allocation2 + $0x2e0] sm:$0xff]
      %v1313 = vld [vmem:[#allocation2 + $0x2e8] sm:$0xff]
      %v1314 = vld [vmem:[#allocation2 + $0x2f0] sm:$0xff]
      %v1315 = vpack.c.bf16 %v1243, %v1243
      %v1316 = vpack.c.bf16 %v1244, %v1244
      %v1317 = vpack.c.bf16 %v1245, %v1245
      %v1318 = vpack.c.bf16 %v1246, %v1246
      %v1319 = vpack.c.bf16 %v1247, %v1247
      %v1320 = vpack.c.bf16 %v1248, %v1248
      %v1321 = vpack.c.bf16 %v1249, %v1249
      %v1322 = vpack.c.bf16 %v1250, %v1250
      %v1323 = vpack.c.bf16 %v1251, %v1251
      %v1324 = vpack.c.bf16 %v1252, %v1252
      %v1325 = vpack.c.bf16 %v1253, %v1253
      %v1326 = vpack.c.bf16 %v1254, %v1254
      %v1327 = vpack.c.bf16 %v1255, %v1255
      %v1328 = vpack.c.bf16 %v1256, %v1256
      %v1329 = vpack.c.bf16 %v1257, %v1257
      %v1330 = vpack.c.bf16 %v1258, %v1258
      %v1331 = vpack.c.bf16 %v1259, %v1259
      %v1332 = vpack.c.bf16 %v1260, %v1260
      %v1333 = vpack.c.bf16 %v1261, %v1261
      %v1334 = vpack.c.bf16 %v1262, %v1262
      %v1335 = vpack.c.bf16 %v1263, %v1263
      %v1336 = vpack.c.bf16 %v1264, %v1264
      %v1337 = vpack.c.bf16 %v1265, %v1265
      %v1338 = vpack.c.bf16 %v1266, %v1266
      %v1339 = vpack.c.bf16 %v1267, %v1267
      %v1340 = vpack.c.bf16 %v1268, %v1268
      %v1341 = vpack.c.bf16 %v1269, %v1269
      %v1342 = vpack.c.bf16 %v1270, %v1270
      %v1343 = vpack.c.bf16 %v1271, %v1271
      %v1344 = vpack.c.bf16 %v1272, %v1272
      %v1345 = vpack.c.bf16 %v1273, %v1273
      %v1346 = vpack.c.bf16 %v1274, %v1274
      %v1347 = vpack.c.bf16 %v1275, %v1275
      %v1348 = vpack.c.bf16 %v1276, %v1276
      %v1349 = vpack.c.bf16 %v1277, %v1277
      %v1350 = vpack.c.bf16 %v1278, %v1278
      %v1351 = vpack.c.bf16 %v1279, %v1279
      %v1352 = vpack.c.bf16 %v1280, %v1280
      %v1353 = vpack.c.bf16 %v1281, %v1281
      %v1354 = vpack.c.bf16 %v1282, %v1282
      %v1355 = vpack.c.bf16 %v1283, %v1283
      %v1356 = vpack.c.bf16 %v1284, %v1284
      %v1357 = vpack.c.bf16 %v1285, %v1285
      %v1358 = vpack.c.bf16 %v1286, %v1286
      %v1359 = vpack.c.bf16 %v1287, %v1287
      %v1360 = vpack.c.bf16 %v1288, %v1288
      %v1361 = vpack.c.bf16 %v1289, %v1289
      %v1362 = vpack.c.bf16 %v1290, %v1290
      %v1363 = vpack.c.bf16 %v1291, %v1291
      %v1364 = vpack.c.bf16 %v1292, %v1292
      %v1365 = vpack.c.bf16 %v1293, %v1293
      %v1366 = vpack.c.bf16 %v1294, %v1294
      %v1367 = vpack.c.bf16 %v1295, %v1295
      %v1368 = vpack.c.bf16 %v1296, %v1296
      %v1369 = vpack.c.bf16 %v1297, %v1297
      %v1370 = vpack.c.bf16 %v1298, %v1298
      %v1371 = vpack.c.bf16 %v1299, %v1299
      %v1372 = vpack.c.bf16 %v1300, %v1300
      %v1373 = vpack.c.bf16 %v1301, %v1301
      %v1374 = vpack.c.bf16 %v1302, %v1302
      %v1375 = vpack.c.bf16 %v1303, %v1303
      %v1376 = vpack.c.bf16 %v1304, %v1304
      %v1377 = vpack.c.bf16 %v1305, %v1305
      %v1378 = vpack.c.bf16 %v1306, %v1306
      %v1379 = vpack.c.bf16 %v1307, %v1307
      %v1380 = vpack.c.bf16 %v1308, %v1308
      %v1381 = vpack.c.bf16 %v1309, %v1309
      %v1382 = vpack.c.bf16 %v1310, %v1310
      %v1383 = vpack.c.bf16 %v1311, %v1311
      %v1384 = vpack.c.bf16 %v1312, %v1312
      %v1385 = vpack.c.bf16 %v1313, %v1313
      %v1386 = vpack.c.bf16 %v1314, %v1314
      %v1387 = vld [vmem:[#allocation2 + $0x1] sm:$0xff]
      %v1388 = vld [vmem:[#allocation2 + $0x9] sm:$0xff]
      %v1389 = vld [vmem:[#allocation2 + $0x11] sm:$0xff]
      %v1390 = vld [vmem:[#allocation2 + $0x21] sm:$0xff]
      %v1391 = vld [vmem:[#allocation2 + $0x29] sm:$0xff]
      %v1392 = vld [vmem:[#allocation2 + $0x31] sm:$0xff]
      %v1393 = vld [vmem:[#allocation2 + $0x41] sm:$0xff]
      %v1394 = vld [vmem:[#allocation2 + $0x49] sm:$0xff]
      %v1395 = vld [vmem:[#allocation2 + $0x51] sm:$0xff]
      %v1396 = vld [vmem:[#allocation2 + $0x61] sm:$0xff]
      %v1397 = vld [vmem:[#allocation2 + $0x69] sm:$0xff]
      %v1398 = vld [vmem:[#allocation2 + $0x71] sm:$0xff]
      %v1399 = vld [vmem:[#allocation2 + $0x81] sm:$0xff]
      %v1400 = vld [vmem:[#allocation2 + $0x89] sm:$0xff]
      %v1401 = vld [vmem:[#allocation2 + $0x91] sm:$0xff]
      %v1402 = vld [vmem:[#allocation2 + $0xa1] sm:$0xff]
      %v1403 = vld [vmem:[#allocation2 + $0xa9] sm:$0xff]
      %v1404 = vld [vmem:[#allocation2 + $0xb1] sm:$0xff]
      %v1405 = vld [vmem:[#allocation2 + $0xc1] sm:$0xff]
      %v1406 = vld [vmem:[#allocation2 + $0xc9] sm:$0xff]
      %v1407 = vld [vmem:[#allocation2 + $0xd1] sm:$0xff]
      %v1408 = vld [vmem:[#allocation2 + $0xe1] sm:$0xff]
      %v1409 = vld [vmem:[#allocation2 + $0xe9] sm:$0xff]
      %v1410 = vld [vmem:[#allocation2 + $0xf1] sm:$0xff]
      %v1411 = vld [vmem:[#allocation2 + $0x101] sm:$0xff]
      %v1412 = vld [vmem:[#allocation2 + $0x109] sm:$0xff]
      %v1413 = vld [vmem:[#allocation2 + $0x111] sm:$0xff]
      %v1414 = vld [vmem:[#allocation2 + $0x121] sm:$0xff]
      %v1415 = vld [vmem:[#allocation2 + $0x129] sm:$0xff]
      %v1416 = vld [vmem:[#allocation2 + $0x131] sm:$0xff]
      %v1417 = vld [vmem:[#allocation2 + $0x141] sm:$0xff]
      %v1418 = vld [vmem:[#allocation2 + $0x149] sm:$0xff]
      %v1419 = vld [vmem:[#allocation2 + $0x151] sm:$0xff]
      %v1420 = vld [vmem:[#allocation2 + $0x161] sm:$0xff]
      %v1421 = vld [vmem:[#allocation2 + $0x169] sm:$0xff]
      %v1422 = vld [vmem:[#allocation2 + $0x171] sm:$0xff]
      %v1423 = vld [vmem:[#allocation2 + $0x181] sm:$0xff]
      %v1424 = vld [vmem:[#allocation2 + $0x189] sm:$0xff]
      %v1425 = vld [vmem:[#allocation2 + $0x191] sm:$0xff]
      %v1426 = vld [vmem:[#allocation2 + $0x1a1] sm:$0xff]
      %v1427 = vld [vmem:[#allocation2 + $0x1a9] sm:$0xff]
      %v1428 = vld [vmem:[#allocation2 + $0x1b1] sm:$0xff]
      %v1429 = vld [vmem:[#allocation2 + $0x1c1] sm:$0xff]
      %v1430 = vld [vmem:[#allocation2 + $0x1c9] sm:$0xff]
      %v1431 = vld [vmem:[#allocation2 + $0x1d1] sm:$0xff]
      %v1432 = vld [vmem:[#allocation2 + $0x1e1] sm:$0xff]
      %v1433 = vld [vmem:[#allocation2 + $0x1e9] sm:$0xff]
      %v1434 = vld [vmem:[#allocation2 + $0x1f1] sm:$0xff]
      %v1435 = vld [vmem:[#allocation2 + $0x201] sm:$0xff]
      %v1436 = vld [vmem:[#allocation2 + $0x209] sm:$0xff]
      %v1437 = vld [vmem:[#allocation2 + $0x211] sm:$0xff]
      %v1438 = vld [vmem:[#allocation2 + $0x221] sm:$0xff]
      %v1439 = vld [vmem:[#allocation2 + $0x229] sm:$0xff]
      %v1440 = vld [vmem:[#allocation2 + $0x231] sm:$0xff]
      %v1441 = vld [vmem:[#allocation2 + $0x241] sm:$0xff]
      %v1442 = vld [vmem:[#allocation2 + $0x249] sm:$0xff]
      %v1443 = vld [vmem:[#allocation2 + $0x251] sm:$0xff]
      %v1444 = vld [vmem:[#allocation2 + $0x261] sm:$0xff]
      %v1445 = vld [vmem:[#allocation2 + $0x269] sm:$0xff]
      %v1446 = vld [vmem:[#allocation2 + $0x271] sm:$0xff]
      %v1447 = vld [vmem:[#allocation2 + $0x281] sm:$0xff]
      %v1448 = vld [vmem:[#allocation2 + $0x289] sm:$0xff]
      %v1449 = vld [vmem:[#allocation2 + $0x291] sm:$0xff]
      %v1450 = vld [vmem:[#allocation2 + $0x2a1] sm:$0xff]
      %v1451 = vld [vmem:[#allocation2 + $0x2a9] sm:$0xff]
      %v1452 = vld [vmem:[#allocation2 + $0x2b1] sm:$0xff]
      %v1453 = vld [vmem:[#allocation2 + $0x2c1] sm:$0xff]
      %v1454 = vld [vmem:[#allocation2 + $0x2c9] sm:$0xff]
      %v1455 = vld [vmem:[#allocation2 + $0x2d1] sm:$0xff]
      %v1456 = vld [vmem:[#allocation2 + $0x2e1] sm:$0xff]
      %v1457 = vld [vmem:[#allocation2 + $0x2e9] sm:$0xff]
      %v1458 = vld [vmem:[#allocation2 + $0x2f1] sm:$0xff]
      %v1459 = vpack.c.bf16 %v1387, %v1387
      %v1460 = vpack.c.bf16 %v1388, %v1388
      %v1461 = vpack.c.bf16 %v1389, %v1389
      %v1462 = vpack.c.bf16 %v1390, %v1390
      %v1463 = vpack.c.bf16 %v1391, %v1391
      %v1464 = vpack.c.bf16 %v1392, %v1392
      %v1465 = vpack.c.bf16 %v1393, %v1393
      %v1466 = vpack.c.bf16 %v1394, %v1394
      %v1467 = vpack.c.bf16 %v1395, %v1395
      %v1468 = vpack.c.bf16 %v1396, %v1396
      %v1469 = vpack.c.bf16 %v1397, %v1397
      %v1470 = vpack.c.bf16 %v1398, %v1398
      %v1471 = vpack.c.bf16 %v1399, %v1399
      %v1472 = vpack.c.bf16 %v1400, %v1400
      %v1473 = vpack.c.bf16 %v1401, %v1401
      %v1474 = vpack.c.bf16 %v1402, %v1402
      %v1475 = vpack.c.bf16 %v1403, %v1403
      %v1476 = vpack.c.bf16 %v1404, %v1404
      %v1477 = vpack.c.bf16 %v1405, %v1405
      %v1478 = vpack.c.bf16 %v1406, %v1406
      %v1479 = vpack.c.bf16 %v1407, %v1407
      %v1480 = vpack.c.bf16 %v1408, %v1408
      %v1481 = vpack.c.bf16 %v1409, %v1409
      %v1482 = vpack.c.bf16 %v1410, %v1410
      %v1483 = vpack.c.bf16 %v1411, %v1411
      %v1484 = vpack.c.bf16 %v1412, %v1412
      %v1485 = vpack.c.bf16 %v1413, %v1413
      %v1486 = vpack.c.bf16 %v1414, %v1414
      %v1487 = vpack.c.bf16 %v1415, %v1415
      %v1488 = vpack.c.bf16 %v1416, %v1416
      %v1489 = vpack.c.bf16 %v1417, %v1417
      %v1490 = vpack.c.bf16 %v1418, %v1418
      %v1491 = vpack.c.bf16 %v1419, %v1419
      %v1492 = vpack.c.bf16 %v1420, %v1420
      %v1493 = vpack.c.bf16 %v1421, %v1421
      %v1494 = vpack.c.bf16 %v1422, %v1422
      %v1495 = vpack.c.bf16 %v1423, %v1423
      %v1496 = vpack.c.bf16 %v1424, %v1424
      %v1497 = vpack.c.bf16 %v1425, %v1425
      %v1498 = vpack.c.bf16 %v1426, %v1426
      %v1499 = vpack.c.bf16 %v1427, %v1427
      %v1500 = vpack.c.bf16 %v1428, %v1428
      %v1501 = vpack.c.bf16 %v1429, %v1429
      %v1502 = vpack.c.bf16 %v1430, %v1430
      %v1503 = vpack.c.bf16 %v1431, %v1431
      %v1504 = vpack.c.bf16 %v1432, %v1432
      %v1505 = vpack.c.bf16 %v1433, %v1433
      %v1506 = vpack.c.bf16 %v1434, %v1434
      %v1507 = vpack.c.bf16 %v1435, %v1435
      %v1508 = vpack.c.bf16 %v1436, %v1436
      %v1509 = vpack.c.bf16 %v1437, %v1437
      %v1510 = vpack.c.bf16 %v1438, %v1438
      %v1511 = vpack.c.bf16 %v1439, %v1439
      %v1512 = vpack.c.bf16 %v1440, %v1440
      %v1513 = vpack.c.bf16 %v1441, %v1441
      %v1514 = vpack.c.bf16 %v1442, %v1442
      %v1515 = vpack.c.bf16 %v1443, %v1443
      %v1516 = vpack.c.bf16 %v1444, %v1444
      %v1517 = vpack.c.bf16 %v1445, %v1445
      %v1518 = vpack.c.bf16 %v1446, %v1446
      %v1519 = vpack.c.bf16 %v1447, %v1447
      %v1520 = vpack.c.bf16 %v1448, %v1448
      %v1521 = vpack.c.bf16 %v1449, %v1449
      %v1522 = vpack.c.bf16 %v1450, %v1450
      %v1523 = vpack.c.bf16 %v1451, %v1451
      %v1524 = vpack.c.bf16 %v1452, %v1452
      %v1525 = vpack.c.bf16 %v1453, %v1453
      %v1526 = vpack.c.bf16 %v1454, %v1454
      %v1527 = vpack.c.bf16 %v1455, %v1455
      %v1528 = vpack.c.bf16 %v1456, %v1456
      %v1529 = vpack.c.bf16 %v1457, %v1457
      %v1530 = vpack.c.bf16 %v1458, %v1458
      %v1531 = vld [vmem:[#allocation2 + $0x2] sm:$0xff]
      %v1532 = vld [vmem:[#allocation2 + $0xa] sm:$0xff]
      %v1533 = vld [vmem:[#allocation2 + $0x12] sm:$0xff]
      %v1534 = vld [vmem:[#allocation2 + $0x22] sm:$0xff]
      %v1535 = vld [vmem:[#allocation2 + $0x2a] sm:$0xff]
      %v1536 = vld [vmem:[#allocation2 + $0x32] sm:$0xff]
      %v1537 = vld [vmem:[#allocation2 + $0x42] sm:$0xff]
      %v1538 = vld [vmem:[#allocation2 + $0x4a] sm:$0xff]
      %v1539 = vld [vmem:[#allocation2 + $0x52] sm:$0xff]
      %v1540 = vld [vmem:[#allocation2 + $0x62] sm:$0xff]
      %v1541 = vld [vmem:[#allocation2 + $0x6a] sm:$0xff]
      %v1542 = vld [vmem:[#allocation2 + $0x72] sm:$0xff]
      %v1543 = vld [vmem:[#allocation2 + $0x82] sm:$0xff]
      %v1544 = vld [vmem:[#allocation2 + $0x8a] sm:$0xff]
      %v1545 = vld [vmem:[#allocation2 + $0x92] sm:$0xff]
      %v1546 = vld [vmem:[#allocation2 + $0xa2] sm:$0xff]
      %v1547 = vld [vmem:[#allocation2 + $0xaa] sm:$0xff]
      %v1548 = vld [vmem:[#allocation2 + $0xb2] sm:$0xff]
      %v1549 = vld [vmem:[#allocation2 + $0xc2] sm:$0xff]
      %v1550 = vld [vmem:[#allocation2 + $0xca] sm:$0xff]
      %v1551 = vld [vmem:[#allocation2 + $0xd2] sm:$0xff]
      %v1552 = vld [vmem:[#allocation2 + $0xe2] sm:$0xff]
      %v1553 = vld [vmem:[#allocation2 + $0xea] sm:$0xff]
      %v1554 = vld [vmem:[#allocation2 + $0xf2] sm:$0xff]
      %v1555 = vld [vmem:[#allocation2 + $0x102] sm:$0xff]
      %v1556 = vld [vmem:[#allocation2 + $0x10a] sm:$0xff]
      %v1557 = vld [vmem:[#allocation2 + $0x112] sm:$0xff]
      %v1558 = vld [vmem:[#allocation2 + $0x122] sm:$0xff]
      %v1559 = vld [vmem:[#allocation2 + $0x12a] sm:$0xff]
      %v1560 = vld [vmem:[#allocation2 + $0x132] sm:$0xff]
      %v1561 = vld [vmem:[#allocation2 + $0x142] sm:$0xff]
      %v1562 = vld [vmem:[#allocation2 + $0x14a] sm:$0xff]
      %v1563 = vld [vmem:[#allocation2 + $0x152] sm:$0xff]
      %v1564 = vld [vmem:[#allocation2 + $0x162] sm:$0xff]
      %v1565 = vld [vmem:[#allocation2 + $0x16a] sm:$0xff]
      %v1566 = vld [vmem:[#allocation2 + $0x172] sm:$0xff]
      %v1567 = vld [vmem:[#allocation2 + $0x182] sm:$0xff]
      %v1568 = vld [vmem:[#allocation2 + $0x18a] sm:$0xff]
      %v1569 = vld [vmem:[#allocation2 + $0x192] sm:$0xff]
      %v1570 = vld [vmem:[#allocation2 + $0x1a2] sm:$0xff]
      %v1571 = vld [vmem:[#allocation2 + $0x1aa] sm:$0xff]
      %v1572 = vld [vmem:[#allocation2 + $0x1b2] sm:$0xff]
      %v1573 = vld [vmem:[#allocation2 + $0x1c2] sm:$0xff]
      %v1574 = vld [vmem:[#allocation2 + $0x1ca] sm:$0xff]
      %v1575 = vld [vmem:[#allocation2 + $0x1d2] sm:$0xff]
      %v1576 = vld [vmem:[#allocation2 + $0x1e2] sm:$0xff]
      %v1577 = vld [vmem:[#allocation2 + $0x1ea] sm:$0xff]
      %v1578 = vld [vmem:[#allocation2 + $0x1f2] sm:$0xff]
      %v1579 = vld [vmem:[#allocation2 + $0x202] sm:$0xff]
      %v1580 = vld [vmem:[#allocation2 + $0x20a] sm:$0xff]
      %v1581 = vld [vmem:[#allocation2 + $0x212] sm:$0xff]
      %v1582 = vld [vmem:[#allocation2 + $0x222] sm:$0xff]
      %v1583 = vld [vmem:[#allocation2 + $0x22a] sm:$0xff]
      %v1584 = vld [vmem:[#allocation2 + $0x232] sm:$0xff]
      %v1585 = vld [vmem:[#allocation2 + $0x242] sm:$0xff]
      %v1586 = vld [vmem:[#allocation2 + $0x24a] sm:$0xff]
      %v1587 = vld [vmem:[#allocation2 + $0x252] sm:$0xff]
      %v1588 = vld [vmem:[#allocation2 + $0x262] sm:$0xff]
      %v1589 = vld [vmem:[#allocation2 + $0x26a] sm:$0xff]
      %v1590 = vld [vmem:[#allocation2 + $0x272] sm:$0xff]
      %v1591 = vld [vmem:[#allocation2 + $0x282] sm:$0xff]
      %v1592 = vld [vmem:[#allocation2 + $0x28a] sm:$0xff]
      %v1593 = vld [vmem:[#allocation2 + $0x292] sm:$0xff]
      %v1594 = vld [vmem:[#allocation2 + $0x2a2] sm:$0xff]
      %v1595 = vld [vmem:[#allocation2 + $0x2aa] sm:$0xff]
      %v1596 = vld [vmem:[#allocation2 + $0x2b2] sm:$0xff]
      %v1597 = vld [vmem:[#allocation2 + $0x2c2] sm:$0xff]
      %v1598 = vld [vmem:[#allocation2 + $0x2ca] sm:$0xff]
      %v1599 = vld [vmem:[#allocation2 + $0x2d2] sm:$0xff]
      %v1600 = vld [vmem:[#allocation2 + $0x2e2] sm:$0xff]
      %v1601 = vld [vmem:[#allocation2 + $0x2ea] sm:$0xff]
      %v1602 = vld [vmem:[#allocation2 + $0x2f2] sm:$0xff]
      %v1603 = vpack.c.bf16 %v1531, %v1531
      %v1604 = vpack.c.bf16 %v1532, %v1532
      %v1605 = vpack.c.bf16 %v1533, %v1533
      %v1606 = vpack.c.bf16 %v1534, %v1534
      %v1607 = vpack.c.bf16 %v1535, %v1535
      %v1608 = vpack.c.bf16 %v1536, %v1536
      %v1609 = vpack.c.bf16 %v1537, %v1537
      %v1610 = vpack.c.bf16 %v1538, %v1538
      %v1611 = vpack.c.bf16 %v1539, %v1539
      %v1612 = vpack.c.bf16 %v1540, %v1540
      %v1613 = vpack.c.bf16 %v1541, %v1541
      %v1614 = vpack.c.bf16 %v1542, %v1542
      %v1615 = vpack.c.bf16 %v1543, %v1543
      %v1616 = vpack.c.bf16 %v1544, %v1544
      %v1617 = vpack.c.bf16 %v1545, %v1545
      %v1618 = vpack.c.bf16 %v1546, %v1546
      %v1619 = vpack.c.bf16 %v1547, %v1547
      %v1620 = vpack.c.bf16 %v1548, %v1548
      %v1621 = vpack.c.bf16 %v1549, %v1549
      %v1622 = vpack.c.bf16 %v1550, %v1550
      %v1623 = vpack.c.bf16 %v1551, %v1551
      %v1624 = vpack.c.bf16 %v1552, %v1552
      %v1625 = vpack.c.bf16 %v1553, %v1553
      %v1626 = vpack.c.bf16 %v1554, %v1554
      %v1627 = vpack.c.bf16 %v1555, %v1555
      %v1628 = vpack.c.bf16 %v1556, %v1556
      %v1629 = vpack.c.bf16 %v1557, %v1557
      %v1630 = vpack.c.bf16 %v1558, %v1558
      %v1631 = vpack.c.bf16 %v1559, %v1559
      %v1632 = vpack.c.bf16 %v1560, %v1560
      %v1633 = vpack.c.bf16 %v1561, %v1561
      %v1634 = vpack.c.bf16 %v1562, %v1562
      %v1635 = vpack.c.bf16 %v1563, %v1563
      %v1636 = vpack.c.bf16 %v1564, %v1564
      %v1637 = vpack.c.bf16 %v1565, %v1565
      %v1638 = vpack.c.bf16 %v1566, %v1566
      %v1639 = vpack.c.bf16 %v1567, %v1567
      %v1640 = vpack.c.bf16 %v1568, %v1568
      %v1641 = vpack.c.bf16 %v1569, %v1569
      %v1642 = vpack.c.bf16 %v1570, %v1570
      %v1643 = vpack.c.bf16 %v1571, %v1571
      %v1644 = vpack.c.bf16 %v1572, %v1572
      %v1645 = vpack.c.bf16 %v1573, %v1573
      %v1646 = vpack.c.bf16 %v1574, %v1574
      %v1647 = vpack.c.bf16 %v1575, %v1575
      %v1648 = vpack.c.bf16 %v1576, %v1576
      %v1649 = vpack.c.bf16 %v1577, %v1577
      %v1650 = vpack.c.bf16 %v1578, %v1578
      %v1651 = vpack.c.bf16 %v1579, %v1579
      %v1652 = vpack.c.bf16 %v1580, %v1580
      %v1653 = vpack.c.bf16 %v1581, %v1581
      %v1654 = vpack.c.bf16 %v1582, %v1582
      %v1655 = vpack.c.bf16 %v1583, %v1583
      %v1656 = vpack.c.bf16 %v1584, %v1584
      %v1657 = vpack.c.bf16 %v1585, %v1585
      %v1658 = vpack.c.bf16 %v1586, %v1586
      %v1659 = vpack.c.bf16 %v1587, %v1587
      %v1660 = vpack.c.bf16 %v1588, %v1588
      %v1661 = vpack.c.bf16 %v1589, %v1589
      %v1662 = vpack.c.bf16 %v1590, %v1590
      %v1663 = vpack.c.bf16 %v1591, %v1591
      %v1664 = vpack.c.bf16 %v1592, %v1592
      %v1665 = vpack.c.bf16 %v1593, %v1593
      %v1666 = vpack.c.bf16 %v1594, %v1594
      %v1667 = vpack.c.bf16 %v1595, %v1595
      %v1668 = vpack.c.bf16 %v1596, %v1596
      %v1669 = vpack.c.bf16 %v1597, %v1597
      %v1670 = vpack.c.bf16 %v1598, %v1598
      %v1671 = vpack.c.bf16 %v1599, %v1599
      %v1672 = vpack.c.bf16 %v1600, %v1600
      %v1673 = vpack.c.bf16 %v1601, %v1601
      %v1674 = vpack.c.bf16 %v1602, %v1602
      %s1675 = scalar_lea.vmem [#allocation2], 32
      %v1676 = vld [vmem:[%s1675] sm:$0xff]
      %v1677 = vld [vmem:[%s1675 + $0x8] sm:$0xff]
      %v1678 = vld [vmem:[%s1675 + $0x10] sm:$0xff]
      %v1679 = vld [vmem:[%s1675 + $0x20] sm:$0xff]
      %v1680 = vld [vmem:[%s1675 + $0x28] sm:$0xff]
      %v1681 = vld [vmem:[%s1675 + $0x30] sm:$0xff]
      %v1682 = vld [vmem:[%s1675 + $0x40] sm:$0xff]
      %v1683 = vld [vmem:[%s1675 + $0x48] sm:$0xff]
      %v1684 = vld [vmem:[%s1675 + $0x50] sm:$0xff]
      %v1685 = vld [vmem:[%s1675 + $0x60] sm:$0xff]
      %v1686 = vld [vmem:[%s1675 + $0x68] sm:$0xff]
      %v1687 = vld [vmem:[%s1675 + $0x70] sm:$0xff]
      %v1688 = vld [vmem:[%s1675 + $0x80] sm:$0xff]
      %v1689 = vld [vmem:[%s1675 + $0x88] sm:$0xff]
      %v1690 = vld [vmem:[%s1675 + $0x90] sm:$0xff]
      %v1691 = vld [vmem:[%s1675 + $0xa0] sm:$0xff]
      %v1692 = vld [vmem:[%s1675 + $0xa8] sm:$0xff]
      %v1693 = vld [vmem:[%s1675 + $0xb0] sm:$0xff]
      %v1694 = vld [vmem:[%s1675 + $0xc0] sm:$0xff]
      %v1695 = vld [vmem:[%s1675 + $0xc8] sm:$0xff]
      %v1696 = vld [vmem:[%s1675 + $0xd0] sm:$0xff]
      %v1697 = vld [vmem:[%s1675 + $0xe0] sm:$0xff]
      %v1698 = vld [vmem:[%s1675 + $0xe8] sm:$0xff]
      %v1699 = vld [vmem:[%s1675 + $0xf0] sm:$0xff]
      %v1700 = vld [vmem:[%s1675 + $0x100] sm:$0xff]
      %v1701 = vld [vmem:[%s1675 + $0x108] sm:$0xff]
      %v1702 = vld [vmem:[%s1675 + $0x110] sm:$0xff]
      %v1703 = vld [vmem:[%s1675 + $0x120] sm:$0xff]
      %v1704 = vld [vmem:[%s1675 + $0x128] sm:$0xff]
      %v1705 = vld [vmem:[%s1675 + $0x130] sm:$0xff]
      %v1706 = vld [vmem:[%s1675 + $0x140] sm:$0xff]
      %v1707 = vld [vmem:[%s1675 + $0x148] sm:$0xff]
      %v1708 = vld [vmem:[%s1675 + $0x150] sm:$0xff]
      %v1709 = vld [vmem:[%s1675 + $0x160] sm:$0xff]
      %v1710 = vld [vmem:[%s1675 + $0x168] sm:$0xff]
      %v1711 = vld [vmem:[%s1675 + $0x170] sm:$0xff]
      %v1712 = vld [vmem:[%s1675 + $0x180] sm:$0xff]
      %v1713 = vld [vmem:[%s1675 + $0x188] sm:$0xff]
      %v1714 = vld [vmem:[%s1675 + $0x190] sm:$0xff]
      %v1715 = vld [vmem:[%s1675 + $0x1a0] sm:$0xff]
      %v1716 = vld [vmem:[%s1675 + $0x1a8] sm:$0xff]
      %v1717 = vld [vmem:[%s1675 + $0x1b0] sm:$0xff]
      %v1718 = vld [vmem:[%s1675 + $0x1c0] sm:$0xff]
      %v1719 = vld [vmem:[%s1675 + $0x1c8] sm:$0xff]
      %v1720 = vld [vmem:[%s1675 + $0x1d0] sm:$0xff]
      %v1721 = vld [vmem:[%s1675 + $0x1e0] sm:$0xff]
      %v1722 = vld [vmem:[%s1675 + $0x1e8] sm:$0xff]
      %v1723 = vld [vmem:[%s1675 + $0x1f0] sm:$0xff]
      %v1724 = vld [vmem:[%s1675 + $0x200] sm:$0xff]
      %v1725 = vld [vmem:[%s1675 + $0x208] sm:$0xff]
      %v1726 = vld [vmem:[%s1675 + $0x210] sm:$0xff]
      %v1727 = vld [vmem:[%s1675 + $0x220] sm:$0xff]
      %v1728 = vld [vmem:[%s1675 + $0x228] sm:$0xff]
      %v1729 = vld [vmem:[%s1675 + $0x230] sm:$0xff]
      %v1730 = vld [vmem:[%s1675 + $0x240] sm:$0xff]
      %v1731 = vld [vmem:[%s1675 + $0x248] sm:$0xff]
      %v1732 = vld [vmem:[%s1675 + $0x250] sm:$0xff]
      %v1733 = vld [vmem:[%s1675 + $0x260] sm:$0xff]
      %v1734 = vld [vmem:[%s1675 + $0x268] sm:$0xff]
      %v1735 = vld [vmem:[%s1675 + $0x270] sm:$0xff]
      %v1736 = vld [vmem:[%s1675 + $0x280] sm:$0xff]
      %v1737 = vld [vmem:[%s1675 + $0x288] sm:$0xff]
      %v1738 = vld [vmem:[%s1675 + $0x290] sm:$0xff]
      %v1739 = vld [vmem:[%s1675 + $0x2a0] sm:$0xff]
      %v1740 = vld [vmem:[%s1675 + $0x2a8] sm:$0xff]
      %v1741 = vld [vmem:[%s1675 + $0x2b0] sm:$0xff]
      %v1742 = vld [vmem:[%s1675 + $0x2c0] sm:$0xff]
      %v1743 = vld [vmem:[%s1675 + $0x2c8] sm:$0xff]
      %v1744 = vld [vmem:[%s1675 + $0x2d0] sm:$0xff]
      %v1745 = vld [vmem:[%s1675 + $0x2e0] sm:$0xff]
      %v1746 = vld [vmem:[%s1675 + $0x2e8] sm:$0xff]
      %v1747 = vld [vmem:[%s1675 + $0x2f0] sm:$0xff]
      %v1748 = vpack.c.bf16 %v1676, %v1676
      %v1749 = vpack.c.bf16 %v1677, %v1677
      %v1750 = vpack.c.bf16 %v1678, %v1678
      %v1751 = vpack.c.bf16 %v1679, %v1679
      %v1752 = vpack.c.bf16 %v1680, %v1680
      %v1753 = vpack.c.bf16 %v1681, %v1681
      %v1754 = vpack.c.bf16 %v1682, %v1682
      %v1755 = vpack.c.bf16 %v1683, %v1683
      %v1756 = vpack.c.bf16 %v1684, %v1684
      %v1757 = vpack.c.bf16 %v1685, %v1685
      %v1758 = vpack.c.bf16 %v1686, %v1686
      %v1759 = vpack.c.bf16 %v1687, %v1687
      %v1760 = vpack.c.bf16 %v1688, %v1688
      %v1761 = vpack.c.bf16 %v1689, %v1689
      %v1762 = vpack.c.bf16 %v1690, %v1690
      %v1763 = vpack.c.bf16 %v1691, %v1691
      %v1764 = vpack.c.bf16 %v1692, %v1692
      %v1765 = vpack.c.bf16 %v1693, %v1693
      %v1766 = vpack.c.bf16 %v1694, %v1694
      %v1767 = vpack.c.bf16 %v1695, %v1695
      %v1768 = vpack.c.bf16 %v1696, %v1696
      %v1769 = vpack.c.bf16 %v1697, %v1697
      %v1770 = vpack.c.bf16 %v1698, %v1698
      %v1771 = vpack.c.bf16 %v1699, %v1699
      %v1772 = vpack.c.bf16 %v1700, %v1700
      %v1773 = vpack.c.bf16 %v1701, %v1701
      %v1774 = vpack.c.bf16 %v1702, %v1702
      %v1775 = vpack.c.bf16 %v1703, %v1703
      %v1776 = vpack.c.bf16 %v1704, %v1704
      %v1777 = vpack.c.bf16 %v1705, %v1705
      %v1778 = vpack.c.bf16 %v1706, %v1706
      %v1779 = vpack.c.bf16 %v1707, %v1707
      %v1780 = vpack.c.bf16 %v1708, %v1708
      %v1781 = vpack.c.bf16 %v1709, %v1709
      %v1782 = vpack.c.bf16 %v1710, %v1710
      %v1783 = vpack.c.bf16 %v1711, %v1711
      %v1784 = vpack.c.bf16 %v1712, %v1712
      %v1785 = vpack.c.bf16 %v1713, %v1713
      %v1786 = vpack.c.bf16 %v1714, %v1714
      %v1787 = vpack.c.bf16 %v1715, %v1715
      %v1788 = vpack.c.bf16 %v1716, %v1716
      %v1789 = vpack.c.bf16 %v1717, %v1717
      %v1790 = vpack.c.bf16 %v1718, %v1718
      %v1791 = vpack.c.bf16 %v1719, %v1719
      %v1792 = vpack.c.bf16 %v1720, %v1720
      %v1793 = vpack.c.bf16 %v1721, %v1721
      %v1794 = vpack.c.bf16 %v1722, %v1722
      %v1795 = vpack.c.bf16 %v1723, %v1723
      %v1796 = vpack.c.bf16 %v1724, %v1724
      %v1797 = vpack.c.bf16 %v1725, %v1725
      %v1798 = vpack.c.bf16 %v1726, %v1726
      %v1799 = vpack.c.bf16 %v1727, %v1727
      %v1800 = vpack.c.bf16 %v1728, %v1728
      %v1801 = vpack.c.bf16 %v1729, %v1729
      %v1802 = vpack.c.bf16 %v1730, %v1730
      %v1803 = vpack.c.bf16 %v1731, %v1731
      %v1804 = vpack.c.bf16 %v1732, %v1732
      %v1805 = vpack.c.bf16 %v1733, %v1733
      %v1806 = vpack.c.bf16 %v1734, %v1734
      %v1807 = vpack.c.bf16 %v1735, %v1735
      %v1808 = vpack.c.bf16 %v1736, %v1736
      %v1809 = vpack.c.bf16 %v1737, %v1737
      %v1810 = vpack.c.bf16 %v1738, %v1738
      %v1811 = vpack.c.bf16 %v1739, %v1739
      %v1812 = vpack.c.bf16 %v1740, %v1740
      %v1813 = vpack.c.bf16 %v1741, %v1741
      %v1814 = vpack.c.bf16 %v1742, %v1742
      %v1815 = vpack.c.bf16 %v1743, %v1743
      %v1816 = vpack.c.bf16 %v1744, %v1744
      %v1817 = vpack.c.bf16 %v1745, %v1745
      %v1818 = vpack.c.bf16 %v1746, %v1746
      %v1819 = vpack.c.bf16 %v1747, %v1747
      %v1820 = vld [vmem:[%s1675 + $0x1] sm:$0xff]
      %v1821 = vld [vmem:[%s1675 + $0x9] sm:$0xff]
      %v1822 = vld [vmem:[%s1675 + $0x11] sm:$0xff]
      %v1823 = vld [vmem:[%s1675 + $0x21] sm:$0xff]
      %v1824 = vld [vmem:[%s1675 + $0x29] sm:$0xff]
      %v1825 = vld [vmem:[%s1675 + $0x31] sm:$0xff]
      %v1826 = vld [vmem:[%s1675 + $0x41] sm:$0xff]
      %v1827 = vld [vmem:[%s1675 + $0x49] sm:$0xff]
      %v1828 = vld [vmem:[%s1675 + $0x51] sm:$0xff]
      %v1829 = vld [vmem:[%s1675 + $0x61] sm:$0xff]
      %v1830 = vld [vmem:[%s1675 + $0x69] sm:$0xff]
      %v1831 = vld [vmem:[%s1675 + $0x71] sm:$0xff]
      %v1832 = vld [vmem:[%s1675 + $0x81] sm:$0xff]
      %v1833 = vld [vmem:[%s1675 + $0x89] sm:$0xff]
      %v1834 = vld [vmem:[%s1675 + $0x91] sm:$0xff]
      %v1835 = vld [vmem:[%s1675 + $0xa1] sm:$0xff]
      %v1836 = vld [vmem:[%s1675 + $0xa9] sm:$0xff]
      %v1837 = vld [vmem:[%s1675 + $0xb1] sm:$0xff]
      %v1838 = vld [vmem:[%s1675 + $0xc1] sm:$0xff]
      %v1839 = vld [vmem:[%s1675 + $0xc9] sm:$0xff]
      %v1840 = vld [vmem:[%s1675 + $0xd1] sm:$0xff]
      %v1841 = vld [vmem:[%s1675 + $0xe1] sm:$0xff]
      %v1842 = vld [vmem:[%s1675 + $0xe9] sm:$0xff]
      %v1843 = vld [vmem:[%s1675 + $0xf1] sm:$0xff]
      %v1844 = vld [vmem:[%s1675 + $0x101] sm:$0xff]
      %v1845 = vld [vmem:[%s1675 + $0x109] sm:$0xff]
      %v1846 = vld [vmem:[%s1675 + $0x111] sm:$0xff]
      %v1847 = vld [vmem:[%s1675 + $0x121] sm:$0xff]
      %v1848 = vld [vmem:[%s1675 + $0x129] sm:$0xff]
      %v1849 = vld [vmem:[%s1675 + $0x131] sm:$0xff]
      %v1850 = vld [vmem:[%s1675 + $0x141] sm:$0xff]
      %v1851 = vld [vmem:[%s1675 + $0x149] sm:$0xff]
      %v1852 = vld [vmem:[%s1675 + $0x151] sm:$0xff]
      %v1853 = vld [vmem:[%s1675 + $0x161] sm:$0xff]
      %v1854 = vld [vmem:[%s1675 + $0x169] sm:$0xff]
      %v1855 = vld [vmem:[%s1675 + $0x171] sm:$0xff]
      %v1856 = vld [vmem:[%s1675 + $0x181] sm:$0xff]
      %v1857 = vld [vmem:[%s1675 + $0x189] sm:$0xff]
      %v1858 = vld [vmem:[%s1675 + $0x191] sm:$0xff]
      %v1859 = vld [vmem:[%s1675 + $0x1a1] sm:$0xff]
      %v1860 = vld [vmem:[%s1675 + $0x1a9] sm:$0xff]
      %v1861 = vld [vmem:[%s1675 + $0x1b1] sm:$0xff]
      %v1862 = vld [vmem:[%s1675 + $0x1c1] sm:$0xff]
      %v1863 = vld [vmem:[%s1675 + $0x1c9] sm:$0xff]
      %v1864 = vld [vmem:[%s1675 + $0x1d1] sm:$0xff]
      %v1865 = vld [vmem:[%s1675 + $0x1e1] sm:$0xff]
      %v1866 = vld [vmem:[%s1675 + $0x1e9] sm:$0xff]
      %v1867 = vld [vmem:[%s1675 + $0x1f1] sm:$0xff]
      %v1868 = vld [vmem:[%s1675 + $0x201] sm:$0xff]
      %v1869 = vld [vmem:[%s1675 + $0x209] sm:$0xff]
      %v1870 = vld [vmem:[%s1675 + $0x211] sm:$0xff]
      %v1871 = vld [vmem:[%s1675 + $0x221] sm:$0xff]
      %v1872 = vld [vmem:[%s1675 + $0x229] sm:$0xff]
      %v1873 = vld [vmem:[%s1675 + $0x231] sm:$0xff]
      %v1874 = vld [vmem:[%s1675 + $0x241] sm:$0xff]
      %v1875 = vld [vmem:[%s1675 + $0x249] sm:$0xff]
      %v1876 = vld [vmem:[%s1675 + $0x251] sm:$0xff]
      %v1877 = vld [vmem:[%s1675 + $0x261] sm:$0xff]
      %v1878 = vld [vmem:[%s1675 + $0x269] sm:$0xff]
      %v1879 = vld [vmem:[%s1675 + $0x271] sm:$0xff]
      %v1880 = vld [vmem:[%s1675 + $0x281] sm:$0xff]
      %v1881 = vld [vmem:[%s1675 + $0x289] sm:$0xff]
      %v1882 = vld [vmem:[%s1675 + $0x291] sm:$0xff]
      %v1883 = vld [vmem:[%s1675 + $0x2a1] sm:$0xff]
      %v1884 = vld [vmem:[%s1675 + $0x2a9] sm:$0xff]
      %v1885 = vld [vmem:[%s1675 + $0x2b1] sm:$0xff]
      %v1886 = vld [vmem:[%s1675 + $0x2c1] sm:$0xff]
      %v1887 = vld [vmem:[%s1675 + $0x2c9] sm:$0xff]
      %v1888 = vld [vmem:[%s1675 + $0x2d1] sm:$0xff]
      %v1889 = vld [vmem:[%s1675 + $0x2e1] sm:$0xff]
      %v1890 = vld [vmem:[%s1675 + $0x2e9] sm:$0xff]
      %v1891 = vld [vmem:[%s1675 + $0x2f1] sm:$0xff]
      %v1892 = vpack.c.bf16 %v1820, %v1820
      %v1893 = vpack.c.bf16 %v1821, %v1821
      %v1894 = vpack.c.bf16 %v1822, %v1822
      %v1895 = vpack.c.bf16 %v1823, %v1823
      %v1896 = vpack.c.bf16 %v1824, %v1824
      %v1897 = vpack.c.bf16 %v1825, %v1825
      %v1898 = vpack.c.bf16 %v1826, %v1826
      %v1899 = vpack.c.bf16 %v1827, %v1827
      %v1900 = vpack.c.bf16 %v1828, %v1828
      %v1901 = vpack.c.bf16 %v1829, %v1829
      %v1902 = vpack.c.bf16 %v1830, %v1830
      %v1903 = vpack.c.bf16 %v1831, %v1831
      %v1904 = vpack.c.bf16 %v1832, %v1832
      %v1905 = vpack.c.bf16 %v1833, %v1833
      %v1906 = vpack.c.bf16 %v1834, %v1834
      %v1907 = vpack.c.bf16 %v1835, %v1835
      %v1908 = vpack.c.bf16 %v1836, %v1836
      %v1909 = vpack.c.bf16 %v1837, %v1837
      %v1910 = vpack.c.bf16 %v1838, %v1838
      %v1911 = vpack.c.bf16 %v1839, %v1839
      %v1912 = vpack.c.bf16 %v1840, %v1840
      %v1913 = vpack.c.bf16 %v1841, %v1841
      %v1914 = vpack.c.bf16 %v1842, %v1842
      %v1915 = vpack.c.bf16 %v1843, %v1843
      %v1916 = vpack.c.bf16 %v1844, %v1844
      %v1917 = vpack.c.bf16 %v1845, %v1845
      %v1918 = vpack.c.bf16 %v1846, %v1846
      %v1919 = vpack.c.bf16 %v1847, %v1847
      %v1920 = vpack.c.bf16 %v1848, %v1848
      %v1921 = vpack.c.bf16 %v1849, %v1849
      %v1922 = vpack.c.bf16 %v1850, %v1850
      %v1923 = vpack.c.bf16 %v1851, %v1851
      %v1924 = vpack.c.bf16 %v1852, %v1852
      %v1925 = vpack.c.bf16 %v1853, %v1853
      %v1926 = vpack.c.bf16 %v1854, %v1854
      %v1927 = vpack.c.bf16 %v1855, %v1855
      %v1928 = vpack.c.bf16 %v1856, %v1856
      %v1929 = vpack.c.bf16 %v1857, %v1857
      %v1930 = vpack.c.bf16 %v1858, %v1858
      %v1931 = vpack.c.bf16 %v1859, %v1859
      %v1932 = vpack.c.bf16 %v1860, %v1860
      %v1933 = vpack.c.bf16 %v1861, %v1861
      %v1934 = vpack.c.bf16 %v1862, %v1862
      %v1935 = vpack.c.bf16 %v1863, %v1863
      %v1936 = vpack.c.bf16 %v1864, %v1864
      %v1937 = vpack.c.bf16 %v1865, %v1865
      %v1938 = vpack.c.bf16 %v1866, %v1866
      %v1939 = vpack.c.bf16 %v1867, %v1867
      %v1940 = vpack.c.bf16 %v1868, %v1868
      %v1941 = vpack.c.bf16 %v1869, %v1869
      %v1942 = vpack.c.bf16 %v1870, %v1870
      %v1943 = vpack.c.bf16 %v1871, %v1871
      %v1944 = vpack.c.bf16 %v1872, %v1872
      %v1945 = vpack.c.bf16 %v1873, %v1873
      %v1946 = vpack.c.bf16 %v1874, %v1874
      %v1947 = vpack.c.bf16 %v1875, %v1875
      %v1948 = vpack.c.bf16 %v1876, %v1876
      %v1949 = vpack.c.bf16 %v1877, %v1877
      %v1950 = vpack.c.bf16 %v1878, %v1878
      %v1951 = vpack.c.bf16 %v1879, %v1879
      %v1952 = vpack.c.bf16 %v1880, %v1880
      %v1953 = vpack.c.bf16 %v1881, %v1881
      %v1954 = vpack.c.bf16 %v1882, %v1882
      %v1955 = vpack.c.bf16 %v1883, %v1883
      %v1956 = vpack.c.bf16 %v1884, %v1884
      %v1957 = vpack.c.bf16 %v1885, %v1885
      %v1958 = vpack.c.bf16 %v1886, %v1886
      %v1959 = vpack.c.bf16 %v1887, %v1887
      %v1960 = vpack.c.bf16 %v1888, %v1888
      %v1961 = vpack.c.bf16 %v1889, %v1889
      %v1962 = vpack.c.bf16 %v1890, %v1890
      %v1963 = vpack.c.bf16 %v1891, %v1891
      %v1964 = vld [vmem:[%s1675 + $0x2] sm:$0xff]
      %v1965 = vld [vmem:[%s1675 + $0xa] sm:$0xff]
      %v1966 = vld [vmem:[%s1675 + $0x12] sm:$0xff]
      %v1967 = vld [vmem:[%s1675 + $0x22] sm:$0xff]
      %v1968 = vld [vmem:[%s1675 + $0x2a] sm:$0xff]
      %v1969 = vld [vmem:[%s1675 + $0x32] sm:$0xff]
      %v1970 = vld [vmem:[%s1675 + $0x42] sm:$0xff]
      %v1971 = vld [vmem:[%s1675 + $0x4a] sm:$0xff]
      %v1972 = vld [vmem:[%s1675 + $0x52] sm:$0xff]
      %v1973 = vld [vmem:[%s1675 + $0x62] sm:$0xff]
      %v1974 = vld [vmem:[%s1675 + $0x6a] sm:$0xff]
      %v1975 = vld [vmem:[%s1675 + $0x72] sm:$0xff]
      %v1976 = vld [vmem:[%s1675 + $0x82] sm:$0xff]
      %v1977 = vld [vmem:[%s1675 + $0x8a] sm:$0xff]
      %v1978 = vld [vmem:[%s1675 + $0x92] sm:$0xff]
      %v1979 = vld [vmem:[%s1675 + $0xa2] sm:$0xff]
      %v1980 = vld [vmem:[%s1675 + $0xaa] sm:$0xff]
      %v1981 = vld [vmem:[%s1675 + $0xb2] sm:$0xff]
      %v1982 = vld [vmem:[%s1675 + $0xc2] sm:$0xff]
      %v1983 = vld [vmem:[%s1675 + $0xca] sm:$0xff]
      %v1984 = vld [vmem:[%s1675 + $0xd2] sm:$0xff]
      %v1985 = vld [vmem:[%s1675 + $0xe2] sm:$0xff]
      %v1986 = vld [vmem:[%s1675 + $0xea] sm:$0xff]
      %v1987 = vld [vmem:[%s1675 + $0xf2] sm:$0xff]
      %v1988 = vld [vmem:[%s1675 + $0x102] sm:$0xff]
      %v1989 = vld [vmem:[%s1675 + $0x10a] sm:$0xff]
      %v1990 = vld [vmem:[%s1675 + $0x112] sm:$0xff]
      %v1991 = vld [vmem:[%s1675 + $0x122] sm:$0xff]
      %v1992 = vld [vmem:[%s1675 + $0x12a] sm:$0xff]
      %v1993 = vld [vmem:[%s1675 + $0x132] sm:$0xff]
      %v1994 = vld [vmem:[%s1675 + $0x142] sm:$0xff]
      %v1995 = vld [vmem:[%s1675 + $0x14a] sm:$0xff]
      %v1996 = vld [vmem:[%s1675 + $0x152] sm:$0xff]
      %v1997 = vld [vmem:[%s1675 + $0x162] sm:$0xff]
      %v1998 = vld [vmem:[%s1675 + $0x16a] sm:$0xff]
      %v1999 = vld [vmem:[%s1675 + $0x172] sm:$0xff]
      %v2000 = vld [vmem:[%s1675 + $0x182] sm:$0xff]
      %v2001 = vld [vmem:[%s1675 + $0x18a] sm:$0xff]
      %v2002 = vld [vmem:[%s1675 + $0x192] sm:$0xff]
      %v2003 = vld [vmem:[%s1675 + $0x1a2] sm:$0xff]
      %v2004 = vld [vmem:[%s1675 + $0x1aa] sm:$0xff]
      %v2005 = vld [vmem:[%s1675 + $0x1b2] sm:$0xff]
      %v2006 = vld [vmem:[%s1675 + $0x1c2] sm:$0xff]
      %v2007 = vld [vmem:[%s1675 + $0x1ca] sm:$0xff]
      %v2008 = vld [vmem:[%s1675 + $0x1d2] sm:$0xff]
      %v2009 = vld [vmem:[%s1675 + $0x1e2] sm:$0xff]
      %v2010 = vld [vmem:[%s1675 + $0x1ea] sm:$0xff]
      %v2011 = vld [vmem:[%s1675 + $0x1f2] sm:$0xff]
      %v2012 = vld [vmem:[%s1675 + $0x202] sm:$0xff]
      %v2013 = vld [vmem:[%s1675 + $0x20a] sm:$0xff]
      %v2014 = vld [vmem:[%s1675 + $0x212] sm:$0xff]
      %v2015 = vld [vmem:[%s1675 + $0x222] sm:$0xff]
      %v2016 = vld [vmem:[%s1675 + $0x22a] sm:$0xff]
      %v2017 = vld [vmem:[%s1675 + $0x232] sm:$0xff]
      %v2018 = vld [vmem:[%s1675 + $0x242] sm:$0xff]
      %v2019 = vld [vmem:[%s1675 + $0x24a] sm:$0xff]
      %v2020 = vld [vmem:[%s1675 + $0x252] sm:$0xff]
      %v2021 = vld [vmem:[%s1675 + $0x262] sm:$0xff]
      %v2022 = vld [vmem:[%s1675 + $0x26a] sm:$0xff]
      %v2023 = vld [vmem:[%s1675 + $0x272] sm:$0xff]
      %v2024 = vld [vmem:[%s1675 + $0x282] sm:$0xff]
      %v2025 = vld [vmem:[%s1675 + $0x28a] sm:$0xff]
      %v2026 = vld [vmem:[%s1675 + $0x292] sm:$0xff]
      %v2027 = vld [vmem:[%s1675 + $0x2a2] sm:$0xff]
      %v2028 = vld [vmem:[%s1675 + $0x2aa] sm:$0xff]
      %v2029 = vld [vmem:[%s1675 + $0x2b2] sm:$0xff]
      %v2030 = vld [vmem:[%s1675 + $0x2c2] sm:$0xff]
      %v2031 = vld [vmem:[%s1675 + $0x2ca] sm:$0xff]
      %v2032 = vld [vmem:[%s1675 + $0x2d2] sm:$0xff]
      %v2033 = vld [vmem:[%s1675 + $0x2e2] sm:$0xff]
      %v2034 = vld [vmem:[%s1675 + $0x2ea] sm:$0xff]
      %v2035 = vld [vmem:[%s1675 + $0x2f2] sm:$0xff]
      %v2036 = vpack.c.bf16 %v1964, %v1964
      %v2037 = vpack.c.bf16 %v1965, %v1965
      %v2038 = vpack.c.bf16 %v1966, %v1966
      %v2039 = vpack.c.bf16 %v1967, %v1967
      %v2040 = vpack.c.bf16 %v1968, %v1968
      %v2041 = vpack.c.bf16 %v1969, %v1969
      %v2042 = vpack.c.bf16 %v1970, %v1970
      %v2043 = vpack.c.bf16 %v1971, %v1971
      %v2044 = vpack.c.bf16 %v1972, %v1972
      %v2045 = vpack.c.bf16 %v1973, %v1973
      %v2046 = vpack.c.bf16 %v1974, %v1974
      %v2047 = vpack.c.bf16 %v1975, %v1975
      %v2048 = vpack.c.bf16 %v1976, %v1976
      %v2049 = vpack.c.bf16 %v1977, %v1977
      %v2050 = vpack.c.bf16 %v1978, %v1978
      %v2051 = vpack.c.bf16 %v1979, %v1979
      %v2052 = vpack.c.bf16 %v1980, %v1980
      %v2053 = vpack.c.bf16 %v1981, %v1981
      %v2054 = vpack.c.bf16 %v1982, %v1982
      %v2055 = vpack.c.bf16 %v1983, %v1983
      %v2056 = vpack.c.bf16 %v1984, %v1984
      %v2057 = vpack.c.bf16 %v1985, %v1985
      %v2058 = vpack.c.bf16 %v1986, %v1986
      %v2059 = vpack.c.bf16 %v1987, %v1987
      %v2060 = vpack.c.bf16 %v1988, %v1988
      %v2061 = vpack.c.bf16 %v1989, %v1989
      %v2062 = vpack.c.bf16 %v1990, %v1990
      %v2063 = vpack.c.bf16 %v1991, %v1991
      %v2064 = vpack.c.bf16 %v1992, %v1992
      %v2065 = vpack.c.bf16 %v1993, %v1993
      %v2066 = vpack.c.bf16 %v1994, %v1994
      %v2067 = vpack.c.bf16 %v1995, %v1995
      %v2068 = vpack.c.bf16 %v1996, %v1996
      %v2069 = vpack.c.bf16 %v1997, %v1997
      %v2070 = vpack.c.bf16 %v1998, %v1998
      %v2071 = vpack.c.bf16 %v1999, %v1999
      %v2072 = vpack.c.bf16 %v2000, %v2000
      %v2073 = vpack.c.bf16 %v2001, %v2001
      %v2074 = vpack.c.bf16 %v2002, %v2002
      %v2075 = vpack.c.bf16 %v2003, %v2003
      %v2076 = vpack.c.bf16 %v2004, %v2004
      %v2077 = vpack.c.bf16 %v2005, %v2005
      %v2078 = vpack.c.bf16 %v2006, %v2006
      %v2079 = vpack.c.bf16 %v2007, %v2007
      %v2080 = vpack.c.bf16 %v2008, %v2008
      %v2081 = vpack.c.bf16 %v2009, %v2009
      %v2082 = vpack.c.bf16 %v2010, %v2010
      %v2083 = vpack.c.bf16 %v2011, %v2011
      %v2084 = vpack.c.bf16 %v2012, %v2012
      %v2085 = vpack.c.bf16 %v2013, %v2013
      %v2086 = vpack.c.bf16 %v2014, %v2014
      %v2087 = vpack.c.bf16 %v2015, %v2015
      %v2088 = vpack.c.bf16 %v2016, %v2016
      %v2089 = vpack.c.bf16 %v2017, %v2017
      %v2090 = vpack.c.bf16 %v2018, %v2018
      %v2091 = vpack.c.bf16 %v2019, %v2019
      %v2092 = vpack.c.bf16 %v2020, %v2020
      %v2093 = vpack.c.bf16 %v2021, %v2021
      %v2094 = vpack.c.bf16 %v2022, %v2022
      %v2095 = vpack.c.bf16 %v2023, %v2023
      %v2096 = vpack.c.bf16 %v2024, %v2024
      %v2097 = vpack.c.bf16 %v2025, %v2025
      %v2098 = vpack.c.bf16 %v2026, %v2026
      %v2099 = vpack.c.bf16 %v2027, %v2027
      %v2100 = vpack.c.bf16 %v2028, %v2028
      %v2101 = vpack.c.bf16 %v2029, %v2029
      %v2102 = vpack.c.bf16 %v2030, %v2030
      %v2103 = vpack.c.bf16 %v2031, %v2031
      %v2104 = vpack.c.bf16 %v2032, %v2032
      %v2105 = vpack.c.bf16 %v2033, %v2033
      %v2106 = vpack.c.bf16 %v2034, %v2034
      %v2107 = vpack.c.bf16 %v2035, %v2035
      %s2108 = scalar_lea.vmem [#allocation2], 64
      %v2109 = vld [vmem:[%s2108] sm:$0xff]
      %v2110 = vld [vmem:[%s2108 + $0x8] sm:$0xff]
      %v2111 = vld [vmem:[%s2108 + $0x10] sm:$0xff]
      %v2112 = vld [vmem:[%s2108 + $0x20] sm:$0xff]
      %v2113 = vld [vmem:[%s2108 + $0x28] sm:$0xff]
      %v2114 = vld [vmem:[%s2108 + $0x30] sm:$0xff]
      %v2115 = vld [vmem:[%s2108 + $0x40] sm:$0xff]
      %v2116 = vld [vmem:[%s2108 + $0x48] sm:$0xff]
      %v2117 = vld [vmem:[%s2108 + $0x50] sm:$0xff]
      %v2118 = vld [vmem:[%s2108 + $0x60] sm:$0xff]
      %v2119 = vld [vmem:[%s2108 + $0x68] sm:$0xff]
      %v2120 = vld [vmem:[%s2108 + $0x70] sm:$0xff]
      %v2121 = vld [vmem:[%s2108 + $0x80] sm:$0xff]
      %v2122 = vld [vmem:[%s2108 + $0x88] sm:$0xff]
      %v2123 = vld [vmem:[%s2108 + $0x90] sm:$0xff]
      %v2124 = vld [vmem:[%s2108 + $0xa0] sm:$0xff]
      %v2125 = vld [vmem:[%s2108 + $0xa8] sm:$0xff]
      %v2126 = vld [vmem:[%s2108 + $0xb0] sm:$0xff]
      %v2127 = vld [vmem:[%s2108 + $0xc0] sm:$0xff]
      %v2128 = vld [vmem:[%s2108 + $0xc8] sm:$0xff]
      %v2129 = vld [vmem:[%s2108 + $0xd0] sm:$0xff]
      %v2130 = vld [vmem:[%s2108 + $0xe0] sm:$0xff]
      %v2131 = vld [vmem:[%s2108 + $0xe8] sm:$0xff]
      %v2132 = vld [vmem:[%s2108 + $0xf0] sm:$0xff]
      %v2133 = vld [vmem:[%s2108 + $0x100] sm:$0xff]
      %v2134 = vld [vmem:[%s2108 + $0x108] sm:$0xff]
      %v2135 = vld [vmem:[%s2108 + $0x110] sm:$0xff]
      %v2136 = vld [vmem:[%s2108 + $0x120] sm:$0xff]
      %v2137 = vld [vmem:[%s2108 + $0x128] sm:$0xff]
      %v2138 = vld [vmem:[%s2108 + $0x130] sm:$0xff]
      %v2139 = vld [vmem:[%s2108 + $0x140] sm:$0xff]
      %v2140 = vld [vmem:[%s2108 + $0x148] sm:$0xff]
      %v2141 = vld [vmem:[%s2108 + $0x150] sm:$0xff]
      %v2142 = vld [vmem:[%s2108 + $0x160] sm:$0xff]
      %v2143 = vld [vmem:[%s2108 + $0x168] sm:$0xff]
      %v2144 = vld [vmem:[%s2108 + $0x170] sm:$0xff]
      %v2145 = vld [vmem:[%s2108 + $0x180] sm:$0xff]
      %v2146 = vld [vmem:[%s2108 + $0x188] sm:$0xff]
      %v2147 = vld [vmem:[%s2108 + $0x190] sm:$0xff]
      %v2148 = vld [vmem:[%s2108 + $0x1a0] sm:$0xff]
      %v2149 = vld [vmem:[%s2108 + $0x1a8] sm:$0xff]
      %v2150 = vld [vmem:[%s2108 + $0x1b0] sm:$0xff]
      %v2151 = vld [vmem:[%s2108 + $0x1c0] sm:$0xff]
      %v2152 = vld [vmem:[%s2108 + $0x1c8] sm:$0xff]
      %v2153 = vld [vmem:[%s2108 + $0x1d0] sm:$0xff]
      %v2154 = vld [vmem:[%s2108 + $0x1e0] sm:$0xff]
      %v2155 = vld [vmem:[%s2108 + $0x1e8] sm:$0xff]
      %v2156 = vld [vmem:[%s2108 + $0x1f0] sm:$0xff]
      %v2157 = vld [vmem:[%s2108 + $0x200] sm:$0xff]
      %v2158 = vld [vmem:[%s2108 + $0x208] sm:$0xff]
      %v2159 = vld [vmem:[%s2108 + $0x210] sm:$0xff]
      %v2160 = vld [vmem:[%s2108 + $0x220] sm:$0xff]
      %v2161 = vld [vmem:[%s2108 + $0x228] sm:$0xff]
      %v2162 = vld [vmem:[%s2108 + $0x230] sm:$0xff]
      %v2163 = vld [vmem:[%s2108 + $0x240] sm:$0xff]
      %v2164 = vld [vmem:[%s2108 + $0x248] sm:$0xff]
      %v2165 = vld [vmem:[%s2108 + $0x250] sm:$0xff]
      %v2166 = vld [vmem:[%s2108 + $0x260] sm:$0xff]
      %v2167 = vld [vmem:[%s2108 + $0x268] sm:$0xff]
      %v2168 = vld [vmem:[%s2108 + $0x270] sm:$0xff]
      %v2169 = vld [vmem:[%s2108 + $0x280] sm:$0xff]
      %v2170 = vld [vmem:[%s2108 + $0x288] sm:$0xff]
      %v2171 = vld [vmem:[%s2108 + $0x290] sm:$0xff]
      %v2172 = vld [vmem:[%s2108 + $0x2a0] sm:$0xff]
      %v2173 = vld [vmem:[%s2108 + $0x2a8] sm:$0xff]
      %v2174 = vld [vmem:[%s2108 + $0x2b0] sm:$0xff]
      %v2175 = vld [vmem:[%s2108 + $0x2c0] sm:$0xff]
      %v2176 = vld [vmem:[%s2108 + $0x2c8] sm:$0xff]
      %v2177 = vld [vmem:[%s2108 + $0x2d0] sm:$0xff]
      %v2178 = vld [vmem:[%s2108 + $0x2e0] sm:$0xff]
      %v2179 = vld [vmem:[%s2108 + $0x2e8] sm:$0xff]
      %v2180 = vld [vmem:[%s2108 + $0x2f0] sm:$0xff]
      %v2181 = vpack.c.bf16 %v2109, %v2109
      %v2182 = vpack.c.bf16 %v2110, %v2110
      %v2183 = vpack.c.bf16 %v2111, %v2111
      %v2184 = vpack.c.bf16 %v2112, %v2112
      %v2185 = vpack.c.bf16 %v2113, %v2113
      %v2186 = vpack.c.bf16 %v2114, %v2114
      %v2187 = vpack.c.bf16 %v2115, %v2115
      %v2188 = vpack.c.bf16 %v2116, %v2116
      %v2189 = vpack.c.bf16 %v2117, %v2117
      %v2190 = vpack.c.bf16 %v2118, %v2118
      %v2191 = vpack.c.bf16 %v2119, %v2119
      %v2192 = vpack.c.bf16 %v2120, %v2120
      %v2193 = vpack.c.bf16 %v2121, %v2121
      %v2194 = vpack.c.bf16 %v2122, %v2122
      %v2195 = vpack.c.bf16 %v2123, %v2123
      %v2196 = vpack.c.bf16 %v2124, %v2124
      %v2197 = vpack.c.bf16 %v2125, %v2125
      %v2198 = vpack.c.bf16 %v2126, %v2126
      %v2199 = vpack.c.bf16 %v2127, %v2127
      %v2200 = vpack.c.bf16 %v2128, %v2128
      %v2201 = vpack.c.bf16 %v2129, %v2129
      %v2202 = vpack.c.bf16 %v2130, %v2130
      %v2203 = vpack.c.bf16 %v2131, %v2131
      %v2204 = vpack.c.bf16 %v2132, %v2132
      %v2205 = vpack.c.bf16 %v2133, %v2133
      %v2206 = vpack.c.bf16 %v2134, %v2134
      %v2207 = vpack.c.bf16 %v2135, %v2135
      %v2208 = vpack.c.bf16 %v2136, %v2136
      %v2209 = vpack.c.bf16 %v2137, %v2137
      %v2210 = vpack.c.bf16 %v2138, %v2138
      %v2211 = vpack.c.bf16 %v2139, %v2139
      %v2212 = vpack.c.bf16 %v2140, %v2140
      %v2213 = vpack.c.bf16 %v2141, %v2141
      %v2214 = vpack.c.bf16 %v2142, %v2142
      %v2215 = vpack.c.bf16 %v2143, %v2143
      %v2216 = vpack.c.bf16 %v2144, %v2144
      %v2217 = vpack.c.bf16 %v2145, %v2145
      %v2218 = vpack.c.bf16 %v2146, %v2146
      %v2219 = vpack.c.bf16 %v2147, %v2147
      %v2220 = vpack.c.bf16 %v2148, %v2148
      %v2221 = vpack.c.bf16 %v2149, %v2149
      %v2222 = vpack.c.bf16 %v2150, %v2150
      %v2223 = vpack.c.bf16 %v2151, %v2151
      %v2224 = vpack.c.bf16 %v2152, %v2152
      %v2225 = vpack.c.bf16 %v2153, %v2153
      %v2226 = vpack.c.bf16 %v2154, %v2154
      %v2227 = vpack.c.bf16 %v2155, %v2155
      %v2228 = vpack.c.bf16 %v2156, %v2156
      %v2229 = vpack.c.bf16 %v2157, %v2157
      %v2230 = vpack.c.bf16 %v2158, %v2158
      %v2231 = vpack.c.bf16 %v2159, %v2159
      %v2232 = vpack.c.bf16 %v2160, %v2160
      %v2233 = vpack.c.bf16 %v2161, %v2161
      %v2234 = vpack.c.bf16 %v2162, %v2162
      %v2235 = vpack.c.bf16 %v2163, %v2163
      %v2236 = vpack.c.bf16 %v2164, %v2164
      %v2237 = vpack.c.bf16 %v2165, %v2165
      %v2238 = vpack.c.bf16 %v2166, %v2166
      %v2239 = vpack.c.bf16 %v2167, %v2167
      %v2240 = vpack.c.bf16 %v2168, %v2168
      %v2241 = vpack.c.bf16 %v2169, %v2169
      %v2242 = vpack.c.bf16 %v2170, %v2170
      %v2243 = vpack.c.bf16 %v2171, %v2171
      %v2244 = vpack.c.bf16 %v2172, %v2172
      %v2245 = vpack.c.bf16 %v2173, %v2173
      %v2246 = vpack.c.bf16 %v2174, %v2174
      %v2247 = vpack.c.bf16 %v2175, %v2175
      %v2248 = vpack.c.bf16 %v2176, %v2176
      %v2249 = vpack.c.bf16 %v2177, %v2177
      %v2250 = vpack.c.bf16 %v2178, %v2178
      %v2251 = vpack.c.bf16 %v2179, %v2179
      %v2252 = vpack.c.bf16 %v2180, %v2180
      %v2253 = vld [vmem:[%s2108 + $0x1] sm:$0xff]
      %v2254 = vld [vmem:[%s2108 + $0x9] sm:$0xff]
      %v2255 = vld [vmem:[%s2108 + $0x11] sm:$0xff]
      %v2256 = vld [vmem:[%s2108 + $0x21] sm:$0xff]
      %v2257 = vld [vmem:[%s2108 + $0x29] sm:$0xff]
      %v2258 = vld [vmem:[%s2108 + $0x31] sm:$0xff]
      %v2259 = vld [vmem:[%s2108 + $0x41] sm:$0xff]
      %v2260 = vld [vmem:[%s2108 + $0x49] sm:$0xff]
      %v2261 = vld [vmem:[%s2108 + $0x51] sm:$0xff]
      %v2262 = vld [vmem:[%s2108 + $0x61] sm:$0xff]
      %v2263 = vld [vmem:[%s2108 + $0x69] sm:$0xff]
      %v2264 = vld [vmem:[%s2108 + $0x71] sm:$0xff]
      %v2265 = vld [vmem:[%s2108 + $0x81] sm:$0xff]
      %v2266 = vld [vmem:[%s2108 + $0x89] sm:$0xff]
      %v2267 = vld [vmem:[%s2108 + $0x91] sm:$0xff]
      %v2268 = vld [vmem:[%s2108 + $0xa1] sm:$0xff]
      %v2269 = vld [vmem:[%s2108 + $0xa9] sm:$0xff]
      %v2270 = vld [vmem:[%s2108 + $0xb1] sm:$0xff]
      %v2271 = vld [vmem:[%s2108 + $0xc1] sm:$0xff]
      %v2272 = vld [vmem:[%s2108 + $0xc9] sm:$0xff]
      %v2273 = vld [vmem:[%s2108 + $0xd1] sm:$0xff]
      %v2274 = vld [vmem:[%s2108 + $0xe1] sm:$0xff]
      %v2275 = vld [vmem:[%s2108 + $0xe9] sm:$0xff]
      %v2276 = vld [vmem:[%s2108 + $0xf1] sm:$0xff]
      %v2277 = vld [vmem:[%s2108 + $0x101] sm:$0xff]
      %v2278 = vld [vmem:[%s2108 + $0x109] sm:$0xff]
      %v2279 = vld [vmem:[%s2108 + $0x111] sm:$0xff]
      %v2280 = vld [vmem:[%s2108 + $0x121] sm:$0xff]
      %v2281 = vld [vmem:[%s2108 + $0x129] sm:$0xff]
      %v2282 = vld [vmem:[%s2108 + $0x131] sm:$0xff]
      %v2283 = vld [vmem:[%s2108 + $0x141] sm:$0xff]
      %v2284 = vld [vmem:[%s2108 + $0x149] sm:$0xff]
      %v2285 = vld [vmem:[%s2108 + $0x151] sm:$0xff]
      %v2286 = vld [vmem:[%s2108 + $0x161] sm:$0xff]
      %v2287 = vld [vmem:[%s2108 + $0x169] sm:$0xff]
      %v2288 = vld [vmem:[%s2108 + $0x171] sm:$0xff]
      %v2289 = vld [vmem:[%s2108 + $0x181] sm:$0xff]
      %v2290 = vld [vmem:[%s2108 + $0x189] sm:$0xff]
      %v2291 = vld [vmem:[%s2108 + $0x191] sm:$0xff]
      %v2292 = vld [vmem:[%s2108 + $0x1a1] sm:$0xff]
      %v2293 = vld [vmem:[%s2108 + $0x1a9] sm:$0xff]
      %v2294 = vld [vmem:[%s2108 + $0x1b1] sm:$0xff]
      %v2295 = vld [vmem:[%s2108 + $0x1c1] sm:$0xff]
      %v2296 = vld [vmem:[%s2108 + $0x1c9] sm:$0xff]
      %v2297 = vld [vmem:[%s2108 + $0x1d1] sm:$0xff]
      %v2298 = vld [vmem:[%s2108 + $0x1e1] sm:$0xff]
      %v2299 = vld [vmem:[%s2108 + $0x1e9] sm:$0xff]
      %v2300 = vld [vmem:[%s2108 + $0x1f1] sm:$0xff]
      %v2301 = vld [vmem:[%s2108 + $0x201] sm:$0xff]
      %v2302 = vld [vmem:[%s2108 + $0x209] sm:$0xff]
      %v2303 = vld [vmem:[%s2108 + $0x211] sm:$0xff]
      %v2304 = vld [vmem:[%s2108 + $0x221] sm:$0xff]
      %v2305 = vld [vmem:[%s2108 + $0x229] sm:$0xff]
      %v2306 = vld [vmem:[%s2108 + $0x231] sm:$0xff]
      %v2307 = vld [vmem:[%s2108 + $0x241] sm:$0xff]
      %v2308 = vld [vmem:[%s2108 + $0x249] sm:$0xff]
      %v2309 = vld [vmem:[%s2108 + $0x251] sm:$0xff]
      %v2310 = vld [vmem:[%s2108 + $0x261] sm:$0xff]
      %v2311 = vld [vmem:[%s2108 + $0x269] sm:$0xff]
      %v2312 = vld [vmem:[%s2108 + $0x271] sm:$0xff]
      %v2313 = vld [vmem:[%s2108 + $0x281] sm:$0xff]
      %v2314 = vld [vmem:[%s2108 + $0x289] sm:$0xff]
      %v2315 = vld [vmem:[%s2108 + $0x291] sm:$0xff]
      %v2316 = vld [vmem:[%s2108 + $0x2a1] sm:$0xff]
      %v2317 = vld [vmem:[%s2108 + $0x2a9] sm:$0xff]
      %v2318 = vld [vmem:[%s2108 + $0x2b1] sm:$0xff]
      %v2319 = vld [vmem:[%s2108 + $0x2c1] sm:$0xff]
      %v2320 = vld [vmem:[%s2108 + $0x2c9] sm:$0xff]
      %v2321 = vld [vmem:[%s2108 + $0x2d1] sm:$0xff]
      %v2322 = vld [vmem:[%s2108 + $0x2e1] sm:$0xff]
      %v2323 = vld [vmem:[%s2108 + $0x2e9] sm:$0xff]
      %v2324 = vld [vmem:[%s2108 + $0x2f1] sm:$0xff]
      %v2325 = vpack.c.bf16 %v2253, %v2253
      %v2326 = vpack.c.bf16 %v2254, %v2254
      %v2327 = vpack.c.bf16 %v2255, %v2255
      %v2328 = vpack.c.bf16 %v2256, %v2256
      %v2329 = vpack.c.bf16 %v2257, %v2257
      %v2330 = vpack.c.bf16 %v2258, %v2258
      %v2331 = vpack.c.bf16 %v2259, %v2259
      %v2332 = vpack.c.bf16 %v2260, %v2260
      %v2333 = vpack.c.bf16 %v2261, %v2261
      %v2334 = vpack.c.bf16 %v2262, %v2262
      %v2335 = vpack.c.bf16 %v2263, %v2263
      %v2336 = vpack.c.bf16 %v2264, %v2264
      %v2337 = vpack.c.bf16 %v2265, %v2265
      %v2338 = vpack.c.bf16 %v2266, %v2266
      %v2339 = vpack.c.bf16 %v2267, %v2267
      %v2340 = vpack.c.bf16 %v2268, %v2268
      %v2341 = vpack.c.bf16 %v2269, %v2269
      %v2342 = vpack.c.bf16 %v2270, %v2270
      %v2343 = vpack.c.bf16 %v2271, %v2271
      %v2344 = vpack.c.bf16 %v2272, %v2272
      %v2345 = vpack.c.bf16 %v2273, %v2273
      %v2346 = vpack.c.bf16 %v2274, %v2274
      %v2347 = vpack.c.bf16 %v2275, %v2275
      %v2348 = vpack.c.bf16 %v2276, %v2276
      %v2349 = vpack.c.bf16 %v2277, %v2277
      %v2350 = vpack.c.bf16 %v2278, %v2278
      %v2351 = vpack.c.bf16 %v2279, %v2279
      %v2352 = vpack.c.bf16 %v2280, %v2280
      %v2353 = vpack.c.bf16 %v2281, %v2281
      %v2354 = vpack.c.bf16 %v2282, %v2282
      %v2355 = vpack.c.bf16 %v2283, %v2283
      %v2356 = vpack.c.bf16 %v2284, %v2284
      %v2357 = vpack.c.bf16 %v2285, %v2285
      %v2358 = vpack.c.bf16 %v2286, %v2286
      %v2359 = vpack.c.bf16 %v2287, %v2287
      %v2360 = vpack.c.bf16 %v2288, %v2288
      %v2361 = vpack.c.bf16 %v2289, %v2289
      %v2362 = vpack.c.bf16 %v2290, %v2290
      %v2363 = vpack.c.bf16 %v2291, %v2291
      %v2364 = vpack.c.bf16 %v2292, %v2292
      %v2365 = vpack.c.bf16 %v2293, %v2293
      %v2366 = vpack.c.bf16 %v2294, %v2294
      %v2367 = vpack.c.bf16 %v2295, %v2295
      %v2368 = vpack.c.bf16 %v2296, %v2296
      %v2369 = vpack.c.bf16 %v2297, %v2297
      %v2370 = vpack.c.bf16 %v2298, %v2298
      %v2371 = vpack.c.bf16 %v2299, %v2299
      %v2372 = vpack.c.bf16 %v2300, %v2300
      %v2373 = vpack.c.bf16 %v2301, %v2301
      %v2374 = vpack.c.bf16 %v2302, %v2302
      %v2375 = vpack.c.bf16 %v2303, %v2303
      %v2376 = vpack.c.bf16 %v2304, %v2304
      %v2377 = vpack.c.bf16 %v2305, %v2305
      %v2378 = vpack.c.bf16 %v2306, %v2306
      %v2379 = vpack.c.bf16 %v2307, %v2307
      %v2380 = vpack.c.bf16 %v2308, %v2308
      %v2381 = vpack.c.bf16 %v2309, %v2309
      %v2382 = vpack.c.bf16 %v2310, %v2310
      %v2383 = vpack.c.bf16 %v2311, %v2311
      %v2384 = vpack.c.bf16 %v2312, %v2312
      %v2385 = vpack.c.bf16 %v2313, %v2313
      %v2386 = vpack.c.bf16 %v2314, %v2314
      %v2387 = vpack.c.bf16 %v2315, %v2315
      %v2388 = vpack.c.bf16 %v2316, %v2316
      %v2389 = vpack.c.bf16 %v2317, %v2317
      %v2390 = vpack.c.bf16 %v2318, %v2318
      %v2391 = vpack.c.bf16 %v2319, %v2319
      %v2392 = vpack.c.bf16 %v2320, %v2320
      %v2393 = vpack.c.bf16 %v2321, %v2321
      %v2394 = vpack.c.bf16 %v2322, %v2322
      %v2395 = vpack.c.bf16 %v2323, %v2323
      %v2396 = vpack.c.bf16 %v2324, %v2324
      %v2397 = vld [vmem:[%s2108 + $0x2] sm:$0xff]
      %v2398 = vld [vmem:[%s2108 + $0xa] sm:$0xff]
      %v2399 = vld [vmem:[%s2108 + $0x12] sm:$0xff]
      %v2400 = vld [vmem:[%s2108 + $0x22] sm:$0xff]
      %v2401 = vld [vmem:[%s2108 + $0x2a] sm:$0xff]
      %v2402 = vld [vmem:[%s2108 + $0x32] sm:$0xff]
      %v2403 = vld [vmem:[%s2108 + $0x42] sm:$0xff]
      %v2404 = vld [vmem:[%s2108 + $0x4a] sm:$0xff]
      %v2405 = vld [vmem:[%s2108 + $0x52] sm:$0xff]
      %v2406 = vld [vmem:[%s2108 + $0x62] sm:$0xff]
      %v2407 = vld [vmem:[%s2108 + $0x6a] sm:$0xff]
      %v2408 = vld [vmem:[%s2108 + $0x72] sm:$0xff]
      %v2409 = vld [vmem:[%s2108 + $0x82] sm:$0xff]
      %v2410 = vld [vmem:[%s2108 + $0x8a] sm:$0xff]
      %v2411 = vld [vmem:[%s2108 + $0x92] sm:$0xff]
      %v2412 = vld [vmem:[%s2108 + $0xa2] sm:$0xff]
      %v2413 = vld [vmem:[%s2108 + $0xaa] sm:$0xff]
      %v2414 = vld [vmem:[%s2108 + $0xb2] sm:$0xff]
      %v2415 = vld [vmem:[%s2108 + $0xc2] sm:$0xff]
      %v2416 = vld [vmem:[%s2108 + $0xca] sm:$0xff]
      %v2417 = vld [vmem:[%s2108 + $0xd2] sm:$0xff]
      %v2418 = vld [vmem:[%s2108 + $0xe2] sm:$0xff]
      %v2419 = vld [vmem:[%s2108 + $0xea] sm:$0xff]
      %v2420 = vld [vmem:[%s2108 + $0xf2] sm:$0xff]
      %v2421 = vld [vmem:[%s2108 + $0x102] sm:$0xff]
      %v2422 = vld [vmem:[%s2108 + $0x10a] sm:$0xff]
      %v2423 = vld [vmem:[%s2108 + $0x112] sm:$0xff]
      %v2424 = vld [vmem:[%s2108 + $0x122] sm:$0xff]
      %v2425 = vld [vmem:[%s2108 + $0x12a] sm:$0xff]
      %v2426 = vld [vmem:[%s2108 + $0x132] sm:$0xff]
      %v2427 = vld [vmem:[%s2108 + $0x142] sm:$0xff]
      %v2428 = vld [vmem:[%s2108 + $0x14a] sm:$0xff]
      %v2429 = vld [vmem:[%s2108 + $0x152] sm:$0xff]
      %v2430 = vld [vmem:[%s2108 + $0x162] sm:$0xff]
      %v2431 = vld [vmem:[%s2108 + $0x16a] sm:$0xff]
      %v2432 = vld [vmem:[%s2108 + $0x172] sm:$0xff]
      %v2433 = vld [vmem:[%s2108 + $0x182] sm:$0xff]
      %v2434 = vld [vmem:[%s2108 + $0x18a] sm:$0xff]
      %v2435 = vld [vmem:[%s2108 + $0x192] sm:$0xff]
      %v2436 = vld [vmem:[%s2108 + $0x1a2] sm:$0xff]
      %v2437 = vld [vmem:[%s2108 + $0x1aa] sm:$0xff]
      %v2438 = vld [vmem:[%s2108 + $0x1b2] sm:$0xff]
      %v2439 = vld [vmem:[%s2108 + $0x1c2] sm:$0xff]
      %v2440 = vld [vmem:[%s2108 + $0x1ca] sm:$0xff]
      %v2441 = vld [vmem:[%s2108 + $0x1d2] sm:$0xff]
      %v2442 = vld [vmem:[%s2108 + $0x1e2] sm:$0xff]
      %v2443 = vld [vmem:[%s2108 + $0x1ea] sm:$0xff]
      %v2444 = vld [vmem:[%s2108 + $0x1f2] sm:$0xff]
      %v2445 = vld [vmem:[%s2108 + $0x202] sm:$0xff]
      %v2446 = vld [vmem:[%s2108 + $0x20a] sm:$0xff]
      %v2447 = vld [vmem:[%s2108 + $0x212] sm:$0xff]
      %v2448 = vld [vmem:[%s2108 + $0x222] sm:$0xff]
      %v2449 = vld [vmem:[%s2108 + $0x22a] sm:$0xff]
      %v2450 = vld [vmem:[%s2108 + $0x232] sm:$0xff]
      %v2451 = vld [vmem:[%s2108 + $0x242] sm:$0xff]
      %v2452 = vld [vmem:[%s2108 + $0x24a] sm:$0xff]
      %v2453 = vld [vmem:[%s2108 + $0x252] sm:$0xff]
      %v2454 = vld [vmem:[%s2108 + $0x262] sm:$0xff]
      %v2455 = vld [vmem:[%s2108 + $0x26a] sm:$0xff]
      %v2456 = vld [vmem:[%s2108 + $0x272] sm:$0xff]
      %v2457 = vld [vmem:[%s2108 + $0x282] sm:$0xff]
      %v2458 = vld [vmem:[%s2108 + $0x28a] sm:$0xff]
      %v2459 = vld [vmem:[%s2108 + $0x292] sm:$0xff]
      %v2460 = vld [vmem:[%s2108 + $0x2a2] sm:$0xff]
      %v2461 = vld [vmem:[%s2108 + $0x2aa] sm:$0xff]
      %v2462 = vld [vmem:[%s2108 + $0x2b2] sm:$0xff]
      %v2463 = vld [vmem:[%s2108 + $0x2c2] sm:$0xff]
      %v2464 = vld [vmem:[%s2108 + $0x2ca] sm:$0xff]
      %v2465 = vld [vmem:[%s2108 + $0x2d2] sm:$0xff]
      %v2466 = vld [vmem:[%s2108 + $0x2e2] sm:$0xff]
      %v2467 = vld [vmem:[%s2108 + $0x2ea] sm:$0xff]
      %v2468 = vld [vmem:[%s2108 + $0x2f2] sm:$0xff]
      %v2469 = vpack.c.bf16 %v2397, %v2397
      %v2470 = vpack.c.bf16 %v2398, %v2398
      %v2471 = vpack.c.bf16 %v2399, %v2399
      %v2472 = vpack.c.bf16 %v2400, %v2400
      %v2473 = vpack.c.bf16 %v2401, %v2401
      %v2474 = vpack.c.bf16 %v2402, %v2402
      %v2475 = vpack.c.bf16 %v2403, %v2403
      %v2476 = vpack.c.bf16 %v2404, %v2404
      %v2477 = vpack.c.bf16 %v2405, %v2405
      %v2478 = vpack.c.bf16 %v2406, %v2406
      %v2479 = vpack.c.bf16 %v2407, %v2407
      %v2480 = vpack.c.bf16 %v2408, %v2408
      %v2481 = vpack.c.bf16 %v2409, %v2409
      %v2482 = vpack.c.bf16 %v2410, %v2410
      %v2483 = vpack.c.bf16 %v2411, %v2411
      %v2484 = vpack.c.bf16 %v2412, %v2412
      %v2485 = vpack.c.bf16 %v2413, %v2413
      %v2486 = vpack.c.bf16 %v2414, %v2414
      %v2487 = vpack.c.bf16 %v2415, %v2415
      %v2488 = vpack.c.bf16 %v2416, %v2416
      %v2489 = vpack.c.bf16 %v2417, %v2417
      %v2490 = vpack.c.bf16 %v2418, %v2418
      %v2491 = vpack.c.bf16 %v2419, %v2419
      %v2492 = vpack.c.bf16 %v2420, %v2420
      %v2493 = vpack.c.bf16 %v2421, %v2421
      %v2494 = vpack.c.bf16 %v2422, %v2422
      %v2495 = vpack.c.bf16 %v2423, %v2423
      %v2496 = vpack.c.bf16 %v2424, %v2424
      %v2497 = vpack.c.bf16 %v2425, %v2425
      %v2498 = vpack.c.bf16 %v2426, %v2426
      %v2499 = vpack.c.bf16 %v2427, %v2427
      %v2500 = vpack.c.bf16 %v2428, %v2428
      %v2501 = vpack.c.bf16 %v2429, %v2429
      %v2502 = vpack.c.bf16 %v2430, %v2430
      %v2503 = vpack.c.bf16 %v2431, %v2431
      %v2504 = vpack.c.bf16 %v2432, %v2432
      %v2505 = vpack.c.bf16 %v2433, %v2433
      %v2506 = vpack.c.bf16 %v2434, %v2434
      %v2507 = vpack.c.bf16 %v2435, %v2435
      %v2508 = vpack.c.bf16 %v2436, %v2436
      %v2509 = vpack.c.bf16 %v2437, %v2437
      %v2510 = vpack.c.bf16 %v2438, %v2438
      %v2511 = vpack.c.bf16 %v2439, %v2439
      %v2512 = vpack.c.bf16 %v2440, %v2440
      %v2513 = vpack.c.bf16 %v2441, %v2441
      %v2514 = vpack.c.bf16 %v2442, %v2442
      %v2515 = vpack.c.bf16 %v2443, %v2443
      %v2516 = vpack.c.bf16 %v2444, %v2444
      %v2517 = vpack.c.bf16 %v2445, %v2445
      %v2518 = vpack.c.bf16 %v2446, %v2446
      %v2519 = vpack.c.bf16 %v2447, %v2447
      %v2520 = vpack.c.bf16 %v2448, %v2448
      %v2521 = vpack.c.bf16 %v2449, %v2449
      %v2522 = vpack.c.bf16 %v2450, %v2450
      %v2523 = vpack.c.bf16 %v2451, %v2451
      %v2524 = vpack.c.bf16 %v2452, %v2452
      %v2525 = vpack.c.bf16 %v2453, %v2453
      %v2526 = vpack.c.bf16 %v2454, %v2454
      %v2527 = vpack.c.bf16 %v2455, %v2455
      %v2528 = vpack.c.bf16 %v2456, %v2456
      %v2529 = vpack.c.bf16 %v2457, %v2457
      %v2530 = vpack.c.bf16 %v2458, %v2458
      %v2531 = vpack.c.bf16 %v2459, %v2459
      %v2532 = vpack.c.bf16 %v2460, %v2460
      %v2533 = vpack.c.bf16 %v2461, %v2461
      %v2534 = vpack.c.bf16 %v2462, %v2462
      %v2535 = vpack.c.bf16 %v2463, %v2463
      %v2536 = vpack.c.bf16 %v2464, %v2464
      %v2537 = vpack.c.bf16 %v2465, %v2465
      %v2538 = vpack.c.bf16 %v2466, %v2466
      %v2539 = vpack.c.bf16 %v2467, %v2467
      %v2540 = vpack.c.bf16 %v2468, %v2468
      %v2613 = vunpack.c.l.b16 %v1315
      %v2614 = vunpack.c.l.b16 %v1316
      %v2615 = vunpack.c.l.b16 %v1317
      %v2616 = vunpack.c.l.b16 %v1318
      %v2617 = vunpack.c.l.b16 %v1319
      %v2618 = vunpack.c.l.b16 %v1320
      %v2619 = vunpack.c.l.b16 %v1321
      %v2620 = vunpack.c.l.b16 %v1322
      %v2621 = vunpack.c.l.b16 %v1323
      %v2622 = vunpack.c.l.b16 %v1324
      %v2623 = vunpack.c.l.b16 %v1325
      %v2624 = vunpack.c.l.b16 %v1326
      %v2625 = vunpack.c.l.b16 %v1327
      %v2626 = vunpack.c.l.b16 %v1328
      %v2627 = vunpack.c.l.b16 %v1329
      %v2628 = vunpack.c.l.b16 %v1330
      %v2629 = vunpack.c.l.b16 %v1331
      %v2630 = vunpack.c.l.b16 %v1332
      %v2631 = vunpack.c.l.b16 %v1333
      %v2632 = vunpack.c.l.b16 %v1334
      %v2633 = vunpack.c.l.b16 %v1335
      %v2634 = vunpack.c.l.b16 %v1336
      %v2635 = vunpack.c.l.b16 %v1337
      %v2636 = vunpack.c.l.b16 %v1338
      %v2637 = vunpack.c.l.b16 %v1339
      %v2638 = vunpack.c.l.b16 %v1340
      %v2639 = vunpack.c.l.b16 %v1341
      %v2640 = vunpack.c.l.b16 %v1342
      %v2641 = vunpack.c.l.b16 %v1343
      %v2642 = vunpack.c.l.b16 %v1344
      %v2643 = vunpack.c.l.b16 %v1345
      %v2644 = vunpack.c.l.b16 %v1346
      %v2645 = vunpack.c.l.b16 %v1347
      %v2646 = vunpack.c.l.b16 %v1348
      %v2647 = vunpack.c.l.b16 %v1349
      %v2648 = vunpack.c.l.b16 %v1350
      %v2649 = vunpack.c.l.b16 %v1351
      %v2650 = vunpack.c.l.b16 %v1352
      %v2651 = vunpack.c.l.b16 %v1353
      %v2652 = vunpack.c.l.b16 %v1354
      %v2653 = vunpack.c.l.b16 %v1355
      %v2654 = vunpack.c.l.b16 %v1356
      %v2655 = vunpack.c.l.b16 %v1357
      %v2656 = vunpack.c.l.b16 %v1358
      %v2657 = vunpack.c.l.b16 %v1359
      %v2658 = vunpack.c.l.b16 %v1360
      %v2659 = vunpack.c.l.b16 %v1361
      %v2660 = vunpack.c.l.b16 %v1362
      %v2661 = vunpack.c.l.b16 %v1363
      %v2662 = vunpack.c.l.b16 %v1364
      %v2663 = vunpack.c.l.b16 %v1365
      %v2664 = vunpack.c.l.b16 %v1366
      %v2665 = vunpack.c.l.b16 %v1367
      %v2666 = vunpack.c.l.b16 %v1368
      %v2667 = vunpack.c.l.b16 %v1369
      %v2668 = vunpack.c.l.b16 %v1370
      %v2669 = vunpack.c.l.b16 %v1371
      %v2670 = vunpack.c.l.b16 %v1372
      %v2671 = vunpack.c.l.b16 %v1373
      %v2672 = vunpack.c.l.b16 %v1374
      %v2673 = vunpack.c.l.b16 %v1375
      %v2674 = vunpack.c.l.b16 %v1376
      %v2675 = vunpack.c.l.b16 %v1377
      %v2676 = vunpack.c.l.b16 %v1378
      %v2677 = vunpack.c.l.b16 %v1379
      %v2678 = vunpack.c.l.b16 %v1380
      %v2679 = vunpack.c.l.b16 %v1381
      %v2680 = vunpack.c.l.b16 %v1382
      %v2681 = vunpack.c.l.b16 %v1383
      %v2682 = vunpack.c.l.b16 %v1384
      %v2683 = vunpack.c.l.b16 %v1385
      %v2684 = vunpack.c.l.b16 %v1386
      %v2685 = vpack.c.b16 %v2614, %v2613
      %v2686 = vpack.c.b16 %v2616, %v2615
      %v2687 = vpack.c.b16 %v2618, %v2617
      %v2688 = vpack.c.b16 %v2620, %v2619
      %v2689 = vpack.c.b16 %v2622, %v2621
      %v2690 = vpack.c.b16 %v2624, %v2623
      %v2691 = vpack.c.b16 %v2626, %v2625
      %v2692 = vpack.c.b16 %v2628, %v2627
      %v2693 = vpack.c.b16 %v2630, %v2629
      %v2694 = vpack.c.b16 %v2632, %v2631
      %v2695 = vpack.c.b16 %v2634, %v2633
      %v2696 = vpack.c.b16 %v2636, %v2635
      %v2697 = vpack.c.b16 %v2638, %v2637
      %v2698 = vpack.c.b16 %v2640, %v2639
      %v2699 = vpack.c.b16 %v2642, %v2641
      %v2700 = vpack.c.b16 %v2644, %v2643
      %v2701 = vpack.c.b16 %v2646, %v2645
      %v2702 = vpack.c.b16 %v2648, %v2647
      %v2703 = vpack.c.b16 %v2650, %v2649
      %v2704 = vpack.c.b16 %v2652, %v2651
      %v2705 = vpack.c.b16 %v2654, %v2653
      %v2706 = vpack.c.b16 %v2656, %v2655
      %v2707 = vpack.c.b16 %v2658, %v2657
      %v2708 = vpack.c.b16 %v2660, %v2659
      %v2709 = vpack.c.b16 %v2662, %v2661
      %v2710 = vpack.c.b16 %v2664, %v2663
      %v2711 = vpack.c.b16 %v2666, %v2665
      %v2712 = vpack.c.b16 %v2668, %v2667
      %v2713 = vpack.c.b16 %v2670, %v2669
      %v2714 = vpack.c.b16 %v2672, %v2671
      %v2715 = vpack.c.b16 %v2674, %v2673
      %v2716 = vpack.c.b16 %v2676, %v2675
      %v2717 = vpack.c.b16 %v2678, %v2677
      %v2718 = vpack.c.b16 %v2680, %v2679
      %v2719 = vpack.c.b16 %v2682, %v2681
      %v2720 = vpack.c.b16 %v2684, %v2683
      %v2793 = vunpack.c.l.b16 %v1459
      %v2794 = vunpack.c.l.b16 %v1460
      %v2795 = vunpack.c.l.b16 %v1461
      %v2796 = vunpack.c.l.b16 %v1462
      %v2797 = vunpack.c.l.b16 %v1463
      %v2798 = vunpack.c.l.b16 %v1464
      %v2799 = vunpack.c.l.b16 %v1465
      %v2800 = vunpack.c.l.b16 %v1466
      %v2801 = vunpack.c.l.b16 %v1467
      %v2802 = vunpack.c.l.b16 %v1468
      %v2803 = vunpack.c.l.b16 %v1469
      %v2804 = vunpack.c.l.b16 %v1470
      %v2805 = vunpack.c.l.b16 %v1471
      %v2806 = vunpack.c.l.b16 %v1472
      %v2807 = vunpack.c.l.b16 %v1473
      %v2808 = vunpack.c.l.b16 %v1474
      %v2809 = vunpack.c.l.b16 %v1475
      %v2810 = vunpack.c.l.b16 %v1476
      %v2811 = vunpack.c.l.b16 %v1477
      %v2812 = vunpack.c.l.b16 %v1478
      %v2813 = vunpack.c.l.b16 %v1479
      %v2814 = vunpack.c.l.b16 %v1480
      %v2815 = vunpack.c.l.b16 %v1481
      %v2816 = vunpack.c.l.b16 %v1482
      %v2817 = vunpack.c.l.b16 %v1483
      %v2818 = vunpack.c.l.b16 %v1484
      %v2819 = vunpack.c.l.b16 %v1485
      %v2820 = vunpack.c.l.b16 %v1486
      %v2821 = vunpack.c.l.b16 %v1487
      %v2822 = vunpack.c.l.b16 %v1488
      %v2823 = vunpack.c.l.b16 %v1489
      %v2824 = vunpack.c.l.b16 %v1490
      %v2825 = vunpack.c.l.b16 %v1491
      %v2826 = vunpack.c.l.b16 %v1492
      %v2827 = vunpack.c.l.b16 %v1493
      %v2828 = vunpack.c.l.b16 %v1494
      %v2829 = vunpack.c.l.b16 %v1495
      %v2830 = vunpack.c.l.b16 %v1496
      %v2831 = vunpack.c.l.b16 %v1497
      %v2832 = vunpack.c.l.b16 %v1498
      %v2833 = vunpack.c.l.b16 %v1499
      %v2834 = vunpack.c.l.b16 %v1500
      %v2835 = vunpack.c.l.b16 %v1501
      %v2836 = vunpack.c.l.b16 %v1502
      %v2837 = vunpack.c.l.b16 %v1503
      %v2838 = vunpack.c.l.b16 %v1504
      %v2839 = vunpack.c.l.b16 %v1505
      %v2840 = vunpack.c.l.b16 %v1506
      %v2841 = vunpack.c.l.b16 %v1507
      %v2842 = vunpack.c.l.b16 %v1508
      %v2843 = vunpack.c.l.b16 %v1509
      %v2844 = vunpack.c.l.b16 %v1510
      %v2845 = vunpack.c.l.b16 %v1511
      %v2846 = vunpack.c.l.b16 %v1512
      %v2847 = vunpack.c.l.b16 %v1513
      %v2848 = vunpack.c.l.b16 %v1514
      %v2849 = vunpack.c.l.b16 %v1515
      %v2850 = vunpack.c.l.b16 %v1516
      %v2851 = vunpack.c.l.b16 %v1517
      %v2852 = vunpack.c.l.b16 %v1518
      %v2853 = vunpack.c.l.b16 %v1519
      %v2854 = vunpack.c.l.b16 %v1520
      %v2855 = vunpack.c.l.b16 %v1521
      %v2856 = vunpack.c.l.b16 %v1522
      %v2857 = vunpack.c.l.b16 %v1523
      %v2858 = vunpack.c.l.b16 %v1524
      %v2859 = vunpack.c.l.b16 %v1525
      %v2860 = vunpack.c.l.b16 %v1526
      %v2861 = vunpack.c.l.b16 %v1527
      %v2862 = vunpack.c.l.b16 %v1528
      %v2863 = vunpack.c.l.b16 %v1529
      %v2864 = vunpack.c.l.b16 %v1530
      %v2865 = vpack.c.b16 %v2794, %v2793
      %v2866 = vpack.c.b16 %v2796, %v2795
      %v2867 = vpack.c.b16 %v2798, %v2797
      %v2868 = vpack.c.b16 %v2800, %v2799
      %v2869 = vpack.c.b16 %v2802, %v2801
      %v2870 = vpack.c.b16 %v2804, %v2803
      %v2871 = vpack.c.b16 %v2806, %v2805
      %v2872 = vpack.c.b16 %v2808, %v2807
      %v2873 = vpack.c.b16 %v2810, %v2809
      %v2874 = vpack.c.b16 %v2812, %v2811
      %v2875 = vpack.c.b16 %v2814, %v2813
      %v2876 = vpack.c.b16 %v2816, %v2815
      %v2877 = vpack.c.b16 %v2818, %v2817
      %v2878 = vpack.c.b16 %v2820, %v2819
      %v2879 = vpack.c.b16 %v2822, %v2821
      %v2880 = vpack.c.b16 %v2824, %v2823
      %v2881 = vpack.c.b16 %v2826, %v2825
      %v2882 = vpack.c.b16 %v2828, %v2827
      %v2883 = vpack.c.b16 %v2830, %v2829
      %v2884 = vpack.c.b16 %v2832, %v2831
      %v2885 = vpack.c.b16 %v2834, %v2833
      %v2886 = vpack.c.b16 %v2836, %v2835
      %v2887 = vpack.c.b16 %v2838, %v2837
      %v2888 = vpack.c.b16 %v2840, %v2839
      %v2889 = vpack.c.b16 %v2842, %v2841
      %v2890 = vpack.c.b16 %v2844, %v2843
      %v2891 = vpack.c.b16 %v2846, %v2845
      %v2892 = vpack.c.b16 %v2848, %v2847
      %v2893 = vpack.c.b16 %v2850, %v2849
      %v2894 = vpack.c.b16 %v2852, %v2851
      %v2895 = vpack.c.b16 %v2854, %v2853
      %v2896 = vpack.c.b16 %v2856, %v2855
      %v2897 = vpack.c.b16 %v2858, %v2857
      %v2898 = vpack.c.b16 %v2860, %v2859
      %v2899 = vpack.c.b16 %v2862, %v2861
      %v2900 = vpack.c.b16 %v2864, %v2863
      %2901 = vrot.lane.b32.xlu0 %v2865, 16
      %v2902 = vpop.permute.xlu0 %2901
      %2903 = vrot.lane.b32.xlu0 %v2866, 16
      %v2904 = vpop.permute.xlu0 %2903
      %2905 = vrot.lane.b32.xlu0 %v2867, 16
      %v2906 = vpop.permute.xlu0 %2905
      %2907 = vrot.lane.b32.xlu0 %v2868, 16
      %v2908 = vpop.permute.xlu0 %2907
      %2909 = vrot.lane.b32.xlu0 %v2869, 16
      %v2910 = vpop.permute.xlu0 %2909
      %2911 = vrot.lane.b32.xlu0 %v2870, 16
      %v2912 = vpop.permute.xlu0 %2911
      %2913 = vrot.lane.b32.xlu0 %v2871, 16
      %v2914 = vpop.permute.xlu0 %2913
      %2915 = vrot.lane.b32.xlu0 %v2872, 16
      %v2916 = vpop.permute.xlu0 %2915
      %2917 = vrot.lane.b32.xlu0 %v2873, 16
      %v2918 = vpop.permute.xlu0 %2917
      %2919 = vrot.lane.b32.xlu0 %v2874, 16
      %v2920 = vpop.permute.xlu0 %2919
      %2921 = vrot.lane.b32.xlu0 %v2875, 16
      %v2922 = vpop.permute.xlu0 %2921
      %2923 = vrot.lane.b32.xlu0 %v2876, 16
      %v2924 = vpop.permute.xlu0 %2923
      %2925 = vrot.lane.b32.xlu0 %v2877, 16
      %v2926 = vpop.permute.xlu0 %2925
      %2927 = vrot.lane.b32.xlu0 %v2878, 16
      %v2928 = vpop.permute.xlu0 %2927
      %2929 = vrot.lane.b32.xlu0 %v2879, 16
      %v2930 = vpop.permute.xlu0 %2929
      %2931 = vrot.lane.b32.xlu0 %v2880, 16
      %v2932 = vpop.permute.xlu0 %2931
      %2933 = vrot.lane.b32.xlu0 %v2881, 16
      %v2934 = vpop.permute.xlu0 %2933
      %2935 = vrot.lane.b32.xlu0 %v2882, 16
      %v2936 = vpop.permute.xlu0 %2935
      %2937 = vrot.lane.b32.xlu0 %v2883, 16
      %v2938 = vpop.permute.xlu0 %2937
      %2939 = vrot.lane.b32.xlu0 %v2884, 16
      %v2940 = vpop.permute.xlu0 %2939
      %2941 = vrot.lane.b32.xlu0 %v2885, 16
      %v2942 = vpop.permute.xlu0 %2941
      %2943 = vrot.lane.b32.xlu0 %v2886, 16
      %v2944 = vpop.permute.xlu0 %2943
      %2945 = vrot.lane.b32.xlu0 %v2887, 16
      %v2946 = vpop.permute.xlu0 %2945
      %2947 = vrot.lane.b32.xlu0 %v2888, 16
      %v2948 = vpop.permute.xlu0 %2947
      %2949 = vrot.lane.b32.xlu0 %v2889, 16
      %v2950 = vpop.permute.xlu0 %2949
      %2951 = vrot.lane.b32.xlu0 %v2890, 16
      %v2952 = vpop.permute.xlu0 %2951
      %2953 = vrot.lane.b32.xlu0 %v2891, 16
      %v2954 = vpop.permute.xlu0 %2953
      %2955 = vrot.lane.b32.xlu0 %v2892, 16
      %v2956 = vpop.permute.xlu0 %2955
      %2957 = vrot.lane.b32.xlu0 %v2893, 16
      %v2958 = vpop.permute.xlu0 %2957
      %2959 = vrot.lane.b32.xlu0 %v2894, 16
      %v2960 = vpop.permute.xlu0 %2959
      %2961 = vrot.lane.b32.xlu0 %v2895, 16
      %v2962 = vpop.permute.xlu0 %2961
      %2963 = vrot.lane.b32.xlu0 %v2896, 16
      %v2964 = vpop.permute.xlu0 %2963
      %2965 = vrot.lane.b32.xlu0 %v2897, 16
      %v2966 = vpop.permute.xlu0 %2965
      %2967 = vrot.lane.b32.xlu0 %v2898, 16
      %v2968 = vpop.permute.xlu0 %2967
      %2969 = vrot.lane.b32.xlu0 %v2899, 16
      %v2970 = vpop.permute.xlu0 %2969
      %2971 = vrot.lane.b32.xlu0 %v2900, 16
      %v2972 = vpop.permute.xlu0 %2971
      %v3045 = vunpack.c.l.b16 %v1603
      %v3046 = vunpack.c.l.b16 %v1604
      %v3047 = vunpack.c.l.b16 %v1605
      %v3048 = vunpack.c.l.b16 %v1606
      %v3049 = vunpack.c.l.b16 %v1607
      %v3050 = vunpack.c.l.b16 %v1608
      %v3051 = vunpack.c.l.b16 %v1609
      %v3052 = vunpack.c.l.b16 %v1610
      %v3053 = vunpack.c.l.b16 %v1611
      %v3054 = vunpack.c.l.b16 %v1612
      %v3055 = vunpack.c.l.b16 %v1613
      %v3056 = vunpack.c.l.b16 %v1614
      %v3057 = vunpack.c.l.b16 %v1615
      %v3058 = vunpack.c.l.b16 %v1616
      %v3059 = vunpack.c.l.b16 %v1617
      %v3060 = vunpack.c.l.b16 %v1618
      %v3061 = vunpack.c.l.b16 %v1619
      %v3062 = vunpack.c.l.b16 %v1620
      %v3063 = vunpack.c.l.b16 %v1621
      %v3064 = vunpack.c.l.b16 %v1622
      %v3065 = vunpack.c.l.b16 %v1623
      %v3066 = vunpack.c.l.b16 %v1624
      %v3067 = vunpack.c.l.b16 %v1625
      %v3068 = vunpack.c.l.b16 %v1626
      %v3069 = vunpack.c.l.b16 %v1627
      %v3070 = vunpack.c.l.b16 %v1628
      %v3071 = vunpack.c.l.b16 %v1629
      %v3072 = vunpack.c.l.b16 %v1630
      %v3073 = vunpack.c.l.b16 %v1631
      %v3074 = vunpack.c.l.b16 %v1632
      %v3075 = vunpack.c.l.b16 %v1633
      %v3076 = vunpack.c.l.b16 %v1634
      %v3077 = vunpack.c.l.b16 %v1635
      %v3078 = vunpack.c.l.b16 %v1636
      %v3079 = vunpack.c.l.b16 %v1637
      %v3080 = vunpack.c.l.b16 %v1638
      %v3081 = vunpack.c.l.b16 %v1639
      %v3082 = vunpack.c.l.b16 %v1640
      %v3083 = vunpack.c.l.b16 %v1641
      %v3084 = vunpack.c.l.b16 %v1642
      %v3085 = vunpack.c.l.b16 %v1643
      %v3086 = vunpack.c.l.b16 %v1644
      %v3087 = vunpack.c.l.b16 %v1645
      %v3088 = vunpack.c.l.b16 %v1646
      %v3089 = vunpack.c.l.b16 %v1647
      %v3090 = vunpack.c.l.b16 %v1648
      %v3091 = vunpack.c.l.b16 %v1649
      %v3092 = vunpack.c.l.b16 %v1650
      %v3093 = vunpack.c.l.b16 %v1651
      %v3094 = vunpack.c.l.b16 %v1652
      %v3095 = vunpack.c.l.b16 %v1653
      %v3096 = vunpack.c.l.b16 %v1654
      %v3097 = vunpack.c.l.b16 %v1655
      %v3098 = vunpack.c.l.b16 %v1656
      %v3099 = vunpack.c.l.b16 %v1657
      %v3100 = vunpack.c.l.b16 %v1658
      %v3101 = vunpack.c.l.b16 %v1659
      %v3102 = vunpack.c.l.b16 %v1660
      %v3103 = vunpack.c.l.b16 %v1661
      %v3104 = vunpack.c.l.b16 %v1662
      %v3105 = vunpack.c.l.b16 %v1663
      %v3106 = vunpack.c.l.b16 %v1664
      %v3107 = vunpack.c.l.b16 %v1665
      %v3108 = vunpack.c.l.b16 %v1666
      %v3109 = vunpack.c.l.b16 %v1667
      %v3110 = vunpack.c.l.b16 %v1668
      %v3111 = vunpack.c.l.b16 %v1669
      %v3112 = vunpack.c.l.b16 %v1670
      %v3113 = vunpack.c.l.b16 %v1671
      %v3114 = vunpack.c.l.b16 %v1672
      %v3115 = vunpack.c.l.b16 %v1673
      %v3116 = vunpack.c.l.b16 %v1674
      %v3117 = vpack.c.b16 %v3046, %v3045
      %v3118 = vpack.c.b16 %v3048, %v3047
      %v3119 = vpack.c.b16 %v3050, %v3049
      %v3120 = vpack.c.b16 %v3052, %v3051
      %v3121 = vpack.c.b16 %v3054, %v3053
      %v3122 = vpack.c.b16 %v3056, %v3055
      %v3123 = vpack.c.b16 %v3058, %v3057
      %v3124 = vpack.c.b16 %v3060, %v3059
      %v3125 = vpack.c.b16 %v3062, %v3061
      %v3126 = vpack.c.b16 %v3064, %v3063
      %v3127 = vpack.c.b16 %v3066, %v3065
      %v3128 = vpack.c.b16 %v3068, %v3067
      %v3129 = vpack.c.b16 %v3070, %v3069
      %v3130 = vpack.c.b16 %v3072, %v3071
      %v3131 = vpack.c.b16 %v3074, %v3073
      %v3132 = vpack.c.b16 %v3076, %v3075
      %v3133 = vpack.c.b16 %v3078, %v3077
      %v3134 = vpack.c.b16 %v3080, %v3079
      %v3135 = vpack.c.b16 %v3082, %v3081
      %v3136 = vpack.c.b16 %v3084, %v3083
      %v3137 = vpack.c.b16 %v3086, %v3085
      %v3138 = vpack.c.b16 %v3088, %v3087
      %v3139 = vpack.c.b16 %v3090, %v3089
      %v3140 = vpack.c.b16 %v3092, %v3091
      %v3141 = vpack.c.b16 %v3094, %v3093
      %v3142 = vpack.c.b16 %v3096, %v3095
      %v3143 = vpack.c.b16 %v3098, %v3097
      %v3144 = vpack.c.b16 %v3100, %v3099
      %v3145 = vpack.c.b16 %v3102, %v3101
      %v3146 = vpack.c.b16 %v3104, %v3103
      %v3147 = vpack.c.b16 %v3106, %v3105
      %v3148 = vpack.c.b16 %v3108, %v3107
      %v3149 = vpack.c.b16 %v3110, %v3109
      %v3150 = vpack.c.b16 %v3112, %v3111
      %v3151 = vpack.c.b16 %v3114, %v3113
      %v3152 = vpack.c.b16 %v3116, %v3115
      %3153 = vrot.lane.b32.xlu0 %v3117, 32
      %v3154 = vpop.permute.xlu0 %3153
      %3155 = vrot.lane.b32.xlu0 %v3118, 32
      %v3156 = vpop.permute.xlu0 %3155
      %3157 = vrot.lane.b32.xlu0 %v3119, 32
      %v3158 = vpop.permute.xlu0 %3157
      %3159 = vrot.lane.b32.xlu0 %v3120, 32
      %v3160 = vpop.permute.xlu0 %3159
      %3161 = vrot.lane.b32.xlu0 %v3121, 32
      %v3162 = vpop.permute.xlu0 %3161
      %3163 = vrot.lane.b32.xlu0 %v3122, 32
      %v3164 = vpop.permute.xlu0 %3163
      %3165 = vrot.lane.b32.xlu0 %v3123, 32
      %v3166 = vpop.permute.xlu0 %3165
      %3167 = vrot.lane.b32.xlu0 %v3124, 32
      %v3168 = vpop.permute.xlu0 %3167
      %3169 = vrot.lane.b32.xlu0 %v3125, 32
      %v3170 = vpop.permute.xlu0 %3169
      %3171 = vrot.lane.b32.xlu0 %v3126, 32
      %v3172 = vpop.permute.xlu0 %3171
      %3173 = vrot.lane.b32.xlu0 %v3127, 32
      %v3174 = vpop.permute.xlu0 %3173
      %3175 = vrot.lane.b32.xlu0 %v3128, 32
      %v3176 = vpop.permute.xlu0 %3175
      %3177 = vrot.lane.b32.xlu0 %v3129, 32
      %v3178 = vpop.permute.xlu0 %3177
      %3179 = vrot.lane.b32.xlu0 %v3130, 32
      %v3180 = vpop.permute.xlu0 %3179
      %3181 = vrot.lane.b32.xlu0 %v3131, 32
      %v3182 = vpop.permute.xlu0 %3181
      %3183 = vrot.lane.b32.xlu0 %v3132, 32
      %v3184 = vpop.permute.xlu0 %3183
      %3185 = vrot.lane.b32.xlu0 %v3133, 32
      %v3186 = vpop.permute.xlu0 %3185
      %3187 = vrot.lane.b32.xlu0 %v3134, 32
      %v3188 = vpop.permute.xlu0 %3187
      %3189 = vrot.lane.b32.xlu0 %v3135, 32
      %v3190 = vpop.permute.xlu0 %3189
      %3191 = vrot.lane.b32.xlu0 %v3136, 32
      %v3192 = vpop.permute.xlu0 %3191
      %3193 = vrot.lane.b32.xlu0 %v3137, 32
      %v3194 = vpop.permute.xlu0 %3193
      %3195 = vrot.lane.b32.xlu0 %v3138, 32
      %v3196 = vpop.permute.xlu0 %3195
      %3197 = vrot.lane.b32.xlu0 %v3139, 32
      %v3198 = vpop.permute.xlu0 %3197
      %3199 = vrot.lane.b32.xlu0 %v3140, 32
      %v3200 = vpop.permute.xlu0 %3199
      %3201 = vrot.lane.b32.xlu0 %v3141, 32
      %v3202 = vpop.permute.xlu0 %3201
      %3203 = vrot.lane.b32.xlu0 %v3142, 32
      %v3204 = vpop.permute.xlu0 %3203
      %3205 = vrot.lane.b32.xlu0 %v3143, 32
      %v3206 = vpop.permute.xlu0 %3205
      %3207 = vrot.lane.b32.xlu0 %v3144, 32
      %v3208 = vpop.permute.xlu0 %3207
      %3209 = vrot.lane.b32.xlu0 %v3145, 32
      %v3210 = vpop.permute.xlu0 %3209
      %3211 = vrot.lane.b32.xlu0 %v3146, 32
      %v3212 = vpop.permute.xlu0 %3211
      %3213 = vrot.lane.b32.xlu0 %v3147, 32
      %v3214 = vpop.permute.xlu0 %3213
      %3215 = vrot.lane.b32.xlu0 %v3148, 32
      %v3216 = vpop.permute.xlu0 %3215
      %3217 = vrot.lane.b32.xlu0 %v3149, 32
      %v3218 = vpop.permute.xlu0 %3217
      %3219 = vrot.lane.b32.xlu0 %v3150, 32
      %v3220 = vpop.permute.xlu0 %3219
      %3221 = vrot.lane.b32.xlu0 %v3151, 32
      %v3222 = vpop.permute.xlu0 %3221
      %3223 = vrot.lane.b32.xlu0 %v3152, 32
      %v3224 = vpop.permute.xlu0 %3223
      %v3297 = vunpack.c.l.b16 %v1748
      %v3298 = vunpack.c.l.b16 %v1749
      %v3299 = vunpack.c.l.b16 %v1750
      %v3300 = vunpack.c.l.b16 %v1751
      %v3301 = vunpack.c.l.b16 %v1752
      %v3302 = vunpack.c.l.b16 %v1753
      %v3303 = vunpack.c.l.b16 %v1754
      %v3304 = vunpack.c.l.b16 %v1755
      %v3305 = vunpack.c.l.b16 %v1756
      %v3306 = vunpack.c.l.b16 %v1757
      %v3307 = vunpack.c.l.b16 %v1758
      %v3308 = vunpack.c.l.b16 %v1759
      %v3309 = vunpack.c.l.b16 %v1760
      %v3310 = vunpack.c.l.b16 %v1761
      %v3311 = vunpack.c.l.b16 %v1762
      %v3312 = vunpack.c.l.b16 %v1763
      %v3313 = vunpack.c.l.b16 %v1764
      %v3314 = vunpack.c.l.b16 %v1765
      %v3315 = vunpack.c.l.b16 %v1766
      %v3316 = vunpack.c.l.b16 %v1767
      %v3317 = vunpack.c.l.b16 %v1768
      %v3318 = vunpack.c.l.b16 %v1769
      %v3319 = vunpack.c.l.b16 %v1770
      %v3320 = vunpack.c.l.b16 %v1771
      %v3321 = vunpack.c.l.b16 %v1772
      %v3322 = vunpack.c.l.b16 %v1773
      %v3323 = vunpack.c.l.b16 %v1774
      %v3324 = vunpack.c.l.b16 %v1775
      %v3325 = vunpack.c.l.b16 %v1776
      %v3326 = vunpack.c.l.b16 %v1777
      %v3327 = vunpack.c.l.b16 %v1778
      %v3328 = vunpack.c.l.b16 %v1779
      %v3329 = vunpack.c.l.b16 %v1780
      %v3330 = vunpack.c.l.b16 %v1781
      %v3331 = vunpack.c.l.b16 %v1782
      %v3332 = vunpack.c.l.b16 %v1783
      %v3333 = vunpack.c.l.b16 %v1784
      %v3334 = vunpack.c.l.b16 %v1785
      %v3335 = vunpack.c.l.b16 %v1786
      %v3336 = vunpack.c.l.b16 %v1787
      %v3337 = vunpack.c.l.b16 %v1788
      %v3338 = vunpack.c.l.b16 %v1789
      %v3339 = vunpack.c.l.b16 %v1790
      %v3340 = vunpack.c.l.b16 %v1791
      %v3341 = vunpack.c.l.b16 %v1792
      %v3342 = vunpack.c.l.b16 %v1793
      %v3343 = vunpack.c.l.b16 %v1794
      %v3344 = vunpack.c.l.b16 %v1795
      %v3345 = vunpack.c.l.b16 %v1796
      %v3346 = vunpack.c.l.b16 %v1797
      %v3347 = vunpack.c.l.b16 %v1798
      %v3348 = vunpack.c.l.b16 %v1799
      %v3349 = vunpack.c.l.b16 %v1800
      %v3350 = vunpack.c.l.b16 %v1801
      %v3351 = vunpack.c.l.b16 %v1802
      %v3352 = vunpack.c.l.b16 %v1803
      %v3353 = vunpack.c.l.b16 %v1804
      %v3354 = vunpack.c.l.b16 %v1805
      %v3355 = vunpack.c.l.b16 %v1806
      %v3356 = vunpack.c.l.b16 %v1807
      %v3357 = vunpack.c.l.b16 %v1808
      %v3358 = vunpack.c.l.b16 %v1809
      %v3359 = vunpack.c.l.b16 %v1810
      %v3360 = vunpack.c.l.b16 %v1811
      %v3361 = vunpack.c.l.b16 %v1812
      %v3362 = vunpack.c.l.b16 %v1813
      %v3363 = vunpack.c.l.b16 %v1814
      %v3364 = vunpack.c.l.b16 %v1815
      %v3365 = vunpack.c.l.b16 %v1816
      %v3366 = vunpack.c.l.b16 %v1817
      %v3367 = vunpack.c.l.b16 %v1818
      %v3368 = vunpack.c.l.b16 %v1819
      %v3369 = vpack.c.b16 %v3298, %v3297
      %v3370 = vpack.c.b16 %v3300, %v3299
      %v3371 = vpack.c.b16 %v3302, %v3301
      %v3372 = vpack.c.b16 %v3304, %v3303
      %v3373 = vpack.c.b16 %v3306, %v3305
      %v3374 = vpack.c.b16 %v3308, %v3307
      %v3375 = vpack.c.b16 %v3310, %v3309
      %v3376 = vpack.c.b16 %v3312, %v3311
      %v3377 = vpack.c.b16 %v3314, %v3313
      %v3378 = vpack.c.b16 %v3316, %v3315
      %v3379 = vpack.c.b16 %v3318, %v3317
      %v3380 = vpack.c.b16 %v3320, %v3319
      %v3381 = vpack.c.b16 %v3322, %v3321
      %v3382 = vpack.c.b16 %v3324, %v3323
      %v3383 = vpack.c.b16 %v3326, %v3325
      %v3384 = vpack.c.b16 %v3328, %v3327
      %v3385 = vpack.c.b16 %v3330, %v3329
      %v3386 = vpack.c.b16 %v3332, %v3331
      %v3387 = vpack.c.b16 %v3334, %v3333
      %v3388 = vpack.c.b16 %v3336, %v3335
      %v3389 = vpack.c.b16 %v3338, %v3337
      %v3390 = vpack.c.b16 %v3340, %v3339
      %v3391 = vpack.c.b16 %v3342, %v3341
      %v3392 = vpack.c.b16 %v3344, %v3343
      %v3393 = vpack.c.b16 %v3346, %v3345
      %v3394 = vpack.c.b16 %v3348, %v3347
      %v3395 = vpack.c.b16 %v3350, %v3349
      %v3396 = vpack.c.b16 %v3352, %v3351
      %v3397 = vpack.c.b16 %v3354, %v3353
      %v3398 = vpack.c.b16 %v3356, %v3355
      %v3399 = vpack.c.b16 %v3358, %v3357
      %v3400 = vpack.c.b16 %v3360, %v3359
      %v3401 = vpack.c.b16 %v3362, %v3361
      %v3402 = vpack.c.b16 %v3364, %v3363
      %v3403 = vpack.c.b16 %v3366, %v3365
      %v3404 = vpack.c.b16 %v3368, %v3367
      %3405 = vrot.lane.b32.xlu0 %v3369, 48
      %v3406 = vpop.permute.xlu0 %3405
      %3407 = vrot.lane.b32.xlu0 %v3370, 48
      %v3408 = vpop.permute.xlu0 %3407
      %3409 = vrot.lane.b32.xlu0 %v3371, 48
      %v3410 = vpop.permute.xlu0 %3409
      %3411 = vrot.lane.b32.xlu0 %v3372, 48
      %v3412 = vpop.permute.xlu0 %3411
      %3413 = vrot.lane.b32.xlu0 %v3373, 48
      %v3414 = vpop.permute.xlu0 %3413
      %3415 = vrot.lane.b32.xlu0 %v3374, 48
      %v3416 = vpop.permute.xlu0 %3415
      %3417 = vrot.lane.b32.xlu0 %v3375, 48
      %v3418 = vpop.permute.xlu0 %3417
      %3419 = vrot.lane.b32.xlu0 %v3376, 48
      %v3420 = vpop.permute.xlu0 %3419
      %3421 = vrot.lane.b32.xlu0 %v3377, 48
      %v3422 = vpop.permute.xlu0 %3421
      %3423 = vrot.lane.b32.xlu0 %v3378, 48
      %v3424 = vpop.permute.xlu0 %3423
      %3425 = vrot.lane.b32.xlu0 %v3379, 48
      %v3426 = vpop.permute.xlu0 %3425
      %3427 = vrot.lane.b32.xlu0 %v3380, 48
      %v3428 = vpop.permute.xlu0 %3427
      %3429 = vrot.lane.b32.xlu0 %v3381, 48
      %v3430 = vpop.permute.xlu0 %3429
      %3431 = vrot.lane.b32.xlu0 %v3382, 48
      %v3432 = vpop.permute.xlu0 %3431
      %3433 = vrot.lane.b32.xlu0 %v3383, 48
      %v3434 = vpop.permute.xlu0 %3433
      %3435 = vrot.lane.b32.xlu0 %v3384, 48
      %v3436 = vpop.permute.xlu0 %3435
      %3437 = vrot.lane.b32.xlu0 %v3385, 48
      %v3438 = vpop.permute.xlu0 %3437
      %3439 = vrot.lane.b32.xlu0 %v3386, 48
      %v3440 = vpop.permute.xlu0 %3439
      %3441 = vrot.lane.b32.xlu0 %v3387, 48
      %v3442 = vpop.permute.xlu0 %3441
      %3443 = vrot.lane.b32.xlu0 %v3388, 48
      %v3444 = vpop.permute.xlu0 %3443
      %3445 = vrot.lane.b32.xlu0 %v3389, 48
      %v3446 = vpop.permute.xlu0 %3445
      %3447 = vrot.lane.b32.xlu0 %v3390, 48
      %v3448 = vpop.permute.xlu0 %3447
      %3449 = vrot.lane.b32.xlu0 %v3391, 48
      %v3450 = vpop.permute.xlu0 %3449
      %3451 = vrot.lane.b32.xlu0 %v3392, 48
      %v3452 = vpop.permute.xlu0 %3451
      %3453 = vrot.lane.b32.xlu0 %v3393, 48
      %v3454 = vpop.permute.xlu0 %3453
      %3455 = vrot.lane.b32.xlu0 %v3394, 48
      %v3456 = vpop.permute.xlu0 %3455
      %3457 = vrot.lane.b32.xlu0 %v3395, 48
      %v3458 = vpop.permute.xlu0 %3457
      %3459 = vrot.lane.b32.xlu0 %v3396, 48
      %v3460 = vpop.permute.xlu0 %3459
      %3461 = vrot.lane.b32.xlu0 %v3397, 48
      %v3462 = vpop.permute.xlu0 %3461
      %3463 = vrot.lane.b32.xlu0 %v3398, 48
      %v3464 = vpop.permute.xlu0 %3463
      %3465 = vrot.lane.b32.xlu0 %v3399, 48
      %v3466 = vpop.permute.xlu0 %3465
      %3467 = vrot.lane.b32.xlu0 %v3400, 48
      %v3468 = vpop.permute.xlu0 %3467
      %3469 = vrot.lane.b32.xlu0 %v3401, 48
      %v3470 = vpop.permute.xlu0 %3469
      %3471 = vrot.lane.b32.xlu0 %v3402, 48
      %v3472 = vpop.permute.xlu0 %3471
      %3473 = vrot.lane.b32.xlu0 %v3403, 48
      %v3474 = vpop.permute.xlu0 %3473
      %3475 = vrot.lane.b32.xlu0 %v3404, 48
      %v3476 = vpop.permute.xlu0 %3475
      %v3549 = vunpack.c.l.b16 %v1892
      %v3550 = vunpack.c.l.b16 %v1893
      %v3551 = vunpack.c.l.b16 %v1894
      %v3552 = vunpack.c.l.b16 %v1895
      %v3553 = vunpack.c.l.b16 %v1896
      %v3554 = vunpack.c.l.b16 %v1897
      %v3555 = vunpack.c.l.b16 %v1898
      %v3556 = vunpack.c.l.b16 %v1899
      %v3557 = vunpack.c.l.b16 %v1900
      %v3558 = vunpack.c.l.b16 %v1901
      %v3559 = vunpack.c.l.b16 %v1902
      %v3560 = vunpack.c.l.b16 %v1903
      %v3561 = vunpack.c.l.b16 %v1904
      %v3562 = vunpack.c.l.b16 %v1905
      %v3563 = vunpack.c.l.b16 %v1906
      %v3564 = vunpack.c.l.b16 %v1907
      %v3565 = vunpack.c.l.b16 %v1908
      %v3566 = vunpack.c.l.b16 %v1909
      %v3567 = vunpack.c.l.b16 %v1910
      %v3568 = vunpack.c.l.b16 %v1911
      %v3569 = vunpack.c.l.b16 %v1912
      %v3570 = vunpack.c.l.b16 %v1913
      %v3571 = vunpack.c.l.b16 %v1914
      %v3572 = vunpack.c.l.b16 %v1915
      %v3573 = vunpack.c.l.b16 %v1916
      %v3574 = vunpack.c.l.b16 %v1917
      %v3575 = vunpack.c.l.b16 %v1918
      %v3576 = vunpack.c.l.b16 %v1919
      %v3577 = vunpack.c.l.b16 %v1920
      %v3578 = vunpack.c.l.b16 %v1921
      %v3579 = vunpack.c.l.b16 %v1922
      %v3580 = vunpack.c.l.b16 %v1923
      %v3581 = vunpack.c.l.b16 %v1924
      %v3582 = vunpack.c.l.b16 %v1925
      %v3583 = vunpack.c.l.b16 %v1926
      %v3584 = vunpack.c.l.b16 %v1927
      %v3585 = vunpack.c.l.b16 %v1928
      %v3586 = vunpack.c.l.b16 %v1929
      %v3587 = vunpack.c.l.b16 %v1930
      %v3588 = vunpack.c.l.b16 %v1931
      %v3589 = vunpack.c.l.b16 %v1932
      %v3590 = vunpack.c.l.b16 %v1933
      %v3591 = vunpack.c.l.b16 %v1934
      %v3592 = vunpack.c.l.b16 %v1935
      %v3593 = vunpack.c.l.b16 %v1936
      %v3594 = vunpack.c.l.b16 %v1937
      %v3595 = vunpack.c.l.b16 %v1938
      %v3596 = vunpack.c.l.b16 %v1939
      %v3597 = vunpack.c.l.b16 %v1940
      %v3598 = vunpack.c.l.b16 %v1941
      %v3599 = vunpack.c.l.b16 %v1942
      %v3600 = vunpack.c.l.b16 %v1943
      %v3601 = vunpack.c.l.b16 %v1944
      %v3602 = vunpack.c.l.b16 %v1945
      %v3603 = vunpack.c.l.b16 %v1946
      %v3604 = vunpack.c.l.b16 %v1947
      %v3605 = vunpack.c.l.b16 %v1948
      %v3606 = vunpack.c.l.b16 %v1949
      %v3607 = vunpack.c.l.b16 %v1950
      %v3608 = vunpack.c.l.b16 %v1951
      %v3609 = vunpack.c.l.b16 %v1952
      %v3610 = vunpack.c.l.b16 %v1953
      %v3611 = vunpack.c.l.b16 %v1954
      %v3612 = vunpack.c.l.b16 %v1955
      %v3613 = vunpack.c.l.b16 %v1956
      %v3614 = vunpack.c.l.b16 %v1957
      %v3615 = vunpack.c.l.b16 %v1958
      %v3616 = vunpack.c.l.b16 %v1959
      %v3617 = vunpack.c.l.b16 %v1960
      %v3618 = vunpack.c.l.b16 %v1961
      %v3619 = vunpack.c.l.b16 %v1962
      %v3620 = vunpack.c.l.b16 %v1963
      %v3621 = vpack.c.b16 %v3550, %v3549
      %v3622 = vpack.c.b16 %v3552, %v3551
      %v3623 = vpack.c.b16 %v3554, %v3553
      %v3624 = vpack.c.b16 %v3556, %v3555
      %v3625 = vpack.c.b16 %v3558, %v3557
      %v3626 = vpack.c.b16 %v3560, %v3559
      %v3627 = vpack.c.b16 %v3562, %v3561
      %v3628 = vpack.c.b16 %v3564, %v3563
      %v3629 = vpack.c.b16 %v3566, %v3565
      %v3630 = vpack.c.b16 %v3568, %v3567
      %v3631 = vpack.c.b16 %v3570, %v3569
      %v3632 = vpack.c.b16 %v3572, %v3571
      %v3633 = vpack.c.b16 %v3574, %v3573
      %v3634 = vpack.c.b16 %v3576, %v3575
      %v3635 = vpack.c.b16 %v3578, %v3577
      %v3636 = vpack.c.b16 %v3580, %v3579
      %v3637 = vpack.c.b16 %v3582, %v3581
      %v3638 = vpack.c.b16 %v3584, %v3583
      %v3639 = vpack.c.b16 %v3586, %v3585
      %v3640 = vpack.c.b16 %v3588, %v3587
      %v3641 = vpack.c.b16 %v3590, %v3589
      %v3642 = vpack.c.b16 %v3592, %v3591
      %v3643 = vpack.c.b16 %v3594, %v3593
      %v3644 = vpack.c.b16 %v3596, %v3595
      %v3645 = vpack.c.b16 %v3598, %v3597
      %v3646 = vpack.c.b16 %v3600, %v3599
      %v3647 = vpack.c.b16 %v3602, %v3601
      %v3648 = vpack.c.b16 %v3604, %v3603
      %v3649 = vpack.c.b16 %v3606, %v3605
      %v3650 = vpack.c.b16 %v3608, %v3607
      %v3651 = vpack.c.b16 %v3610, %v3609
      %v3652 = vpack.c.b16 %v3612, %v3611
      %v3653 = vpack.c.b16 %v3614, %v3613
      %v3654 = vpack.c.b16 %v3616, %v3615
      %v3655 = vpack.c.b16 %v3618, %v3617
      %v3656 = vpack.c.b16 %v3620, %v3619
      %3657 = vrot.lane.b32.xlu0 %v3621, 64
      %v3658 = vpop.permute.xlu0 %3657
      %3659 = vrot.lane.b32.xlu0 %v3622, 64
      %v3660 = vpop.permute.xlu0 %3659
      %3661 = vrot.lane.b32.xlu0 %v3623, 64
      %v3662 = vpop.permute.xlu0 %3661
      %3663 = vrot.lane.b32.xlu0 %v3624, 64
      %v3664 = vpop.permute.xlu0 %3663
      %3665 = vrot.lane.b32.xlu0 %v3625, 64
      %v3666 = vpop.permute.xlu0 %3665
      %3667 = vrot.lane.b32.xlu0 %v3626, 64
      %v3668 = vpop.permute.xlu0 %3667
      %3669 = vrot.lane.b32.xlu0 %v3627, 64
      %v3670 = vpop.permute.xlu0 %3669
      %3671 = vrot.lane.b32.xlu0 %v3628, 64
      %v3672 = vpop.permute.xlu0 %3671
      %3673 = vrot.lane.b32.xlu0 %v3629, 64
      %v3674 = vpop.permute.xlu0 %3673
      %3675 = vrot.lane.b32.xlu0 %v3630, 64
      %v3676 = vpop.permute.xlu0 %3675
      %3677 = vrot.lane.b32.xlu0 %v3631, 64
      %v3678 = vpop.permute.xlu0 %3677
      %3679 = vrot.lane.b32.xlu0 %v3632, 64
      %v3680 = vpop.permute.xlu0 %3679
      %3681 = vrot.lane.b32.xlu0 %v3633, 64
      %v3682 = vpop.permute.xlu0 %3681
      %3683 = vrot.lane.b32.xlu0 %v3634, 64
      %v3684 = vpop.permute.xlu0 %3683
      %3685 = vrot.lane.b32.xlu0 %v3635, 64
      %v3686 = vpop.permute.xlu0 %3685
      %3687 = vrot.lane.b32.xlu0 %v3636, 64
      %v3688 = vpop.permute.xlu0 %3687
      %3689 = vrot.lane.b32.xlu0 %v3637, 64
      %v3690 = vpop.permute.xlu0 %3689
      %3691 = vrot.lane.b32.xlu0 %v3638, 64
      %v3692 = vpop.permute.xlu0 %3691
      %3693 = vrot.lane.b32.xlu0 %v3639, 64
      %v3694 = vpop.permute.xlu0 %3693
      %3695 = vrot.lane.b32.xlu0 %v3640, 64
      %v3696 = vpop.permute.xlu0 %3695
      %3697 = vrot.lane.b32.xlu0 %v3641, 64
      %v3698 = vpop.permute.xlu0 %3697
      %3699 = vrot.lane.b32.xlu0 %v3642, 64
      %v3700 = vpop.permute.xlu0 %3699
      %3701 = vrot.lane.b32.xlu0 %v3643, 64
      %v3702 = vpop.permute.xlu0 %3701
      %3703 = vrot.lane.b32.xlu0 %v3644, 64
      %v3704 = vpop.permute.xlu0 %3703
      %3705 = vrot.lane.b32.xlu0 %v3645, 64
      %v3706 = vpop.permute.xlu0 %3705
      %3707 = vrot.lane.b32.xlu0 %v3646, 64
      %v3708 = vpop.permute.xlu0 %3707
      %3709 = vrot.lane.b32.xlu0 %v3647, 64
      %v3710 = vpop.permute.xlu0 %3709
      %3711 = vrot.lane.b32.xlu0 %v3648, 64
      %v3712 = vpop.permute.xlu0 %3711
      %3713 = vrot.lane.b32.xlu0 %v3649, 64
      %v3714 = vpop.permute.xlu0 %3713
      %3715 = vrot.lane.b32.xlu0 %v3650, 64
      %v3716 = vpop.permute.xlu0 %3715
      %3717 = vrot.lane.b32.xlu0 %v3651, 64
      %v3718 = vpop.permute.xlu0 %3717
      %3719 = vrot.lane.b32.xlu0 %v3652, 64
      %v3720 = vpop.permute.xlu0 %3719
      %3721 = vrot.lane.b32.xlu0 %v3653, 64
      %v3722 = vpop.permute.xlu0 %3721
      %3723 = vrot.lane.b32.xlu0 %v3654, 64
      %v3724 = vpop.permute.xlu0 %3723
      %3725 = vrot.lane.b32.xlu0 %v3655, 64
      %v3726 = vpop.permute.xlu0 %3725
      %3727 = vrot.lane.b32.xlu0 %v3656, 64
      %v3728 = vpop.permute.xlu0 %3727
      %v3801 = vunpack.c.l.b16 %v2036
      %v3802 = vunpack.c.l.b16 %v2037
      %v3803 = vunpack.c.l.b16 %v2038
      %v3804 = vunpack.c.l.b16 %v2039
      %v3805 = vunpack.c.l.b16 %v2040
      %v3806 = vunpack.c.l.b16 %v2041
      %v3807 = vunpack.c.l.b16 %v2042
      %v3808 = vunpack.c.l.b16 %v2043
      %v3809 = vunpack.c.l.b16 %v2044
      %v3810 = vunpack.c.l.b16 %v2045
      %v3811 = vunpack.c.l.b16 %v2046
      %v3812 = vunpack.c.l.b16 %v2047
      %v3813 = vunpack.c.l.b16 %v2048
      %v3814 = vunpack.c.l.b16 %v2049
      %v3815 = vunpack.c.l.b16 %v2050
      %v3816 = vunpack.c.l.b16 %v2051
      %v3817 = vunpack.c.l.b16 %v2052
      %v3818 = vunpack.c.l.b16 %v2053
      %v3819 = vunpack.c.l.b16 %v2054
      %v3820 = vunpack.c.l.b16 %v2055
      %v3821 = vunpack.c.l.b16 %v2056
      %v3822 = vunpack.c.l.b16 %v2057
      %v3823 = vunpack.c.l.b16 %v2058
      %v3824 = vunpack.c.l.b16 %v2059
      %v3825 = vunpack.c.l.b16 %v2060
      %v3826 = vunpack.c.l.b16 %v2061
      %v3827 = vunpack.c.l.b16 %v2062
      %v3828 = vunpack.c.l.b16 %v2063
      %v3829 = vunpack.c.l.b16 %v2064
      %v3830 = vunpack.c.l.b16 %v2065
      %v3831 = vunpack.c.l.b16 %v2066
      %v3832 = vunpack.c.l.b16 %v2067
      %v3833 = vunpack.c.l.b16 %v2068
      %v3834 = vunpack.c.l.b16 %v2069
      %v3835 = vunpack.c.l.b16 %v2070
      %v3836 = vunpack.c.l.b16 %v2071
      %v3837 = vunpack.c.l.b16 %v2072
      %v3838 = vunpack.c.l.b16 %v2073
      %v3839 = vunpack.c.l.b16 %v2074
      %v3840 = vunpack.c.l.b16 %v2075
      %v3841 = vunpack.c.l.b16 %v2076
      %v3842 = vunpack.c.l.b16 %v2077
      %v3843 = vunpack.c.l.b16 %v2078
      %v3844 = vunpack.c.l.b16 %v2079
      %v3845 = vunpack.c.l.b16 %v2080
      %v3846 = vunpack.c.l.b16 %v2081
      %v3847 = vunpack.c.l.b16 %v2082
      %v3848 = vunpack.c.l.b16 %v2083
      %v3849 = vunpack.c.l.b16 %v2084
      %v3850 = vunpack.c.l.b16 %v2085
      %v3851 = vunpack.c.l.b16 %v2086
      %v3852 = vunpack.c.l.b16 %v2087
      %v3853 = vunpack.c.l.b16 %v2088
      %v3854 = vunpack.c.l.b16 %v2089
      %v3855 = vunpack.c.l.b16 %v2090
      %v3856 = vunpack.c.l.b16 %v2091
      %v3857 = vunpack.c.l.b16 %v2092
      %v3858 = vunpack.c.l.b16 %v2093
      %v3859 = vunpack.c.l.b16 %v2094
      %v3860 = vunpack.c.l.b16 %v2095
      %v3861 = vunpack.c.l.b16 %v2096
      %v3862 = vunpack.c.l.b16 %v2097
      %v3863 = vunpack.c.l.b16 %v2098
      %v3864 = vunpack.c.l.b16 %v2099
      %v3865 = vunpack.c.l.b16 %v2100
      %v3866 = vunpack.c.l.b16 %v2101
      %v3867 = vunpack.c.l.b16 %v2102
      %v3868 = vunpack.c.l.b16 %v2103
      %v3869 = vunpack.c.l.b16 %v2104
      %v3870 = vunpack.c.l.b16 %v2105
      %v3871 = vunpack.c.l.b16 %v2106
      %v3872 = vunpack.c.l.b16 %v2107
      %v3873 = vpack.c.b16 %v3802, %v3801
      %v3874 = vpack.c.b16 %v3804, %v3803
      %v3875 = vpack.c.b16 %v3806, %v3805
      %v3876 = vpack.c.b16 %v3808, %v3807
      %v3877 = vpack.c.b16 %v3810, %v3809
      %v3878 = vpack.c.b16 %v3812, %v3811
      %v3879 = vpack.c.b16 %v3814, %v3813
      %v3880 = vpack.c.b16 %v3816, %v3815
      %v3881 = vpack.c.b16 %v3818, %v3817
      %v3882 = vpack.c.b16 %v3820, %v3819
      %v3883 = vpack.c.b16 %v3822, %v3821
      %v3884 = vpack.c.b16 %v3824, %v3823
      %v3885 = vpack.c.b16 %v3826, %v3825
      %v3886 = vpack.c.b16 %v3828, %v3827
      %v3887 = vpack.c.b16 %v3830, %v3829
      %v3888 = vpack.c.b16 %v3832, %v3831
      %v3889 = vpack.c.b16 %v3834, %v3833
      %v3890 = vpack.c.b16 %v3836, %v3835
      %v3891 = vpack.c.b16 %v3838, %v3837
      %v3892 = vpack.c.b16 %v3840, %v3839
      %v3893 = vpack.c.b16 %v3842, %v3841
      %v3894 = vpack.c.b16 %v3844, %v3843
      %v3895 = vpack.c.b16 %v3846, %v3845
      %v3896 = vpack.c.b16 %v3848, %v3847
      %v3897 = vpack.c.b16 %v3850, %v3849
      %v3898 = vpack.c.b16 %v3852, %v3851
      %v3899 = vpack.c.b16 %v3854, %v3853
      %v3900 = vpack.c.b16 %v3856, %v3855
      %v3901 = vpack.c.b16 %v3858, %v3857
      %v3902 = vpack.c.b16 %v3860, %v3859
      %v3903 = vpack.c.b16 %v3862, %v3861
      %v3904 = vpack.c.b16 %v3864, %v3863
      %v3905 = vpack.c.b16 %v3866, %v3865
      %v3906 = vpack.c.b16 %v3868, %v3867
      %v3907 = vpack.c.b16 %v3870, %v3869
      %v3908 = vpack.c.b16 %v3872, %v3871
      %3909 = vrot.lane.b32.xlu0 %v3873, 80
      %v3910 = vpop.permute.xlu0 %3909
      %3911 = vrot.lane.b32.xlu0 %v3874, 80
      %v3912 = vpop.permute.xlu0 %3911
      %3913 = vrot.lane.b32.xlu0 %v3875, 80
      %v3914 = vpop.permute.xlu0 %3913
      %3915 = vrot.lane.b32.xlu0 %v3876, 80
      %v3916 = vpop.permute.xlu0 %3915
      %3917 = vrot.lane.b32.xlu0 %v3877, 80
      %v3918 = vpop.permute.xlu0 %3917
      %3919 = vrot.lane.b32.xlu0 %v3878, 80
      %v3920 = vpop.permute.xlu0 %3919
      %3921 = vrot.lane.b32.xlu0 %v3879, 80
      %v3922 = vpop.permute.xlu0 %3921
      %3923 = vrot.lane.b32.xlu0 %v3880, 80
      %v3924 = vpop.permute.xlu0 %3923
      %3925 = vrot.lane.b32.xlu0 %v3881, 80
      %v3926 = vpop.permute.xlu0 %3925
      %3927 = vrot.lane.b32.xlu0 %v3882, 80
      %v3928 = vpop.permute.xlu0 %3927
      %3929 = vrot.lane.b32.xlu0 %v3883, 80
      %v3930 = vpop.permute.xlu0 %3929
      %3931 = vrot.lane.b32.xlu0 %v3884, 80
      %v3932 = vpop.permute.xlu0 %3931
      %3933 = vrot.lane.b32.xlu0 %v3885, 80
      %v3934 = vpop.permute.xlu0 %3933
      %3935 = vrot.lane.b32.xlu0 %v3886, 80
      %v3936 = vpop.permute.xlu0 %3935
      %3937 = vrot.lane.b32.xlu0 %v3887, 80
      %v3938 = vpop.permute.xlu0 %3937
      %3939 = vrot.lane.b32.xlu0 %v3888, 80
      %v3940 = vpop.permute.xlu0 %3939
      %3941 = vrot.lane.b32.xlu0 %v3889, 80
      %v3942 = vpop.permute.xlu0 %3941
      %3943 = vrot.lane.b32.xlu0 %v3890, 80
      %v3944 = vpop.permute.xlu0 %3943
      %3945 = vrot.lane.b32.xlu0 %v3891, 80
      %v3946 = vpop.permute.xlu0 %3945
      %3947 = vrot.lane.b32.xlu0 %v3892, 80
      %v3948 = vpop.permute.xlu0 %3947
      %3949 = vrot.lane.b32.xlu0 %v3893, 80
      %v3950 = vpop.permute.xlu0 %3949
      %3951 = vrot.lane.b32.xlu0 %v3894, 80
      %v3952 = vpop.permute.xlu0 %3951
      %3953 = vrot.lane.b32.xlu0 %v3895, 80
      %v3954 = vpop.permute.xlu0 %3953
      %3955 = vrot.lane.b32.xlu0 %v3896, 80
      %v3956 = vpop.permute.xlu0 %3955
      %3957 = vrot.lane.b32.xlu0 %v3897, 80
      %v3958 = vpop.permute.xlu0 %3957
      %3959 = vrot.lane.b32.xlu0 %v3898, 80
      %v3960 = vpop.permute.xlu0 %3959
      %3961 = vrot.lane.b32.xlu0 %v3899, 80
      %v3962 = vpop.permute.xlu0 %3961
      %3963 = vrot.lane.b32.xlu0 %v3900, 80
      %v3964 = vpop.permute.xlu0 %3963
      %3965 = vrot.lane.b32.xlu0 %v3901, 80
      %v3966 = vpop.permute.xlu0 %3965
      %3967 = vrot.lane.b32.xlu0 %v3902, 80
      %v3968 = vpop.permute.xlu0 %3967
      %3969 = vrot.lane.b32.xlu0 %v3903, 80
      %v3970 = vpop.permute.xlu0 %3969
      %3971 = vrot.lane.b32.xlu0 %v3904, 80
      %v3972 = vpop.permute.xlu0 %3971
      %3973 = vrot.lane.b32.xlu0 %v3905, 80
      %v3974 = vpop.permute.xlu0 %3973
      %3975 = vrot.lane.b32.xlu0 %v3906, 80
      %v3976 = vpop.permute.xlu0 %3975
      %3977 = vrot.lane.b32.xlu0 %v3907, 80
      %v3978 = vpop.permute.xlu0 %3977
      %3979 = vrot.lane.b32.xlu0 %v3908, 80
      %v3980 = vpop.permute.xlu0 %3979
      %v4053 = vunpack.c.l.b16 %v2181
      %v4054 = vunpack.c.l.b16 %v2182
      %v4055 = vunpack.c.l.b16 %v2183
      %v4056 = vunpack.c.l.b16 %v2184
      %v4057 = vunpack.c.l.b16 %v2185
      %v4058 = vunpack.c.l.b16 %v2186
      %v4059 = vunpack.c.l.b16 %v2187
      %v4060 = vunpack.c.l.b16 %v2188
      %v4061 = vunpack.c.l.b16 %v2189
      %v4062 = vunpack.c.l.b16 %v2190
      %v4063 = vunpack.c.l.b16 %v2191
      %v4064 = vunpack.c.l.b16 %v2192
      %v4065 = vunpack.c.l.b16 %v2193
      %v4066 = vunpack.c.l.b16 %v2194
      %v4067 = vunpack.c.l.b16 %v2195
      %v4068 = vunpack.c.l.b16 %v2196
      %v4069 = vunpack.c.l.b16 %v2197
      %v4070 = vunpack.c.l.b16 %v2198
      %v4071 = vunpack.c.l.b16 %v2199
      %v4072 = vunpack.c.l.b16 %v2200
      %v4073 = vunpack.c.l.b16 %v2201
      %v4074 = vunpack.c.l.b16 %v2202
      %v4075 = vunpack.c.l.b16 %v2203
      %v4076 = vunpack.c.l.b16 %v2204
      %v4077 = vunpack.c.l.b16 %v2205
      %v4078 = vunpack.c.l.b16 %v2206
      %v4079 = vunpack.c.l.b16 %v2207
      %v4080 = vunpack.c.l.b16 %v2208
      %v4081 = vunpack.c.l.b16 %v2209
      %v4082 = vunpack.c.l.b16 %v2210
      %v4083 = vunpack.c.l.b16 %v2211
      %v4084 = vunpack.c.l.b16 %v2212
      %v4085 = vunpack.c.l.b16 %v2213
      %v4086 = vunpack.c.l.b16 %v2214
      %v4087 = vunpack.c.l.b16 %v2215
      %v4088 = vunpack.c.l.b16 %v2216
      %v4089 = vunpack.c.l.b16 %v2217
      %v4090 = vunpack.c.l.b16 %v2218
      %v4091 = vunpack.c.l.b16 %v2219
      %v4092 = vunpack.c.l.b16 %v2220
      %v4093 = vunpack.c.l.b16 %v2221
      %v4094 = vunpack.c.l.b16 %v2222
      %v4095 = vunpack.c.l.b16 %v2223
      %v4096 = vunpack.c.l.b16 %v2224
      %v4097 = vunpack.c.l.b16 %v2225
      %v4098 = vunpack.c.l.b16 %v2226
      %v4099 = vunpack.c.l.b16 %v2227
      %v4100 = vunpack.c.l.b16 %v2228
      %v4101 = vunpack.c.l.b16 %v2229
      %v4102 = vunpack.c.l.b16 %v2230
      %v4103 = vunpack.c.l.b16 %v2231
      %v4104 = vunpack.c.l.b16 %v2232
      %v4105 = vunpack.c.l.b16 %v2233
      %v4106 = vunpack.c.l.b16 %v2234
      %v4107 = vunpack.c.l.b16 %v2235
      %v4108 = vunpack.c.l.b16 %v2236
      %v4109 = vunpack.c.l.b16 %v2237
      %v4110 = vunpack.c.l.b16 %v2238
      %v4111 = vunpack.c.l.b16 %v2239
      %v4112 = vunpack.c.l.b16 %v2240
      %v4113 = vunpack.c.l.b16 %v2241
      %v4114 = vunpack.c.l.b16 %v2242
      %v4115 = vunpack.c.l.b16 %v2243
      %v4116 = vunpack.c.l.b16 %v2244
      %v4117 = vunpack.c.l.b16 %v2245
      %v4118 = vunpack.c.l.b16 %v2246
      %v4119 = vunpack.c.l.b16 %v2247
      %v4120 = vunpack.c.l.b16 %v2248
      %v4121 = vunpack.c.l.b16 %v2249
      %v4122 = vunpack.c.l.b16 %v2250
      %v4123 = vunpack.c.l.b16 %v2251
      %v4124 = vunpack.c.l.b16 %v2252
      %v4125 = vpack.c.b16 %v4054, %v4053
      %v4126 = vpack.c.b16 %v4056, %v4055
      %v4127 = vpack.c.b16 %v4058, %v4057
      %v4128 = vpack.c.b16 %v4060, %v4059
      %v4129 = vpack.c.b16 %v4062, %v4061
      %v4130 = vpack.c.b16 %v4064, %v4063
      %v4131 = vpack.c.b16 %v4066, %v4065
      %v4132 = vpack.c.b16 %v4068, %v4067
      %v4133 = vpack.c.b16 %v4070, %v4069
      %v4134 = vpack.c.b16 %v4072, %v4071
      %v4135 = vpack.c.b16 %v4074, %v4073
      %v4136 = vpack.c.b16 %v4076, %v4075
      %v4137 = vpack.c.b16 %v4078, %v4077
      %v4138 = vpack.c.b16 %v4080, %v4079
      %v4139 = vpack.c.b16 %v4082, %v4081
      %v4140 = vpack.c.b16 %v4084, %v4083
      %v4141 = vpack.c.b16 %v4086, %v4085
      %v4142 = vpack.c.b16 %v4088, %v4087
      %v4143 = vpack.c.b16 %v4090, %v4089
      %v4144 = vpack.c.b16 %v4092, %v4091
      %v4145 = vpack.c.b16 %v4094, %v4093
      %v4146 = vpack.c.b16 %v4096, %v4095
      %v4147 = vpack.c.b16 %v4098, %v4097
      %v4148 = vpack.c.b16 %v4100, %v4099
      %v4149 = vpack.c.b16 %v4102, %v4101
      %v4150 = vpack.c.b16 %v4104, %v4103
      %v4151 = vpack.c.b16 %v4106, %v4105
      %v4152 = vpack.c.b16 %v4108, %v4107
      %v4153 = vpack.c.b16 %v4110, %v4109
      %v4154 = vpack.c.b16 %v4112, %v4111
      %v4155 = vpack.c.b16 %v4114, %v4113
      %v4156 = vpack.c.b16 %v4116, %v4115
      %v4157 = vpack.c.b16 %v4118, %v4117
      %v4158 = vpack.c.b16 %v4120, %v4119
      %v4159 = vpack.c.b16 %v4122, %v4121
      %v4160 = vpack.c.b16 %v4124, %v4123
      %4161 = vrot.lane.b32.xlu0 %v4125, 96
      %v4162 = vpop.permute.xlu0 %4161
      %4163 = vrot.lane.b32.xlu0 %v4126, 96
      %v4164 = vpop.permute.xlu0 %4163
      %4165 = vrot.lane.b32.xlu0 %v4127, 96
      %v4166 = vpop.permute.xlu0 %4165
      %4167 = vrot.lane.b32.xlu0 %v4128, 96
      %v4168 = vpop.permute.xlu0 %4167
      %4169 = vrot.lane.b32.xlu0 %v4129, 96
      %v4170 = vpop.permute.xlu0 %4169
      %4171 = vrot.lane.b32.xlu0 %v4130, 96
      %v4172 = vpop.permute.xlu0 %4171
      %4173 = vrot.lane.b32.xlu0 %v4131, 96
      %v4174 = vpop.permute.xlu0 %4173
      %4175 = vrot.lane.b32.xlu0 %v4132, 96
      %v4176 = vpop.permute.xlu0 %4175
      %4177 = vrot.lane.b32.xlu0 %v4133, 96
      %v4178 = vpop.permute.xlu0 %4177
      %4179 = vrot.lane.b32.xlu0 %v4134, 96
      %v4180 = vpop.permute.xlu0 %4179
      %4181 = vrot.lane.b32.xlu0 %v4135, 96
      %v4182 = vpop.permute.xlu0 %4181
      %4183 = vrot.lane.b32.xlu0 %v4136, 96
      %v4184 = vpop.permute.xlu0 %4183
      %4185 = vrot.lane.b32.xlu0 %v4137, 96
      %v4186 = vpop.permute.xlu0 %4185
      %4187 = vrot.lane.b32.xlu0 %v4138, 96
      %v4188 = vpop.permute.xlu0 %4187
      %4189 = vrot.lane.b32.xlu0 %v4139, 96
      %v4190 = vpop.permute.xlu0 %4189
      %4191 = vrot.lane.b32.xlu0 %v4140, 96
      %v4192 = vpop.permute.xlu0 %4191
      %4193 = vrot.lane.b32.xlu0 %v4141, 96
      %v4194 = vpop.permute.xlu0 %4193
      %4195 = vrot.lane.b32.xlu0 %v4142, 96
      %v4196 = vpop.permute.xlu0 %4195
      %4197 = vrot.lane.b32.xlu0 %v4143, 96
      %v4198 = vpop.permute.xlu0 %4197
      %4199 = vrot.lane.b32.xlu0 %v4144, 96
      %v4200 = vpop.permute.xlu0 %4199
      %4201 = vrot.lane.b32.xlu0 %v4145, 96
      %v4202 = vpop.permute.xlu0 %4201
      %4203 = vrot.lane.b32.xlu0 %v4146, 96
      %v4204 = vpop.permute.xlu0 %4203
      %4205 = vrot.lane.b32.xlu0 %v4147, 96
      %v4206 = vpop.permute.xlu0 %4205
      %4207 = vrot.lane.b32.xlu0 %v4148, 96
      %v4208 = vpop.permute.xlu0 %4207
      %4209 = vrot.lane.b32.xlu0 %v4149, 96
      %v4210 = vpop.permute.xlu0 %4209
      %4211 = vrot.lane.b32.xlu0 %v4150, 96
      %v4212 = vpop.permute.xlu0 %4211
      %4213 = vrot.lane.b32.xlu0 %v4151, 96
      %v4214 = vpop.permute.xlu0 %4213
      %4215 = vrot.lane.b32.xlu0 %v4152, 96
      %v4216 = vpop.permute.xlu0 %4215
      %4217 = vrot.lane.b32.xlu0 %v4153, 96
      %v4218 = vpop.permute.xlu0 %4217
      %4219 = vrot.lane.b32.xlu0 %v4154, 96
      %v4220 = vpop.permute.xlu0 %4219
      %4221 = vrot.lane.b32.xlu0 %v4155, 96
      %v4222 = vpop.permute.xlu0 %4221
      %4223 = vrot.lane.b32.xlu0 %v4156, 96
      %v4224 = vpop.permute.xlu0 %4223
      %4225 = vrot.lane.b32.xlu0 %v4157, 96
      %v4226 = vpop.permute.xlu0 %4225
      %4227 = vrot.lane.b32.xlu0 %v4158, 96
      %v4228 = vpop.permute.xlu0 %4227
      %4229 = vrot.lane.b32.xlu0 %v4159, 96
      %v4230 = vpop.permute.xlu0 %4229
      %4231 = vrot.lane.b32.xlu0 %v4160, 96
      %v4232 = vpop.permute.xlu0 %4231
      %v4305 = vunpack.c.l.b16 %v2325
      %v4306 = vunpack.c.l.b16 %v2326
      %v4307 = vunpack.c.l.b16 %v2327
      %v4308 = vunpack.c.l.b16 %v2328
      %v4309 = vunpack.c.l.b16 %v2329
      %v4310 = vunpack.c.l.b16 %v2330
      %v4311 = vunpack.c.l.b16 %v2331
      %v4312 = vunpack.c.l.b16 %v2332
      %v4313 = vunpack.c.l.b16 %v2333
      %v4314 = vunpack.c.l.b16 %v2334
      %v4315 = vunpack.c.l.b16 %v2335
      %v4316 = vunpack.c.l.b16 %v2336
      %v4317 = vunpack.c.l.b16 %v2337
      %v4318 = vunpack.c.l.b16 %v2338
      %v4319 = vunpack.c.l.b16 %v2339
      %v4320 = vunpack.c.l.b16 %v2340
      %v4321 = vunpack.c.l.b16 %v2341
      %v4322 = vunpack.c.l.b16 %v2342
      %v4323 = vunpack.c.l.b16 %v2343
      %v4324 = vunpack.c.l.b16 %v2344
      %v4325 = vunpack.c.l.b16 %v2345
      %v4326 = vunpack.c.l.b16 %v2346
      %v4327 = vunpack.c.l.b16 %v2347
      %v4328 = vunpack.c.l.b16 %v2348
      %v4329 = vunpack.c.l.b16 %v2349
      %v4330 = vunpack.c.l.b16 %v2350
      %v4331 = vunpack.c.l.b16 %v2351
      %v4332 = vunpack.c.l.b16 %v2352
      %v4333 = vunpack.c.l.b16 %v2353
      %v4334 = vunpack.c.l.b16 %v2354
      %v4335 = vunpack.c.l.b16 %v2355
      %v4336 = vunpack.c.l.b16 %v2356
      %v4337 = vunpack.c.l.b16 %v2357
      %v4338 = vunpack.c.l.b16 %v2358
      %v4339 = vunpack.c.l.b16 %v2359
      %v4340 = vunpack.c.l.b16 %v2360
      %v4341 = vunpack.c.l.b16 %v2361
      %v4342 = vunpack.c.l.b16 %v2362
      %v4343 = vunpack.c.l.b16 %v2363
      %v4344 = vunpack.c.l.b16 %v2364
      %v4345 = vunpack.c.l.b16 %v2365
      %v4346 = vunpack.c.l.b16 %v2366
      %v4347 = vunpack.c.l.b16 %v2367
      %v4348 = vunpack.c.l.b16 %v2368
      %v4349 = vunpack.c.l.b16 %v2369
      %v4350 = vunpack.c.l.b16 %v2370
      %v4351 = vunpack.c.l.b16 %v2371
      %v4352 = vunpack.c.l.b16 %v2372
      %v4353 = vunpack.c.l.b16 %v2373
      %v4354 = vunpack.c.l.b16 %v2374
      %v4355 = vunpack.c.l.b16 %v2375
      %v4356 = vunpack.c.l.b16 %v2376
      %v4357 = vunpack.c.l.b16 %v2377
      %v4358 = vunpack.c.l.b16 %v2378
      %v4359 = vunpack.c.l.b16 %v2379
      %v4360 = vunpack.c.l.b16 %v2380
      %v4361 = vunpack.c.l.b16 %v2381
      %v4362 = vunpack.c.l.b16 %v2382
      %v4363 = vunpack.c.l.b16 %v2383
      %v4364 = vunpack.c.l.b16 %v2384
      %v4365 = vunpack.c.l.b16 %v2385
      %v4366 = vunpack.c.l.b16 %v2386
      %v4367 = vunpack.c.l.b16 %v2387
      %v4368 = vunpack.c.l.b16 %v2388
      %v4369 = vunpack.c.l.b16 %v2389
      %v4370 = vunpack.c.l.b16 %v2390
      %v4371 = vunpack.c.l.b16 %v2391
      %v4372 = vunpack.c.l.b16 %v2392
      %v4373 = vunpack.c.l.b16 %v2393
      %v4374 = vunpack.c.l.b16 %v2394
      %v4375 = vunpack.c.l.b16 %v2395
      %v4376 = vunpack.c.l.b16 %v2396
      %v4377 = vpack.c.b16 %v4306, %v4305
      %v4378 = vpack.c.b16 %v4308, %v4307
      %v4379 = vpack.c.b16 %v4310, %v4309
      %v4380 = vpack.c.b16 %v4312, %v4311
      %v4381 = vpack.c.b16 %v4314, %v4313
      %v4382 = vpack.c.b16 %v4316, %v4315
      %v4383 = vpack.c.b16 %v4318, %v4317
      %v4384 = vpack.c.b16 %v4320, %v4319
      %v4385 = vpack.c.b16 %v4322, %v4321
      %v4386 = vpack.c.b16 %v4324, %v4323
      %v4387 = vpack.c.b16 %v4326, %v4325
      %v4388 = vpack.c.b16 %v4328, %v4327
      %v4389 = vpack.c.b16 %v4330, %v4329
      %v4390 = vpack.c.b16 %v4332, %v4331
      %v4391 = vpack.c.b16 %v4334, %v4333
      %v4392 = vpack.c.b16 %v4336, %v4335
      %v4393 = vpack.c.b16 %v4338, %v4337
      %v4394 = vpack.c.b16 %v4340, %v4339
      %v4395 = vpack.c.b16 %v4342, %v4341
      %v4396 = vpack.c.b16 %v4344, %v4343
      %v4397 = vpack.c.b16 %v4346, %v4345
      %v4398 = vpack.c.b16 %v4348, %v4347
      %v4399 = vpack.c.b16 %v4350, %v4349
      %v4400 = vpack.c.b16 %v4352, %v4351
      %v4401 = vpack.c.b16 %v4354, %v4353
      %v4402 = vpack.c.b16 %v4356, %v4355
      %v4403 = vpack.c.b16 %v4358, %v4357
      %v4404 = vpack.c.b16 %v4360, %v4359
      %v4405 = vpack.c.b16 %v4362, %v4361
      %v4406 = vpack.c.b16 %v4364, %v4363
      %v4407 = vpack.c.b16 %v4366, %v4365
      %v4408 = vpack.c.b16 %v4368, %v4367
      %v4409 = vpack.c.b16 %v4370, %v4369
      %v4410 = vpack.c.b16 %v4372, %v4371
      %v4411 = vpack.c.b16 %v4374, %v4373
      %v4412 = vpack.c.b16 %v4376, %v4375
      %4413 = vrot.lane.b32.xlu0 %v4377, 112
      %v4414 = vpop.permute.xlu0 %4413
      %4415 = vrot.lane.b32.xlu0 %v4378, 112
      %v4416 = vpop.permute.xlu0 %4415
      %4417 = vrot.lane.b32.xlu0 %v4379, 112
      %v4418 = vpop.permute.xlu0 %4417
      %4419 = vrot.lane.b32.xlu0 %v4380, 112
      %v4420 = vpop.permute.xlu0 %4419
      %4421 = vrot.lane.b32.xlu0 %v4381, 112
      %v4422 = vpop.permute.xlu0 %4421
      %4423 = vrot.lane.b32.xlu0 %v4382, 112
      %v4424 = vpop.permute.xlu0 %4423
      %4425 = vrot.lane.b32.xlu0 %v4383, 112
      %v4426 = vpop.permute.xlu0 %4425
      %4427 = vrot.lane.b32.xlu0 %v4384, 112
      %v4428 = vpop.permute.xlu0 %4427
      %4429 = vrot.lane.b32.xlu0 %v4385, 112
      %v4430 = vpop.permute.xlu0 %4429
      %4431 = vrot.lane.b32.xlu0 %v4386, 112
      %v4432 = vpop.permute.xlu0 %4431
      %4433 = vrot.lane.b32.xlu0 %v4387, 112
      %v4434 = vpop.permute.xlu0 %4433
      %4435 = vrot.lane.b32.xlu0 %v4388, 112
      %v4436 = vpop.permute.xlu0 %4435
      %4437 = vrot.lane.b32.xlu0 %v4389, 112
      %v4438 = vpop.permute.xlu0 %4437
      %4439 = vrot.lane.b32.xlu0 %v4390, 112
      %v4440 = vpop.permute.xlu0 %4439
      %4441 = vrot.lane.b32.xlu0 %v4391, 112
      %v4442 = vpop.permute.xlu0 %4441
      %4443 = vrot.lane.b32.xlu0 %v4392, 112
      %v4444 = vpop.permute.xlu0 %4443
      %4445 = vrot.lane.b32.xlu0 %v4393, 112
      %v4446 = vpop.permute.xlu0 %4445
      %4447 = vrot.lane.b32.xlu0 %v4394, 112
      %v4448 = vpop.permute.xlu0 %4447
      %4449 = vrot.lane.b32.xlu0 %v4395, 112
      %v4450 = vpop.permute.xlu0 %4449
      %4451 = vrot.lane.b32.xlu0 %v4396, 112
      %v4452 = vpop.permute.xlu0 %4451
      %4453 = vrot.lane.b32.xlu0 %v4397, 112
      %v4454 = vpop.permute.xlu0 %4453
      %4455 = vrot.lane.b32.xlu0 %v4398, 112
      %v4456 = vpop.permute.xlu0 %4455
      %4457 = vrot.lane.b32.xlu0 %v4399, 112
      %v4458 = vpop.permute.xlu0 %4457
      %4459 = vrot.lane.b32.xlu0 %v4400, 112
      %v4460 = vpop.permute.xlu0 %4459
      %4461 = vrot.lane.b32.xlu0 %v4401, 112
      %v4462 = vpop.permute.xlu0 %4461
      %4463 = vrot.lane.b32.xlu0 %v4402, 112
      %v4464 = vpop.permute.xlu0 %4463
      %4465 = vrot.lane.b32.xlu0 %v4403, 112
      %v4466 = vpop.permute.xlu0 %4465
      %4467 = vrot.lane.b32.xlu0 %v4404, 112
      %v4468 = vpop.permute.xlu0 %4467
      %4469 = vrot.lane.b32.xlu0 %v4405, 112
      %v4470 = vpop.permute.xlu0 %4469
      %4471 = vrot.lane.b32.xlu0 %v4406, 112
      %v4472 = vpop.permute.xlu0 %4471
      %4473 = vrot.lane.b32.xlu0 %v4407, 112
      %v4474 = vpop.permute.xlu0 %4473
      %4475 = vrot.lane.b32.xlu0 %v4408, 112
      %v4476 = vpop.permute.xlu0 %4475
      %4477 = vrot.lane.b32.xlu0 %v4409, 112
      %v4478 = vpop.permute.xlu0 %4477
      %4479 = vrot.lane.b32.xlu0 %v4410, 112
      %v4480 = vpop.permute.xlu0 %4479
      %4481 = vrot.lane.b32.xlu0 %v4411, 112
      %v4482 = vpop.permute.xlu0 %4481
      %4483 = vrot.lane.b32.xlu0 %v4412, 112
      %v4484 = vpop.permute.xlu0 %4483
      %v4557 = vunpack.c.l.b16 %v2469
      %v4558 = vunpack.c.l.b16 %v2470
      %v4559 = vunpack.c.l.b16 %v2471
      %v4560 = vunpack.c.l.b16 %v2472
      %v4561 = vunpack.c.l.b16 %v2473
      %v4562 = vunpack.c.l.b16 %v2474
      %v4563 = vunpack.c.l.b16 %v2475
      %v4564 = vunpack.c.l.b16 %v2476
      %v4565 = vunpack.c.l.b16 %v2477
      %v4566 = vunpack.c.l.b16 %v2478
      %v4567 = vunpack.c.l.b16 %v2479
      %v4568 = vunpack.c.l.b16 %v2480
      %v4569 = vunpack.c.l.b16 %v2481
      %v4570 = vunpack.c.l.b16 %v2482
      %v4571 = vunpack.c.l.b16 %v2483
      %v4572 = vunpack.c.l.b16 %v2484
      %v4573 = vunpack.c.l.b16 %v2485
      %v4574 = vunpack.c.l.b16 %v2486
      %v4575 = vunpack.c.l.b16 %v2487
      %v4576 = vunpack.c.l.b16 %v2488
      %v4577 = vunpack.c.l.b16 %v2489
      %v4578 = vunpack.c.l.b16 %v2490
      %v4579 = vunpack.c.l.b16 %v2491
      %v4580 = vunpack.c.l.b16 %v2492
      %v4581 = vunpack.c.l.b16 %v2493
      %v4582 = vunpack.c.l.b16 %v2494
      %v4583 = vunpack.c.l.b16 %v2495
      %v4584 = vunpack.c.l.b16 %v2496
      %v4585 = vunpack.c.l.b16 %v2497
      %v4586 = vunpack.c.l.b16 %v2498
      %v4587 = vunpack.c.l.b16 %v2499
      %v4588 = vunpack.c.l.b16 %v2500
      %v4589 = vunpack.c.l.b16 %v2501
      %v4590 = vunpack.c.l.b16 %v2502
      %v4591 = vunpack.c.l.b16 %v2503
      %v4592 = vunpack.c.l.b16 %v2504
      %v4593 = vunpack.c.l.b16 %v2505
      %v4594 = vunpack.c.l.b16 %v2506
      %v4595 = vunpack.c.l.b16 %v2507
      %v4596 = vunpack.c.l.b16 %v2508
      %v4597 = vunpack.c.l.b16 %v2509
      %v4598 = vunpack.c.l.b16 %v2510
      %v4599 = vunpack.c.l.b16 %v2511
      %v4600 = vunpack.c.l.b16 %v2512
      %v4601 = vunpack.c.l.b16 %v2513
      %v4602 = vunpack.c.l.b16 %v2514
      %v4603 = vunpack.c.l.b16 %v2515
      %v4604 = vunpack.c.l.b16 %v2516
      %v4605 = vunpack.c.l.b16 %v2517
      %v4606 = vunpack.c.l.b16 %v2518
      %v4607 = vunpack.c.l.b16 %v2519
      %v4608 = vunpack.c.l.b16 %v2520
      %v4609 = vunpack.c.l.b16 %v2521
      %v4610 = vunpack.c.l.b16 %v2522
      %v4611 = vunpack.c.l.b16 %v2523
      %v4612 = vunpack.c.l.b16 %v2524
      %v4613 = vunpack.c.l.b16 %v2525
      %v4614 = vunpack.c.l.b16 %v2526
      %v4615 = vunpack.c.l.b16 %v2527
      %v4616 = vunpack.c.l.b16 %v2528
      %v4617 = vunpack.c.l.b16 %v2529
      %v4618 = vunpack.c.l.b16 %v2530
      %v4619 = vunpack.c.l.b16 %v2531
      %v4620 = vunpack.c.l.b16 %v2532
      %v4621 = vunpack.c.l.b16 %v2533
      %v4622 = vunpack.c.l.b16 %v2534
      %v4623 = vunpack.c.l.b16 %v2535
      %v4624 = vunpack.c.l.b16 %v2536
      %v4625 = vunpack.c.l.b16 %v2537
      %v4626 = vunpack.c.l.b16 %v2538
      %v4627 = vunpack.c.l.b16 %v2539
      %v4628 = vunpack.c.l.b16 %v2540
      %v4629 = vpack.c.b16 %v4558, %v4557
      %v4630 = vpack.c.b16 %v4560, %v4559
      %v4631 = vpack.c.b16 %v4562, %v4561
      %v4632 = vpack.c.b16 %v4564, %v4563
      %v4633 = vpack.c.b16 %v4566, %v4565
      %v4634 = vpack.c.b16 %v4568, %v4567
      %v4635 = vpack.c.b16 %v4570, %v4569
      %v4636 = vpack.c.b16 %v4572, %v4571
      %v4637 = vpack.c.b16 %v4574, %v4573
      %v4638 = vpack.c.b16 %v4576, %v4575
      %v4639 = vpack.c.b16 %v4578, %v4577
      %v4640 = vpack.c.b16 %v4580, %v4579
      %v4641 = vpack.c.b16 %v4582, %v4581
      %v4642 = vpack.c.b16 %v4584, %v4583
      %v4643 = vpack.c.b16 %v4586, %v4585
      %v4644 = vpack.c.b16 %v4588, %v4587
      %v4645 = vpack.c.b16 %v4590, %v4589
      %v4646 = vpack.c.b16 %v4592, %v4591
      %v4647 = vpack.c.b16 %v4594, %v4593
      %v4648 = vpack.c.b16 %v4596, %v4595
      %v4649 = vpack.c.b16 %v4598, %v4597
      %v4650 = vpack.c.b16 %v4600, %v4599
      %v4651 = vpack.c.b16 %v4602, %v4601
      %v4652 = vpack.c.b16 %v4604, %v4603
      %v4653 = vpack.c.b16 %v4606, %v4605
      %v4654 = vpack.c.b16 %v4608, %v4607
      %v4655 = vpack.c.b16 %v4610, %v4609
      %v4656 = vpack.c.b16 %v4612, %v4611
      %v4657 = vpack.c.b16 %v4614, %v4613
      %v4658 = vpack.c.b16 %v4616, %v4615
      %v4659 = vpack.c.b16 %v4618, %v4617
      %v4660 = vpack.c.b16 %v4620, %v4619
      %v4661 = vpack.c.b16 %v4622, %v4621
      %v4662 = vpack.c.b16 %v4624, %v4623
      %v4663 = vpack.c.b16 %v4626, %v4625
      %v4664 = vpack.c.b16 %v4628, %v4627
      %v4667 = vsel %vm1138, %v2685, %v2902
      %v4670 = vsel %vm1138, %v2686, %v2904
      %v4673 = vsel %vm1138, %v2687, %v2906
      %v4676 = vsel %vm1138, %v2688, %v2908
      %v4679 = vsel %vm1138, %v2689, %v2910
      %v4682 = vsel %vm1138, %v2690, %v2912
      %v4685 = vsel %vm1138, %v2691, %v2914
      %v4688 = vsel %vm1138, %v2692, %v2916
      %v4691 = vsel %vm1138, %v2693, %v2918
      %v4694 = vsel %vm1138, %v2694, %v2920
      %v4697 = vsel %vm1138, %v2695, %v2922
      %v4700 = vsel %vm1138, %v2696, %v2924
      %v4703 = vsel %vm1138, %v2697, %v2926
      %v4706 = vsel %vm1138, %v2698, %v2928
      %v4709 = vsel %vm1138, %v2699, %v2930
      %v4712 = vsel %vm1138, %v2700, %v2932
      %v4715 = vsel %vm1138, %v2701, %v2934
      %v4718 = vsel %vm1138, %v2702, %v2936
      %v4721 = vsel %vm1138, %v2703, %v2938
      %v4724 = vsel %vm1138, %v2704, %v2940
      %v4727 = vsel %vm1138, %v2705, %v2942
      %v4730 = vsel %vm1138, %v2706, %v2944
      %v4733 = vsel %vm1138, %v2707, %v2946
      %v4736 = vsel %vm1138, %v2708, %v2948
      %v4739 = vsel %vm1138, %v2709, %v2950
      %v4742 = vsel %vm1138, %v2710, %v2952
      %v4745 = vsel %vm1138, %v2711, %v2954
      %v4748 = vsel %vm1138, %v2712, %v2956
      %v4751 = vsel %vm1138, %v2713, %v2958
      %v4754 = vsel %vm1138, %v2714, %v2960
      %v4757 = vsel %vm1138, %v2715, %v2962
      %v4760 = vsel %vm1138, %v2716, %v2964
      %v4763 = vsel %vm1138, %v2717, %v2966
      %v4766 = vsel %vm1138, %v2718, %v2968
      %v4769 = vsel %vm1138, %v2719, %v2970
      %v4772 = vsel %vm1138, %v2720, %v2972
      %vm4773 = vcmask 261120
      %v4775 = vsel %vm4773, %v4667, %v3154
      %v4777 = vsel %vm4773, %v4670, %v3156
      %v4779 = vsel %vm4773, %v4673, %v3158
      %v4781 = vsel %vm4773, %v4676, %v3160
      %v4783 = vsel %vm4773, %v4679, %v3162
      %v4785 = vsel %vm4773, %v4682, %v3164
      %v4787 = vsel %vm4773, %v4685, %v3166
      %v4789 = vsel %vm4773, %v4688, %v3168
      %v4791 = vsel %vm4773, %v4691, %v3170
      %v4793 = vsel %vm4773, %v4694, %v3172
      %v4795 = vsel %vm4773, %v4697, %v3174
      %v4797 = vsel %vm4773, %v4700, %v3176
      %v4799 = vsel %vm4773, %v4703, %v3178
      %v4801 = vsel %vm4773, %v4706, %v3180
      %v4803 = vsel %vm4773, %v4709, %v3182
      %v4805 = vsel %vm4773, %v4712, %v3184
      %v4807 = vsel %vm4773, %v4715, %v3186
      %v4809 = vsel %vm4773, %v4718, %v3188
      %v4811 = vsel %vm4773, %v4721, %v3190
      %v4813 = vsel %vm4773, %v4724, %v3192
      %v4815 = vsel %vm4773, %v4727, %v3194
      %v4817 = vsel %vm4773, %v4730, %v3196
      %v4819 = vsel %vm4773, %v4733, %v3198
      %v4821 = vsel %vm4773, %v4736, %v3200
      %v4823 = vsel %vm4773, %v4739, %v3202
      %v4825 = vsel %vm4773, %v4742, %v3204
      %v4827 = vsel %vm4773, %v4745, %v3206
      %v4829 = vsel %vm4773, %v4748, %v3208
      %v4831 = vsel %vm4773, %v4751, %v3210
      %v4833 = vsel %vm4773, %v4754, %v3212
      %v4835 = vsel %vm4773, %v4757, %v3214
      %v4837 = vsel %vm4773, %v4760, %v3216
      %v4839 = vsel %vm4773, %v4763, %v3218
      %v4841 = vsel %vm4773, %v4766, %v3220
      %v4843 = vsel %vm4773, %v4769, %v3222
      %v4845 = vsel %vm4773, %v4772, %v3224
      %vm4846 = vcmask 392192
      %v4848 = vsel %vm4846, %v4775, %v3406
      %v4850 = vsel %vm4846, %v4777, %v3408
      %v4852 = vsel %vm4846, %v4779, %v3410
      %v4854 = vsel %vm4846, %v4781, %v3412
      %v4856 = vsel %vm4846, %v4783, %v3414
      %v4858 = vsel %vm4846, %v4785, %v3416
      %v4860 = vsel %vm4846, %v4787, %v3418
      %v4862 = vsel %vm4846, %v4789, %v3420
      %v4864 = vsel %vm4846, %v4791, %v3422
      %v4866 = vsel %vm4846, %v4793, %v3424
      %v4868 = vsel %vm4846, %v4795, %v3426
      %v4870 = vsel %vm4846, %v4797, %v3428
      %v4872 = vsel %vm4846, %v4799, %v3430
      %v4874 = vsel %vm4846, %v4801, %v3432
      %v4876 = vsel %vm4846, %v4803, %v3434
      %v4878 = vsel %vm4846, %v4805, %v3436
      %v4880 = vsel %vm4846, %v4807, %v3438
      %v4882 = vsel %vm4846, %v4809, %v3440
      %v4884 = vsel %vm4846, %v4811, %v3442
      %v4886 = vsel %vm4846, %v4813, %v3444
      %v4888 = vsel %vm4846, %v4815, %v3446
      %v4890 = vsel %vm4846, %v4817, %v3448
      %v4892 = vsel %vm4846, %v4819, %v3450
      %v4894 = vsel %vm4846, %v4821, %v3452
      %v4896 = vsel %vm4846, %v4823, %v3454
      %v4898 = vsel %vm4846, %v4825, %v3456
      %v4900 = vsel %vm4846, %v4827, %v3458
      %v4902 = vsel %vm4846, %v4829, %v3460
      %v4904 = vsel %vm4846, %v4831, %v3462
      %v4906 = vsel %vm4846, %v4833, %v3464
      %v4908 = vsel %vm4846, %v4835, %v3466
      %v4910 = vsel %vm4846, %v4837, %v3468
      %v4912 = vsel %vm4846, %v4839, %v3470
      %v4914 = vsel %vm4846, %v4841, %v3472
      %v4916 = vsel %vm4846, %v4843, %v3474
      %v4918 = vsel %vm4846, %v4845, %v3476
      %vm4919 = vcmask 523264
      %v4921 = vsel %vm4919, %v4848, %v3658
      %v4923 = vsel %vm4919, %v4850, %v3660
      %v4925 = vsel %vm4919, %v4852, %v3662
      %v4927 = vsel %vm4919, %v4854, %v3664
      %v4929 = vsel %vm4919, %v4856, %v3666
      %v4931 = vsel %vm4919, %v4858, %v3668
      %v4933 = vsel %vm4919, %v4860, %v3670
      %v4935 = vsel %vm4919, %v4862, %v3672
      %v4937 = vsel %vm4919, %v4864, %v3674
      %v4939 = vsel %vm4919, %v4866, %v3676
      %v4941 = vsel %vm4919, %v4868, %v3678
      %v4943 = vsel %vm4919, %v4870, %v3680
      %v4945 = vsel %vm4919, %v4872, %v3682
      %v4947 = vsel %vm4919, %v4874, %v3684
      %v4949 = vsel %vm4919, %v4876, %v3686
      %v4951 = vsel %vm4919, %v4878, %v3688
      %v4953 = vsel %vm4919, %v4880, %v3690
      %v4955 = vsel %vm4919, %v4882, %v3692
      %v4957 = vsel %vm4919, %v4884, %v3694
      %v4959 = vsel %vm4919, %v4886, %v3696
      %v4961 = vsel %vm4919, %v4888, %v3698
      %v4963 = vsel %vm4919, %v4890, %v3700
      %v4965 = vsel %vm4919, %v4892, %v3702
      %v4967 = vsel %vm4919, %v4894, %v3704
      %v4969 = vsel %vm4919, %v4896, %v3706
      %v4971 = vsel %vm4919, %v4898, %v3708
      %v4973 = vsel %vm4919, %v4900, %v3710
      %v4975 = vsel %vm4919, %v4902, %v3712
      %v4977 = vsel %vm4919, %v4904, %v3714
      %v4979 = vsel %vm4919, %v4906, %v3716
      %v4981 = vsel %vm4919, %v4908, %v3718
      %v4983 = vsel %vm4919, %v4910, %v3720
      %v4985 = vsel %vm4919, %v4912, %v3722
      %v4987 = vsel %vm4919, %v4914, %v3724
      %v4989 = vsel %vm4919, %v4916, %v3726
      %v4991 = vsel %vm4919, %v4918, %v3728
      %vm4992 = vcmask 654336
      %v4994 = vsel %vm4992, %v4921, %v3910
      %v4996 = vsel %vm4992, %v4923, %v3912
      %v4998 = vsel %vm4992, %v4925, %v3914
      %v5000 = vsel %vm4992, %v4927, %v3916
      %v5002 = vsel %vm4992, %v4929, %v3918
      %v5004 = vsel %vm4992, %v4931, %v3920
      %v5006 = vsel %vm4992, %v4933, %v3922
      %v5008 = vsel %vm4992, %v4935, %v3924
      %v5010 = vsel %vm4992, %v4937, %v3926
      %v5012 = vsel %vm4992, %v4939, %v3928
      %v5014 = vsel %vm4992, %v4941, %v3930
      %v5016 = vsel %vm4992, %v4943, %v3932
      %v5018 = vsel %vm4992, %v4945, %v3934
      %v5020 = vsel %vm4992, %v4947, %v3936
      %v5022 = vsel %vm4992, %v4949, %v3938
      %v5024 = vsel %vm4992, %v4951, %v3940
      %v5026 = vsel %vm4992, %v4953, %v3942
      %v5028 = vsel %vm4992, %v4955, %v3944
      %v5030 = vsel %vm4992, %v4957, %v3946
      %v5032 = vsel %vm4992, %v4959, %v3948
      %v5034 = vsel %vm4992, %v4961, %v3950
      %v5036 = vsel %vm4992, %v4963, %v3952
      %v5038 = vsel %vm4992, %v4965, %v3954
      %v5040 = vsel %vm4992, %v4967, %v3956
      %v5042 = vsel %vm4992, %v4969, %v3958
      %v5044 = vsel %vm4992, %v4971, %v3960
      %v5046 = vsel %vm4992, %v4973, %v3962
      %v5048 = vsel %vm4992, %v4975, %v3964
      %v5050 = vsel %vm4992, %v4977, %v3966
      %v5052 = vsel %vm4992, %v4979, %v3968
      %v5054 = vsel %vm4992, %v4981, %v3970
      %v5056 = vsel %vm4992, %v4983, %v3972
      %v5058 = vsel %vm4992, %v4985, %v3974
      %v5060 = vsel %vm4992, %v4987, %v3976
      %v5062 = vsel %vm4992, %v4989, %v3978
      %v5064 = vsel %vm4992, %v4991, %v3980
      %vm5065 = vcmask 785408
      %v5067 = vsel %vm5065, %v4994, %v4162
      %v5069 = vsel %vm5065, %v4996, %v4164
      %v5071 = vsel %vm5065, %v4998, %v4166
      %v5073 = vsel %vm5065, %v5000, %v4168
      %v5075 = vsel %vm5065, %v5002, %v4170
      %v5077 = vsel %vm5065, %v5004, %v4172
      %v5079 = vsel %vm5065, %v5006, %v4174
      %v5081 = vsel %vm5065, %v5008, %v4176
      %v5083 = vsel %vm5065, %v5010, %v4178
      %v5085 = vsel %vm5065, %v5012, %v4180
      %v5087 = vsel %vm5065, %v5014, %v4182
      %v5089 = vsel %vm5065, %v5016, %v4184
      %v5091 = vsel %vm5065, %v5018, %v4186
      %v5093 = vsel %vm5065, %v5020, %v4188
      %v5095 = vsel %vm5065, %v5022, %v4190
      %v5097 = vsel %vm5065, %v5024, %v4192
      %v5099 = vsel %vm5065, %v5026, %v4194
      %v5101 = vsel %vm5065, %v5028, %v4196
      %v5103 = vsel %vm5065, %v5030, %v4198
      %v5105 = vsel %vm5065, %v5032, %v4200
      %v5107 = vsel %vm5065, %v5034, %v4202
      %v5109 = vsel %vm5065, %v5036, %v4204
      %v5111 = vsel %vm5065, %v5038, %v4206
      %v5113 = vsel %vm5065, %v5040, %v4208
      %v5115 = vsel %vm5065, %v5042, %v4210
      %v5117 = vsel %vm5065, %v5044, %v4212
      %v5119 = vsel %vm5065, %v5046, %v4214
      %v5121 = vsel %vm5065, %v5048, %v4216
      %v5123 = vsel %vm5065, %v5050, %v4218
      %v5125 = vsel %vm5065, %v5052, %v4220
      %v5127 = vsel %vm5065, %v5054, %v4222
      %v5129 = vsel %vm5065, %v5056, %v4224
      %v5131 = vsel %vm5065, %v5058, %v4226
      %v5133 = vsel %vm5065, %v5060, %v4228
      %v5135 = vsel %vm5065, %v5062, %v4230
      %v5137 = vsel %vm5065, %v5064, %v4232
      %vm5138 = vcmask 916480
      %v5140 = vsel %vm5138, %v5067, %v4414
      %v5143 = vsel %vm5138, %v5069, %v4416
      %v5146 = vsel %vm5138, %v5071, %v4418
      %v5149 = vsel %vm5138, %v5073, %v4420
      %v5152 = vsel %vm5138, %v5075, %v4422
      %v5155 = vsel %vm5138, %v5077, %v4424
      %v5158 = vsel %vm5138, %v5079, %v4426
      %v5161 = vsel %vm5138, %v5081, %v4428
      %v5164 = vsel %vm5138, %v5083, %v4430
      %v5167 = vsel %vm5138, %v5085, %v4432
      %v5170 = vsel %vm5138, %v5087, %v4434
      %v5173 = vsel %vm5138, %v5089, %v4436
      %v5176 = vsel %vm5138, %v5091, %v4438
      %v5179 = vsel %vm5138, %v5093, %v4440
      %v5182 = vsel %vm5138, %v5095, %v4442
      %v5185 = vsel %vm5138, %v5097, %v4444
      %v5188 = vsel %vm5138, %v5099, %v4446
      %v5191 = vsel %vm5138, %v5101, %v4448
      %v5194 = vsel %vm5138, %v5103, %v4450
      %v5197 = vsel %vm5138, %v5105, %v4452
      %v5200 = vsel %vm5138, %v5107, %v4454
      %v5203 = vsel %vm5138, %v5109, %v4456
      %v5206 = vsel %vm5138, %v5111, %v4458
      %v5209 = vsel %vm5138, %v5113, %v4460
      %v5212 = vsel %vm5138, %v5115, %v4462
      %v5215 = vsel %vm5138, %v5117, %v4464
      %v5218 = vsel %vm5138, %v5119, %v4466
      %v5221 = vsel %vm5138, %v5121, %v4468
      %v5224 = vsel %vm5138, %v5123, %v4470
      %v5227 = vsel %vm5138, %v5125, %v4472
      %v5230 = vsel %vm5138, %v5127, %v4474
      %v5233 = vsel %vm5138, %v5129, %v4476
      %v5236 = vsel %vm5138, %v5131, %v4478
      %v5239 = vsel %vm5138, %v5133, %v4480
      %v5242 = vsel %vm5138, %v5135, %v4482
      %v5245 = vsel %vm5138, %v5137, %v4484
      %v5247 = vld [vmem:[%s3] sm:$0xf]
      %v5248 = vld [vmem:[%s3 + $0x4] sm:$0xf]
      %v5249 = vld [vmem:[%s3 + $0x8] sm:$0xf]
      %v5250 = vld [vmem:[%s3 + $0xc] sm:$0xf]
      %v5251 = vld [vmem:[%s3 + $0x10] sm:$0xf]
      %v5252 = vld [vmem:[%s3 + $0x14] sm:$0xf]
      %v5253 = vld [vmem:[%s3 + $0x18] sm:$0xf]
      %v5254 = vld [vmem:[%s3 + $0x1c] sm:$0xf]
      %v5255 = vld [vmem:[%s3 + $0x20] sm:$0xf]
      %v5256 = vld [vmem:[%s3 + $0x24] sm:$0xf]
      %v5257 = vld [vmem:[%s3 + $0x28] sm:$0xf]
      %v5258 = vld [vmem:[%s3 + $0x2c] sm:$0xf]
      %v5259 = vld [vmem:[%s3 + $0x30] sm:$0xf]
      %v5260 = vld [vmem:[%s3 + $0x34] sm:$0xf]
      %v5261 = vld [vmem:[%s3 + $0x38] sm:$0xf]
      %v5262 = vld [vmem:[%s3 + $0x3c] sm:$0xf]
      %v5263 = vld [vmem:[%s3 + $0x40] sm:$0xf]
      %v5264 = vld [vmem:[%s3 + $0x44] sm:$0xf]
      %v5265 = vld [vmem:[%s4] sm:$0x1]
      %v5267 = vperm.slane %v5265, 0
      %v5287 = vunpack.c.l.b16 %v5247
      %v5288 = vunpack.c.l.b16 %v5248
      %v5289 = vunpack.c.l.b16 %v5249
      %v5290 = vunpack.c.l.b16 %v5250
      %v5291 = vunpack.c.l.b16 %v5251
      %v5292 = vunpack.c.l.b16 %v5252
      %v5293 = vunpack.c.l.b16 %v5253
      %v5294 = vunpack.c.l.b16 %v5254
      %v5295 = vunpack.c.l.b16 %v5255
      %v5296 = vunpack.c.l.b16 %v5256
      %v5297 = vunpack.c.l.b16 %v5257
      %v5298 = vunpack.c.l.b16 %v5258
      %v5299 = vunpack.c.l.b16 %v5259
      %v5300 = vunpack.c.l.b16 %v5260
      %v5301 = vunpack.c.l.b16 %v5261
      %v5302 = vunpack.c.l.b16 %v5262
      %v5303 = vunpack.c.l.b16 %v5263
      %v5304 = vunpack.c.l.b16 %v5264
      %v5305 = vpack.c.b16 %v5288, %v5287
      %v5306 = vpack.c.b16 %v5290, %v5289
      %v5307 = vpack.c.b16 %v5292, %v5291
      %v5308 = vpack.c.b16 %v5294, %v5293
      %v5309 = vpack.c.b16 %v5296, %v5295
      %v5310 = vpack.c.b16 %v5298, %v5297
      %v5311 = vpack.c.b16 %v5300, %v5299
      %v5312 = vpack.c.b16 %v5302, %v5301
      %v5313 = vpack.c.b16 %v5304, %v5303
      %v5324 = vsel %vm1138, %v4629, 0
      %v5327 = vsel %vm1138, %v4630, 0
      %v5330 = vsel %vm1138, %v4631, 0
      %v5333 = vsel %vm1138, %v4632, 0
      %v5336 = vsel %vm1138, %v4633, 0
      %v5339 = vsel %vm1138, %v4634, 0
      %v5342 = vsel %vm1138, %v4635, 0
      %v5345 = vsel %vm1138, %v4636, 0
      %v5348 = vsel %vm1138, %v4637, 0
      %v5351 = vsel %vm1138, %v4638, 0
      %v5354 = vsel %vm1138, %v4639, 0
      %v5357 = vsel %vm1138, %v4640, 0
      %v5360 = vsel %vm1138, %v4641, 0
      %v5363 = vsel %vm1138, %v4642, 0
      %v5366 = vsel %vm1138, %v4643, 0
      %v5369 = vsel %vm1138, %v4644, 0
      %v5372 = vsel %vm1138, %v4645, 0
      %v5375 = vsel %vm1138, %v4646, 0
      %v5378 = vsel %vm1138, %v4647, 0
      %v5381 = vsel %vm1138, %v4648, 0
      %v5384 = vsel %vm1138, %v4649, 0
      %v5387 = vsel %vm1138, %v4650, 0
      %v5390 = vsel %vm1138, %v4651, 0
      %v5393 = vsel %vm1138, %v4652, 0
      %v5396 = vsel %vm1138, %v4653, 0
      %v5399 = vsel %vm1138, %v4654, 0
      %v5402 = vsel %vm1138, %v4655, 0
      %v5405 = vsel %vm1138, %v4656, 0
      %v5408 = vsel %vm1138, %v4657, 0
      %v5411 = vsel %vm1138, %v4658, 0
      %v5414 = vsel %vm1138, %v4659, 0
      %v5417 = vsel %vm1138, %v4660, 0
      %v5420 = vsel %vm1138, %v4661, 0
      %v5423 = vsel %vm1138, %v4662, 0
      %v5426 = vsel %vm1138, %v4663, 0
      %v5429 = vsel %vm1138, %v4664, 0
      %5431 = vmatpush.bf16.msra.mxu0 %v5312
      %5432 = vmatpush.bf16.msra.mxu0 %v5311
      %5433 = vmatpush.bf16.msra.mxu0 %v5310
      %5434 = vmatpush.bf16.msra.mxu0 %v5309
      %5435 = vmatpush.bf16.msra.mxu0 %v5308
      %5436 = vmatpush.bf16.msra.mxu0 %v5307
      %5437 = vmatpush.bf16.msra.mxu0 %v5306
      %5438 = vmatpush.bf16.msra.mxu0 %v5305
      %5439 = vmatmul.bf16.gmra.mxu0 %v5140
      %v5440 = vpop.f32.mrf.mxu0
      %v5441 = vadd.f32 %v5267, %v5440
      %v5442 = vpop.f32.mrf.mxu0
      %v5443 = vadd.f32 %v5267, %v5442
      %5444 = vmatmul.bf16.gmra.mxu0 %v5143
      %v5445 = vpop.f32.mrf.mxu0
      %v5446 = vadd.f32 %v5267, %v5445
      %v5447 = vpop.f32.mrf.mxu0
      %v5448 = vadd.f32 %v5267, %v5447
      %5449 = vmatmul.bf16.gmra.mxu0 %v5146
      %v5450 = vpop.f32.mrf.mxu0
      %v5451 = vadd.f32 %v5267, %v5450
      %v5452 = vpop.f32.mrf.mxu0
      %v5453 = vadd.f32 %v5267, %v5452
      %5454 = vmatmul.bf16.gmra.mxu0 %v5149
      %v5455 = vpop.f32.mrf.mxu0
      %v5456 = vadd.f32 %v5267, %v5455
      %v5457 = vpop.f32.mrf.mxu0
      %v5458 = vadd.f32 %v5267, %v5457
      %5459 = vmatmul.bf16.gmra.mxu0 %v5152
      %v5460 = vpop.f32.mrf.mxu0
      %v5461 = vadd.f32 %v5267, %v5460
      %v5462 = vpop.f32.mrf.mxu0
      %v5463 = vadd.f32 %v5267, %v5462
      %5464 = vmatmul.bf16.gmra.mxu0 %v5155
      %v5465 = vpop.f32.mrf.mxu0
      %v5466 = vadd.f32 %v5267, %v5465
      %v5467 = vpop.f32.mrf.mxu0
      %v5468 = vadd.f32 %v5267, %v5467
      %5469 = vmatmul.bf16.gmra.mxu0 %v5158
      %v5470 = vpop.f32.mrf.mxu0
      %v5471 = vadd.f32 %v5267, %v5470
      %v5472 = vpop.f32.mrf.mxu0
      %v5473 = vadd.f32 %v5267, %v5472
      %5474 = vmatmul.bf16.gmra.mxu0 %v5161
      %v5475 = vpop.f32.mrf.mxu0
      %v5476 = vadd.f32 %v5267, %v5475
      %v5477 = vpop.f32.mrf.mxu0
      %v5478 = vadd.f32 %v5267, %v5477
      %5479 = vmatmul.bf16.gmra.mxu0 %v5164
      %v5480 = vpop.f32.mrf.mxu0
      %v5481 = vadd.f32 %v5267, %v5480
      %v5482 = vpop.f32.mrf.mxu0
      %v5483 = vadd.f32 %v5267, %v5482
      %5484 = vmatmul.bf16.gmra.mxu0 %v5167
      %v5485 = vpop.f32.mrf.mxu0
      %v5486 = vadd.f32 %v5267, %v5485
      %v5487 = vpop.f32.mrf.mxu0
      %v5488 = vadd.f32 %v5267, %v5487
      %5489 = vmatmul.bf16.gmra.mxu0 %v5170
      %v5490 = vpop.f32.mrf.mxu0
      %v5491 = vadd.f32 %v5267, %v5490
      %v5492 = vpop.f32.mrf.mxu0
      %v5493 = vadd.f32 %v5267, %v5492
      %5494 = vmatmul.bf16.gmra.mxu0 %v5173
      %v5495 = vpop.f32.mrf.mxu0
      %v5496 = vadd.f32 %v5267, %v5495
      %v5497 = vpop.f32.mrf.mxu0
      %v5498 = vadd.f32 %v5267, %v5497
      %5499 = vmatmul.bf16.gmra.mxu0 %v5176
      %v5500 = vpop.f32.mrf.mxu0
      %v5501 = vadd.f32 %v5267, %v5500
      %v5502 = vpop.f32.mrf.mxu0
      %v5503 = vadd.f32 %v5267, %v5502
      %5504 = vmatmul.bf16.gmra.mxu0 %v5179
      %v5505 = vpop.f32.mrf.mxu0
      %v5506 = vadd.f32 %v5267, %v5505
      %v5507 = vpop.f32.mrf.mxu0
      %v5508 = vadd.f32 %v5267, %v5507
      %5509 = vmatmul.bf16.gmra.mxu0 %v5182
      %v5510 = vpop.f32.mrf.mxu0
      %v5511 = vadd.f32 %v5267, %v5510
      %v5512 = vpop.f32.mrf.mxu0
      %v5513 = vadd.f32 %v5267, %v5512
      %5514 = vmatmul.bf16.gmra.mxu0 %v5185
      %v5515 = vpop.f32.mrf.mxu0
      %v5516 = vadd.f32 %v5267, %v5515
      %v5517 = vpop.f32.mrf.mxu0
      %v5518 = vadd.f32 %v5267, %v5517
      %5519 = vmatmul.bf16.gmra.mxu0 %v5188
      %v5520 = vpop.f32.mrf.mxu0
      %v5521 = vadd.f32 %v5267, %v5520
      %v5522 = vpop.f32.mrf.mxu0
      %v5523 = vadd.f32 %v5267, %v5522
      %5524 = vmatmul.bf16.gmra.mxu0 %v5191
      %v5525 = vpop.f32.mrf.mxu0
      %v5526 = vadd.f32 %v5267, %v5525
      %v5527 = vpop.f32.mrf.mxu0
      %v5528 = vadd.f32 %v5267, %v5527
      %5529 = vmatmul.bf16.gmra.mxu0 %v5194
      %v5530 = vpop.f32.mrf.mxu0
      %v5531 = vadd.f32 %v5267, %v5530
      %v5532 = vpop.f32.mrf.mxu0
      %v5533 = vadd.f32 %v5267, %v5532
      %5534 = vmatmul.bf16.gmra.mxu0 %v5197
      %v5535 = vpop.f32.mrf.mxu0
      %v5536 = vadd.f32 %v5267, %v5535
      %v5537 = vpop.f32.mrf.mxu0
      %v5538 = vadd.f32 %v5267, %v5537
      %5539 = vmatmul.bf16.gmra.mxu0 %v5200
      %v5540 = vpop.f32.mrf.mxu0
      %v5541 = vadd.f32 %v5267, %v5540
      %v5542 = vpop.f32.mrf.mxu0
      %v5543 = vadd.f32 %v5267, %v5542
      %5544 = vmatmul.bf16.gmra.mxu0 %v5203
      %v5545 = vpop.f32.mrf.mxu0
      %v5546 = vadd.f32 %v5267, %v5545
      %v5547 = vpop.f32.mrf.mxu0
      %v5548 = vadd.f32 %v5267, %v5547
      %5549 = vmatmul.bf16.gmra.mxu0 %v5206
      %v5550 = vpop.f32.mrf.mxu0
      %v5551 = vadd.f32 %v5267, %v5550
      %v5552 = vpop.f32.mrf.mxu0
      %v5553 = vadd.f32 %v5267, %v5552
      %5554 = vmatmul.bf16.gmra.mxu0 %v5209
      %v5555 = vpop.f32.mrf.mxu0
      %v5556 = vadd.f32 %v5267, %v5555
      %v5557 = vpop.f32.mrf.mxu0
      %v5558 = vadd.f32 %v5267, %v5557
      %5559 = vmatmul.bf16.gmra.mxu0 %v5212
      %v5560 = vpop.f32.mrf.mxu0
      %v5561 = vadd.f32 %v5267, %v5560
      %v5562 = vpop.f32.mrf.mxu0
      %v5563 = vadd.f32 %v5267, %v5562
      %5564 = vmatmul.bf16.gmra.mxu0 %v5215
      %v5565 = vpop.f32.mrf.mxu0
      %v5566 = vadd.f32 %v5267, %v5565
      %v5567 = vpop.f32.mrf.mxu0
      %v5568 = vadd.f32 %v5267, %v5567
      %5569 = vmatmul.bf16.gmra.mxu0 %v5218
      %v5570 = vpop.f32.mrf.mxu0
      %v5571 = vadd.f32 %v5267, %v5570
      %v5572 = vpop.f32.mrf.mxu0
      %v5573 = vadd.f32 %v5267, %v5572
      %5574 = vmatmul.bf16.gmra.mxu0 %v5221
      %v5575 = vpop.f32.mrf.mxu0
      %v5576 = vadd.f32 %v5267, %v5575
      %v5577 = vpop.f32.mrf.mxu0
      %v5578 = vadd.f32 %v5267, %v5577
      %5579 = vmatmul.bf16.gmra.mxu0 %v5224
      %v5580 = vpop.f32.mrf.mxu0
      %v5581 = vadd.f32 %v5267, %v5580
      %v5582 = vpop.f32.mrf.mxu0
      %v5583 = vadd.f32 %v5267, %v5582
      %5584 = vmatmul.bf16.gmra.mxu0 %v5227
      %v5585 = vpop.f32.mrf.mxu0
      %v5586 = vadd.f32 %v5267, %v5585
      %v5587 = vpop.f32.mrf.mxu0
      %v5588 = vadd.f32 %v5267, %v5587
      %5589 = vmatmul.bf16.gmra.mxu0 %v5230
      %v5590 = vpop.f32.mrf.mxu0
      %v5591 = vadd.f32 %v5267, %v5590
      %v5592 = vpop.f32.mrf.mxu0
      %v5593 = vadd.f32 %v5267, %v5592
      %5594 = vmatmul.bf16.gmra.mxu0 %v5233
      %v5595 = vpop.f32.mrf.mxu0
      %v5596 = vadd.f32 %v5267, %v5595
      %v5597 = vpop.f32.mrf.mxu0
      %v5598 = vadd.f32 %v5267, %v5597
      %5599 = vmatmul.bf16.gmra.mxu0 %v5236
      %v5600 = vpop.f32.mrf.mxu0
      %v5601 = vadd.f32 %v5267, %v5600
      %v5602 = vpop.f32.mrf.mxu0
      %v5603 = vadd.f32 %v5267, %v5602
      %5604 = vmatmul.bf16.gmra.mxu0 %v5239
      %v5605 = vpop.f32.mrf.mxu0
      %v5606 = vadd.f32 %v5267, %v5605
      %v5607 = vpop.f32.mrf.mxu0
      %v5608 = vadd.f32 %v5267, %v5607
      %5609 = vmatmul.bf16.gmra.mxu0 %v5242
      %v5610 = vpop.f32.mrf.mxu0
      %v5611 = vadd.f32 %v5267, %v5610
      %v5612 = vpop.f32.mrf.mxu0
      %v5613 = vadd.f32 %v5267, %v5612
      %5614 = vmatmul.bf16.gmra.mxu0 %v5245
      %v5615 = vpop.f32.mrf.mxu0
      %v5616 = vadd.f32 %v5267, %v5615
      %v5617 = vpop.f32.mrf.mxu0
      %v5618 = vadd.f32 %v5267, %v5617
      %5619 = vdwg.mxu0
      %5620 = vmatpush.bf16.msra.mxu0 0
      %5621 = vmatpush.bf16.msra.mxu0 0
      %5622 = vmatpush.bf16.msra.mxu0 0
      %5623 = vmatpush.bf16.msra.mxu0 0
      %5624 = vmatpush.bf16.msra.mxu0 0
      %5625 = vmatpush.bf16.msra.mxu0 0
      %5626 = vmatpush.bf16.msra.mxu0 0
      %5627 = vmatpush.bf16.msra.mxu0 %v5313
      %5628 = vmatmul.bf16.gmra.mxu0 %v5324
      %v5629 = vpop.f32.mrf.mxu0
      %v5630 = vadd.f32 %v5441, %v5629
      %v5631 = vpop.f32.mrf.mxu0
      %v5632 = vadd.f32 %v5443, %v5631
      %5633 = vmatmul.bf16.gmra.mxu0 %v5327
      %v5634 = vpop.f32.mrf.mxu0
      %v5635 = vadd.f32 %v5446, %v5634
      %v5636 = vpop.f32.mrf.mxu0
      %v5637 = vadd.f32 %v5448, %v5636
      %5638 = vmatmul.bf16.gmra.mxu0 %v5330
      %v5639 = vpop.f32.mrf.mxu0
      %v5640 = vadd.f32 %v5451, %v5639
      %v5641 = vpop.f32.mrf.mxu0
      %v5642 = vadd.f32 %v5453, %v5641
      %5643 = vmatmul.bf16.gmra.mxu0 %v5333
      %v5644 = vpop.f32.mrf.mxu0
      %v5645 = vadd.f32 %v5456, %v5644
      %v5646 = vpop.f32.mrf.mxu0
      %v5647 = vadd.f32 %v5458, %v5646
      %5648 = vmatmul.bf16.gmra.mxu0 %v5336
      %v5649 = vpop.f32.mrf.mxu0
      %v5650 = vadd.f32 %v5461, %v5649
      %v5651 = vpop.f32.mrf.mxu0
      %v5652 = vadd.f32 %v5463, %v5651
      %5653 = vmatmul.bf16.gmra.mxu0 %v5339
      %v5654 = vpop.f32.mrf.mxu0
      %v5655 = vadd.f32 %v5466, %v5654
      %v5656 = vpop.f32.mrf.mxu0
      %v5657 = vadd.f32 %v5468, %v5656
      %5658 = vmatmul.bf16.gmra.mxu0 %v5342
      %v5659 = vpop.f32.mrf.mxu0
      %v5660 = vadd.f32 %v5471, %v5659
      %v5661 = vpop.f32.mrf.mxu0
      %v5662 = vadd.f32 %v5473, %v5661
      %5663 = vmatmul.bf16.gmra.mxu0 %v5345
      %v5664 = vpop.f32.mrf.mxu0
      %v5665 = vadd.f32 %v5476, %v5664
      %v5666 = vpop.f32.mrf.mxu0
      %v5667 = vadd.f32 %v5478, %v5666
      %5668 = vmatmul.bf16.gmra.mxu0 %v5348
      %v5669 = vpop.f32.mrf.mxu0
      %v5670 = vadd.f32 %v5481, %v5669
      %v5671 = vpop.f32.mrf.mxu0
      %v5672 = vadd.f32 %v5483, %v5671
      %5673 = vmatmul.bf16.gmra.mxu0 %v5351
      %v5674 = vpop.f32.mrf.mxu0
      %v5675 = vadd.f32 %v5486, %v5674
      %v5676 = vpop.f32.mrf.mxu0
      %v5677 = vadd.f32 %v5488, %v5676
      %5678 = vmatmul.bf16.gmra.mxu0 %v5354
      %v5679 = vpop.f32.mrf.mxu0
      %v5680 = vadd.f32 %v5491, %v5679
      %v5681 = vpop.f32.mrf.mxu0
      %v5682 = vadd.f32 %v5493, %v5681
      %5683 = vmatmul.bf16.gmra.mxu0 %v5357
      %v5684 = vpop.f32.mrf.mxu0
      %v5685 = vadd.f32 %v5496, %v5684
      %v5686 = vpop.f32.mrf.mxu0
      %v5687 = vadd.f32 %v5498, %v5686
      %5688 = vmatmul.bf16.gmra.mxu0 %v5360
      %v5689 = vpop.f32.mrf.mxu0
      %v5690 = vadd.f32 %v5501, %v5689
      %v5691 = vpop.f32.mrf.mxu0
      %v5692 = vadd.f32 %v5503, %v5691
      %5693 = vmatmul.bf16.gmra.mxu0 %v5363
      %v5694 = vpop.f32.mrf.mxu0
      %v5695 = vadd.f32 %v5506, %v5694
      %v5696 = vpop.f32.mrf.mxu0
      %v5697 = vadd.f32 %v5508, %v5696
      %5698 = vmatmul.bf16.gmra.mxu0 %v5366
      %v5699 = vpop.f32.mrf.mxu0
      %v5700 = vadd.f32 %v5511, %v5699
      %v5701 = vpop.f32.mrf.mxu0
      %v5702 = vadd.f32 %v5513, %v5701
      %5703 = vmatmul.bf16.gmra.mxu0 %v5369
      %v5704 = vpop.f32.mrf.mxu0
      %v5705 = vadd.f32 %v5516, %v5704
      %v5706 = vpop.f32.mrf.mxu0
      %v5707 = vadd.f32 %v5518, %v5706
      %5708 = vmatmul.bf16.gmra.mxu0 %v5372
      %v5709 = vpop.f32.mrf.mxu0
      %v5710 = vadd.f32 %v5521, %v5709
      %v5711 = vpop.f32.mrf.mxu0
      %v5712 = vadd.f32 %v5523, %v5711
      %5713 = vmatmul.bf16.gmra.mxu0 %v5375
      %v5714 = vpop.f32.mrf.mxu0
      %v5715 = vadd.f32 %v5526, %v5714
      %v5716 = vpop.f32.mrf.mxu0
      %v5717 = vadd.f32 %v5528, %v5716
      %5718 = vmatmul.bf16.gmra.mxu0 %v5378
      %v5719 = vpop.f32.mrf.mxu0
      %v5720 = vadd.f32 %v5531, %v5719
      %v5721 = vpop.f32.mrf.mxu0
      %v5722 = vadd.f32 %v5533, %v5721
      %5723 = vmatmul.bf16.gmra.mxu0 %v5381
      %v5724 = vpop.f32.mrf.mxu0
      %v5725 = vadd.f32 %v5536, %v5724
      %v5726 = vpop.f32.mrf.mxu0
      %v5727 = vadd.f32 %v5538, %v5726
      %5728 = vmatmul.bf16.gmra.mxu0 %v5384
      %v5729 = vpop.f32.mrf.mxu0
      %v5730 = vadd.f32 %v5541, %v5729
      %v5731 = vpop.f32.mrf.mxu0
      %v5732 = vadd.f32 %v5543, %v5731
      %5733 = vmatmul.bf16.gmra.mxu0 %v5387
      %v5734 = vpop.f32.mrf.mxu0
      %v5735 = vadd.f32 %v5546, %v5734
      %v5736 = vpop.f32.mrf.mxu0
      %v5737 = vadd.f32 %v5548, %v5736
      %5738 = vmatmul.bf16.gmra.mxu0 %v5390
      %v5739 = vpop.f32.mrf.mxu0
      %v5740 = vadd.f32 %v5551, %v5739
      %v5741 = vpop.f32.mrf.mxu0
      %v5742 = vadd.f32 %v5553, %v5741
      %5743 = vmatmul.bf16.gmra.mxu0 %v5393
      %v5744 = vpop.f32.mrf.mxu0
      %v5745 = vadd.f32 %v5556, %v5744
      %v5746 = vpop.f32.mrf.mxu0
      %v5747 = vadd.f32 %v5558, %v5746
      %5748 = vmatmul.bf16.gmra.mxu0 %v5396
      %v5749 = vpop.f32.mrf.mxu0
      %v5750 = vadd.f32 %v5561, %v5749
      %v5751 = vpop.f32.mrf.mxu0
      %v5752 = vadd.f32 %v5563, %v5751
      %5753 = vmatmul.bf16.gmra.mxu0 %v5399
      %v5754 = vpop.f32.mrf.mxu0
      %v5755 = vadd.f32 %v5566, %v5754
      %v5756 = vpop.f32.mrf.mxu0
      %v5757 = vadd.f32 %v5568, %v5756
      %5758 = vmatmul.bf16.gmra.mxu0 %v5402
      %v5759 = vpop.f32.mrf.mxu0
      %v5760 = vadd.f32 %v5571, %v5759
      %v5761 = vpop.f32.mrf.mxu0
      %v5762 = vadd.f32 %v5573, %v5761
      %5763 = vmatmul.bf16.gmra.mxu0 %v5405
      %v5764 = vpop.f32.mrf.mxu0
      %v5765 = vadd.f32 %v5576, %v5764
      %v5766 = vpop.f32.mrf.mxu0
      %v5767 = vadd.f32 %v5578, %v5766
      %5768 = vmatmul.bf16.gmra.mxu0 %v5408
      %v5769 = vpop.f32.mrf.mxu0
      %v5770 = vadd.f32 %v5581, %v5769
      %v5771 = vpop.f32.mrf.mxu0
      %v5772 = vadd.f32 %v5583, %v5771
      %5773 = vmatmul.bf16.gmra.mxu0 %v5411
      %v5774 = vpop.f32.mrf.mxu0
      %v5775 = vadd.f32 %v5586, %v5774
      %v5776 = vpop.f32.mrf.mxu0
      %v5777 = vadd.f32 %v5588, %v5776
      %5778 = vmatmul.bf16.gmra.mxu0 %v5414
      %v5779 = vpop.f32.mrf.mxu0
      %v5780 = vadd.f32 %v5591, %v5779
      %v5781 = vpop.f32.mrf.mxu0
      %v5782 = vadd.f32 %v5593, %v5781
      %5783 = vmatmul.bf16.gmra.mxu0 %v5417
      %v5784 = vpop.f32.mrf.mxu0
      %v5785 = vadd.f32 %v5596, %v5784
      %v5786 = vpop.f32.mrf.mxu0
      %v5787 = vadd.f32 %v5598, %v5786
      %5788 = vmatmul.bf16.gmra.mxu0 %v5420
      %v5789 = vpop.f32.mrf.mxu0
      %v5790 = vadd.f32 %v5601, %v5789
      %v5791 = vpop.f32.mrf.mxu0
      %v5792 = vadd.f32 %v5603, %v5791
      %5793 = vmatmul.bf16.gmra.mxu0 %v5423
      %v5794 = vpop.f32.mrf.mxu0
      %v5795 = vadd.f32 %v5606, %v5794
      %v5796 = vpop.f32.mrf.mxu0
      %v5797 = vadd.f32 %v5608, %v5796
      %5798 = vmatmul.bf16.gmra.mxu0 %v5426
      %v5799 = vpop.f32.mrf.mxu0
      %v5800 = vadd.f32 %v5611, %v5799
      %v5801 = vpop.f32.mrf.mxu0
      %v5802 = vadd.f32 %v5613, %v5801
      %5803 = vmatmul.bf16.gmra.mxu0 %v5429
      %v5804 = vpop.f32.mrf.mxu0
      %v5805 = vadd.f32 %v5616, %v5804
      %v5806 = vpop.f32.mrf.mxu0
      %v5807 = vadd.f32 %v5618, %v5806
      %5808 = vdwg.mxu0
      %v5809 = vmax.f32 %v5630, 0.0
      %v5810 = vmax.f32 %v5632, 0.0
      %v5811 = vmax.f32 %v5635, 0.0
      %v5812 = vmax.f32 %v5637, 0.0
      %v5813 = vmax.f32 %v5640, 0.0
      %v5814 = vmax.f32 %v5642, 0.0
      %v5815 = vmax.f32 %v5645, 0.0
      %v5816 = vmax.f32 %v5647, 0.0
      %v5817 = vmax.f32 %v5650, 0.0
      %v5818 = vmax.f32 %v5652, 0.0
      %v5819 = vmax.f32 %v5655, 0.0
      %v5820 = vmax.f32 %v5657, 0.0
      %v5821 = vmax.f32 %v5660, 0.0
      %v5822 = vmax.f32 %v5662, 0.0
      %v5823 = vmax.f32 %v5665, 0.0
      %v5824 = vmax.f32 %v5667, 0.0
      %v5825 = vmax.f32 %v5670, 0.0
      %v5826 = vmax.f32 %v5672, 0.0
      %v5827 = vmax.f32 %v5675, 0.0
      %v5828 = vmax.f32 %v5677, 0.0
      %v5829 = vmax.f32 %v5680, 0.0
      %v5830 = vmax.f32 %v5682, 0.0
      %v5831 = vmax.f32 %v5685, 0.0
      %v5832 = vmax.f32 %v5687, 0.0
      %v5833 = vmax.f32 %v5690, 0.0
      %v5834 = vmax.f32 %v5692, 0.0
      %v5835 = vmax.f32 %v5695, 0.0
      %v5836 = vmax.f32 %v5697, 0.0
      %v5837 = vmax.f32 %v5700, 0.0
      %v5838 = vmax.f32 %v5702, 0.0
      %v5839 = vmax.f32 %v5705, 0.0
      %v5840 = vmax.f32 %v5707, 0.0
      %v5841 = vmax.f32 %v5710, 0.0
      %v5842 = vmax.f32 %v5712, 0.0
      %v5843 = vmax.f32 %v5715, 0.0
      %v5844 = vmax.f32 %v5717, 0.0
      %v5845 = vmax.f32 %v5720, 0.0
      %v5846 = vmax.f32 %v5722, 0.0
      %v5847 = vmax.f32 %v5725, 0.0
      %v5848 = vmax.f32 %v5727, 0.0
      %v5849 = vmax.f32 %v5730, 0.0
      %v5850 = vmax.f32 %v5732, 0.0
      %v5851 = vmax.f32 %v5735, 0.0
      %v5852 = vmax.f32 %v5737, 0.0
      %v5853 = vmax.f32 %v5740, 0.0
      %v5854 = vmax.f32 %v5742, 0.0
      %v5855 = vmax.f32 %v5745, 0.0
      %v5856 = vmax.f32 %v5747, 0.0
      %v5857 = vmax.f32 %v5750, 0.0
      %v5858 = vmax.f32 %v5752, 0.0
      %v5859 = vmax.f32 %v5755, 0.0
      %v5860 = vmax.f32 %v5757, 0.0
      %v5861 = vmax.f32 %v5760, 0.0
      %v5862 = vmax.f32 %v5762, 0.0
      %v5863 = vmax.f32 %v5765, 0.0
      %v5864 = vmax.f32 %v5767, 0.0
      %v5865 = vmax.f32 %v5770, 0.0
      %v5866 = vmax.f32 %v5772, 0.0
      %v5867 = vmax.f32 %v5775, 0.0
      %v5868 = vmax.f32 %v5777, 0.0
      %v5869 = vmax.f32 %v5780, 0.0
      %v5870 = vmax.f32 %v5782, 0.0
      %v5871 = vmax.f32 %v5785, 0.0
      %v5872 = vmax.f32 %v5787, 0.0
      %v5873 = vmax.f32 %v5790, 0.0
      %v5874 = vmax.f32 %v5792, 0.0
      %v5875 = vmax.f32 %v5795, 0.0
      %v5876 = vmax.f32 %v5797, 0.0
      %v5877 = vmax.f32 %v5800, 0.0
      %v5878 = vmax.f32 %v5802, 0.0
      %v5879 = vmax.f32 %v5805, 0.0
      %v5880 = vmax.f32 %v5807, 0.0
      %v5881 = vmax.f32 %v5809, %v5812
      %v5882 = vmax.f32 %v5810, %v5813
      %v5883 = vmax.f32 %v5811, %v5814
      %v5884 = vmax.f32 %v5815, %v5818
      %v5885 = vmax.f32 %v5816, %v5819
      %v5886 = vmax.f32 %v5817, %v5820
      %v5887 = vmax.f32 %v5821, %v5824
      %v5888 = vmax.f32 %v5822, %v5825
      %v5889 = vmax.f32 %v5823, %v5826
      %v5890 = vmax.f32 %v5827, %v5830
      %v5891 = vmax.f32 %v5828, %v5831
      %v5892 = vmax.f32 %v5829, %v5832
      %v5893 = vmax.f32 %v5833, %v5836
      %v5894 = vmax.f32 %v5834, %v5837
      %v5895 = vmax.f32 %v5835, %v5838
      %v5896 = vmax.f32 %v5839, %v5842
      %v5897 = vmax.f32 %v5840, %v5843
      %v5898 = vmax.f32 %v5841, %v5844
      %v5899 = vmax.f32 %v5845, %v5848
      %v5900 = vmax.f32 %v5846, %v5849
      %v5901 = vmax.f32 %v5847, %v5850
      %v5902 = vmax.f32 %v5851, %v5854
      %v5903 = vmax.f32 %v5852, %v5855
      %v5904 = vmax.f32 %v5853, %v5856
      %v5905 = vmax.f32 %v5857, %v5860
      %v5906 = vmax.f32 %v5858, %v5861
      %v5907 = vmax.f32 %v5859, %v5862
      %v5908 = vmax.f32 %v5863, %v5866
      %v5909 = vmax.f32 %v5864, %v5867
      %v5910 = vmax.f32 %v5865, %v5868
      %v5911 = vmax.f32 %v5869, %v5872
      %v5912 = vmax.f32 %v5870, %v5873
      %v5913 = vmax.f32 %v5871, %v5874
      %v5914 = vmax.f32 %v5875, %v5878
      %v5915 = vmax.f32 %v5876, %v5879
      %v5916 = vmax.f32 %v5877, %v5880
      %5917 = vst.msk [vmem:[#allocation3] sm:$0xff] %vm4773, %v5881
      %5918 = vst.msk [vmem:[#allocation3 + $0x8] sm:$0xff] %vm4773, %v5882
      %5919 = vst.msk [vmem:[#allocation3 + $0x10] sm:$0xff] %vm4773, %v5883
      %5920 = vst.msk [vmem:[#allocation3 + $0x18] sm:$0xff] %vm4773, %v5884
      %5921 = vst.msk [vmem:[#allocation3 + $0x20] sm:$0xff] %vm4773, %v5885
      %5922 = vst.msk [vmem:[#allocation3 + $0x28] sm:$0xff] %vm4773, %v5886
      %5923 = vst.msk [vmem:[#allocation3 + $0x30] sm:$0xff] %vm4773, %v5887
      %5924 = vst.msk [vmem:[#allocation3 + $0x38] sm:$0xff] %vm4773, %v5888
      %5925 = vst.msk [vmem:[#allocation3 + $0x40] sm:$0xff] %vm4773, %v5889
      %5926 = vst.msk [vmem:[#allocation3 + $0x48] sm:$0xff] %vm4773, %v5890
      %5927 = vst.msk [vmem:[#allocation3 + $0x50] sm:$0xff] %vm4773, %v5891
      %5928 = vst.msk [vmem:[#allocation3 + $0x58] sm:$0xff] %vm4773, %v5892
      %5929 = vst.msk [vmem:[#allocation3 + $0x60] sm:$0xff] %vm4773, %v5893
      %5930 = vst.msk [vmem:[#allocation3 + $0x68] sm:$0xff] %vm4773, %v5894
      %5931 = vst.msk [vmem:[#allocation3 + $0x70] sm:$0xff] %vm4773, %v5895
      %5932 = vst.msk [vmem:[#allocation3 + $0x78] sm:$0xff] %vm4773, %v5896
      %5933 = vst.msk [vmem:[#allocation3 + $0x80] sm:$0xff] %vm4773, %v5897
      %5934 = vst.msk [vmem:[#allocation3 + $0x88] sm:$0xff] %vm4773, %v5898
      %5935 = vst.msk [vmem:[#allocation3 + $0x90] sm:$0xff] %vm4773, %v5899
      %5936 = vst.msk [vmem:[#allocation3 + $0x98] sm:$0xff] %vm4773, %v5900
      %5937 = vst.msk [vmem:[#allocation3 + $0xa0] sm:$0xff] %vm4773, %v5901
      %5938 = vst.msk [vmem:[#allocation3 + $0xa8] sm:$0xff] %vm4773, %v5902
      %5939 = vst.msk [vmem:[#allocation3 + $0xb0] sm:$0xff] %vm4773, %v5903
      %5940 = vst.msk [vmem:[#allocation3 + $0xb8] sm:$0xff] %vm4773, %v5904
      %5941 = vst.msk [vmem:[#allocation3 + $0xc0] sm:$0xff] %vm4773, %v5905
      %5942 = vst.msk [vmem:[#allocation3 + $0xc8] sm:$0xff] %vm4773, %v5906
      %5943 = vst.msk [vmem:[#allocation3 + $0xd0] sm:$0xff] %vm4773, %v5907
      %5944 = vst.msk [vmem:[#allocation3 + $0xd8] sm:$0xff] %vm4773, %v5908
      %5945 = vst.msk [vmem:[#allocation3 + $0xe0] sm:$0xff] %vm4773, %v5909
      %5946 = vst.msk [vmem:[#allocation3 + $0xe8] sm:$0xff] %vm4773, %v5910
      %5947 = vst.msk [vmem:[#allocation3 + $0xf0] sm:$0xff] %vm4773, %v5911
      %5948 = vst.msk [vmem:[#allocation3 + $0xf8] sm:$0xff] %vm4773, %v5912
      %5949 = vst.msk [vmem:[#allocation3 + $0x100] sm:$0xff] %vm4773, %v5913
      %5950 = vst.msk [vmem:[#allocation3 + $0x108] sm:$0xff] %vm4773, %v5914
      %5951 = vst.msk [vmem:[#allocation3 + $0x110] sm:$0xff] %vm4773, %v5915
      %5952 = vst.msk [vmem:[#allocation3 + $0x118] sm:$0xff] %vm4773, %v5916
      %v5953 = vld [vmem:[#allocation3] ss:$2 sm:$0xff]
      %s5954 = scalar_lea.vmem [#allocation3], 16
      %v5955 = vld [vmem:[%s5954] ss:$2 sm:$0xf]
      %s5956 = scalar_lea.vmem [#allocation3], 24
      %v5957 = vld [vmem:[%s5956] ss:$2 sm:$0xff]
      %s5958 = scalar_lea.vmem [#allocation3], 40
      %v5959 = vld [vmem:[%s5958] ss:$2 sm:$0xf]
      %s5960 = scalar_lea.vmem [#allocation3], 48
      %v5961 = vld [vmem:[%s5960] ss:$2 sm:$0xff]
      %s5962 = scalar_lea.vmem [#allocation3], 64
      %v5963 = vld [vmem:[%s5962] ss:$2 sm:$0xf]
      %s5964 = scalar_lea.vmem [#allocation3], 72
      %v5965 = vld [vmem:[%s5964] ss:$2 sm:$0xff]
      %s5966 = scalar_lea.vmem [#allocation3], 88
      %v5967 = vld [vmem:[%s5966] ss:$2 sm:$0xf]
      %s5968 = scalar_lea.vmem [#allocation3], 96
      %v5969 = vld [vmem:[%s5968] ss:$2 sm:$0xff]
      %s5970 = scalar_lea.vmem [#allocation3], 112
      %v5971 = vld [vmem:[%s5970] ss:$2 sm:$0xf]
      %s5972 = scalar_lea.vmem [#allocation3], 120
      %v5973 = vld [vmem:[%s5972] ss:$2 sm:$0xff]
      %s5974 = scalar_lea.vmem [#allocation3], 136
      %v5975 = vld [vmem:[%s5974] ss:$2 sm:$0xf]
      %s5976 = scalar_lea.vmem [#allocation3], 144
      %v5977 = vld [vmem:[%s5976] ss:$2 sm:$0xff]
      %s5978 = scalar_lea.vmem [#allocation3], 160
      %v5979 = vld [vmem:[%s5978] ss:$2 sm:$0xf]
      %s5980 = scalar_lea.vmem [#allocation3], 168
      %v5981 = vld [vmem:[%s5980] ss:$2 sm:$0xff]
      %s5982 = scalar_lea.vmem [#allocation3], 184
      %v5983 = vld [vmem:[%s5982] ss:$2 sm:$0xf]
      %s5984 = scalar_lea.vmem [#allocation3], 192
      %v5985 = vld [vmem:[%s5984] ss:$2 sm:$0xff]
      %s5986 = scalar_lea.vmem [#allocation3], 208
      %v5987 = vld [vmem:[%s5986] ss:$2 sm:$0xf]
      %s5988 = scalar_lea.vmem [#allocation3], 216
      %v5989 = vld [vmem:[%s5988] ss:$2 sm:$0xff]
      %s5990 = scalar_lea.vmem [#allocation3], 232
      %v5991 = vld [vmem:[%s5990] ss:$2 sm:$0xf]
      %s5992 = scalar_lea.vmem [#allocation3], 240
      %v5993 = vld [vmem:[%s5992] ss:$2 sm:$0xff]
      %s5994 = scalar_lea.vmem [#allocation3], 256
      %v5995 = vld [vmem:[%s5994] ss:$2 sm:$0xf]
      %s5996 = scalar_lea.vmem [#allocation3], 264
      %v5997 = vld [vmem:[%s5996] ss:$2 sm:$0xff]
      %s5998 = scalar_lea.vmem [#allocation3], 280
      %v5999 = vld [vmem:[%s5998] ss:$2 sm:$0xf]
      %s6000 = scalar_lea.vmem [#allocation3], 1
      %v6001 = vld [vmem:[%s6000] ss:$2 sm:$0xff]
      %s6002 = scalar_lea.vmem [#allocation3], 17
      %v6003 = vld [vmem:[%s6002] ss:$2 sm:$0xf]
      %s6004 = scalar_lea.vmem [#allocation3], 25
      %v6005 = vld [vmem:[%s6004] ss:$2 sm:$0xff]
      %s6006 = scalar_lea.vmem [#allocation3], 41
      %v6007 = vld [vmem:[%s6006] ss:$2 sm:$0xf]
      %s6008 = scalar_lea.vmem [#allocation3], 49
      %v6009 = vld [vmem:[%s6008] ss:$2 sm:$0xff]
      %s6010 = scalar_lea.vmem [#allocation3], 65
      %v6011 = vld [vmem:[%s6010] ss:$2 sm:$0xf]
      %s6012 = scalar_lea.vmem [#allocation3], 73
      %v6013 = vld [vmem:[%s6012] ss:$2 sm:$0xff]
      %s6014 = scalar_lea.vmem [#allocation3], 89
      %v6015 = vld [vmem:[%s6014] ss:$2 sm:$0xf]
      %s6016 = scalar_lea.vmem [#allocation3], 97
      %v6017 = vld [vmem:[%s6016] ss:$2 sm:$0xff]
      %s6018 = scalar_lea.vmem [#allocation3], 113
      %v6019 = vld [vmem:[%s6018] ss:$2 sm:$0xf]
      %s6020 = scalar_lea.vmem [#allocation3], 121
      %v6021 = vld [vmem:[%s6020] ss:$2 sm:$0xff]
      %s6022 = scalar_lea.vmem [#allocation3], 137
      %v6023 = vld [vmem:[%s6022] ss:$2 sm:$0xf]
      %s6024 = scalar_lea.vmem [#allocation3], 145
      %v6025 = vld [vmem:[%s6024] ss:$2 sm:$0xff]
      %s6026 = scalar_lea.vmem [#allocation3], 161
      %v6027 = vld [vmem:[%s6026] ss:$2 sm:$0xf]
      %s6028 = scalar_lea.vmem [#allocation3], 169
      %v6029 = vld [vmem:[%s6028] ss:$2 sm:$0xff]
      %s6030 = scalar_lea.vmem [#allocation3], 185
      %v6031 = vld [vmem:[%s6030] ss:$2 sm:$0xf]
      %s6032 = scalar_lea.vmem [#allocation3], 193
      %v6033 = vld [vmem:[%s6032] ss:$2 sm:$0xff]
      %s6034 = scalar_lea.vmem [#allocation3], 209
      %v6035 = vld [vmem:[%s6034] ss:$2 sm:$0xf]
      %s6036 = scalar_lea.vmem [#allocation3], 217
      %v6037 = vld [vmem:[%s6036] ss:$2 sm:$0xff]
      %s6038 = scalar_lea.vmem [#allocation3], 233
      %v6039 = vld [vmem:[%s6038] ss:$2 sm:$0xf]
      %s6040 = scalar_lea.vmem [#allocation3], 241
      %v6041 = vld [vmem:[%s6040] ss:$2 sm:$0xff]
      %s6042 = scalar_lea.vmem [#allocation3], 257
      %v6043 = vld [vmem:[%s6042] ss:$2 sm:$0xf]
      %s6044 = scalar_lea.vmem [#allocation3], 265
      %v6045 = vld [vmem:[%s6044] ss:$2 sm:$0xff]
      %s6046 = scalar_lea.vmem [#allocation3], 281
      %v6047 = vld [vmem:[%s6046] ss:$2 sm:$0xf]
      %v6048 = vmax.f32 %v5953, %v6001
      %v6049 = vmax.f32 %v5955, %v6003
      %v6050 = vmax.f32 %v5957, %v6005
      %v6051 = vmax.f32 %v5959, %v6007
      %v6052 = vmax.f32 %v5961, %v6009
      %v6053 = vmax.f32 %v5963, %v6011
      %v6054 = vmax.f32 %v5965, %v6013
      %v6055 = vmax.f32 %v5967, %v6015
      %v6056 = vmax.f32 %v5969, %v6017
      %v6057 = vmax.f32 %v5971, %v6019
      %v6058 = vmax.f32 %v5973, %v6021
      %v6059 = vmax.f32 %v5975, %v6023
      %v6060 = vmax.f32 %v5977, %v6025
      %v6061 = vmax.f32 %v5979, %v6027
      %v6062 = vmax.f32 %v5981, %v6029
      %v6063 = vmax.f32 %v5983, %v6031
      %v6064 = vmax.f32 %v5985, %v6033
      %v6065 = vmax.f32 %v5987, %v6035
      %v6066 = vmax.f32 %v5989, %v6037
      %v6067 = vmax.f32 %v5991, %v6039
      %v6068 = vmax.f32 %v5993, %v6041
      %v6069 = vmax.f32 %v5995, %v6043
      %v6070 = vmax.f32 %v5997, %v6045
      %v6071 = vmax.f32 %v5999, %v6047
      %v6072 = vpack.c.bf16 %v6048, %v6048
      %v6073 = vpack.c.bf16 %v6049, %v6049
      %v6074 = vpack.c.bf16 %v6050, %v6050
      %v6075 = vpack.c.bf16 %v6051, %v6051
      %v6076 = vpack.c.bf16 %v6052, %v6052
      %v6077 = vpack.c.bf16 %v6053, %v6053
      %v6078 = vpack.c.bf16 %v6054, %v6054
      %v6079 = vpack.c.bf16 %v6055, %v6055
      %v6080 = vpack.c.bf16 %v6056, %v6056
      %v6081 = vpack.c.bf16 %v6057, %v6057
      %v6082 = vpack.c.bf16 %v6058, %v6058
      %v6083 = vpack.c.bf16 %v6059, %v6059
      %v6084 = vpack.c.bf16 %v6060, %v6060
      %v6085 = vpack.c.bf16 %v6061, %v6061
      %v6086 = vpack.c.bf16 %v6062, %v6062
      %v6087 = vpack.c.bf16 %v6063, %v6063
      %v6088 = vpack.c.bf16 %v6064, %v6064
      %v6089 = vpack.c.bf16 %v6065, %v6065
      %v6090 = vpack.c.bf16 %v6066, %v6066
      %v6091 = vpack.c.bf16 %v6067, %v6067
      %v6092 = vpack.c.bf16 %v6068, %v6068
      %v6093 = vpack.c.bf16 %v6069, %v6069
      %v6094 = vpack.c.bf16 %v6070, %v6070
      %v6095 = vpack.c.bf16 %v6071, %v6071
      %vm6096 = vcmask 257024
      %6097 = vst.msk [vmem:[%s224] sm:$0xf] %vm6096, %v6072
      %vm6098 = vcmask 254976
      %6099 = vst.msk [vmem:[%s224 + $0x4] sm:$0x3] %vm6098, %v6073
      %6100 = vst.msk [vmem:[%s224 + $0x8] sm:$0xf] %vm6096, %v6074
      %6101 = vst.msk [vmem:[%s224 + $0xc] sm:$0x3] %vm6098, %v6075
      %6102 = vst.msk [vmem:[%s224 + $0x10] sm:$0xf] %vm6096, %v6076
      %6103 = vst.msk [vmem:[%s224 + $0x14] sm:$0x3] %vm6098, %v6077
      %6104 = vst.msk [vmem:[%s224 + $0x18] sm:$0xf] %vm6096, %v6078
      %6105 = vst.msk [vmem:[%s224 + $0x1c] sm:$0x3] %vm6098, %v6079
      %6106 = vst.msk [vmem:[%s224 + $0x20] sm:$0xf] %vm6096, %v6080
      %6107 = vst.msk [vmem:[%s224 + $0x24] sm:$0x3] %vm6098, %v6081
      %6108 = vst.msk [vmem:[%s224 + $0x28] sm:$0xf] %vm6096, %v6082
      %6109 = vst.msk [vmem:[%s224 + $0x2c] sm:$0x3] %vm6098, %v6083
      %6110 = vst.msk [vmem:[%s224 + $0x30] sm:$0xf] %vm6096, %v6084
      %6111 = vst.msk [vmem:[%s224 + $0x34] sm:$0x3] %vm6098, %v6085
      %6112 = vst.msk [vmem:[%s224 + $0x38] sm:$0xf] %vm6096, %v6086
      %6113 = vst.msk [vmem:[%s224 + $0x3c] sm:$0x3] %vm6098, %v6087
      %6114 = vst.msk [vmem:[%s224 + $0x40] sm:$0xf] %vm6096, %v6088
      %6115 = vst.msk [vmem:[%s224 + $0x44] sm:$0x3] %vm6098, %v6089
      %6116 = vst.msk [vmem:[%s224 + $0x48] sm:$0xf] %vm6096, %v6090
      %6117 = vst.msk [vmem:[%s224 + $0x4c] sm:$0x3] %vm6098, %v6091
      %6118 = vst.msk [vmem:[%s224 + $0x50] sm:$0xf] %vm6096, %v6092
      %6119 = vst.msk [vmem:[%s224 + $0x54] sm:$0x3] %vm6098, %v6093
      %6120 = vst.msk [vmem:[%s224 + $0x58] sm:$0xf] %vm6096, %v6094
      %6121 = vst.msk [vmem:[%s224 + $0x5c] sm:$0x3] %vm6098, %v6095
      %p6122 = scmp.lt.s32.totalorder %s16, 1
      %s6123 = scalar_select %p6122, %s16, 1
      %s6124 = smul.addr %s6123, 24
      %s6125 = smul.addr %s6124, 4
      %s6126 = scalar_lea.vmem %s5, %s6125
      // Predicated region
      $region41: #{netf1_forward.2} parent=39 // pred_check
        %p6127 = pneg %p144
      $region42: #{netf1_forward.2} parent=39 // pred_check_branch
        %6129 = sbr.rel (%p6127) target = $region44
      $region43: #{netf1_forward.2} parent=39 // pred_region
        _
      $region44: #{netf1_forward.2} parent=39 // pred_fallthru
        _
    $region40: #{netf1_forward.2} parent=5 // pred_fallthru
      _
    %p6130 = scmp.le.s32.totalorder 2, %s11
    // Predicated region
    $region45: #{netf1_forward.2} parent=5 // pred_check
      %p6131 = pneg %p6130
    $region46: #{netf1_forward.2} parent=5 // pred_check_branch
      %6133 = sbr.rel (%p6131) target = $region48
    $region47: #{netf1_forward.2} parent=5 // pred_region
      %s6134 = ssub.s32 %s11, 2
      // Predicated region
      $region49: #{netf1_forward.2} parent=47 // pred_check
        %p6135 = pneg %p150
      $region50: #{netf1_forward.2} parent=47 // pred_check_branch
        %6137 = sbr.rel (%p6135) target = $region52
      $region51: #{netf1_forward.2} parent=47 // pred_region
        %p6138 = scmp.lt.s32.totalorder %s17, 1
        %s6139 = scalar_select %p6138, %s17, 1
        %s6140 = smul.addr %s6139, 24
        %s6141 = smul.addr %s6140, 4
        %s6142 = scalar_lea.vmem %s5, %s6141
      $region52: #{netf1_forward.2} parent=47 // pred_fallthru
        _
    $region48: #{netf1_forward.2} parent=5 // pred_fallthru
      _
  $region6: #{netf1_forward.2} parent=0 // loop_footer
    %s15 = sadd.s32 1, %s11
  $region7: #{netf1_forward.2} parent=0 // loop_footer_branch
    %10 = sbr.rel target = $region3
  $region8: #{netf1_forward.2} parent=0 // loop_exit
    _

</llo_original>
